<compile_context>
chip_gen: v6e
topology: v6e:2x2x1
jax: 0.10.0
libtpu: 0.0.40
codegen_flags: <defaults>
</compile_context>

<pallas_src>
import functools

import numpy as np
import jax
import jax.numpy as jnp
from jax import lax
from jax.experimental import pallas as pl
from jax.experimental.pallas import tpu as pltpu


# ----------------------------------------------------------------------------
# Fused kernel: a block of G images in, G lane-dense images out.
# ----------------------------------------------------------------------------
def _double_deconv_kernel(x_ref, b1u_ref, ah_ref, b2_ref, sh_ref,
                          gpool_ref, gn_ref, o_ref, *, eps, slope):
    # x_ref    : (G, H, W*Cin)  f32   lane-dense input images
    # b1u_ref  : (3, W*Cin, Wo*C) bf16  banded conv1 (+ W-upsample folded), per dy
    # ah_ref   : (3, Ho, H)     f32   H-upsample ∘ conv1 row-shift, per dy
    # b2_ref   : (3, Wo*C, Wo*C) bf16 banded conv2, per dy
    # sh_ref   : (3, Ho, Ho)    f32   conv2 row-shift matrices, per dy
    # gpool_ref: (Wo*C, Wo*C)   f32   group-mean pool with lane broadcast folded in
    # gn_ref   : (4, Wo*C)      f32   [gamma1, beta1, gamma2, beta2] lane-tiled
    # o_ref    : (G, Ho, Wo*C)  f32   lane-dense output
    f32, bf16 = jnp.float32, jnp.bfloat16
    G = x_ref.shape[0]

    gamma1 = gn_ref[0:1, :]
    beta1 = gn_ref[1:2, :]
    gamma2 = gn_ref[2:3, :]
    beta2 = gn_ref[3:4, :]

    def gn_lrelu(xd, gamma, beta):
        # Single-pass per-group statistics, f32 throughout, lane-dense.
        s = jnp.sum(xd, axis=0, keepdims=True)                    # (1, Wo*C)
        ss = jnp.sum(xd * xd, axis=0, keepdims=True)              # (1, Wo*C)
        pooled = jnp.dot(jnp.concatenate([s, ss], axis=0),
                         gpool_ref[...],
                         preferred_element_type=f32)              # (2, Wo*C)
        mean = pooled[0:1, :]
        var = jnp.maximum(pooled[1:2, :] - mean * mean, 0.0)      # clamp >= 0
        a = gamma * lax.rsqrt(var + eps)
        b = beta - mean * a
        y = xd * a + b
        return jnp.where(y >= 0, y, slope * y)

    for g in range(G):
        xb = x_ref[g].astype(bf16)                                # (H, W*Cin)

        # ---- conv1 (banded) + W-upsample (folded) + H-upsample (folded) ----
        up = None
        for dy in range(3):
            c1 = jnp.dot(xb, b1u_ref[dy], preferred_element_type=f32)
            part = jnp.dot(ah_ref[dy], c1, preferred_element_type=f32)
            up = part if up is None else up + part                # (Ho, Wo*C)

        tmp = gn_lrelu(up, gamma1, beta1)                         # (Ho, Wo*C)

        # ---- conv2 (banded, no halo scratch) --------------------------------
        tmpb = tmp.astype(bf16)
        c2 = None
        for dy in range(3):
            t = jnp.dot(tmpb, b2_ref[dy], preferred_element_type=f32)
            part = jnp.dot(sh_ref[dy], t, preferred_element_type=f32)
            c2 = part if c2 is None else c2 + part                # (Ho, Wo*C)

        o_ref[g] = gn_lrelu(c2, gamma2, beta2) + tmp


# ----------------------------------------------------------------------------
# Host-side precomputation helpers (numpy, compile-time constants).
# ----------------------------------------------------------------------------
def _bilinear_matrix(n_in, n_out):
    """nn.Upsample(mode='bilinear', align_corners=True), 1-D weights."""
    a = np.zeros((n_out, n_in), dtype=np.float32)
    if n_out == 1 or n_in == 1:
        a[:, 0] = 1.0
        return a
    scale = (n_in - 1) / (n_out - 1)
    for o in range(n_out):
        src = o * scale
        i0 = min(int(np.floor(src)), n_in - 1)
        i1 = min(i0 + 1, n_in - 1)
        f = src - i0
        a[o, i0] += 1.0 - f
        a[o, i1] += f
    return a


def _banded_conv_w(wnp, width, cin, cout):
    """Banded 'SAME' 3x3-conv matrices along W: (3, width*cin, width*cout)."""
    band = np.zeros((3, width * cin, width * cout), np.float32)
    for dy in range(3):
        for wo in range(width):
            for dx in range(3):
                wi = wo + dx - 1
                if 0 <= wi < width:
                    band[dy, wi * cin:(wi + 1) * cin,
                         wo * cout:(wo + 1) * cout] = wnp[dy, dx]
    return band


def _shift_matrices(n):
    """Row-shift matrices for the 3 vertical taps of a 'SAME' conv: (3, n, n)."""
    s = np.zeros((3, n, n), np.float32)
    for dy in range(3):
        for h in range(n):
            hi = h + dy - 1
            if 0 <= hi < n:
                s[dy, h, hi] = 1.0
    return s


# ----------------------------------------------------------------------------
# Host-side glue.
# ----------------------------------------------------------------------------
def _double_deconv_forward(x_nchw, w1, w2, g1, b1, g2, b2, *, groups, scale,
                           images_per_step=1):
    N, Cin, H, W = x_nchw.shape
    C = w1.shape[-1]
    Ho, Wo = H * scale, W * scale
    WoC = Wo * C
    cg = C // groups
    G = images_per_step
    assert N % G == 0, "batch must be divisible by images_per_step"

    # NCHW -> NHWC -> lane-dense (N, H, W*Cin): reshape merges contiguous minors.
    x = jnp.transpose(x_nchw, (0, 2, 3, 1)).reshape(N, H, W * Cin)

    w1np = np.asarray(w1, np.float32)                 # (3, 3, Cin, C)  HWIO
    w2np = np.asarray(w2, np.float32)                 # (3, 3, C,   C)

    # Bilinear interpolation operators (align_corners=True).
    ah1 = _bilinear_matrix(H, Ho)                     # (Ho, H)
    aw1 = _bilinear_matrix(W, Wo)                     # (Wo, W)

    # W-upsample as a block-Kronecker matrix (W*C, Wo*C).
    awk = np.zeros((W * C, WoC), np.float32)
    eye_c = np.eye(C, dtype=np.float32)
    for wo in range(Wo):
        for w in range(W):
            if aw1[wo, w] != 0.0:
                awk[w * C:(w + 1) * C, wo * C:(wo + 1) * C] = aw1[wo, w] * eye_c

    # conv1: banded matrices with the W-upsample pre-multiplied on the host.
    b1_band = _banded_conv_w(w1np, W, Cin, C)                 # (3, W*Cin, W*C)
    b1u = np.einsum("dkm,mn->dkn", b1_band, awk)              # (3, W*Cin, Wo*C)
    # H-upsample composed with conv1's per-dy row shift.
    ah = np.einsum("oh,dhi->doi", ah1, _shift_matrices(H))    # (3, Ho, H)

    # conv2: banded matrices + row-shift matrices.
    b2_band = _banded_conv_w(w2np, Wo, C, C)                  # (3, Wo*C, Wo*C)
    sh = _shift_matrices(Ho)                                  # (3, Ho, Ho)

    # Group-mean pooling with the per-lane broadcast folded in: (Wo*C, Wo*C).
    lane_chan = np.tile(np.arange(C), Wo)
    lane_grp = lane_chan // cg
    gpool = (lane_grp[:, None] == lane_grp[None, :]).astype(np.float32)
    gpool /= float(Ho * Wo * cg)

    # Packed, lane-tiled GroupNorm affine params: (4, Wo*C).
    gn_pack = np.stack([np.tile(np.asarray(g1, np.float32), Wo),
                        np.tile(np.asarray(b1, np.float32), Wo),
                        np.tile(np.asarray(g2, np.float32), Wo),
                        np.tile(np.asarray(b2, np.float32), Wo)], axis=0)

    kernel = functools.partial(_double_deconv_kernel, eps=1e-5, slope=0.01)

    out = pl.pallas_call(
        kernel,
        out_shape=jax.ShapeDtypeStruct((N, Ho, WoC), jnp.float32),
        grid=(N // G,),
        in_specs=[
            pl.BlockSpec((G, H, W * Cin), lambda n: (n, 0, 0)),      # x
            pl.BlockSpec((3, W * Cin, WoC), lambda n: (0, 0, 0)),    # conv1⊗upW
            pl.BlockSpec((3, Ho, H), lambda n: (0, 0, 0)),           # upH∘shift
            pl.BlockSpec((3, WoC, WoC), lambda n: (0, 0, 0)),        # conv2 band
            pl.BlockSpec((3, Ho, Ho), lambda n: (0, 0, 0)),          # conv2 shift
            pl.BlockSpec((WoC, WoC), lambda n: (0, 0)),              # group pool
            pl.BlockSpec((4, WoC), lambda n: (0, 0)),                # GN params
        ],
        out_specs=pl.BlockSpec((G, Ho, WoC), lambda n: (n, 0, 0)),
        compiler_params=pltpu.CompilerParams(
            dimension_semantics=("parallel",)),
    )(x,
      jnp.asarray(b1u, jnp.bfloat16),
      jnp.asarray(ah, jnp.float32),
      jnp.asarray(b2_band, jnp.bfloat16),
      jnp.asarray(sh, jnp.float32),
      jnp.asarray(gpool, jnp.float32),
      jnp.asarray(gn_pack, jnp.float32))

    return jnp.transpose(out.reshape(N, Ho, Wo, C), (0, 3, 1, 2))   # -> NCHW


class DoubleDeconv2dPallas:
    def __init__(self, key, source_channels=32, output_channels=32,
                 number_grouping=4, scale_factor=2):
        self.groups = number_grouping
        self.scale = scale_factor
        k1, k2, k3, k4, k5, k6 = jax.random.split(key, 6)
        # Conv weights in HWIO layout: (3, 3, Cin, Cout); Conv2d bias=False.
        self.w1 = jax.random.normal(
            k1, (3, 3, source_channels, output_channels), jnp.float32
        ) / np.sqrt(9.0 * source_channels)
        self.w2 = jax.random.normal(
            k2, (3, 3, output_channels, output_channels), jnp.float32
        ) / np.sqrt(9.0 * output_channels)
        # GroupNorm affine params (perturbed so the affine path is exercised).
        self.g1 = 1.0 + 0.1 * jax.random.normal(k3, (output_channels,), jnp.float32)
        self.b1 = 0.1 * jax.random.normal(k4, (output_channels,), jnp.float32)
        self.g2 = 1.0 + 0.1 * jax.random.normal(k5, (output_channels,), jnp.float32)
        self.b2 = 0.1 * jax.random.normal(k6, (output_channels,), jnp.float32)

    def __call__(self, x_nchw, images_per_step=1):
        # images_per_step=1 keeps per-image grid parallelism (v7x: 2 TCs);
        # on single-TC chips (v5e/v6e) images_per_step=N folds the batch.
        return _double_deconv_forward(x_nchw, self.w1, self.w2,
                                      self.g1, self.b1, self.g2, self.b2,
                                      groups=self.groups, scale=self.scale,
                                      images_per_step=images_per_step)


# ----------------------------------------------------------------------------
# Plain-JAX f32 reference for validation.
# ----------------------------------------------------------------------------
def reference_forward(x_nchw, mod):
    x = jnp.transpose(x_nchw, (0, 2, 3, 1))

    def conv(xi, w):
        return lax.conv_general_dilated(
            xi, w, (1, 1), "SAME",
            dimension_numbers=("NHWC", "HWIO", "NHWC"))

    def gn(xi, gamma, beta, groups, eps=1e-5):
        N, H, W, C = xi.shape
        cg = C // groups
        xr = xi.reshape(N, H, W, groups, cg)
        mean = xr.mean(axis=(1, 2, 4), keepdims=True)
        var = ((xr - mean) ** 2).mean(axis=(1, 2, 4), keepdims=True)
        xn = ((xr - mean) / jnp.sqrt(var + eps)).reshape(N, H, W, C)
        return xn * gamma + beta

    def lrelu(v):
        return jnp.where(v >= 0, v, 0.01 * v)

    N, H, W, _ = x.shape
    Ho, Wo = H * mod.scale, W * mod.scale
    Ah = jnp.asarray(_bilinear_matrix(H, Ho))
    Aw = jnp.asarray(_bilinear_matrix(W, Wo))
    c1 = conv(x, mod.w1)
    up = jnp.einsum("ab,nbwc->nawc", Ah, c1)     # upsample H
    up = jnp.einsum("pq,naqc->napc", Aw, up)     # upsample W
    tmp = lrelu(gn(up, mod.g1, mod.b1, mod.groups))
    c2 = conv(tmp, mod.w2)
    ret = lrelu(gn(c2, mod.g2, mod.b2, mod.groups)) + tmp
    return jnp.transpose(ret, (0, 3, 1, 2))


if __name__ == "__main__":
    key = jax.random.PRNGKey(0)
    kx, kp = jax.random.split(key)

    # module-consistent small shapes: batch=2, channels=32, spatial=8x8
    N, Cs, H, W = 2, 32, 8, 8
    x = jax.random.normal(kx, (N, Cs, H, W), jnp.float32)

    mod = DoubleDeconv2dPallas(kp, source_channels=Cs, output_channels=32,
                               number_grouping=4, scale_factor=2)

    out = jax.block_until_ready(mod(x))
    assert out.shape == (N, 32, H * 2, W * 2), out.shape

    ref = jax.block_until_ready(reference_forward(x, mod))
    # Tolerance accounts for bf16 conv operands (f32 accumulation, f32 GN math).
    np.testing.assert_allclose(np.asarray(out), np.asarray(ref),
                               rtol=5e-2, atol=5e-2)

    print("KERNEL_OK")
</pallas_src>

<mosaic_0001>
module attributes {stable_mosaic.version = 11 : i64} {
  func.func @_double_deconv_kernel(%arg0: i32, %arg1: memref<1x8x256xf32, #tpu.memory_space<vmem>>, %arg2: memref<3x256x512xbf16, #tpu.memory_space<vmem>>, %arg3: memref<3x16x8xf32, #tpu.memory_space<vmem>>, %arg4: memref<3x512x512xbf16, #tpu.memory_space<vmem>>, %arg5: memref<3x16x16xf32, #tpu.memory_space<vmem>>, %arg6: memref<512x512xf32, #tpu.memory_space<vmem>>, %arg7: memref<4x512xf32, #tpu.memory_space<vmem>>, %arg8: memref<1x16x512xf32, #tpu.memory_space<vmem>>) attributes {dimension_semantics = [#tpu.dimension_semantics<parallel>], iteration_bounds = array<i64: 2>, scalar_prefetch = 0 : i64, scratch_operands = 0 : i64, tpu.core_type = #tpu.core_type<tc>, window_params = [{transform_indices = @transform_0, window_bounds = array<i64: 1, 8, 256>}, {pipeline_mode = #tpu.pipeline_mode<synchronous>, transform_indices = @transform_1, window_bounds = array<i64: 3, 256, 512>}, {pipeline_mode = #tpu.pipeline_mode<synchronous>, transform_indices = @transform_2, window_bounds = array<i64: 3, 16, 8>}, {pipeline_mode = #tpu.pipeline_mode<synchronous>, transform_indices = @transform_3, window_bounds = array<i64: 3, 512, 512>}, {pipeline_mode = #tpu.pipeline_mode<synchronous>, transform_indices = @transform_4, window_bounds = array<i64: 3, 16, 16>}, {pipeline_mode = #tpu.pipeline_mode<synchronous>, transform_indices = @transform_5, window_bounds = array<i64: 512, 512>}, {pipeline_mode = #tpu.pipeline_mode<synchronous>, transform_indices = @transform_6, window_bounds = array<i64: 4, 512>}, {transform_indices = @transform_7, window_bounds = array<i64: 1, 16, 512>}]} {
    %c0 = arith.constant 0 : index
    %c0_0 = arith.constant 0 : index
    %0 = vector.load %arg7[%c0, %c0_0] : memref<4x512xf32, #tpu.memory_space<vmem>>, vector<1x512xf32>
    %c1 = arith.constant 1 : index
    %c0_1 = arith.constant 0 : index
    %1 = vector.load %arg7[%c1, %c0_1] : memref<4x512xf32, #tpu.memory_space<vmem>>, vector<1x512xf32>
    %c2 = arith.constant 2 : index
    %c0_2 = arith.constant 0 : index
    %2 = vector.load %arg7[%c2, %c0_2] : memref<4x512xf32, #tpu.memory_space<vmem>>, vector<1x512xf32>
    %c3 = arith.constant 3 : index
    %c0_3 = arith.constant 0 : index
    %3 = vector.load %arg7[%c3, %c0_3] : memref<4x512xf32, #tpu.memory_space<vmem>>, vector<1x512xf32>
    %c0_4 = arith.constant 0 : index
    %c0_5 = arith.constant 0 : index
    %c0_6 = arith.constant 0 : index
    %4 = vector.load %arg1[%c0_4, %c0_5, %c0_6] : memref<1x8x256xf32, #tpu.memory_space<vmem>>, vector<1x8x256xf32>
    %5 = vector.shape_cast %4 : vector<1x8x256xf32> to vector<8x256xf32>
    %6 = arith.truncf %5 : vector<8x256xf32> to vector<8x256xbf16>
    %c0_7 = arith.constant 0 : index
    %c0_8 = arith.constant 0 : index
    %c0_9 = arith.constant 0 : index
    %7 = vector.load %arg2[%c0_7, %c0_8, %c0_9] : memref<3x256x512xbf16, #tpu.memory_space<vmem>>, vector<1x256x512xbf16>
    %8 = vector.shape_cast %7 : vector<1x256x512xbf16> to vector<256x512xbf16>
    %cst = arith.constant dense<0.000000e+00> : vector<8x512xf32>
    %9 = tpu.matmul %6, %8, %cst {dimension_numbers = #tpu.dot_dimension_numbers<[1], [0], [0], [1], [0, 0, 1, 1], [], []>} : vector<8x256xbf16>, vector<256x512xbf16>, vector<8x512xf32> -> vector<8x512xf32>
    %c0_10 = arith.constant 0 : index
    %c0_11 = arith.constant 0 : index
    %c0_12 = arith.constant 0 : index
    %10 = vector.load %arg3[%c0_10, %c0_11, %c0_12] : memref<3x16x8xf32, #tpu.memory_space<vmem>>, vector<1x16x8xf32>
    %11 = vector.shape_cast %10 : vector<1x16x8xf32> to vector<16x8xf32>
    %cst_13 = arith.constant dense<0.000000e+00> : vector<16x512xf32>
    %12 = tpu.matmul %11, %9, %cst_13 {dimension_numbers = #tpu.dot_dimension_numbers<[1], [0], [0], [1], [0, 0, 1, 1], [], []>} : vector<16x8xf32>, vector<8x512xf32>, vector<16x512xf32> -> vector<16x512xf32>
    %c1_14 = arith.constant 1 : index
    %c0_15 = arith.constant 0 : index
    %c0_16 = arith.constant 0 : index
    %13 = vector.load %arg2[%c1_14, %c0_15, %c0_16] : memref<3x256x512xbf16, #tpu.memory_space<vmem>>, vector<1x256x512xbf16>
    %14 = vector.shape_cast %13 : vector<1x256x512xbf16> to vector<256x512xbf16>
    %cst_17 = arith.constant dense<0.000000e+00> : vector<8x512xf32>
    %15 = tpu.matmul %6, %14, %cst_17 {dimension_numbers = #tpu.dot_dimension_numbers<[1], [0], [0], [1], [0, 0, 1, 1], [], []>} : vector<8x256xbf16>, vector<256x512xbf16>, vector<8x512xf32> -> vector<8x512xf32>
    %c1_18 = arith.constant 1 : index
    %c0_19 = arith.constant 0 : index
    %c0_20 = arith.constant 0 : index
    %16 = vector.load %arg3[%c1_18, %c0_19, %c0_20] : memref<3x16x8xf32, #tpu.memory_space<vmem>>, vector<1x16x8xf32>
    %17 = vector.shape_cast %16 : vector<1x16x8xf32> to vector<16x8xf32>
    %cst_21 = arith.constant dense<0.000000e+00> : vector<16x512xf32>
    %18 = tpu.matmul %17, %15, %cst_21 {dimension_numbers = #tpu.dot_dimension_numbers<[1], [0], [0], [1], [0, 0, 1, 1], [], []>} : vector<16x8xf32>, vector<8x512xf32>, vector<16x512xf32> -> vector<16x512xf32>
    %19 = arith.addf %12, %18 : vector<16x512xf32>
    %c2_22 = arith.constant 2 : index
    %c0_23 = arith.constant 0 : index
    %c0_24 = arith.constant 0 : index
    %20 = vector.load %arg2[%c2_22, %c0_23, %c0_24] : memref<3x256x512xbf16, #tpu.memory_space<vmem>>, vector<1x256x512xbf16>
    %21 = vector.shape_cast %20 : vector<1x256x512xbf16> to vector<256x512xbf16>
    %cst_25 = arith.constant dense<0.000000e+00> : vector<8x512xf32>
    %22 = tpu.matmul %6, %21, %cst_25 {dimension_numbers = #tpu.dot_dimension_numbers<[1], [0], [0], [1], [0, 0, 1, 1], [], []>} : vector<8x256xbf16>, vector<256x512xbf16>, vector<8x512xf32> -> vector<8x512xf32>
    %c2_26 = arith.constant 2 : index
    %c0_27 = arith.constant 0 : index
    %c0_28 = arith.constant 0 : index
    %23 = vector.load %arg3[%c2_26, %c0_27, %c0_28] : memref<3x16x8xf32, #tpu.memory_space<vmem>>, vector<1x16x8xf32>
    %24 = vector.shape_cast %23 : vector<1x16x8xf32> to vector<16x8xf32>
    %cst_29 = arith.constant dense<0.000000e+00> : vector<16x512xf32>
    %25 = tpu.matmul %24, %22, %cst_29 {dimension_numbers = #tpu.dot_dimension_numbers<[1], [0], [0], [1], [0, 0, 1, 1], [], []>} : vector<16x8xf32>, vector<8x512xf32>, vector<16x512xf32> -> vector<16x512xf32>
    %26 = arith.addf %19, %25 : vector<16x512xf32>
    %cst_30 = arith.constant dense<0.000000e+00> : vector<512xf32>
    %27 = vector.multi_reduction <add>, %26, %cst_30 [0] : vector<16x512xf32> to vector<512xf32>
    %28 = vector.shape_cast %27 : vector<512xf32> to vector<1x512xf32>
    %29 = arith.mulf %26, %26 : vector<16x512xf32>
    %cst_31 = arith.constant dense<0.000000e+00> : vector<512xf32>
    %30 = vector.multi_reduction <add>, %29, %cst_31 [0] : vector<16x512xf32> to vector<512xf32>
    %31 = vector.shape_cast %30 : vector<512xf32> to vector<1x512xf32>
    %32 = tpu.concatenate %28, %31 in 0 : vector<1x512xf32>, vector<1x512xf32> -> vector<2x512xf32>
    %c0_32 = arith.constant 0 : index
    %c0_33 = arith.constant 0 : index
    %33 = vector.load %arg6[%c0_32, %c0_33] : memref<512x512xf32, #tpu.memory_space<vmem>>, vector<512x512xf32>
    %cst_34 = arith.constant dense<0.000000e+00> : vector<2x512xf32>
    %34 = tpu.matmul %32, %33, %cst_34 {dimension_numbers = #tpu.dot_dimension_numbers<[1], [0], [0], [1], [0, 0, 1, 1], [], []>} : vector<2x512xf32>, vector<512x512xf32>, vector<2x512xf32> -> vector<2x512xf32>
    %35 = vector.extract_strided_slice %34 {offsets = [0, 0], sizes = [1, 512], strides = [1, 1]} : vector<2x512xf32> to vector<1x512xf32>
    %36 = vector.extract_strided_slice %34 {offsets = [1, 0], sizes = [1, 512], strides = [1, 1]} : vector<2x512xf32> to vector<1x512xf32>
    %37 = arith.mulf %35, %35 : vector<1x512xf32>
    %38 = arith.subf %36, %37 : vector<1x512xf32>
    %cst_35 = arith.constant 0.000000e+00 : f32
    %39 = vector.broadcast %cst_35 : f32 to vector<1x512xf32>
    %40 = arith.maximumf %38, %39 : vector<1x512xf32>
    %cst_36 = arith.constant 9.99999974E-6 : f32
    %41 = vector.broadcast %cst_36 : f32 to vector<1x512xf32>
    %42 = arith.addf %40, %41 : vector<1x512xf32>
    %43 = math.rsqrt %42 : vector<1x512xf32>
    %44 = arith.mulf %0, %43 : vector<1x512xf32>
    %45 = arith.mulf %35, %44 : vector<1x512xf32>
    %46 = arith.subf %1, %45 : vector<1x512xf32>
    %47 = vector.broadcast %44 : vector<1x512xf32> to vector<16x512xf32>
    %48 = arith.mulf %26, %47 : vector<16x512xf32>
    %49 = vector.broadcast %46 : vector<1x512xf32> to vector<16x512xf32>
    %50 = arith.addf %48, %49 : vector<16x512xf32>
    %cst_37 = arith.constant 0.000000e+00 : f32
    %51 = vector.broadcast %cst_37 : f32 to vector<16x512xf32>
    %52 = arith.cmpf oge, %50, %51 : vector<16x512xf32>
    %cst_38 = arith.constant 0.00999999977 : f32
    %53 = vector.broadcast %cst_38 : f32 to vector<16x512xf32>
    %54 = arith.mulf %53, %50 : vector<16x512xf32>
    %55 = arith.select %52, %50, %54 : vector<16x512xi1>, vector<16x512xf32>
    %56 = arith.truncf %55 : vector<16x512xf32> to vector<16x512xbf16>
    %c0_39 = arith.constant 0 : index
    %c0_40 = arith.constant 0 : index
    %c0_41 = arith.constant 0 : index
    %57 = vector.load %arg4[%c0_39, %c0_40, %c0_41] : memref<3x512x512xbf16, #tpu.memory_space<vmem>>, vector<1x512x512xbf16>
    %58 = vector.shape_cast %57 : vector<1x512x512xbf16> to vector<512x512xbf16>
    %cst_42 = arith.constant dense<0.000000e+00> : vector<16x512xf32>
    %59 = tpu.matmul %56, %58, %cst_42 {dimension_numbers = #tpu.dot_dimension_numbers<[1], [0], [0], [1], [0, 0, 1, 1], [], []>} : vector<16x512xbf16>, vector<512x512xbf16>, vector<16x512xf32> -> vector<16x512xf32>
    %c0_43 = arith.constant 0 : index
    %c0_44 = arith.constant 0 : index
    %c0_45 = arith.constant 0 : index
    %60 = vector.load %arg5[%c0_43, %c0_44, %c0_45] : memref<3x16x16xf32, #tpu.memory_space<vmem>>, vector<1x16x16xf32>
    %61 = vector.shape_cast %60 : vector<1x16x16xf32> to vector<16x16xf32>
    %cst_46 = arith.constant dense<0.000000e+00> : vector<16x512xf32>
    %62 = tpu.matmul %61, %59, %cst_46 {dimension_numbers = #tpu.dot_dimension_numbers<[1], [0], [0], [1], [0, 0, 1, 1], [], []>} : vector<16x16xf32>, vector<16x512xf32>, vector<16x512xf32> -> vector<16x512xf32>
    %c1_47 = arith.constant 1 : index
    %c0_48 = arith.constant 0 : index
    %c0_49 = arith.constant 0 : index
    %63 = vector.load %arg4[%c1_47, %c0_48, %c0_49] : memref<3x512x512xbf16, #tpu.memory_space<vmem>>, vector<1x512x512xbf16>
    %64 = vector.shape_cast %63 : vector<1x512x512xbf16> to vector<512x512xbf16>
    %cst_50 = arith.constant dense<0.000000e+00> : vector<16x512xf32>
    %65 = tpu.matmul %56, %64, %cst_50 {dimension_numbers = #tpu.dot_dimension_numbers<[1], [0], [0], [1], [0, 0, 1, 1], [], []>} : vector<16x512xbf16>, vector<512x512xbf16>, vector<16x512xf32> -> vector<16x512xf32>
    %c1_51 = arith.constant 1 : index
    %c0_52 = arith.constant 0 : index
    %c0_53 = arith.constant 0 : index
    %66 = vector.load %arg5[%c1_51, %c0_52, %c0_53] : memref<3x16x16xf32, #tpu.memory_space<vmem>>, vector<1x16x16xf32>
    %67 = vector.shape_cast %66 : vector<1x16x16xf32> to vector<16x16xf32>
    %cst_54 = arith.constant dense<0.000000e+00> : vector<16x512xf32>
    %68 = tpu.matmul %67, %65, %cst_54 {dimension_numbers = #tpu.dot_dimension_numbers<[1], [0], [0], [1], [0, 0, 1, 1], [], []>} : vector<16x16xf32>, vector<16x512xf32>, vector<16x512xf32> -> vector<16x512xf32>
    %69 = arith.addf %62, %68 : vector<16x512xf32>
    %c2_55 = arith.constant 2 : index
    %c0_56 = arith.constant 0 : index
    %c0_57 = arith.constant 0 : index
    %70 = vector.load %arg4[%c2_55, %c0_56, %c0_57] : memref<3x512x512xbf16, #tpu.memory_space<vmem>>, vector<1x512x512xbf16>
    %71 = vector.shape_cast %70 : vector<1x512x512xbf16> to vector<512x512xbf16>
    %cst_58 = arith.constant dense<0.000000e+00> : vector<16x512xf32>
    %72 = tpu.matmul %56, %71, %cst_58 {dimension_numbers = #tpu.dot_dimension_numbers<[1], [0], [0], [1], [0, 0, 1, 1], [], []>} : vector<16x512xbf16>, vector<512x512xbf16>, vector<16x512xf32> -> vector<16x512xf32>
    %c2_59 = arith.constant 2 : index
    %c0_60 = arith.constant 0 : index
    %c0_61 = arith.constant 0 : index
    %73 = vector.load %arg5[%c2_59, %c0_60, %c0_61] : memref<3x16x16xf32, #tpu.memory_space<vmem>>, vector<1x16x16xf32>
    %74 = vector.shape_cast %73 : vector<1x16x16xf32> to vector<16x16xf32>
    %cst_62 = arith.constant dense<0.000000e+00> : vector<16x512xf32>
    %75 = tpu.matmul %74, %72, %cst_62 {dimension_numbers = #tpu.dot_dimension_numbers<[1], [0], [0], [1], [0, 0, 1, 1], [], []>} : vector<16x16xf32>, vector<16x512xf32>, vector<16x512xf32> -> vector<16x512xf32>
    %76 = arith.addf %69, %75 : vector<16x512xf32>
    %cst_63 = arith.constant dense<0.000000e+00> : vector<512xf32>
    %77 = vector.multi_reduction <add>, %76, %cst_63 [0] : vector<16x512xf32> to vector<512xf32>
    %78 = vector.shape_cast %77 : vector<512xf32> to vector<1x512xf32>
    %79 = arith.mulf %76, %76 : vector<16x512xf32>
    %cst_64 = arith.constant dense<0.000000e+00> : vector<512xf32>
    %80 = vector.multi_reduction <add>, %79, %cst_64 [0] : vector<16x512xf32> to vector<512xf32>
    %81 = vector.shape_cast %80 : vector<512xf32> to vector<1x512xf32>
    %82 = tpu.concatenate %78, %81 in 0 : vector<1x512xf32>, vector<1x512xf32> -> vector<2x512xf32>
    %c0_65 = arith.constant 0 : index
    %c0_66 = arith.constant 0 : index
    %83 = vector.load %arg6[%c0_65, %c0_66] : memref<512x512xf32, #tpu.memory_space<vmem>>, vector<512x512xf32>
    %cst_67 = arith.constant dense<0.000000e+00> : vector<2x512xf32>
    %84 = tpu.matmul %82, %83, %cst_67 {dimension_numbers = #tpu.dot_dimension_numbers<[1], [0], [0], [1], [0, 0, 1, 1], [], []>} : vector<2x512xf32>, vector<512x512xf32>, vector<2x512xf32> -> vector<2x512xf32>
    %85 = vector.extract_strided_slice %84 {offsets = [0, 0], sizes = [1, 512], strides = [1, 1]} : vector<2x512xf32> to vector<1x512xf32>
    %86 = vector.extract_strided_slice %84 {offsets = [1, 0], sizes = [1, 512], strides = [1, 1]} : vector<2x512xf32> to vector<1x512xf32>
    %87 = arith.mulf %85, %85 : vector<1x512xf32>
    %88 = arith.subf %86, %87 : vector<1x512xf32>
    %cst_68 = arith.constant 0.000000e+00 : f32
    %89 = vector.broadcast %cst_68 : f32 to vector<1x512xf32>
    %90 = arith.maximumf %88, %89 : vector<1x512xf32>
    %cst_69 = arith.constant 9.99999974E-6 : f32
    %91 = vector.broadcast %cst_69 : f32 to vector<1x512xf32>
    %92 = arith.addf %90, %91 : vector<1x512xf32>
    %93 = math.rsqrt %92 : vector<1x512xf32>
    %94 = arith.mulf %2, %93 : vector<1x512xf32>
    %95 = arith.mulf %85, %94 : vector<1x512xf32>
    %96 = arith.subf %3, %95 : vector<1x512xf32>
    %97 = vector.broadcast %94 : vector<1x512xf32> to vector<16x512xf32>
    %98 = arith.mulf %76, %97 : vector<16x512xf32>
    %99 = vector.broadcast %96 : vector<1x512xf32> to vector<16x512xf32>
    %100 = arith.addf %98, %99 : vector<16x512xf32>
    %cst_70 = arith.constant 0.000000e+00 : f32
    %101 = vector.broadcast %cst_70 : f32 to vector<16x512xf32>
    %102 = arith.cmpf oge, %100, %101 : vector<16x512xf32>
    %cst_71 = arith.constant 0.00999999977 : f32
    %103 = vector.broadcast %cst_71 : f32 to vector<16x512xf32>
    %104 = arith.mulf %103, %100 : vector<16x512xf32>
    %105 = arith.select %102, %100, %104 : vector<16x512xi1>, vector<16x512xf32>
    %106 = arith.addf %105, %55 : vector<16x512xf32>
    %c0_72 = arith.constant 0 : index
    %c0_73 = arith.constant 0 : index
    %c0_74 = arith.constant 0 : index
    %107 = vector.load %arg8[%c0_72, %c0_73, %c0_74] : memref<1x16x512xf32, #tpu.memory_space<vmem>>, vector<1x16x512xf32>
    %108 = vector.shape_cast %107 : vector<1x16x512xf32> to vector<16x512xf32>
    %109 = vector.shape_cast %106 : vector<16x512xf32> to vector<1x16x512xf32>
    tpu.vector_store %arg8[%c0_72, %c0_73, %c0_74], %109 {strides = array<i32>} : memref<1x16x512xf32, #tpu.memory_space<vmem>>, vector<1x16x512xf32>,
    return
  }
  func.func @transform_0(%arg0: i32) -> (i32, i32, i32) {
    %c0_i32 = arith.constant 0 : i32
    %c0_i32_0 = arith.constant 0 : i32
    %c0_i32_1 = arith.constant 0 : i32
    return %arg0, %c0_i32, %c0_i32_0 : i32, i32, i32
  }
  func.func @transform_1(%arg0: i32) -> (i32, i32, i32) {
    %c0_i32 = arith.constant 0 : i32
    %c0_i32_0 = arith.constant 0 : i32
    %c0_i32_1 = arith.constant 0 : i32
    %c0_i32_2 = arith.constant 0 : i32
    return %c0_i32, %c0_i32_0, %c0_i32_1 : i32, i32, i32
  }
  func.func @transform_2(%arg0: i32) -> (i32, i32, i32) {
    %c0_i32 = arith.constant 0 : i32
    %c0_i32_0 = arith.constant 0 : i32
    %c0_i32_1 = arith.constant 0 : i32
    %c0_i32_2 = arith.constant 0 : i32
    return %c0_i32, %c0_i32_0, %c0_i32_1 : i32, i32, i32
  }
  func.func @transform_3(%arg0: i32) -> (i32, i32, i32) {
    %c0_i32 = arith.constant 0 : i32
    %c0_i32_0 = arith.constant 0 : i32
    %c0_i32_1 = arith.constant 0 : i32
    %c0_i32_2 = arith.constant 0 : i32
    return %c0_i32, %c0_i32_0, %c0_i32_1 : i32, i32, i32
  }
  func.func @transform_4(%arg0: i32) -> (i32, i32, i32) {
    %c0_i32 = arith.constant 0 : i32
    %c0_i32_0 = arith.constant 0 : i32
    %c0_i32_1 = arith.constant 0 : i32
    %c0_i32_2 = arith.constant 0 : i32
    return %c0_i32, %c0_i32_0, %c0_i32_1 : i32, i32, i32
  }
  func.func @transform_5(%arg0: i32) -> (i32, i32) {
    %c0_i32 = arith.constant 0 : i32
    %c0_i32_0 = arith.constant 0 : i32
    %c0_i32_1 = arith.constant 0 : i32
    return %c0_i32, %c0_i32_0 : i32, i32
  }
  func.func @transform_6(%arg0: i32) -> (i32, i32) {
    %c0_i32 = arith.constant 0 : i32
    %c0_i32_0 = arith.constant 0 : i32
    %c0_i32_1 = arith.constant 0 : i32
    return %c0_i32, %c0_i32_0 : i32, i32
  }
  func.func @transform_7(%arg0: i32) -> (i32, i32, i32) {
    %c0_i32 = arith.constant 0 : i32
    %c0_i32_0 = arith.constant 0 : i32
    %c0_i32_1 = arith.constant 0 : i32
    return %arg0, %c0_i32, %c0_i32_0 : i32, i32, i32
  }
}

</mosaic_0001>

<llo_original>
// kernel: tpu_custom_call.1
$region0: #{tpu_custom_call.1}
  #allocation0 [shape = 'u32[]', space=smem, size = 0x4, offset = 0x4, fixed_abs, tag = 'smem constant byte address 0x4 - core index']
  #allocation1 [shape = 'u32[144,128]{1,0:T(1,128)}', space=vmem, size = 0x12000, scoped, tag = 'internal scratch']
  %s0 = inlined_call_operand.hbm [shape: f32[2,8,256], index: 0, kind: input, shape index: {}]
  %s1 = inlined_call_operand.hbm [shape: bf16[3,256,512], index: 1, kind: input, shape index: {}]
  %s2 = inlined_call_operand.vmem [shape: f32[3,16,8], index: 2, kind: input, shape index: {}]
  %s3 = inlined_call_operand.hbm [shape: bf16[3,512,512], index: 3, kind: input, shape index: {}]
  %s4 = inlined_call_operand.hbm [shape: f32[3,16,16], index: 4, kind: input, shape index: {}]
  %s5 = inlined_call_operand.hbm [shape: f32[512,512], index: 5, kind: input, shape index: {}]
  %s6 = inlined_call_operand.hbm [shape: f32[4,512], index: 6, kind: input, shape index: {}]
  %s7 = inlined_call_operand.hbm [shape: f32[2,16,512], index: 7, kind: output, shape index: {}]
  %s8 = sld [smem:[#allocation0]]
  $region85: #{tpu_custom_call.1} parent=0
    _
  %s10 = ssub.s32 1, %s8
  %s11 = scalar_select 0, %s10, %s8
  $region1: #{tpu_custom_call.1} parent=0
    #allocation2 [shape = 'u8[16384]{0}', space=vmem, size = 0x4000, scoped, tag = 'input window, operand 0']
    #allocation3 [shape = 's32[2]{0}', space=sflag, size = 0x8, scoped, tag = 'scoped memory for tpu_custom_call.1']
    #allocation4 [shape = 's32[2]{0}', space=sflag, size = 0x8, scoped, tag = 'scoped memory for tpu_custom_call.1']
    #allocation5 [shape = 'u8[786432]{0}', space=vmem, size = 0xc0000, scoped, tag = 'input window, operand 1, single buffered']
    #allocation6 [shape = 's32[1]{0}', space=sflag, size = 0x4, scoped, tag = 'scoped memory for tpu_custom_call.1']
    #allocation7 [shape = 'u8[1572864]{0}', space=vmem, size = 0x180000, scoped, tag = 'input window, operand 3, single buffered']
    #allocation8 [shape = 'u8[24576]{0}', space=vmem, size = 0x6000, scoped, tag = 'input window, operand 4, single buffered']
    #allocation9 [shape = 's32[1]{0}', space=sflag, size = 0x4, scoped, tag = 'scoped memory for tpu_custom_call.1']
    #allocation10 [shape = 'u8[1048576]{0}', space=vmem, size = 0x100000, scoped, tag = 'input window, operand 5, single buffered']
    #allocation11 [shape = 'u8[8192]{0}', space=vmem, size = 0x2000, scoped, tag = 'input window, operand 6, single buffered']
    #allocation12 [shape = 's32[1]{0}', space=sflag, size = 0x4, scoped, tag = 'scoped memory for tpu_custom_call.1']
    #allocation13 [shape = 'u8[65536]{0}', space=vmem, size = 0x10000, scoped, tag = 'output window, operand 0']
    %12 = vsyncpa [#allocation3], 0
    %s13 = scalar_lea.sflag [#allocation3], 1
    %14 = vsyncpa %s13, 0
    %15 = vsyncpa [#allocation6], 0
    %16 = vsyncpa [#allocation9], 0
    %17 = vsyncpa [#allocation12], 0
    %18 = vsyncpa [#allocation4], 0
    %s19 = scalar_lea.sflag [#allocation4], 1
    %20 = vsyncpa %s19, 0
    loop: start=0, step=1, limit=4
    $region2: #{tpu_custom_call.1} parent=1 // loop_pre_header
      _
    $region3: #{tpu_custom_call.1} parent=1 // loop_header
      %s22 = sphi 0, %s26
      %p23 = scmp.ge.s32.totalorder %s22, 4
      %s32 = sphi 0, %s34
      %s35 = sphi 0, %s32
      %s36 = sphi 0, %s35
      %s52 = sphi 0, %s36
      %s56 = sphi 0, %s56
      %s58 = sphi 0, %s56
      %s59 = sphi 0, %s58
      %s73 = sphi 0, %s59
      %s77 = sphi 0, %s77
      %s79 = sphi 0, %s77
      %s80 = sphi 0, %s79
      %s94 = sphi 0, %s80
      %s98 = sphi 0, %s98
      %s100 = sphi 0, %s98
      %s101 = sphi 0, %s100
      %s115 = sphi 0, %s101
      %s119 = sphi 0, %s119
      %s121 = sphi 0, %s119
      %s122 = sphi 0, %s121
      %s136 = sphi 0, %s122
      %s140 = sphi 0, %s140
      %s142 = sphi 0, %s140
      %s143 = sphi 0, %s142
      %s157 = sphi 0, %s143
      %s161 = sphi 0, %s161
      %s163 = sphi 0, %s161
      %s164 = sphi 0, %s163
      %s178 = sphi 0, %s164
      %s184 = sphi 0, %s186
      %s187 = sphi 0, %s184
      %s188 = sphi 0, %s187
      %s204 = sphi 0, %s188
    $region4: #{tpu_custom_call.1} parent=1 // loop_header_branch
      %25 = sbr.rel (%p23) target = $region8
    $region5: #{tpu_custom_call.1} parent=1 // loop_body
      %s27 = ssub.s32 %s22, 1
      %s28 = ssub.s32 %s22, 2
      %s29 = sadd.s32 %s22, 1
      %s30 = ssub.s32 %s22, %s29
      %p31 = scmp.eq.s32.totalorder %s30, 0
      %s33 = sadd.s32 %s32, 1
      %s34 = scalar_select %p31, %s32, %s33
      %p37 = pneg %p31
      %p38 = scmp.eq.s32.totalorder %s22, 1
      %p39 = por %p37, %p38
      %p40 = scmp.ne.s32.totalorder %s32, %s35
      %p41 = scmp.eq.s32.totalorder %s22, 0
      %p42 = por %p40, %p41
      %p43 = scmp.ne.s32.totalorder %s32, %s35
      %p44 = scmp.eq.s32.totalorder %s27, 1
      %p45 = por %p43, %p44
      %p46 = scmp.ne.s32.totalorder %s35, %s36
      %p47 = scmp.eq.s32.totalorder %s27, 0
      %p48 = por %p46, %p47
      %p49 = scmp.ne.s32.totalorder %s35, %s36
      %p50 = scmp.eq.s32.totalorder %s28, 1
      %p51 = por %p49, %p50
      %p53 = scmp.ne.s32.totalorder %s36, %s52
      %p54 = scmp.eq.s32.totalorder %s28, 0
      %p55 = por %p53, %p54
      %s57 = sadd.s32 %s56, 1
      %p60 = scmp.eq.s32.totalorder %s22, 1
      %p61 = scmp.ne.s32.totalorder %s56, %s58
      %p62 = scmp.eq.s32.totalorder %s22, 0
      %p63 = por %p61, %p62
      %p64 = scmp.ne.s32.totalorder %s56, %s58
      %p65 = scmp.eq.s32.totalorder %s27, 1
      %p66 = por %p64, %p65
      %p67 = scmp.ne.s32.totalorder %s58, %s59
      %p68 = scmp.eq.s32.totalorder %s27, 0
      %p69 = por %p67, %p68
      %p70 = scmp.ne.s32.totalorder %s58, %s59
      %p71 = scmp.eq.s32.totalorder %s28, 1
      %p72 = por %p70, %p71
      %p74 = scmp.ne.s32.totalorder %s59, %s73
      %p75 = scmp.eq.s32.totalorder %s28, 0
      %p76 = por %p74, %p75
      %s78 = sadd.s32 %s77, 1
      %p81 = scmp.eq.s32.totalorder %s22, 1
      %p82 = scmp.ne.s32.totalorder %s77, %s79
      %p83 = scmp.eq.s32.totalorder %s22, 0
      %p84 = por %p82, %p83
      %p85 = scmp.ne.s32.totalorder %s77, %s79
      %p86 = scmp.eq.s32.totalorder %s27, 1
      %p87 = por %p85, %p86
      %p88 = scmp.ne.s32.totalorder %s79, %s80
      %p89 = scmp.eq.s32.totalorder %s27, 0
      %p90 = por %p88, %p89
      %p91 = scmp.ne.s32.totalorder %s79, %s80
      %p92 = scmp.eq.s32.totalorder %s28, 1
      %p93 = por %p91, %p92
      %p95 = scmp.ne.s32.totalorder %s80, %s94
      %p96 = scmp.eq.s32.totalorder %s28, 0
      %p97 = por %p95, %p96
      %s99 = sadd.s32 %s98, 1
      %p102 = scmp.eq.s32.totalorder %s22, 1
      %p103 = scmp.ne.s32.totalorder %s98, %s100
      %p104 = scmp.eq.s32.totalorder %s22, 0
      %p105 = por %p103, %p104
      %p106 = scmp.ne.s32.totalorder %s98, %s100
      %p107 = scmp.eq.s32.totalorder %s27, 1
      %p108 = por %p106, %p107
      %p109 = scmp.ne.s32.totalorder %s100, %s101
      %p110 = scmp.eq.s32.totalorder %s27, 0
      %p111 = por %p109, %p110
      %p112 = scmp.ne.s32.totalorder %s100, %s101
      %p113 = scmp.eq.s32.totalorder %s28, 1
      %p114 = por %p112, %p113
      %p116 = scmp.ne.s32.totalorder %s101, %s115
      %p117 = scmp.eq.s32.totalorder %s28, 0
      %p118 = por %p116, %p117
      %s120 = sadd.s32 %s119, 1
      %p123 = scmp.eq.s32.totalorder %s22, 1
      %p124 = scmp.ne.s32.totalorder %s119, %s121
      %p125 = scmp.eq.s32.totalorder %s22, 0
      %p126 = por %p124, %p125
      %p127 = scmp.ne.s32.totalorder %s119, %s121
      %p128 = scmp.eq.s32.totalorder %s27, 1
      %p129 = por %p127, %p128
      %p130 = scmp.ne.s32.totalorder %s121, %s122
      %p131 = scmp.eq.s32.totalorder %s27, 0
      %p132 = por %p130, %p131
      %p133 = scmp.ne.s32.totalorder %s121, %s122
      %p134 = scmp.eq.s32.totalorder %s28, 1
      %p135 = por %p133, %p134
      %p137 = scmp.ne.s32.totalorder %s122, %s136
      %p138 = scmp.eq.s32.totalorder %s28, 0
      %p139 = por %p137, %p138
      %s141 = sadd.s32 %s140, 1
      %p144 = scmp.eq.s32.totalorder %s22, 1
      %p145 = scmp.ne.s32.totalorder %s140, %s142
      %p146 = scmp.eq.s32.totalorder %s22, 0
      %p147 = por %p145, %p146
      %p148 = scmp.ne.s32.totalorder %s140, %s142
      %p149 = scmp.eq.s32.totalorder %s27, 1
      %p150 = por %p148, %p149
      %p151 = scmp.ne.s32.totalorder %s142, %s143
      %p152 = scmp.eq.s32.totalorder %s27, 0
      %p153 = por %p151, %p152
      %p154 = scmp.ne.s32.totalorder %s142, %s143
      %p155 = scmp.eq.s32.totalorder %s28, 1
      %p156 = por %p154, %p155
      %p158 = scmp.ne.s32.totalorder %s143, %s157
      %p159 = scmp.eq.s32.totalorder %s28, 0
      %p160 = por %p158, %p159
      %s162 = sadd.s32 %s161, 1
      %p165 = scmp.eq.s32.totalorder %s22, 1
      %p166 = scmp.ne.s32.totalorder %s161, %s163
      %p167 = scmp.eq.s32.totalorder %s22, 0
      %p168 = por %p166, %p167
      %p169 = scmp.ne.s32.totalorder %s161, %s163
      %p170 = scmp.eq.s32.totalorder %s27, 1
      %p171 = por %p169, %p170
      %p172 = scmp.ne.s32.totalorder %s163, %s164
      %p173 = scmp.eq.s32.totalorder %s27, 0
      %p174 = por %p172, %p173
      %p175 = scmp.ne.s32.totalorder %s163, %s164
      %p176 = scmp.eq.s32.totalorder %s28, 1
      %p177 = por %p175, %p176
      %p179 = scmp.ne.s32.totalorder %s164, %s178
      %p180 = scmp.eq.s32.totalorder %s28, 0
      %p181 = por %p179, %p180
      %s182 = ssub.s32 %s22, %s29
      %p183 = scmp.eq.s32.totalorder %s182, 0
      %s185 = sadd.s32 %s184, 1
      %s186 = scalar_select %p183, %s184, %s185
      %p189 = pneg %p183
      %p190 = scmp.eq.s32.totalorder %s22, 1
      %p191 = por %p189, %p190
      %p192 = scmp.ne.s32.totalorder %s184, %s187
      %p193 = scmp.eq.s32.totalorder %s22, 0
      %p194 = por %p192, %p193
      %p195 = scmp.ne.s32.totalorder %s184, %s187
      %p196 = scmp.eq.s32.totalorder %s27, 1
      %p197 = por %p195, %p196
      %p198 = scmp.ne.s32.totalorder %s187, %s188
      %p199 = scmp.eq.s32.totalorder %s27, 0
      %p200 = por %p198, %p199
      %p201 = scmp.ne.s32.totalorder %s187, %s188
      %p202 = scmp.eq.s32.totalorder %s28, 1
      %p203 = por %p201, %p202
      %p205 = scmp.ne.s32.totalorder %s188, %s204
      %p206 = scmp.eq.s32.totalorder %s28, 0
      %p207 = por %p205, %p206
      %p208 = scmp.le.s32.totalorder 1, %s22
      %p209 = scmp.lt.s32.totalorder %s22, 3
      %p210 = pnand %p208, %p209
      %p211 = pneg %p210
      // Predicated region
      $region9: #{tpu_custom_call.1} parent=5 // pred_check
        _
      $region10: #{tpu_custom_call.1} parent=5 // pred_check_branch
        %213 = sbr.rel (%p210) target = $region12
      $region11: #{tpu_custom_call.1} parent=5 // pred_region
        %s214 = ssub.s32 %s22, 1
        // Predicated region
        $region13: #{tpu_custom_call.1} parent=11 // pred_check
          %p215 = pneg %p69
        $region14: #{tpu_custom_call.1} parent=11 // pred_check_branch
          %217 = sbr.rel (%p215) target = $region16
        $region15: #{tpu_custom_call.1} parent=11 // pred_region
          %s219 = ssub.s32 24576, 24576
          %220 = vsyncadd [#allocation6], %s219
          %s221 = sshll.u32 [#allocation5], 4
          %s222 = int_to_ptr.vmem [resolvable:$true] %s221
          %227 = dma.hbm_to_vmem [thread:$0]  %s1, 24576, %s222, [#allocation6], 256, 256, 16
        $region16: #{tpu_custom_call.1} parent=11 // pred_fallthru
          _
        // Predicated region
        $region17: #{tpu_custom_call.1} parent=11 // pred_check
          %p228 = pneg %p90
        $region18: #{tpu_custom_call.1} parent=11 // pred_check_branch
          %230 = sbr.rel (%p228) target = $region20
        $region19: #{tpu_custom_call.1} parent=11 // pred_region
          _
        $region20: #{tpu_custom_call.1} parent=11 // pred_fallthru
          _
        // Predicated region
        $region21: #{tpu_custom_call.1} parent=11 // pred_check
          %p231 = pneg %p111
        $region22: #{tpu_custom_call.1} parent=11 // pred_check_branch
          %233 = sbr.rel (%p231) target = $region24
        $region23: #{tpu_custom_call.1} parent=11 // pred_region
          %s235 = ssub.s32 49152, 49152
          %236 = vsyncadd [#allocation6], %s235
          %s237 = sshll.u32 [#allocation7], 4
          %s238 = int_to_ptr.vmem [resolvable:$true] %s237
          %243 = dma.hbm_to_vmem [thread:$0]  %s3, 49152, %s238, [#allocation6], 256, 256, 16
        $region24: #{tpu_custom_call.1} parent=11 // pred_fallthru
          _
        // Predicated region
        $region25: #{tpu_custom_call.1} parent=11 // pred_check
          %p244 = pneg %p132
        $region26: #{tpu_custom_call.1} parent=11 // pred_check_branch
          %246 = sbr.rel (%p244) target = $region28
        $region27: #{tpu_custom_call.1} parent=11 // pred_region
          %s248 = ssub.s32 768, 768
          %249 = vsyncadd [#allocation9], %s248
          %s250 = sshll.u32 [#allocation8], 4
          %s251 = int_to_ptr.vmem [resolvable:$true] %s250
          %256 = dma.hbm_to_vmem [thread:$0]  %s4, 768, %s251, [#allocation9], 128, 128, 8
        $region28: #{tpu_custom_call.1} parent=11 // pred_fallthru
          _
        // Predicated region
        $region29: #{tpu_custom_call.1} parent=11 // pred_check
          %p257 = pneg %p153
        $region30: #{tpu_custom_call.1} parent=11 // pred_check_branch
          %259 = sbr.rel (%p257) target = $region32
        $region31: #{tpu_custom_call.1} parent=11 // pred_region
          %s261 = ssub.s32 32768, 32768
          %262 = vsyncadd [#allocation9], %s261
          %s263 = sshll.u32 [#allocation10], 4
          %s264 = int_to_ptr.vmem [resolvable:$true] %s263
          %269 = dma.hbm_to_vmem [thread:$0]  %s5, 32768, %s264, [#allocation9], 512, 512, 32
        $region32: #{tpu_custom_call.1} parent=11 // pred_fallthru
          _
        // Predicated region
        $region33: #{tpu_custom_call.1} parent=11 // pred_check
          %p270 = pneg %p174
        $region34: #{tpu_custom_call.1} parent=11 // pred_check_branch
          %272 = sbr.rel (%p270) target = $region36
        $region35: #{tpu_custom_call.1} parent=11 // pred_region
          %s274 = ssub.s32 256, 256
          %275 = vsyncadd [#allocation12], %s274
          %s277 = sshll.u32 [#allocation11], 4
          %s278 = int_to_ptr.vmem [resolvable:$true] %s277
          %280 = dma.hbm_to_vmem [thread:$0]  %s6, 256, %s278, [#allocation12]
        $region36: #{tpu_custom_call.1} parent=11 // pred_fallthru
          _
      $region12: #{tpu_custom_call.1} parent=5 // pred_fallthru
        _
      %p281 = scmp.lt.s32.totalorder %s22, 2
      // Predicated region
      $region37: #{tpu_custom_call.1} parent=5 // pred_check
        %p282 = pneg %p281
      $region38: #{tpu_custom_call.1} parent=5 // pred_check_branch
        %284 = sbr.rel (%p282) target = $region40
      $region39: #{tpu_custom_call.1} parent=5 // pred_region
        // Predicated region
        $region41: #{tpu_custom_call.1} parent=39 // pred_check
          %p285 = pneg %p42
        $region42: #{tpu_custom_call.1} parent=39 // pred_check_branch
          %287 = sbr.rel (%p285) target = $region44
        $region43: #{tpu_custom_call.1} parent=39 // pred_region
          %s288 = sand.u32 %s32, 1
          %s289 = scalar_lea.sflag [#allocation3], %s288
          %s290 = sand.u32 %s32, 1
          %s291 = smul.addr %s290, 16
          %s292 = scalar_lea.vmem [#allocation2], %s291
          %s294 = ssub.s32 256, 256
          %295 = vsyncadd %s289, %s294
          %s296 = smul.addr %s22, 2
          %s297 = smul.addr %s296, 128
          %s298 = scalar_lea.hbm %s0, %s297
          %s300 = sshll.u32 %s292, 4
          %s301 = int_to_ptr.vmem [resolvable:$true] %s300
          %303 = dma.hbm_to_vmem [thread:$0]  %s298, 256, %s301, %s289
        $region44: #{tpu_custom_call.1} parent=39 // pred_fallthru
          _
      $region40: #{tpu_custom_call.1} parent=5 // pred_fallthru
        _
      %p304 = scmp.le.s32.totalorder 1, %s22
      %p305 = scmp.lt.s32.totalorder %s22, 3
      %p306 = pnand %p304, %p305
      %p307 = pneg %p306
      // Predicated region
      $region45: #{tpu_custom_call.1} parent=5 // pred_check
        _
      $region46: #{tpu_custom_call.1} parent=5 // pred_check_branch
        %309 = sbr.rel (%p306) target = $region48
      $region47: #{tpu_custom_call.1} parent=5 // pred_region
        %s310 = ssub.s32 %s22, 1
        %s311 = sand.u32 %s35, 1
        %s312 = scalar_lea.sflag [#allocation3], %s311
        %s313 = sand.u32 %s35, 1
        %s314 = smul.addr %s313, 16
        %s315 = scalar_lea.vmem [#allocation2], %s314
        // Predicated region
        $region49: #{tpu_custom_call.1} parent=47 // pred_check
          %p316 = pneg %p48
        $region50: #{tpu_custom_call.1} parent=47 // pred_check_branch
          %318 = sbr.rel (%p316) target = $region52
        $region51: #{tpu_custom_call.1} parent=47 // pred_region
          %319 = dma.done %s312, 256
        $region52: #{tpu_custom_call.1} parent=47 // pred_fallthru
          _
        // Predicated region
        $region53: #{tpu_custom_call.1} parent=47 // pred_check
          %p320 = pneg %p69
        $region54: #{tpu_custom_call.1} parent=47 // pred_check_branch
          %322 = sbr.rel (%p320) target = $region56
        $region55: #{tpu_custom_call.1} parent=47 // pred_region
          %323 = dma.done [#allocation6], 24576
        $region56: #{tpu_custom_call.1} parent=47 // pred_fallthru
          _
        // Predicated region
        $region57: #{tpu_custom_call.1} parent=47 // pred_check
          %p324 = pneg %p111
        $region58: #{tpu_custom_call.1} parent=47 // pred_check_branch
          %326 = sbr.rel (%p324) target = $region60
        $region59: #{tpu_custom_call.1} parent=47 // pred_region
          %327 = dma.done [#allocation6], 49152
        $region60: #{tpu_custom_call.1} parent=47 // pred_fallthru
          _
        // Predicated region
        $region61: #{tpu_custom_call.1} parent=47 // pred_check
          %p328 = pneg %p132
        $region62: #{tpu_custom_call.1} parent=47 // pred_check_branch
          %330 = sbr.rel (%p328) target = $region64
        $region63: #{tpu_custom_call.1} parent=47 // pred_region
          %331 = dma.done [#allocation9], 768
        $region64: #{tpu_custom_call.1} parent=47 // pred_fallthru
          _
        // Predicated region
        $region65: #{tpu_custom_call.1} parent=47 // pred_check
          %p332 = pneg %p153
        $region66: #{tpu_custom_call.1} parent=47 // pred_check_branch
          %334 = sbr.rel (%p332) target = $region68
        $region67: #{tpu_custom_call.1} parent=47 // pred_region
          %335 = dma.done [#allocation9], 32768
        $region68: #{tpu_custom_call.1} parent=47 // pred_fallthru
          _
        // Predicated region
        $region69: #{tpu_custom_call.1} parent=47 // pred_check
          %p336 = pneg %p174
        $region70: #{tpu_custom_call.1} parent=47 // pred_check_branch
          %338 = sbr.rel (%p336) target = $region72
        $region71: #{tpu_custom_call.1} parent=47 // pred_region
          %339 = dma.done [#allocation12], 256
        $region72: #{tpu_custom_call.1} parent=47 // pred_fallthru
          _
        %s340 = sand.u32 %s35, 1
        %s341 = scalar_lea.sflag [#allocation3], %s340
        %s342 = sand.u32 %s35, 1
        %s343 = smul.addr %s342, 16
        %s344 = scalar_lea.vmem [#allocation2], %s343
        %p345 = pneg %p48
        %p346 = pneg %p45
        %p347 = pneg %p69
        %p348 = pneg %p66
        %p349 = pneg %p90
        %p350 = pneg %p87
        %p351 = pneg %p111
        %p352 = pneg %p108
        %p353 = pneg %p132
        %p354 = pneg %p129
        %p355 = pneg %p153
        %p356 = pneg %p150
        %p357 = pneg %p174
        %p358 = pneg %p171
        %p359 = pneg %p200
        %p360 = pneg %p197
        %s361 = sand.u32 %s187, 1
        %s362 = scalar_lea.sflag [#allocation4], %s361
        %s363 = sand.u32 %s187, 1
        %s364 = smul.addr %s363, 64
        %s365 = scalar_lea.vmem [#allocation13], %s364
        %v366 = vld [vmem:[#allocation11] ss:$4 sm:$0xf]
        %s367 = scalar_lea.vmem [#allocation11], 1
        %v368 = vld [vmem:[%s367] ss:$4 sm:$0xf]
        %s369 = scalar_lea.vmem [#allocation11], 2
        %v370 = vld [vmem:[%s369] ss:$4 sm:$0xf]
        %s371 = scalar_lea.vmem [#allocation11], 3
        %v372 = vld [vmem:[%s371] ss:$4 sm:$0xf]
        %v373 = vld [vmem:[%s315] sm:$0xff]
        %v374 = vld [vmem:[%s315 + $0x8] sm:$0xff]
        %v375 = vpack.c.bf16 %v373, %v373
        %v376 = vpack.c.bf16 %v374, %v374
        %v377 = vld [vmem:[#allocation5] sm:$0xff]
        %v378 = vld [vmem:[#allocation5 + $0x8] sm:$0xff]
        %v379 = vld [vmem:[#allocation5 + $0x10] sm:$0xff]
        %v380 = vld [vmem:[#allocation5 + $0x18] sm:$0xff]
        %v381 = vld [vmem:[#allocation5 + $0x20] sm:$0xff]
        %v382 = vld [vmem:[#allocation5 + $0x28] sm:$0xff]
        %v383 = vld [vmem:[#allocation5 + $0x30] sm:$0xff]
        %v384 = vld [vmem:[#allocation5 + $0x38] sm:$0xff]
        %v385 = vld [vmem:[#allocation5 + $0x40] sm:$0xff]
        %v386 = vld [vmem:[#allocation5 + $0x48] sm:$0xff]
        %v387 = vld [vmem:[#allocation5 + $0x50] sm:$0xff]
        %v388 = vld [vmem:[#allocation5 + $0x58] sm:$0xff]
        %v389 = vld [vmem:[#allocation5 + $0x60] sm:$0xff]
        %v390 = vld [vmem:[#allocation5 + $0x68] sm:$0xff]
        %v391 = vld [vmem:[#allocation5 + $0x70] sm:$0xff]
        %v392 = vld [vmem:[#allocation5 + $0x78] sm:$0xff]
        %v393 = vld [vmem:[#allocation5 + $0x80] sm:$0xff]
        %v394 = vld [vmem:[#allocation5 + $0x88] sm:$0xff]
        %v395 = vld [vmem:[#allocation5 + $0x90] sm:$0xff]
        %v396 = vld [vmem:[#allocation5 + $0x98] sm:$0xff]
        %v397 = vld [vmem:[#allocation5 + $0xa0] sm:$0xff]
        %v398 = vld [vmem:[#allocation5 + $0xa8] sm:$0xff]
        %v399 = vld [vmem:[#allocation5 + $0xb0] sm:$0xff]
        %v400 = vld [vmem:[#allocation5 + $0xb8] sm:$0xff]
        %v401 = vld [vmem:[#allocation5 + $0xc0] sm:$0xff]
        %v402 = vld [vmem:[#allocation5 + $0xc8] sm:$0xff]
        %v403 = vld [vmem:[#allocation5 + $0xd0] sm:$0xff]
        %v404 = vld [vmem:[#allocation5 + $0xd8] sm:$0xff]
        %v405 = vld [vmem:[#allocation5 + $0xe0] sm:$0xff]
        %v406 = vld [vmem:[#allocation5 + $0xe8] sm:$0xff]
        %v407 = vld [vmem:[#allocation5 + $0xf0] sm:$0xff]
        %v408 = vld [vmem:[#allocation5 + $0xf8] sm:$0xff]
        %v409 = vld [vmem:[#allocation5 + $0x100] sm:$0xff]
        %v410 = vld [vmem:[#allocation5 + $0x108] sm:$0xff]
        %v411 = vld [vmem:[#allocation5 + $0x110] sm:$0xff]
        %v412 = vld [vmem:[#allocation5 + $0x118] sm:$0xff]
        %v413 = vld [vmem:[#allocation5 + $0x120] sm:$0xff]
        %v414 = vld [vmem:[#allocation5 + $0x128] sm:$0xff]
        %v415 = vld [vmem:[#allocation5 + $0x130] sm:$0xff]
        %v416 = vld [vmem:[#allocation5 + $0x138] sm:$0xff]
        %v417 = vld [vmem:[#allocation5 + $0x140] sm:$0xff]
        %v418 = vld [vmem:[#allocation5 + $0x148] sm:$0xff]
        %v419 = vld [vmem:[#allocation5 + $0x150] sm:$0xff]
        %v420 = vld [vmem:[#allocation5 + $0x158] sm:$0xff]
        %v421 = vld [vmem:[#allocation5 + $0x160] sm:$0xff]
        %v422 = vld [vmem:[#allocation5 + $0x168] sm:$0xff]
        %v423 = vld [vmem:[#allocation5 + $0x170] sm:$0xff]
        %v424 = vld [vmem:[#allocation5 + $0x178] sm:$0xff]
        %v425 = vld [vmem:[#allocation5 + $0x180] sm:$0xff]
        %v426 = vld [vmem:[#allocation5 + $0x188] sm:$0xff]
        %v427 = vld [vmem:[#allocation5 + $0x190] sm:$0xff]
        %v428 = vld [vmem:[#allocation5 + $0x198] sm:$0xff]
        %v429 = vld [vmem:[#allocation5 + $0x1a0] sm:$0xff]
        %v430 = vld [vmem:[#allocation5 + $0x1a8] sm:$0xff]
        %v431 = vld [vmem:[#allocation5 + $0x1b0] sm:$0xff]
        %v432 = vld [vmem:[#allocation5 + $0x1b8] sm:$0xff]
        %v433 = vld [vmem:[#allocation5 + $0x1c0] sm:$0xff]
        %v434 = vld [vmem:[#allocation5 + $0x1c8] sm:$0xff]
        %v435 = vld [vmem:[#allocation5 + $0x1d0] sm:$0xff]
        %v436 = vld [vmem:[#allocation5 + $0x1d8] sm:$0xff]
        %v437 = vld [vmem:[#allocation5 + $0x1e0] sm:$0xff]
        %v438 = vld [vmem:[#allocation5 + $0x1e8] sm:$0xff]
        %v439 = vld [vmem:[#allocation5 + $0x1f0] sm:$0xff]
        %v440 = vld [vmem:[#allocation5 + $0x1f8] sm:$0xff]
        %v505 = vunpack.c.l.b16 %v377
        %v506 = vunpack.c.h.b16 %v377
        %v507 = vunpack.c.l.b16 %v378
        %v508 = vunpack.c.h.b16 %v378
        %v509 = vunpack.c.l.b16 %v379
        %v510 = vunpack.c.h.b16 %v379
        %v511 = vunpack.c.l.b16 %v380
        %v512 = vunpack.c.h.b16 %v380
        %v513 = vunpack.c.l.b16 %v381
        %v514 = vunpack.c.h.b16 %v381
        %v515 = vunpack.c.l.b16 %v382
        %v516 = vunpack.c.h.b16 %v382
        %v517 = vunpack.c.l.b16 %v383
        %v518 = vunpack.c.h.b16 %v383
        %v519 = vunpack.c.l.b16 %v384
        %v520 = vunpack.c.h.b16 %v384
        %v521 = vunpack.c.l.b16 %v385
        %v522 = vunpack.c.h.b16 %v385
        %v523 = vunpack.c.l.b16 %v386
        %v524 = vunpack.c.h.b16 %v386
        %v525 = vunpack.c.l.b16 %v387
        %v526 = vunpack.c.h.b16 %v387
        %v527 = vunpack.c.l.b16 %v388
        %v528 = vunpack.c.h.b16 %v388
        %v529 = vunpack.c.l.b16 %v389
        %v530 = vunpack.c.h.b16 %v389
        %v531 = vunpack.c.l.b16 %v390
        %v532 = vunpack.c.h.b16 %v390
        %v533 = vunpack.c.l.b16 %v391
        %v534 = vunpack.c.h.b16 %v391
        %v535 = vunpack.c.l.b16 %v392
        %v536 = vunpack.c.h.b16 %v392
        %v537 = vunpack.c.l.b16 %v393
        %v538 = vunpack.c.h.b16 %v393
        %v539 = vunpack.c.l.b16 %v394
        %v540 = vunpack.c.h.b16 %v394
        %v541 = vunpack.c.l.b16 %v395
        %v542 = vunpack.c.h.b16 %v395
        %v543 = vunpack.c.l.b16 %v396
        %v544 = vunpack.c.h.b16 %v396
        %v545 = vunpack.c.l.b16 %v397
        %v546 = vunpack.c.h.b16 %v397
        %v547 = vunpack.c.l.b16 %v398
        %v548 = vunpack.c.h.b16 %v398
        %v549 = vunpack.c.l.b16 %v399
        %v550 = vunpack.c.h.b16 %v399
        %v551 = vunpack.c.l.b16 %v400
        %v552 = vunpack.c.h.b16 %v400
        %v553 = vunpack.c.l.b16 %v401
        %v554 = vunpack.c.h.b16 %v401
        %v555 = vunpack.c.l.b16 %v402
        %v556 = vunpack.c.h.b16 %v402
        %v557 = vunpack.c.l.b16 %v403
        %v558 = vunpack.c.h.b16 %v403
        %v559 = vunpack.c.l.b16 %v404
        %v560 = vunpack.c.h.b16 %v404
        %v561 = vunpack.c.l.b16 %v405
        %v562 = vunpack.c.h.b16 %v405
        %v563 = vunpack.c.l.b16 %v406
        %v564 = vunpack.c.h.b16 %v406
        %v565 = vunpack.c.l.b16 %v407
        %v566 = vunpack.c.h.b16 %v407
        %v567 = vunpack.c.l.b16 %v408
        %v568 = vunpack.c.h.b16 %v408
        %v569 = vunpack.c.l.b16 %v409
        %v570 = vunpack.c.h.b16 %v409
        %v571 = vunpack.c.l.b16 %v410
        %v572 = vunpack.c.h.b16 %v410
        %v573 = vunpack.c.l.b16 %v411
        %v574 = vunpack.c.h.b16 %v411
        %v575 = vunpack.c.l.b16 %v412
        %v576 = vunpack.c.h.b16 %v412
        %v577 = vunpack.c.l.b16 %v413
        %v578 = vunpack.c.h.b16 %v413
        %v579 = vunpack.c.l.b16 %v414
        %v580 = vunpack.c.h.b16 %v414
        %v581 = vunpack.c.l.b16 %v415
        %v582 = vunpack.c.h.b16 %v415
        %v583 = vunpack.c.l.b16 %v416
        %v584 = vunpack.c.h.b16 %v416
        %v585 = vunpack.c.l.b16 %v417
        %v586 = vunpack.c.h.b16 %v417
        %v587 = vunpack.c.l.b16 %v418
        %v588 = vunpack.c.h.b16 %v418
        %v589 = vunpack.c.l.b16 %v419
        %v590 = vunpack.c.h.b16 %v419
        %v591 = vunpack.c.l.b16 %v420
        %v592 = vunpack.c.h.b16 %v420
        %v593 = vunpack.c.l.b16 %v421
        %v594 = vunpack.c.h.b16 %v421
        %v595 = vunpack.c.l.b16 %v422
        %v596 = vunpack.c.h.b16 %v422
        %v597 = vunpack.c.l.b16 %v423
        %v598 = vunpack.c.h.b16 %v423
        %v599 = vunpack.c.l.b16 %v424
        %v600 = vunpack.c.h.b16 %v424
        %v601 = vunpack.c.l.b16 %v425
        %v602 = vunpack.c.h.b16 %v425
        %v603 = vunpack.c.l.b16 %v426
        %v604 = vunpack.c.h.b16 %v426
        %v605 = vunpack.c.l.b16 %v427
        %v606 = vunpack.c.h.b16 %v427
        %v607 = vunpack.c.l.b16 %v428
        %v608 = vunpack.c.h.b16 %v428
        %v609 = vunpack.c.l.b16 %v429
        %v610 = vunpack.c.h.b16 %v429
        %v611 = vunpack.c.l.b16 %v430
        %v612 = vunpack.c.h.b16 %v430
        %v613 = vunpack.c.l.b16 %v431
        %v614 = vunpack.c.h.b16 %v431
        %v615 = vunpack.c.l.b16 %v432
        %v616 = vunpack.c.h.b16 %v432
        %v617 = vunpack.c.l.b16 %v433
        %v618 = vunpack.c.h.b16 %v433
        %v619 = vunpack.c.l.b16 %v434
        %v620 = vunpack.c.h.b16 %v434
        %v621 = vunpack.c.l.b16 %v435
        %v622 = vunpack.c.h.b16 %v435
        %v623 = vunpack.c.l.b16 %v436
        %v624 = vunpack.c.h.b16 %v436
        %v625 = vunpack.c.l.b16 %v437
        %v626 = vunpack.c.h.b16 %v437
        %v627 = vunpack.c.l.b16 %v438
        %v628 = vunpack.c.h.b16 %v438
        %v629 = vunpack.c.l.b16 %v439
        %v630 = vunpack.c.h.b16 %v439
        %v631 = vunpack.c.l.b16 %v440
        %v632 = vunpack.c.h.b16 %v440
        %v633 = vpack.c.b16 %v509, %v505
        %v634 = vpack.c.b16 %v510, %v506
        %v635 = vpack.c.b16 %v511, %v507
        %v636 = vpack.c.b16 %v512, %v508
        %v637 = vpack.c.b16 %v517, %v513
        %v638 = vpack.c.b16 %v518, %v514
        %v639 = vpack.c.b16 %v519, %v515
        %v640 = vpack.c.b16 %v520, %v516
        %v641 = vpack.c.b16 %v525, %v521
        %v642 = vpack.c.b16 %v526, %v522
        %v643 = vpack.c.b16 %v527, %v523
        %v644 = vpack.c.b16 %v528, %v524
        %v645 = vpack.c.b16 %v533, %v529
        %v646 = vpack.c.b16 %v534, %v530
        %v647 = vpack.c.b16 %v535, %v531
        %v648 = vpack.c.b16 %v536, %v532
        %v649 = vpack.c.b16 %v541, %v537
        %v650 = vpack.c.b16 %v542, %v538
        %v651 = vpack.c.b16 %v543, %v539
        %v652 = vpack.c.b16 %v544, %v540
        %v653 = vpack.c.b16 %v549, %v545
        %v654 = vpack.c.b16 %v550, %v546
        %v655 = vpack.c.b16 %v551, %v547
        %v656 = vpack.c.b16 %v552, %v548
        %v657 = vpack.c.b16 %v557, %v553
        %v658 = vpack.c.b16 %v558, %v554
        %v659 = vpack.c.b16 %v559, %v555
        %v660 = vpack.c.b16 %v560, %v556
        %v661 = vpack.c.b16 %v565, %v561
        %v662 = vpack.c.b16 %v566, %v562
        %v663 = vpack.c.b16 %v567, %v563
        %v664 = vpack.c.b16 %v568, %v564
        %v665 = vpack.c.b16 %v573, %v569
        %v666 = vpack.c.b16 %v574, %v570
        %v667 = vpack.c.b16 %v575, %v571
        %v668 = vpack.c.b16 %v576, %v572
        %v669 = vpack.c.b16 %v581, %v577
        %v670 = vpack.c.b16 %v582, %v578
        %v671 = vpack.c.b16 %v583, %v579
        %v672 = vpack.c.b16 %v584, %v580
        %v673 = vpack.c.b16 %v589, %v585
        %v674 = vpack.c.b16 %v590, %v586
        %v675 = vpack.c.b16 %v591, %v587
        %v676 = vpack.c.b16 %v592, %v588
        %v677 = vpack.c.b16 %v597, %v593
        %v678 = vpack.c.b16 %v598, %v594
        %v679 = vpack.c.b16 %v599, %v595
        %v680 = vpack.c.b16 %v600, %v596
        %v681 = vpack.c.b16 %v605, %v601
        %v682 = vpack.c.b16 %v606, %v602
        %v683 = vpack.c.b16 %v607, %v603
        %v684 = vpack.c.b16 %v608, %v604
        %v685 = vpack.c.b16 %v613, %v609
        %v686 = vpack.c.b16 %v614, %v610
        %v687 = vpack.c.b16 %v615, %v611
        %v688 = vpack.c.b16 %v616, %v612
        %v689 = vpack.c.b16 %v621, %v617
        %v690 = vpack.c.b16 %v622, %v618
        %v691 = vpack.c.b16 %v623, %v619
        %v692 = vpack.c.b16 %v624, %v620
        %v693 = vpack.c.b16 %v629, %v625
        %v694 = vpack.c.b16 %v630, %v626
        %v695 = vpack.c.b16 %v631, %v627
        %v696 = vpack.c.b16 %v632, %v628
        %761 = vmatprep.subr.bf16.mxu0 %v662
        %762 = vmatpush1.bf16.msra.mxu0 %v661
        %763 = vmatprep.subr.bf16.mxu0 %v658
        %764 = vmatpush1.bf16.msra.mxu0 %v657
        %765 = vmatprep.subr.bf16.mxu0 %v654
        %766 = vmatpush1.bf16.msra.mxu0 %v653
        %767 = vmatprep.subr.bf16.mxu0 %v650
        %768 = vmatpush1.bf16.msra.mxu0 %v649
        %769 = vmatprep.subr.bf16.mxu0 %v646
        %770 = vmatpush1.bf16.msra.mxu0 %v645
        %771 = vmatprep.subr.bf16.mxu0 %v642
        %772 = vmatpush1.bf16.msra.mxu0 %v641
        %773 = vmatprep.subr.bf16.mxu0 %v638
        %774 = vmatpush1.bf16.msra.mxu0 %v637
        %775 = vmatprep.subr.bf16.mxu0 %v634
        %776 = vmatpush1.bf16.msra.mxu0 %v633
        %777 = vmatprep.subr.bf16.mxu0 %v694
        %778 = vmatpush2.bf16.msra.mxu0 %v693
        %779 = vmatprep.subr.bf16.mxu0 %v690
        %780 = vmatpush2.bf16.msra.mxu0 %v689
        %781 = vmatprep.subr.bf16.mxu0 %v686
        %782 = vmatpush2.bf16.msra.mxu0 %v685
        %783 = vmatprep.subr.bf16.mxu0 %v682
        %784 = vmatpush2.bf16.msra.mxu0 %v681
        %785 = vmatprep.subr.bf16.mxu0 %v678
        %786 = vmatpush2.bf16.msra.mxu0 %v677
        %787 = vmatprep.subr.bf16.mxu0 %v674
        %788 = vmatpush2.bf16.msra.mxu0 %v673
        %789 = vmatprep.subr.bf16.mxu0 %v670
        %790 = vmatpush2.bf16.msra.mxu0 %v669
        %791 = vmatprep.subr.bf16.mxu0 %v666
        %792 = vmatpush2.bf16.msra.mxu0 %v665
        %793 = vmatprep.mubr.bf16.mxu0 %v376
        %794 = vmatmul.mubr.bf16.gmra.mxu0 %v375
        %v795 = vpop.f32.mrf.mxu0
        %v796 = vadd.f32 0.0, %v795
        %v797 = vpop.f32.mrf.mxu0
        %v798 = vadd.f32 0.0, %v797
        %v799 = vpop.f32.mrf.mxu0
        %v800 = vpop.f32.mrf.mxu0
        %801 = vdwg.mxu0
        %802 = vmatprep.subr.bf16.mxu0 %v664
        %803 = vmatpush1.bf16.msra.mxu0 %v663
        %804 = vmatprep.subr.bf16.mxu0 %v660
        %805 = vmatpush1.bf16.msra.mxu0 %v659
        %806 = vmatprep.subr.bf16.mxu0 %v656
        %807 = vmatpush1.bf16.msra.mxu0 %v655
        %808 = vmatprep.subr.bf16.mxu0 %v652
        %809 = vmatpush1.bf16.msra.mxu0 %v651
        %810 = vmatprep.subr.bf16.mxu0 %v648
        %811 = vmatpush1.bf16.msra.mxu0 %v647
        %812 = vmatprep.subr.bf16.mxu0 %v644
        %813 = vmatpush1.bf16.msra.mxu0 %v643
        %814 = vmatprep.subr.bf16.mxu0 %v640
        %815 = vmatpush1.bf16.msra.mxu0 %v639
        %816 = vmatprep.subr.bf16.mxu0 %v636
        %817 = vmatpush1.bf16.msra.mxu0 %v635
        %818 = vmatprep.subr.bf16.mxu0 %v696
        %819 = vmatpush2.bf16.msra.mxu0 %v695
        %820 = vmatprep.subr.bf16.mxu0 %v692
        %821 = vmatpush2.bf16.msra.mxu0 %v691
        %822 = vmatprep.subr.bf16.mxu0 %v688
        %823 = vmatpush2.bf16.msra.mxu0 %v687
        %824 = vmatprep.subr.bf16.mxu0 %v684
        %825 = vmatpush2.bf16.msra.mxu0 %v683
        %826 = vmatprep.subr.bf16.mxu0 %v680
        %827 = vmatpush2.bf16.msra.mxu0 %v679
        %828 = vmatprep.subr.bf16.mxu0 %v676
        %829 = vmatpush2.bf16.msra.mxu0 %v675
        %830 = vmatprep.subr.bf16.mxu0 %v672
        %831 = vmatpush2.bf16.msra.mxu0 %v671
        %832 = vmatprep.subr.bf16.mxu0 %v668
        %833 = vmatpush2.bf16.msra.mxu0 %v667
        %834 = vmatprep.mubr.bf16.mxu0 %v376
        %835 = vmatmul.mubr.bf16.gmra.mxu0 %v375
        %v836 = vpop.f32.mrf.mxu0
        %v837 = vadd.f32 0.0, %v836
        %v838 = vpop.f32.mrf.mxu0
        %v839 = vadd.f32 0.0, %v838
        %v840 = vpop.f32.mrf.mxu0
        %v841 = vpop.f32.mrf.mxu0
        %842 = vdwg.mxu0
        %v843 = vld [vmem:[%s2] sm:$0xff]
        %v844 = vld [vmem:[%s2 + $0x8] sm:$0xff]
        %s845 = scalar_lea.vmem [#allocation5], 512
        %v846 = vld [vmem:[%s845] sm:$0xff]
        %v847 = vld [vmem:[%s845 + $0x8] sm:$0xff]
        %v848 = vld [vmem:[%s845 + $0x10] sm:$0xff]
        %v849 = vld [vmem:[%s845 + $0x18] sm:$0xff]
        %v850 = vld [vmem:[%s845 + $0x20] sm:$0xff]
        %v851 = vld [vmem:[%s845 + $0x28] sm:$0xff]
        %v852 = vld [vmem:[%s845 + $0x30] sm:$0xff]
        %v853 = vld [vmem:[%s845 + $0x38] sm:$0xff]
        %v854 = vld [vmem:[%s845 + $0x40] sm:$0xff]
        %v855 = vld [vmem:[%s845 + $0x48] sm:$0xff]
        %v856 = vld [vmem:[%s845 + $0x50] sm:$0xff]
        %v857 = vld [vmem:[%s845 + $0x58] sm:$0xff]
        %v858 = vld [vmem:[%s845 + $0x60] sm:$0xff]
        %v859 = vld [vmem:[%s845 + $0x68] sm:$0xff]
        %v860 = vld [vmem:[%s845 + $0x70] sm:$0xff]
        %v861 = vld [vmem:[%s845 + $0x78] sm:$0xff]
        %v862 = vld [vmem:[%s845 + $0x80] sm:$0xff]
        %v863 = vld [vmem:[%s845 + $0x88] sm:$0xff]
        %v864 = vld [vmem:[%s845 + $0x90] sm:$0xff]
        %v865 = vld [vmem:[%s845 + $0x98] sm:$0xff]
        %v866 = vld [vmem:[%s845 + $0xa0] sm:$0xff]
        %v867 = vld [vmem:[%s845 + $0xa8] sm:$0xff]
        %v868 = vld [vmem:[%s845 + $0xb0] sm:$0xff]
        %v869 = vld [vmem:[%s845 + $0xb8] sm:$0xff]
        %v870 = vld [vmem:[%s845 + $0xc0] sm:$0xff]
        %v871 = vld [vmem:[%s845 + $0xc8] sm:$0xff]
        %v872 = vld [vmem:[%s845 + $0xd0] sm:$0xff]
        %v873 = vld [vmem:[%s845 + $0xd8] sm:$0xff]
        %v874 = vld [vmem:[%s845 + $0xe0] sm:$0xff]
        %v875 = vld [vmem:[%s845 + $0xe8] sm:$0xff]
        %v876 = vld [vmem:[%s845 + $0xf0] sm:$0xff]
        %v877 = vld [vmem:[%s845 + $0xf8] sm:$0xff]
        %v878 = vld [vmem:[%s845 + $0x100] sm:$0xff]
        %v879 = vld [vmem:[%s845 + $0x108] sm:$0xff]
        %v880 = vld [vmem:[%s845 + $0x110] sm:$0xff]
        %v881 = vld [vmem:[%s845 + $0x118] sm:$0xff]
        %v882 = vld [vmem:[%s845 + $0x120] sm:$0xff]
        %v883 = vld [vmem:[%s845 + $0x128] sm:$0xff]
        %v884 = vld [vmem:[%s845 + $0x130] sm:$0xff]
        %v885 = vld [vmem:[%s845 + $0x138] sm:$0xff]
        %v886 = vld [vmem:[%s845 + $0x140] sm:$0xff]
        %v887 = vld [vmem:[%s845 + $0x148] sm:$0xff]
        %v888 = vld [vmem:[%s845 + $0x150] sm:$0xff]
        %v889 = vld [vmem:[%s845 + $0x158] sm:$0xff]
        %v890 = vld [vmem:[%s845 + $0x160] sm:$0xff]
        %v891 = vld [vmem:[%s845 + $0x168] sm:$0xff]
        %v892 = vld [vmem:[%s845 + $0x170] sm:$0xff]
        %v893 = vld [vmem:[%s845 + $0x178] sm:$0xff]
        %v894 = vld [vmem:[%s845 + $0x180] sm:$0xff]
        %v895 = vld [vmem:[%s845 + $0x188] sm:$0xff]
        %v896 = vld [vmem:[%s845 + $0x190] sm:$0xff]
        %v897 = vld [vmem:[%s845 + $0x198] sm:$0xff]
        %v898 = vld [vmem:[%s845 + $0x1a0] sm:$0xff]
        %v899 = vld [vmem:[%s845 + $0x1a8] sm:$0xff]
        %v900 = vld [vmem:[%s845 + $0x1b0] sm:$0xff]
        %v901 = vld [vmem:[%s845 + $0x1b8] sm:$0xff]
        %v902 = vld [vmem:[%s845 + $0x1c0] sm:$0xff]
        %v903 = vld [vmem:[%s845 + $0x1c8] sm:$0xff]
        %v904 = vld [vmem:[%s845 + $0x1d0] sm:$0xff]
        %v905 = vld [vmem:[%s845 + $0x1d8] sm:$0xff]
        %v906 = vld [vmem:[%s845 + $0x1e0] sm:$0xff]
        %v907 = vld [vmem:[%s845 + $0x1e8] sm:$0xff]
        %v908 = vld [vmem:[%s845 + $0x1f0] sm:$0xff]
        %v909 = vld [vmem:[%s845 + $0x1f8] sm:$0xff]
        %v974 = vunpack.c.l.b16 %v846
        %v975 = vunpack.c.h.b16 %v846
        %v976 = vunpack.c.l.b16 %v847
        %v977 = vunpack.c.h.b16 %v847
        %v978 = vunpack.c.l.b16 %v848
        %v979 = vunpack.c.h.b16 %v848
        %v980 = vunpack.c.l.b16 %v849
        %v981 = vunpack.c.h.b16 %v849
        %v982 = vunpack.c.l.b16 %v850
        %v983 = vunpack.c.h.b16 %v850
        %v984 = vunpack.c.l.b16 %v851
        %v985 = vunpack.c.h.b16 %v851
        %v986 = vunpack.c.l.b16 %v852
        %v987 = vunpack.c.h.b16 %v852
        %v988 = vunpack.c.l.b16 %v853
        %v989 = vunpack.c.h.b16 %v853
        %v990 = vunpack.c.l.b16 %v854
        %v991 = vunpack.c.h.b16 %v854
        %v992 = vunpack.c.l.b16 %v855
        %v993 = vunpack.c.h.b16 %v855
        %v994 = vunpack.c.l.b16 %v856
        %v995 = vunpack.c.h.b16 %v856
        %v996 = vunpack.c.l.b16 %v857
        %v997 = vunpack.c.h.b16 %v857
        %v998 = vunpack.c.l.b16 %v858
        %v999 = vunpack.c.h.b16 %v858
        %v1000 = vunpack.c.l.b16 %v859
        %v1001 = vunpack.c.h.b16 %v859
        %v1002 = vunpack.c.l.b16 %v860
        %v1003 = vunpack.c.h.b16 %v860
        %v1004 = vunpack.c.l.b16 %v861
        %v1005 = vunpack.c.h.b16 %v861
        %v1006 = vunpack.c.l.b16 %v862
        %v1007 = vunpack.c.h.b16 %v862
        %v1008 = vunpack.c.l.b16 %v863
        %v1009 = vunpack.c.h.b16 %v863
        %v1010 = vunpack.c.l.b16 %v864
        %v1011 = vunpack.c.h.b16 %v864
        %v1012 = vunpack.c.l.b16 %v865
        %v1013 = vunpack.c.h.b16 %v865
        %v1014 = vunpack.c.l.b16 %v866
        %v1015 = vunpack.c.h.b16 %v866
        %v1016 = vunpack.c.l.b16 %v867
        %v1017 = vunpack.c.h.b16 %v867
        %v1018 = vunpack.c.l.b16 %v868
        %v1019 = vunpack.c.h.b16 %v868
        %v1020 = vunpack.c.l.b16 %v869
        %v1021 = vunpack.c.h.b16 %v869
        %v1022 = vunpack.c.l.b16 %v870
        %v1023 = vunpack.c.h.b16 %v870
        %v1024 = vunpack.c.l.b16 %v871
        %v1025 = vunpack.c.h.b16 %v871
        %v1026 = vunpack.c.l.b16 %v872
        %v1027 = vunpack.c.h.b16 %v872
        %v1028 = vunpack.c.l.b16 %v873
        %v1029 = vunpack.c.h.b16 %v873
        %v1030 = vunpack.c.l.b16 %v874
        %v1031 = vunpack.c.h.b16 %v874
        %v1032 = vunpack.c.l.b16 %v875
        %v1033 = vunpack.c.h.b16 %v875
        %v1034 = vunpack.c.l.b16 %v876
        %v1035 = vunpack.c.h.b16 %v876
        %v1036 = vunpack.c.l.b16 %v877
        %v1037 = vunpack.c.h.b16 %v877
        %v1038 = vunpack.c.l.b16 %v878
        %v1039 = vunpack.c.h.b16 %v878
        %v1040 = vunpack.c.l.b16 %v879
        %v1041 = vunpack.c.h.b16 %v879
        %v1042 = vunpack.c.l.b16 %v880
        %v1043 = vunpack.c.h.b16 %v880
        %v1044 = vunpack.c.l.b16 %v881
        %v1045 = vunpack.c.h.b16 %v881
        %v1046 = vunpack.c.l.b16 %v882
        %v1047 = vunpack.c.h.b16 %v882
        %v1048 = vunpack.c.l.b16 %v883
        %v1049 = vunpack.c.h.b16 %v883
        %v1050 = vunpack.c.l.b16 %v884
        %v1051 = vunpack.c.h.b16 %v884
        %v1052 = vunpack.c.l.b16 %v885
        %v1053 = vunpack.c.h.b16 %v885
        %v1054 = vunpack.c.l.b16 %v886
        %v1055 = vunpack.c.h.b16 %v886
        %v1056 = vunpack.c.l.b16 %v887
        %v1057 = vunpack.c.h.b16 %v887
        %v1058 = vunpack.c.l.b16 %v888
        %v1059 = vunpack.c.h.b16 %v888
        %v1060 = vunpack.c.l.b16 %v889
        %v1061 = vunpack.c.h.b16 %v889
        %v1062 = vunpack.c.l.b16 %v890
        %v1063 = vunpack.c.h.b16 %v890
        %v1064 = vunpack.c.l.b16 %v891
        %v1065 = vunpack.c.h.b16 %v891
        %v1066 = vunpack.c.l.b16 %v892
        %v1067 = vunpack.c.h.b16 %v892
        %v1068 = vunpack.c.l.b16 %v893
        %v1069 = vunpack.c.h.b16 %v893
        %v1070 = vunpack.c.l.b16 %v894
        %v1071 = vunpack.c.h.b16 %v894
        %v1072 = vunpack.c.l.b16 %v895
        %v1073 = vunpack.c.h.b16 %v895
        %v1074 = vunpack.c.l.b16 %v896
        %v1075 = vunpack.c.h.b16 %v896
        %v1076 = vunpack.c.l.b16 %v897
        %v1077 = vunpack.c.h.b16 %v897
        %v1078 = vunpack.c.l.b16 %v898
        %v1079 = vunpack.c.h.b16 %v898
        %v1080 = vunpack.c.l.b16 %v899
        %v1081 = vunpack.c.h.b16 %v899
        %v1082 = vunpack.c.l.b16 %v900
        %v1083 = vunpack.c.h.b16 %v900
        %v1084 = vunpack.c.l.b16 %v901
        %v1085 = vunpack.c.h.b16 %v901
        %v1086 = vunpack.c.l.b16 %v902
        %v1087 = vunpack.c.h.b16 %v902
        %v1088 = vunpack.c.l.b16 %v903
        %v1089 = vunpack.c.h.b16 %v903
        %v1090 = vunpack.c.l.b16 %v904
        %v1091 = vunpack.c.h.b16 %v904
        %v1092 = vunpack.c.l.b16 %v905
        %v1093 = vunpack.c.h.b16 %v905
        %v1094 = vunpack.c.l.b16 %v906
        %v1095 = vunpack.c.h.b16 %v906
        %v1096 = vunpack.c.l.b16 %v907
        %v1097 = vunpack.c.h.b16 %v907
        %v1098 = vunpack.c.l.b16 %v908
        %v1099 = vunpack.c.h.b16 %v908
        %v1100 = vunpack.c.l.b16 %v909
        %v1101 = vunpack.c.h.b16 %v909
        %v1102 = vpack.c.b16 %v978, %v974
        %v1103 = vpack.c.b16 %v979, %v975
        %v1104 = vpack.c.b16 %v980, %v976
        %v1105 = vpack.c.b16 %v981, %v977
        %v1106 = vpack.c.b16 %v986, %v982
        %v1107 = vpack.c.b16 %v987, %v983
        %v1108 = vpack.c.b16 %v988, %v984
        %v1109 = vpack.c.b16 %v989, %v985
        %v1110 = vpack.c.b16 %v994, %v990
        %v1111 = vpack.c.b16 %v995, %v991
        %v1112 = vpack.c.b16 %v996, %v992
        %v1113 = vpack.c.b16 %v997, %v993
        %v1114 = vpack.c.b16 %v1002, %v998
        %v1115 = vpack.c.b16 %v1003, %v999
        %v1116 = vpack.c.b16 %v1004, %v1000
        %v1117 = vpack.c.b16 %v1005, %v1001
        %v1118 = vpack.c.b16 %v1010, %v1006
        %v1119 = vpack.c.b16 %v1011, %v1007
        %v1120 = vpack.c.b16 %v1012, %v1008
        %v1121 = vpack.c.b16 %v1013, %v1009
        %v1122 = vpack.c.b16 %v1018, %v1014
        %v1123 = vpack.c.b16 %v1019, %v1015
        %v1124 = vpack.c.b16 %v1020, %v1016
        %v1125 = vpack.c.b16 %v1021, %v1017
        %v1126 = vpack.c.b16 %v1026, %v1022
        %v1127 = vpack.c.b16 %v1027, %v1023
        %v1128 = vpack.c.b16 %v1028, %v1024
        %v1129 = vpack.c.b16 %v1029, %v1025
        %v1130 = vpack.c.b16 %v1034, %v1030
        %v1131 = vpack.c.b16 %v1035, %v1031
        %v1132 = vpack.c.b16 %v1036, %v1032
        %v1133 = vpack.c.b16 %v1037, %v1033
        %v1134 = vpack.c.b16 %v1042, %v1038
        %v1135 = vpack.c.b16 %v1043, %v1039
        %v1136 = vpack.c.b16 %v1044, %v1040
        %v1137 = vpack.c.b16 %v1045, %v1041
        %v1138 = vpack.c.b16 %v1050, %v1046
        %v1139 = vpack.c.b16 %v1051, %v1047
        %v1140 = vpack.c.b16 %v1052, %v1048
        %v1141 = vpack.c.b16 %v1053, %v1049
        %v1142 = vpack.c.b16 %v1058, %v1054
        %v1143 = vpack.c.b16 %v1059, %v1055
        %v1144 = vpack.c.b16 %v1060, %v1056
        %v1145 = vpack.c.b16 %v1061, %v1057
        %v1146 = vpack.c.b16 %v1066, %v1062
        %v1147 = vpack.c.b16 %v1067, %v1063
        %v1148 = vpack.c.b16 %v1068, %v1064
        %v1149 = vpack.c.b16 %v1069, %v1065
        %v1150 = vpack.c.b16 %v1074, %v1070
        %v1151 = vpack.c.b16 %v1075, %v1071
        %v1152 = vpack.c.b16 %v1076, %v1072
        %v1153 = vpack.c.b16 %v1077, %v1073
        %v1154 = vpack.c.b16 %v1082, %v1078
        %v1155 = vpack.c.b16 %v1083, %v1079
        %v1156 = vpack.c.b16 %v1084, %v1080
        %v1157 = vpack.c.b16 %v1085, %v1081
        %v1158 = vpack.c.b16 %v1090, %v1086
        %v1159 = vpack.c.b16 %v1091, %v1087
        %v1160 = vpack.c.b16 %v1092, %v1088
        %v1161 = vpack.c.b16 %v1093, %v1089
        %v1162 = vpack.c.b16 %v1098, %v1094
        %v1163 = vpack.c.b16 %v1099, %v1095
        %v1164 = vpack.c.b16 %v1100, %v1096
        %v1165 = vpack.c.b16 %v1101, %v1097
        %1230 = vmatprep.subr.bf16.mxu0 %v1131
        %1231 = vmatpush1.bf16.msra.mxu0 %v1130
        %1232 = vmatprep.subr.bf16.mxu0 %v1127
        %1233 = vmatpush1.bf16.msra.mxu0 %v1126
        %1234 = vmatprep.subr.bf16.mxu0 %v1123
        %1235 = vmatpush1.bf16.msra.mxu0 %v1122
        %1236 = vmatprep.subr.bf16.mxu0 %v1119
        %1237 = vmatpush1.bf16.msra.mxu0 %v1118
        %1238 = vmatprep.subr.bf16.mxu0 %v1115
        %1239 = vmatpush1.bf16.msra.mxu0 %v1114
        %1240 = vmatprep.subr.bf16.mxu0 %v1111
        %1241 = vmatpush1.bf16.msra.mxu0 %v1110
        %1242 = vmatprep.subr.bf16.mxu0 %v1107
        %1243 = vmatpush1.bf16.msra.mxu0 %v1106
        %1244 = vmatprep.subr.bf16.mxu0 %v1103
        %1245 = vmatpush1.bf16.msra.mxu0 %v1102
        %1246 = vmatprep.subr.bf16.mxu0 %v1163
        %1247 = vmatpush2.bf16.msra.mxu0 %v1162
        %1248 = vmatprep.subr.bf16.mxu0 %v1159
        %1249 = vmatpush2.bf16.msra.mxu0 %v1158
        %1250 = vmatprep.subr.bf16.mxu0 %v1155
        %1251 = vmatpush2.bf16.msra.mxu0 %v1154
        %1252 = vmatprep.subr.bf16.mxu0 %v1151
        %1253 = vmatpush2.bf16.msra.mxu0 %v1150
        %1254 = vmatprep.subr.bf16.mxu0 %v1147
        %1255 = vmatpush2.bf16.msra.mxu0 %v1146
        %1256 = vmatprep.subr.bf16.mxu0 %v1143
        %1257 = vmatpush2.bf16.msra.mxu0 %v1142
        %1258 = vmatprep.subr.bf16.mxu0 %v1139
        %1259 = vmatpush2.bf16.msra.mxu0 %v1138
        %1260 = vmatprep.subr.bf16.mxu0 %v1135
        %1261 = vmatpush2.bf16.msra.mxu0 %v1134
        %1262 = vmatprep.mubr.bf16.mxu0 %v376
        %1263 = vmatmul.mubr.bf16.gmra.mxu0 %v375
        %v1264 = vpop.f32.mrf.mxu0
        %v1265 = vadd.f32 0.0, %v1264
        %v1266 = vpop.f32.mrf.mxu0
        %v1267 = vadd.f32 0.0, %v1266
        %v1268 = vpop.f32.mrf.mxu0
        %v1269 = vpop.f32.mrf.mxu0
        %1270 = vdwg.mxu0
        %1271 = vmatprep.subr.bf16.mxu0 %v1133
        %1272 = vmatpush1.bf16.msra.mxu0 %v1132
        %1273 = vmatprep.subr.bf16.mxu0 %v1129
        %1274 = vmatpush1.bf16.msra.mxu0 %v1128
        %1275 = vmatprep.subr.bf16.mxu0 %v1125
        %1276 = vmatpush1.bf16.msra.mxu0 %v1124
        %1277 = vmatprep.subr.bf16.mxu0 %v1121
        %1278 = vmatpush1.bf16.msra.mxu0 %v1120
        %1279 = vmatprep.subr.bf16.mxu0 %v1117
        %1280 = vmatpush1.bf16.msra.mxu0 %v1116
        %1281 = vmatprep.subr.bf16.mxu0 %v1113
        %1282 = vmatpush1.bf16.msra.mxu0 %v1112
        %1283 = vmatprep.subr.bf16.mxu0 %v1109
        %1284 = vmatpush1.bf16.msra.mxu0 %v1108
        %1285 = vmatprep.subr.bf16.mxu0 %v1105
        %1286 = vmatpush1.bf16.msra.mxu0 %v1104
        %1287 = vmatprep.subr.bf16.mxu0 %v1165
        %1288 = vmatpush2.bf16.msra.mxu0 %v1164
        %1289 = vmatprep.subr.bf16.mxu0 %v1161
        %1290 = vmatpush2.bf16.msra.mxu0 %v1160
        %1291 = vmatprep.subr.bf16.mxu0 %v1157
        %1292 = vmatpush2.bf16.msra.mxu0 %v1156
        %1293 = vmatprep.subr.bf16.mxu0 %v1153
        %1294 = vmatpush2.bf16.msra.mxu0 %v1152
        %1295 = vmatprep.subr.bf16.mxu0 %v1149
        %1296 = vmatpush2.bf16.msra.mxu0 %v1148
        %1297 = vmatprep.subr.bf16.mxu0 %v1145
        %1298 = vmatpush2.bf16.msra.mxu0 %v1144
        %1299 = vmatprep.subr.bf16.mxu0 %v1141
        %1300 = vmatpush2.bf16.msra.mxu0 %v1140
        %1301 = vmatprep.subr.bf16.mxu0 %v1137
        %1302 = vmatpush2.bf16.msra.mxu0 %v1136
        %1303 = vmatprep.mubr.bf16.mxu0 %v376
        %1304 = vmatmul.mubr.bf16.gmra.mxu0 %v375
        %v1305 = vpop.f32.mrf.mxu0
        %v1306 = vadd.f32 0.0, %v1305
        %v1307 = vpop.f32.mrf.mxu0
        %v1308 = vadd.f32 0.0, %v1307
        %v1309 = vpop.f32.mrf.mxu0
        %v1310 = vpop.f32.mrf.mxu0
        %1311 = vdwg.mxu0
        %s1312 = scalar_lea.vmem %s2, 16
        %v1313 = vld [vmem:[%s1312] sm:$0xff]
        %v1314 = vld [vmem:[%s1312 + $0x8] sm:$0xff]
        %vm1315 = vcmask 64512
        %v1317 = vsel %vm1315, %v1313, 0
        %v1320 = vsel %vm1315, %v1314, 0
        %1322 = vmatprep.subr.mxu0 0.0
        %1323 = vmatpush1.msra.mxu0 0.0
        %1324 = vmatprep.subr.mxu0 0.0
        %1325 = vmatpush1.msra.mxu0 0.0
        %1326 = vmatprep.subr.mxu0 0.0
        %1327 = vmatpush1.msra.mxu0 0.0
        %1328 = vmatprep.subr.mxu0 0.0
        %1329 = vmatpush1.msra.mxu0 0.0
        %1330 = vmatprep.subr.mxu0 0.0
        %1331 = vmatpush1.msra.mxu0 0.0
        %1332 = vmatprep.subr.mxu0 0.0
        %1333 = vmatpush1.msra.mxu0 0.0
        %1334 = vmatprep.subr.mxu0 0.0
        %1335 = vmatpush1.msra.mxu0 0.0
        %1336 = vmatprep.subr.mxu0 0.0
        %1337 = vmatpush1.msra.mxu0 0.0
        %1338 = vmatprep.subr.mxu0 0.0
        %1339 = vmatpush1.msra.mxu0 0.0
        %1340 = vmatprep.subr.mxu0 0.0
        %1341 = vmatpush1.msra.mxu0 0.0
        %1342 = vmatprep.subr.mxu0 0.0
        %1343 = vmatpush1.msra.mxu0 0.0
        %1344 = vmatprep.subr.mxu0 0.0
        %1345 = vmatpush1.msra.mxu0 0.0
        %1346 = vmatprep.subr.mxu0 0.0
        %1347 = vmatpush1.msra.mxu0 0.0
        %1348 = vmatprep.subr.mxu0 0.0
        %1349 = vmatpush1.msra.mxu0 0.0
        %1350 = vmatprep.subr.mxu0 0.0
        %1351 = vmatpush1.msra.mxu0 0.0
        %1352 = vmatprep.subr.mxu0 %v1267
        %1353 = vmatpush1.msra.mxu0 %v1265
        %1354 = vmatprep.subr.mxu0 0.0
        %1355 = vmatpush2.msra.mxu0 0.0
        %1356 = vmatprep.subr.mxu0 0.0
        %1357 = vmatpush2.msra.mxu0 0.0
        %1358 = vmatprep.subr.mxu0 0.0
        %1359 = vmatpush2.msra.mxu0 0.0
        %1360 = vmatprep.subr.mxu0 0.0
        %1361 = vmatpush2.msra.mxu0 0.0
        %1362 = vmatprep.subr.mxu0 0.0
        %1363 = vmatpush2.msra.mxu0 0.0
        %1364 = vmatprep.subr.mxu0 0.0
        %1365 = vmatpush2.msra.mxu0 0.0
        %1366 = vmatprep.subr.mxu0 0.0
        %1367 = vmatpush2.msra.mxu0 0.0
        %1368 = vmatprep.subr.mxu0 0.0
        %1369 = vmatpush2.msra.mxu0 0.0
        %1370 = vmatprep.subr.mxu0 0.0
        %1371 = vmatpush2.msra.mxu0 0.0
        %1372 = vmatprep.subr.mxu0 0.0
        %1373 = vmatpush2.msra.mxu0 0.0
        %1374 = vmatprep.subr.mxu0 0.0
        %1375 = vmatpush2.msra.mxu0 0.0
        %1376 = vmatprep.subr.mxu0 0.0
        %1377 = vmatpush2.msra.mxu0 0.0
        %1378 = vmatprep.subr.mxu0 0.0
        %1379 = vmatpush2.msra.mxu0 0.0
        %1380 = vmatprep.subr.mxu0 0.0
        %1381 = vmatpush2.msra.mxu0 0.0
        %1382 = vmatprep.subr.mxu0 0.0
        %1383 = vmatpush2.msra.mxu0 0.0
        %1384 = vmatprep.subr.mxu0 0.0
        %1385 = vmatpush2.msra.mxu0 0.0
        %1386 = vmatprep.mubr.f32.mxu0 0.0
        %1387 = vmatmul.mubr.f32.gmra.mxu0 %v1317
        %v1388 = vpop.f32.mrf.mxu0
        %v1389 = vadd.f32 0.0, %v1388
        %v1390 = vpop.f32.mrf.mxu0
        %v1391 = vadd.f32 0.0, %v1390
        %1392 = vmatprep.mubr.f32.mxu0 0.0
        %1393 = vmatmul.mubr.f32.gmra.mxu0 %v1320
        %v1394 = vpop.f32.mrf.mxu0
        %v1395 = vadd.f32 0.0, %v1394
        %v1396 = vpop.f32.mrf.mxu0
        %v1397 = vadd.f32 0.0, %v1396
        %1398 = vdwg.mxu0
        %1399 = vmatprep.subr.mxu0 0.0
        %1400 = vmatpush1.msra.mxu0 0.0
        %1401 = vmatprep.subr.mxu0 0.0
        %1402 = vmatpush1.msra.mxu0 0.0
        %1403 = vmatprep.subr.mxu0 0.0
        %1404 = vmatpush1.msra.mxu0 0.0
        %1405 = vmatprep.subr.mxu0 0.0
        %1406 = vmatpush1.msra.mxu0 0.0
        %1407 = vmatprep.subr.mxu0 0.0
        %1408 = vmatpush1.msra.mxu0 0.0
        %1409 = vmatprep.subr.mxu0 0.0
        %1410 = vmatpush1.msra.mxu0 0.0
        %1411 = vmatprep.subr.mxu0 0.0
        %1412 = vmatpush1.msra.mxu0 0.0
        %1413 = vmatprep.subr.mxu0 0.0
        %1414 = vmatpush1.msra.mxu0 0.0
        %1415 = vmatprep.subr.mxu0 0.0
        %1416 = vmatpush1.msra.mxu0 0.0
        %1417 = vmatprep.subr.mxu0 0.0
        %1418 = vmatpush1.msra.mxu0 0.0
        %1419 = vmatprep.subr.mxu0 0.0
        %1420 = vmatpush1.msra.mxu0 0.0
        %1421 = vmatprep.subr.mxu0 0.0
        %1422 = vmatpush1.msra.mxu0 0.0
        %1423 = vmatprep.subr.mxu0 0.0
        %1424 = vmatpush1.msra.mxu0 0.0
        %1425 = vmatprep.subr.mxu0 0.0
        %1426 = vmatpush1.msra.mxu0 0.0
        %1427 = vmatprep.subr.mxu0 0.0
        %1428 = vmatpush1.msra.mxu0 0.0
        %1429 = vmatprep.subr.mxu0 %v1308
        %1430 = vmatpush1.msra.mxu0 %v1306
        %1431 = vmatprep.subr.mxu0 0.0
        %1432 = vmatpush2.msra.mxu0 0.0
        %1433 = vmatprep.subr.mxu0 0.0
        %1434 = vmatpush2.msra.mxu0 0.0
        %1435 = vmatprep.subr.mxu0 0.0
        %1436 = vmatpush2.msra.mxu0 0.0
        %1437 = vmatprep.subr.mxu0 0.0
        %1438 = vmatpush2.msra.mxu0 0.0
        %1439 = vmatprep.subr.mxu0 0.0
        %1440 = vmatpush2.msra.mxu0 0.0
        %1441 = vmatprep.subr.mxu0 0.0
        %1442 = vmatpush2.msra.mxu0 0.0
        %1443 = vmatprep.subr.mxu0 0.0
        %1444 = vmatpush2.msra.mxu0 0.0
        %1445 = vmatprep.subr.mxu0 0.0
        %1446 = vmatpush2.msra.mxu0 0.0
        %1447 = vmatprep.subr.mxu0 0.0
        %1448 = vmatpush2.msra.mxu0 0.0
        %1449 = vmatprep.subr.mxu0 0.0
        %1450 = vmatpush2.msra.mxu0 0.0
        %1451 = vmatprep.subr.mxu0 0.0
        %1452 = vmatpush2.msra.mxu0 0.0
        %1453 = vmatprep.subr.mxu0 0.0
        %1454 = vmatpush2.msra.mxu0 0.0
        %1455 = vmatprep.subr.mxu0 0.0
        %1456 = vmatpush2.msra.mxu0 0.0
        %1457 = vmatprep.subr.mxu0 0.0
        %1458 = vmatpush2.msra.mxu0 0.0
        %1459 = vmatprep.subr.mxu0 0.0
        %1460 = vmatpush2.msra.mxu0 0.0
        %1461 = vmatprep.subr.mxu0 0.0
        %1462 = vmatpush2.msra.mxu0 0.0
        %1463 = vmatprep.mubr.f32.mxu0 0.0
        %1464 = vmatmul.mubr.f32.gmra.mxu0 %v1317
        %v1465 = vpop.f32.mrf.mxu0
        %v1466 = vadd.f32 0.0, %v1465
        %v1467 = vpop.f32.mrf.mxu0
        %v1468 = vadd.f32 0.0, %v1467
        %1469 = vmatprep.mubr.f32.mxu0 0.0
        %1470 = vmatmul.mubr.f32.gmra.mxu0 %v1320
        %v1471 = vpop.f32.mrf.mxu0
        %v1472 = vadd.f32 0.0, %v1471
        %v1473 = vpop.f32.mrf.mxu0
        %v1474 = vadd.f32 0.0, %v1473
        %1475 = vdwg.mxu0
        %v1477 = vsel %vm1315, %v843, 0
        %v1480 = vsel %vm1315, %v844, 0
        %1482 = vmatprep.subr.mxu0 0.0
        %1483 = vmatpush1.msra.mxu0 0.0
        %1484 = vmatprep.subr.mxu0 0.0
        %1485 = vmatpush1.msra.mxu0 0.0
        %1486 = vmatprep.subr.mxu0 0.0
        %1487 = vmatpush1.msra.mxu0 0.0
        %1488 = vmatprep.subr.mxu0 0.0
        %1489 = vmatpush1.msra.mxu0 0.0
        %1490 = vmatprep.subr.mxu0 0.0
        %1491 = vmatpush1.msra.mxu0 0.0
        %1492 = vmatprep.subr.mxu0 0.0
        %1493 = vmatpush1.msra.mxu0 0.0
        %1494 = vmatprep.subr.mxu0 0.0
        %1495 = vmatpush1.msra.mxu0 0.0
        %1496 = vmatprep.subr.mxu0 0.0
        %1497 = vmatpush1.msra.mxu0 0.0
        %1498 = vmatprep.subr.mxu0 0.0
        %1499 = vmatpush1.msra.mxu0 0.0
        %1500 = vmatprep.subr.mxu0 0.0
        %1501 = vmatpush1.msra.mxu0 0.0
        %1502 = vmatprep.subr.mxu0 0.0
        %1503 = vmatpush1.msra.mxu0 0.0
        %1504 = vmatprep.subr.mxu0 0.0
        %1505 = vmatpush1.msra.mxu0 0.0
        %1506 = vmatprep.subr.mxu0 0.0
        %1507 = vmatpush1.msra.mxu0 0.0
        %1508 = vmatprep.subr.mxu0 0.0
        %1509 = vmatpush1.msra.mxu0 0.0
        %1510 = vmatprep.subr.mxu0 0.0
        %1511 = vmatpush1.msra.mxu0 0.0
        %1512 = vmatprep.subr.mxu0 %v798
        %1513 = vmatpush1.msra.mxu0 %v796
        %1514 = vmatprep.subr.mxu0 0.0
        %1515 = vmatpush2.msra.mxu0 0.0
        %1516 = vmatprep.subr.mxu0 0.0
        %1517 = vmatpush2.msra.mxu0 0.0
        %1518 = vmatprep.subr.mxu0 0.0
        %1519 = vmatpush2.msra.mxu0 0.0
        %1520 = vmatprep.subr.mxu0 0.0
        %1521 = vmatpush2.msra.mxu0 0.0
        %1522 = vmatprep.subr.mxu0 0.0
        %1523 = vmatpush2.msra.mxu0 0.0
        %1524 = vmatprep.subr.mxu0 0.0
        %1525 = vmatpush2.msra.mxu0 0.0
        %1526 = vmatprep.subr.mxu0 0.0
        %1527 = vmatpush2.msra.mxu0 0.0
        %1528 = vmatprep.subr.mxu0 0.0
        %1529 = vmatpush2.msra.mxu0 0.0
        %1530 = vmatprep.subr.mxu0 0.0
        %1531 = vmatpush2.msra.mxu0 0.0
        %1532 = vmatprep.subr.mxu0 0.0
        %1533 = vmatpush2.msra.mxu0 0.0
        %1534 = vmatprep.subr.mxu0 0.0
        %1535 = vmatpush2.msra.mxu0 0.0
        %1536 = vmatprep.subr.mxu0 0.0
        %1537 = vmatpush2.msra.mxu0 0.0
        %1538 = vmatprep.subr.mxu0 0.0
        %1539 = vmatpush2.msra.mxu0 0.0
        %1540 = vmatprep.subr.mxu0 0.0
        %1541 = vmatpush2.msra.mxu0 0.0
        %1542 = vmatprep.subr.mxu0 0.0
        %1543 = vmatpush2.msra.mxu0 0.0
        %1544 = vmatprep.subr.mxu0 0.0
        %1545 = vmatpush2.msra.mxu0 0.0
        %1546 = vmatprep.mubr.f32.mxu0 0.0
        %1547 = vmatmul.mubr.f32.gmra.mxu0 %v1477
        %v1548 = vpop.f32.mrf.mxu0
        %v1549 = vadd.f32 %v1389, %v1548
        %v1550 = vpop.f32.mrf.mxu0
        %v1551 = vadd.f32 %v1391, %v1550
        %1552 = vmatprep.mubr.f32.mxu0 0.0
        %1553 = vmatmul.mubr.f32.gmra.mxu0 %v1480
        %v1554 = vpop.f32.mrf.mxu0
        %v1555 = vadd.f32 %v1395, %v1554
        %v1556 = vpop.f32.mrf.mxu0
        %v1557 = vadd.f32 %v1397, %v1556
        %1558 = vdwg.mxu0
        %1559 = vmatprep.subr.mxu0 0.0
        %1560 = vmatpush1.msra.mxu0 0.0
        %1561 = vmatprep.subr.mxu0 0.0
        %1562 = vmatpush1.msra.mxu0 0.0
        %1563 = vmatprep.subr.mxu0 0.0
        %1564 = vmatpush1.msra.mxu0 0.0
        %1565 = vmatprep.subr.mxu0 0.0
        %1566 = vmatpush1.msra.mxu0 0.0
        %1567 = vmatprep.subr.mxu0 0.0
        %1568 = vmatpush1.msra.mxu0 0.0
        %1569 = vmatprep.subr.mxu0 0.0
        %1570 = vmatpush1.msra.mxu0 0.0
        %1571 = vmatprep.subr.mxu0 0.0
        %1572 = vmatpush1.msra.mxu0 0.0
        %1573 = vmatprep.subr.mxu0 0.0
        %1574 = vmatpush1.msra.mxu0 0.0
        %1575 = vmatprep.subr.mxu0 0.0
        %1576 = vmatpush1.msra.mxu0 0.0
        %1577 = vmatprep.subr.mxu0 0.0
        %1578 = vmatpush1.msra.mxu0 0.0
        %1579 = vmatprep.subr.mxu0 0.0
        %1580 = vmatpush1.msra.mxu0 0.0
        %1581 = vmatprep.subr.mxu0 0.0
        %1582 = vmatpush1.msra.mxu0 0.0
        %1583 = vmatprep.subr.mxu0 0.0
        %1584 = vmatpush1.msra.mxu0 0.0
        %1585 = vmatprep.subr.mxu0 0.0
        %1586 = vmatpush1.msra.mxu0 0.0
        %1587 = vmatprep.subr.mxu0 0.0
        %1588 = vmatpush1.msra.mxu0 0.0
        %1589 = vmatprep.subr.mxu0 %v839
        %1590 = vmatpush1.msra.mxu0 %v837
        %1591 = vmatprep.subr.mxu0 0.0
        %1592 = vmatpush2.msra.mxu0 0.0
        %1593 = vmatprep.subr.mxu0 0.0
        %1594 = vmatpush2.msra.mxu0 0.0
        %1595 = vmatprep.subr.mxu0 0.0
        %1596 = vmatpush2.msra.mxu0 0.0
        %1597 = vmatprep.subr.mxu0 0.0
        %1598 = vmatpush2.msra.mxu0 0.0
        %1599 = vmatprep.subr.mxu0 0.0
        %1600 = vmatpush2.msra.mxu0 0.0
        %1601 = vmatprep.subr.mxu0 0.0
        %1602 = vmatpush2.msra.mxu0 0.0
        %1603 = vmatprep.subr.mxu0 0.0
        %1604 = vmatpush2.msra.mxu0 0.0
        %1605 = vmatprep.subr.mxu0 0.0
        %1606 = vmatpush2.msra.mxu0 0.0
        %1607 = vmatprep.subr.mxu0 0.0
        %1608 = vmatpush2.msra.mxu0 0.0
        %1609 = vmatprep.subr.mxu0 0.0
        %1610 = vmatpush2.msra.mxu0 0.0
        %1611 = vmatprep.subr.mxu0 0.0
        %1612 = vmatpush2.msra.mxu0 0.0
        %1613 = vmatprep.subr.mxu0 0.0
        %1614 = vmatpush2.msra.mxu0 0.0
        %1615 = vmatprep.subr.mxu0 0.0
        %1616 = vmatpush2.msra.mxu0 0.0
        %1617 = vmatprep.subr.mxu0 0.0
        %1618 = vmatpush2.msra.mxu0 0.0
        %1619 = vmatprep.subr.mxu0 0.0
        %1620 = vmatpush2.msra.mxu0 0.0
        %1621 = vmatprep.subr.mxu0 0.0
        %1622 = vmatpush2.msra.mxu0 0.0
        %1623 = vmatprep.mubr.f32.mxu0 0.0
        %1624 = vmatmul.mubr.f32.gmra.mxu0 %v1477
        %v1625 = vpop.f32.mrf.mxu0
        %v1626 = vadd.f32 %v1466, %v1625
        %v1627 = vpop.f32.mrf.mxu0
        %v1628 = vadd.f32 %v1468, %v1627
        %1629 = vmatprep.mubr.f32.mxu0 0.0
        %1630 = vmatmul.mubr.f32.gmra.mxu0 %v1480
        %v1631 = vpop.f32.mrf.mxu0
        %v1632 = vadd.f32 %v1472, %v1631
        %v1633 = vpop.f32.mrf.mxu0
        %v1634 = vadd.f32 %v1474, %v1633
        %1635 = vdwg.mxu0
        %s1636 = scalar_lea.vmem [#allocation5], 1024
        %v1637 = vld [vmem:[%s1636] sm:$0xff]
        %v1638 = vld [vmem:[%s1636 + $0x8] sm:$0xff]
        %v1639 = vld [vmem:[%s1636 + $0x10] sm:$0xff]
        %v1640 = vld [vmem:[%s1636 + $0x18] sm:$0xff]
        %v1641 = vld [vmem:[%s1636 + $0x20] sm:$0xff]
        %v1642 = vld [vmem:[%s1636 + $0x28] sm:$0xff]
        %v1643 = vld [vmem:[%s1636 + $0x30] sm:$0xff]
        %v1644 = vld [vmem:[%s1636 + $0x38] sm:$0xff]
        %v1645 = vld [vmem:[%s1636 + $0x40] sm:$0xff]
        %v1646 = vld [vmem:[%s1636 + $0x48] sm:$0xff]
        %v1647 = vld [vmem:[%s1636 + $0x50] sm:$0xff]
        %v1648 = vld [vmem:[%s1636 + $0x58] sm:$0xff]
        %v1649 = vld [vmem:[%s1636 + $0x60] sm:$0xff]
        %v1650 = vld [vmem:[%s1636 + $0x68] sm:$0xff]
        %v1651 = vld [vmem:[%s1636 + $0x70] sm:$0xff]
        %v1652 = vld [vmem:[%s1636 + $0x78] sm:$0xff]
        %v1653 = vld [vmem:[%s1636 + $0x80] sm:$0xff]
        %v1654 = vld [vmem:[%s1636 + $0x88] sm:$0xff]
        %v1655 = vld [vmem:[%s1636 + $0x90] sm:$0xff]
        %v1656 = vld [vmem:[%s1636 + $0x98] sm:$0xff]
        %v1657 = vld [vmem:[%s1636 + $0xa0] sm:$0xff]
        %v1658 = vld [vmem:[%s1636 + $0xa8] sm:$0xff]
        %v1659 = vld [vmem:[%s1636 + $0xb0] sm:$0xff]
        %v1660 = vld [vmem:[%s1636 + $0xb8] sm:$0xff]
        %v1661 = vld [vmem:[%s1636 + $0xc0] sm:$0xff]
        %v1662 = vld [vmem:[%s1636 + $0xc8] sm:$0xff]
        %v1663 = vld [vmem:[%s1636 + $0xd0] sm:$0xff]
        %v1664 = vld [vmem:[%s1636 + $0xd8] sm:$0xff]
        %v1665 = vld [vmem:[%s1636 + $0xe0] sm:$0xff]
        %v1666 = vld [vmem:[%s1636 + $0xe8] sm:$0xff]
        %v1667 = vld [vmem:[%s1636 + $0xf0] sm:$0xff]
        %v1668 = vld [vmem:[%s1636 + $0xf8] sm:$0xff]
        %v1669 = vld [vmem:[%s1636 + $0x100] sm:$0xff]
        %v1670 = vld [vmem:[%s1636 + $0x108] sm:$0xff]
        %v1671 = vld [vmem:[%s1636 + $0x110] sm:$0xff]
        %v1672 = vld [vmem:[%s1636 + $0x118] sm:$0xff]
        %v1673 = vld [vmem:[%s1636 + $0x120] sm:$0xff]
        %v1674 = vld [vmem:[%s1636 + $0x128] sm:$0xff]
        %v1675 = vld [vmem:[%s1636 + $0x130] sm:$0xff]
        %v1676 = vld [vmem:[%s1636 + $0x138] sm:$0xff]
        %v1677 = vld [vmem:[%s1636 + $0x140] sm:$0xff]
        %v1678 = vld [vmem:[%s1636 + $0x148] sm:$0xff]
        %v1679 = vld [vmem:[%s1636 + $0x150] sm:$0xff]
        %v1680 = vld [vmem:[%s1636 + $0x158] sm:$0xff]
        %v1681 = vld [vmem:[%s1636 + $0x160] sm:$0xff]
        %v1682 = vld [vmem:[%s1636 + $0x168] sm:$0xff]
        %v1683 = vld [vmem:[%s1636 + $0x170] sm:$0xff]
        %v1684 = vld [vmem:[%s1636 + $0x178] sm:$0xff]
        %v1685 = vld [vmem:[%s1636 + $0x180] sm:$0xff]
        %v1686 = vld [vmem:[%s1636 + $0x188] sm:$0xff]
        %v1687 = vld [vmem:[%s1636 + $0x190] sm:$0xff]
        %v1688 = vld [vmem:[%s1636 + $0x198] sm:$0xff]
        %v1689 = vld [vmem:[%s1636 + $0x1a0] sm:$0xff]
        %v1690 = vld [vmem:[%s1636 + $0x1a8] sm:$0xff]
        %v1691 = vld [vmem:[%s1636 + $0x1b0] sm:$0xff]
        %v1692 = vld [vmem:[%s1636 + $0x1b8] sm:$0xff]
        %v1693 = vld [vmem:[%s1636 + $0x1c0] sm:$0xff]
        %v1694 = vld [vmem:[%s1636 + $0x1c8] sm:$0xff]
        %v1695 = vld [vmem:[%s1636 + $0x1d0] sm:$0xff]
        %v1696 = vld [vmem:[%s1636 + $0x1d8] sm:$0xff]
        %v1697 = vld [vmem:[%s1636 + $0x1e0] sm:$0xff]
        %v1698 = vld [vmem:[%s1636 + $0x1e8] sm:$0xff]
        %v1699 = vld [vmem:[%s1636 + $0x1f0] sm:$0xff]
        %v1700 = vld [vmem:[%s1636 + $0x1f8] sm:$0xff]
        %v1765 = vunpack.c.l.b16 %v1637
        %v1766 = vunpack.c.h.b16 %v1637
        %v1767 = vunpack.c.l.b16 %v1638
        %v1768 = vunpack.c.h.b16 %v1638
        %v1769 = vunpack.c.l.b16 %v1639
        %v1770 = vunpack.c.h.b16 %v1639
        %v1771 = vunpack.c.l.b16 %v1640
        %v1772 = vunpack.c.h.b16 %v1640
        %v1773 = vunpack.c.l.b16 %v1641
        %v1774 = vunpack.c.h.b16 %v1641
        %v1775 = vunpack.c.l.b16 %v1642
        %v1776 = vunpack.c.h.b16 %v1642
        %v1777 = vunpack.c.l.b16 %v1643
        %v1778 = vunpack.c.h.b16 %v1643
        %v1779 = vunpack.c.l.b16 %v1644
        %v1780 = vunpack.c.h.b16 %v1644
        %v1781 = vunpack.c.l.b16 %v1645
        %v1782 = vunpack.c.h.b16 %v1645
        %v1783 = vunpack.c.l.b16 %v1646
        %v1784 = vunpack.c.h.b16 %v1646
        %v1785 = vunpack.c.l.b16 %v1647
        %v1786 = vunpack.c.h.b16 %v1647
        %v1787 = vunpack.c.l.b16 %v1648
        %v1788 = vunpack.c.h.b16 %v1648
        %v1789 = vunpack.c.l.b16 %v1649
        %v1790 = vunpack.c.h.b16 %v1649
        %v1791 = vunpack.c.l.b16 %v1650
        %v1792 = vunpack.c.h.b16 %v1650
        %v1793 = vunpack.c.l.b16 %v1651
        %v1794 = vunpack.c.h.b16 %v1651
        %v1795 = vunpack.c.l.b16 %v1652
        %v1796 = vunpack.c.h.b16 %v1652
        %v1797 = vunpack.c.l.b16 %v1653
        %v1798 = vunpack.c.h.b16 %v1653
        %v1799 = vunpack.c.l.b16 %v1654
        %v1800 = vunpack.c.h.b16 %v1654
        %v1801 = vunpack.c.l.b16 %v1655
        %v1802 = vunpack.c.h.b16 %v1655
        %v1803 = vunpack.c.l.b16 %v1656
        %v1804 = vunpack.c.h.b16 %v1656
        %v1805 = vunpack.c.l.b16 %v1657
        %v1806 = vunpack.c.h.b16 %v1657
        %v1807 = vunpack.c.l.b16 %v1658
        %v1808 = vunpack.c.h.b16 %v1658
        %v1809 = vunpack.c.l.b16 %v1659
        %v1810 = vunpack.c.h.b16 %v1659
        %v1811 = vunpack.c.l.b16 %v1660
        %v1812 = vunpack.c.h.b16 %v1660
        %v1813 = vunpack.c.l.b16 %v1661
        %v1814 = vunpack.c.h.b16 %v1661
        %v1815 = vunpack.c.l.b16 %v1662
        %v1816 = vunpack.c.h.b16 %v1662
        %v1817 = vunpack.c.l.b16 %v1663
        %v1818 = vunpack.c.h.b16 %v1663
        %v1819 = vunpack.c.l.b16 %v1664
        %v1820 = vunpack.c.h.b16 %v1664
        %v1821 = vunpack.c.l.b16 %v1665
        %v1822 = vunpack.c.h.b16 %v1665
        %v1823 = vunpack.c.l.b16 %v1666
        %v1824 = vunpack.c.h.b16 %v1666
        %v1825 = vunpack.c.l.b16 %v1667
        %v1826 = vunpack.c.h.b16 %v1667
        %v1827 = vunpack.c.l.b16 %v1668
        %v1828 = vunpack.c.h.b16 %v1668
        %v1829 = vunpack.c.l.b16 %v1669
        %v1830 = vunpack.c.h.b16 %v1669
        %v1831 = vunpack.c.l.b16 %v1670
        %v1832 = vunpack.c.h.b16 %v1670
        %v1833 = vunpack.c.l.b16 %v1671
        %v1834 = vunpack.c.h.b16 %v1671
        %v1835 = vunpack.c.l.b16 %v1672
        %v1836 = vunpack.c.h.b16 %v1672
        %v1837 = vunpack.c.l.b16 %v1673
        %v1838 = vunpack.c.h.b16 %v1673
        %v1839 = vunpack.c.l.b16 %v1674
        %v1840 = vunpack.c.h.b16 %v1674
        %v1841 = vunpack.c.l.b16 %v1675
        %v1842 = vunpack.c.h.b16 %v1675
        %v1843 = vunpack.c.l.b16 %v1676
        %v1844 = vunpack.c.h.b16 %v1676
        %v1845 = vunpack.c.l.b16 %v1677
        %v1846 = vunpack.c.h.b16 %v1677
        %v1847 = vunpack.c.l.b16 %v1678
        %v1848 = vunpack.c.h.b16 %v1678
        %v1849 = vunpack.c.l.b16 %v1679
        %v1850 = vunpack.c.h.b16 %v1679
        %v1851 = vunpack.c.l.b16 %v1680
        %v1852 = vunpack.c.h.b16 %v1680
        %v1853 = vunpack.c.l.b16 %v1681
        %v1854 = vunpack.c.h.b16 %v1681
        %v1855 = vunpack.c.l.b16 %v1682
        %v1856 = vunpack.c.h.b16 %v1682
        %v1857 = vunpack.c.l.b16 %v1683
        %v1858 = vunpack.c.h.b16 %v1683
        %v1859 = vunpack.c.l.b16 %v1684
        %v1860 = vunpack.c.h.b16 %v1684
        %v1861 = vunpack.c.l.b16 %v1685
        %v1862 = vunpack.c.h.b16 %v1685
        %v1863 = vunpack.c.l.b16 %v1686
        %v1864 = vunpack.c.h.b16 %v1686
        %v1865 = vunpack.c.l.b16 %v1687
        %v1866 = vunpack.c.h.b16 %v1687
        %v1867 = vunpack.c.l.b16 %v1688
        %v1868 = vunpack.c.h.b16 %v1688
        %v1869 = vunpack.c.l.b16 %v1689
        %v1870 = vunpack.c.h.b16 %v1689
        %v1871 = vunpack.c.l.b16 %v1690
        %v1872 = vunpack.c.h.b16 %v1690
        %v1873 = vunpack.c.l.b16 %v1691
        %v1874 = vunpack.c.h.b16 %v1691
        %v1875 = vunpack.c.l.b16 %v1692
        %v1876 = vunpack.c.h.b16 %v1692
        %v1877 = vunpack.c.l.b16 %v1693
        %v1878 = vunpack.c.h.b16 %v1693
        %v1879 = vunpack.c.l.b16 %v1694
        %v1880 = vunpack.c.h.b16 %v1694
        %v1881 = vunpack.c.l.b16 %v1695
        %v1882 = vunpack.c.h.b16 %v1695
        %v1883 = vunpack.c.l.b16 %v1696
        %v1884 = vunpack.c.h.b16 %v1696
        %v1885 = vunpack.c.l.b16 %v1697
        %v1886 = vunpack.c.h.b16 %v1697
        %v1887 = vunpack.c.l.b16 %v1698
        %v1888 = vunpack.c.h.b16 %v1698
        %v1889 = vunpack.c.l.b16 %v1699
        %v1890 = vunpack.c.h.b16 %v1699
        %v1891 = vunpack.c.l.b16 %v1700
        %v1892 = vunpack.c.h.b16 %v1700
        %v1893 = vpack.c.b16 %v1769, %v1765
        %v1894 = vpack.c.b16 %v1770, %v1766
        %v1895 = vpack.c.b16 %v1771, %v1767
        %v1896 = vpack.c.b16 %v1772, %v1768
        %v1897 = vpack.c.b16 %v1777, %v1773
        %v1898 = vpack.c.b16 %v1778, %v1774
        %v1899 = vpack.c.b16 %v1779, %v1775
        %v1900 = vpack.c.b16 %v1780, %v1776
        %v1901 = vpack.c.b16 %v1785, %v1781
        %v1902 = vpack.c.b16 %v1786, %v1782
        %v1903 = vpack.c.b16 %v1787, %v1783
        %v1904 = vpack.c.b16 %v1788, %v1784
        %v1905 = vpack.c.b16 %v1793, %v1789
        %v1906 = vpack.c.b16 %v1794, %v1790
        %v1907 = vpack.c.b16 %v1795, %v1791
        %v1908 = vpack.c.b16 %v1796, %v1792
        %v1909 = vpack.c.b16 %v1801, %v1797
        %v1910 = vpack.c.b16 %v1802, %v1798
        %v1911 = vpack.c.b16 %v1803, %v1799
        %v1912 = vpack.c.b16 %v1804, %v1800
        %v1913 = vpack.c.b16 %v1809, %v1805
        %v1914 = vpack.c.b16 %v1810, %v1806
        %v1915 = vpack.c.b16 %v1811, %v1807
        %v1916 = vpack.c.b16 %v1812, %v1808
        %v1917 = vpack.c.b16 %v1817, %v1813
        %v1918 = vpack.c.b16 %v1818, %v1814
        %v1919 = vpack.c.b16 %v1819, %v1815
        %v1920 = vpack.c.b16 %v1820, %v1816
        %v1921 = vpack.c.b16 %v1825, %v1821
        %v1922 = vpack.c.b16 %v1826, %v1822
        %v1923 = vpack.c.b16 %v1827, %v1823
        %v1924 = vpack.c.b16 %v1828, %v1824
        %v1925 = vpack.c.b16 %v1833, %v1829
        %v1926 = vpack.c.b16 %v1834, %v1830
        %v1927 = vpack.c.b16 %v1835, %v1831
        %v1928 = vpack.c.b16 %v1836, %v1832
        %v1929 = vpack.c.b16 %v1841, %v1837
        %v1930 = vpack.c.b16 %v1842, %v1838
        %v1931 = vpack.c.b16 %v1843, %v1839
        %v1932 = vpack.c.b16 %v1844, %v1840
        %v1933 = vpack.c.b16 %v1849, %v1845
        %v1934 = vpack.c.b16 %v1850, %v1846
        %v1935 = vpack.c.b16 %v1851, %v1847
        %v1936 = vpack.c.b16 %v1852, %v1848
        %v1937 = vpack.c.b16 %v1857, %v1853
        %v1938 = vpack.c.b16 %v1858, %v1854
        %v1939 = vpack.c.b16 %v1859, %v1855
        %v1940 = vpack.c.b16 %v1860, %v1856
        %v1941 = vpack.c.b16 %v1865, %v1861
        %v1942 = vpack.c.b16 %v1866, %v1862
        %v1943 = vpack.c.b16 %v1867, %v1863
        %v1944 = vpack.c.b16 %v1868, %v1864
        %v1945 = vpack.c.b16 %v1873, %v1869
        %v1946 = vpack.c.b16 %v1874, %v1870
        %v1947 = vpack.c.b16 %v1875, %v1871
        %v1948 = vpack.c.b16 %v1876, %v1872
        %v1949 = vpack.c.b16 %v1881, %v1877
        %v1950 = vpack.c.b16 %v1882, %v1878
        %v1951 = vpack.c.b16 %v1883, %v1879
        %v1952 = vpack.c.b16 %v1884, %v1880
        %v1953 = vpack.c.b16 %v1889, %v1885
        %v1954 = vpack.c.b16 %v1890, %v1886
        %v1955 = vpack.c.b16 %v1891, %v1887
        %v1956 = vpack.c.b16 %v1892, %v1888
        %2021 = vmatprep.subr.bf16.mxu0 %v1922
        %2022 = vmatpush1.bf16.msra.mxu0 %v1921
        %2023 = vmatprep.subr.bf16.mxu0 %v1918
        %2024 = vmatpush1.bf16.msra.mxu0 %v1917
        %2025 = vmatprep.subr.bf16.mxu0 %v1914
        %2026 = vmatpush1.bf16.msra.mxu0 %v1913
        %2027 = vmatprep.subr.bf16.mxu0 %v1910
        %2028 = vmatpush1.bf16.msra.mxu0 %v1909
        %2029 = vmatprep.subr.bf16.mxu0 %v1906
        %2030 = vmatpush1.bf16.msra.mxu0 %v1905
        %2031 = vmatprep.subr.bf16.mxu0 %v1902
        %2032 = vmatpush1.bf16.msra.mxu0 %v1901
        %2033 = vmatprep.subr.bf16.mxu0 %v1898
        %2034 = vmatpush1.bf16.msra.mxu0 %v1897
        %2035 = vmatprep.subr.bf16.mxu0 %v1894
        %2036 = vmatpush1.bf16.msra.mxu0 %v1893
        %2037 = vmatprep.subr.bf16.mxu0 %v1954
        %2038 = vmatpush2.bf16.msra.mxu0 %v1953
        %2039 = vmatprep.subr.bf16.mxu0 %v1950
        %2040 = vmatpush2.bf16.msra.mxu0 %v1949
        %2041 = vmatprep.subr.bf16.mxu0 %v1946
        %2042 = vmatpush2.bf16.msra.mxu0 %v1945
        %2043 = vmatprep.subr.bf16.mxu0 %v1942
        %2044 = vmatpush2.bf16.msra.mxu0 %v1941
        %2045 = vmatprep.subr.bf16.mxu0 %v1938
        %2046 = vmatpush2.bf16.msra.mxu0 %v1937
        %2047 = vmatprep.subr.bf16.mxu0 %v1934
        %2048 = vmatpush2.bf16.msra.mxu0 %v1933
        %2049 = vmatprep.subr.bf16.mxu0 %v1930
        %2050 = vmatpush2.bf16.msra.mxu0 %v1929
        %2051 = vmatprep.subr.bf16.mxu0 %v1926
        %2052 = vmatpush2.bf16.msra.mxu0 %v1925
        %2053 = vmatprep.mubr.bf16.mxu0 %v376
        %2054 = vmatmul.mubr.bf16.gmra.mxu0 %v375
        %v2055 = vpop.f32.mrf.mxu0
        %v2056 = vadd.f32 0.0, %v2055
        %v2057 = vpop.f32.mrf.mxu0
        %v2058 = vadd.f32 0.0, %v2057
        %v2059 = vpop.f32.mrf.mxu0
        %v2060 = vpop.f32.mrf.mxu0
        %2061 = vdwg.mxu0
        %2062 = vmatprep.subr.bf16.mxu0 %v1924
        %2063 = vmatpush1.bf16.msra.mxu0 %v1923
        %2064 = vmatprep.subr.bf16.mxu0 %v1920
        %2065 = vmatpush1.bf16.msra.mxu0 %v1919
        %2066 = vmatprep.subr.bf16.mxu0 %v1916
        %2067 = vmatpush1.bf16.msra.mxu0 %v1915
        %2068 = vmatprep.subr.bf16.mxu0 %v1912
        %2069 = vmatpush1.bf16.msra.mxu0 %v1911
        %2070 = vmatprep.subr.bf16.mxu0 %v1908
        %2071 = vmatpush1.bf16.msra.mxu0 %v1907
        %2072 = vmatprep.subr.bf16.mxu0 %v1904
        %2073 = vmatpush1.bf16.msra.mxu0 %v1903
        %2074 = vmatprep.subr.bf16.mxu0 %v1900
        %2075 = vmatpush1.bf16.msra.mxu0 %v1899
        %2076 = vmatprep.subr.bf16.mxu0 %v1896
        %2077 = vmatpush1.bf16.msra.mxu0 %v1895
        %2078 = vmatprep.subr.bf16.mxu0 %v1956
        %2079 = vmatpush2.bf16.msra.mxu0 %v1955
        %2080 = vmatprep.subr.bf16.mxu0 %v1952
        %2081 = vmatpush2.bf16.msra.mxu0 %v1951
        %2082 = vmatprep.subr.bf16.mxu0 %v1948
        %2083 = vmatpush2.bf16.msra.mxu0 %v1947
        %2084 = vmatprep.subr.bf16.mxu0 %v1944
        %2085 = vmatpush2.bf16.msra.mxu0 %v1943
        %2086 = vmatprep.subr.bf16.mxu0 %v1940
        %2087 = vmatpush2.bf16.msra.mxu0 %v1939
        %2088 = vmatprep.subr.bf16.mxu0 %v1936
        %2089 = vmatpush2.bf16.msra.mxu0 %v1935
        %2090 = vmatprep.subr.bf16.mxu0 %v1932
        %2091 = vmatpush2.bf16.msra.mxu0 %v1931
        %2092 = vmatprep.subr.bf16.mxu0 %v1928
        %2093 = vmatpush2.bf16.msra.mxu0 %v1927
        %2094 = vmatprep.mubr.bf16.mxu0 %v376
        %2095 = vmatmul.mubr.bf16.gmra.mxu0 %v375
        %v2096 = vpop.f32.mrf.mxu0
        %v2097 = vadd.f32 0.0, %v2096
        %v2098 = vpop.f32.mrf.mxu0
        %v2099 = vadd.f32 0.0, %v2098
        %v2100 = vpop.f32.mrf.mxu0
        %v2101 = vpop.f32.mrf.mxu0
        %2102 = vdwg.mxu0
        %s2103 = scalar_lea.vmem %s2, 32
        %v2104 = vld [vmem:[%s2103] sm:$0xff]
        %v2105 = vld [vmem:[%s2103 + $0x8] sm:$0xff]
        %v2107 = vsel %vm1315, %v2104, 0
        %v2110 = vsel %vm1315, %v2105, 0
        %2112 = vmatprep.subr.mxu0 0.0
        %2113 = vmatpush1.msra.mxu0 0.0
        %2114 = vmatprep.subr.mxu0 0.0
        %2115 = vmatpush1.msra.mxu0 0.0
        %2116 = vmatprep.subr.mxu0 0.0
        %2117 = vmatpush1.msra.mxu0 0.0
        %2118 = vmatprep.subr.mxu0 0.0
        %2119 = vmatpush1.msra.mxu0 0.0
        %2120 = vmatprep.subr.mxu0 0.0
        %2121 = vmatpush1.msra.mxu0 0.0
        %2122 = vmatprep.subr.mxu0 0.0
        %2123 = vmatpush1.msra.mxu0 0.0
        %2124 = vmatprep.subr.mxu0 0.0
        %2125 = vmatpush1.msra.mxu0 0.0
        %2126 = vmatprep.subr.mxu0 0.0
        %2127 = vmatpush1.msra.mxu0 0.0
        %2128 = vmatprep.subr.mxu0 0.0
        %2129 = vmatpush1.msra.mxu0 0.0
        %2130 = vmatprep.subr.mxu0 0.0
        %2131 = vmatpush1.msra.mxu0 0.0
        %2132 = vmatprep.subr.mxu0 0.0
        %2133 = vmatpush1.msra.mxu0 0.0
        %2134 = vmatprep.subr.mxu0 0.0
        %2135 = vmatpush1.msra.mxu0 0.0
        %2136 = vmatprep.subr.mxu0 0.0
        %2137 = vmatpush1.msra.mxu0 0.0
        %2138 = vmatprep.subr.mxu0 0.0
        %2139 = vmatpush1.msra.mxu0 0.0
        %2140 = vmatprep.subr.mxu0 0.0
        %2141 = vmatpush1.msra.mxu0 0.0
        %2142 = vmatprep.subr.mxu0 %v2058
        %2143 = vmatpush1.msra.mxu0 %v2056
        %2144 = vmatprep.subr.mxu0 0.0
        %2145 = vmatpush2.msra.mxu0 0.0
        %2146 = vmatprep.subr.mxu0 0.0
        %2147 = vmatpush2.msra.mxu0 0.0
        %2148 = vmatprep.subr.mxu0 0.0
        %2149 = vmatpush2.msra.mxu0 0.0
        %2150 = vmatprep.subr.mxu0 0.0
        %2151 = vmatpush2.msra.mxu0 0.0
        %2152 = vmatprep.subr.mxu0 0.0
        %2153 = vmatpush2.msra.mxu0 0.0
        %2154 = vmatprep.subr.mxu0 0.0
        %2155 = vmatpush2.msra.mxu0 0.0
        %2156 = vmatprep.subr.mxu0 0.0
        %2157 = vmatpush2.msra.mxu0 0.0
        %2158 = vmatprep.subr.mxu0 0.0
        %2159 = vmatpush2.msra.mxu0 0.0
        %2160 = vmatprep.subr.mxu0 0.0
        %2161 = vmatpush2.msra.mxu0 0.0
        %2162 = vmatprep.subr.mxu0 0.0
        %2163 = vmatpush2.msra.mxu0 0.0
        %2164 = vmatprep.subr.mxu0 0.0
        %2165 = vmatpush2.msra.mxu0 0.0
        %2166 = vmatprep.subr.mxu0 0.0
        %2167 = vmatpush2.msra.mxu0 0.0
        %2168 = vmatprep.subr.mxu0 0.0
        %2169 = vmatpush2.msra.mxu0 0.0
        %2170 = vmatprep.subr.mxu0 0.0
        %2171 = vmatpush2.msra.mxu0 0.0
        %2172 = vmatprep.subr.mxu0 0.0
        %2173 = vmatpush2.msra.mxu0 0.0
        %2174 = vmatprep.subr.mxu0 0.0
        %2175 = vmatpush2.msra.mxu0 0.0
        %2176 = vmatprep.mubr.f32.mxu0 0.0
        %2177 = vmatmul.mubr.f32.gmra.mxu0 %v2107
        %v2178 = vpop.f32.mrf.mxu0
        %v2179 = vadd.f32 0.0, %v2178
        %v2180 = vpop.f32.mrf.mxu0
        %v2181 = vadd.f32 0.0, %v2180
        %2182 = vmatprep.mubr.f32.mxu0 0.0
        %2183 = vmatmul.mubr.f32.gmra.mxu0 %v2110
        %v2184 = vpop.f32.mrf.mxu0
        %v2185 = vadd.f32 0.0, %v2184
        %v2186 = vpop.f32.mrf.mxu0
        %v2187 = vadd.f32 0.0, %v2186
        %2188 = vdwg.mxu0
        %2189 = vmatprep.subr.mxu0 0.0
        %2190 = vmatpush1.msra.mxu0 0.0
        %2191 = vmatprep.subr.mxu0 0.0
        %2192 = vmatpush1.msra.mxu0 0.0
        %2193 = vmatprep.subr.mxu0 0.0
        %2194 = vmatpush1.msra.mxu0 0.0
        %2195 = vmatprep.subr.mxu0 0.0
        %2196 = vmatpush1.msra.mxu0 0.0
        %2197 = vmatprep.subr.mxu0 0.0
        %2198 = vmatpush1.msra.mxu0 0.0
        %2199 = vmatprep.subr.mxu0 0.0
        %2200 = vmatpush1.msra.mxu0 0.0
        %2201 = vmatprep.subr.mxu0 0.0
        %2202 = vmatpush1.msra.mxu0 0.0
        %2203 = vmatprep.subr.mxu0 0.0
        %2204 = vmatpush1.msra.mxu0 0.0
        %2205 = vmatprep.subr.mxu0 0.0
        %2206 = vmatpush1.msra.mxu0 0.0
        %2207 = vmatprep.subr.mxu0 0.0
        %2208 = vmatpush1.msra.mxu0 0.0
        %2209 = vmatprep.subr.mxu0 0.0
        %2210 = vmatpush1.msra.mxu0 0.0
        %2211 = vmatprep.subr.mxu0 0.0
        %2212 = vmatpush1.msra.mxu0 0.0
        %2213 = vmatprep.subr.mxu0 0.0
        %2214 = vmatpush1.msra.mxu0 0.0
        %2215 = vmatprep.subr.mxu0 0.0
        %2216 = vmatpush1.msra.mxu0 0.0
        %2217 = vmatprep.subr.mxu0 0.0
        %2218 = vmatpush1.msra.mxu0 0.0
        %2219 = vmatprep.subr.mxu0 %v2099
        %2220 = vmatpush1.msra.mxu0 %v2097
        %2221 = vmatprep.subr.mxu0 0.0
        %2222 = vmatpush2.msra.mxu0 0.0
        %2223 = vmatprep.subr.mxu0 0.0
        %2224 = vmatpush2.msra.mxu0 0.0
        %2225 = vmatprep.subr.mxu0 0.0
        %2226 = vmatpush2.msra.mxu0 0.0
        %2227 = vmatprep.subr.mxu0 0.0
        %2228 = vmatpush2.msra.mxu0 0.0
        %2229 = vmatprep.subr.mxu0 0.0
        %2230 = vmatpush2.msra.mxu0 0.0
        %2231 = vmatprep.subr.mxu0 0.0
        %2232 = vmatpush2.msra.mxu0 0.0
        %2233 = vmatprep.subr.mxu0 0.0
        %2234 = vmatpush2.msra.mxu0 0.0
        %2235 = vmatprep.subr.mxu0 0.0
        %2236 = vmatpush2.msra.mxu0 0.0
        %2237 = vmatprep.subr.mxu0 0.0
        %2238 = vmatpush2.msra.mxu0 0.0
        %2239 = vmatprep.subr.mxu0 0.0
        %2240 = vmatpush2.msra.mxu0 0.0
        %2241 = vmatprep.subr.mxu0 0.0
        %2242 = vmatpush2.msra.mxu0 0.0
        %2243 = vmatprep.subr.mxu0 0.0
        %2244 = vmatpush2.msra.mxu0 0.0
        %2245 = vmatprep.subr.mxu0 0.0
        %2246 = vmatpush2.msra.mxu0 0.0
        %2247 = vmatprep.subr.mxu0 0.0
        %2248 = vmatpush2.msra.mxu0 0.0
        %2249 = vmatprep.subr.mxu0 0.0
        %2250 = vmatpush2.msra.mxu0 0.0
        %2251 = vmatprep.subr.mxu0 0.0
        %2252 = vmatpush2.msra.mxu0 0.0
        %2253 = vmatprep.mubr.f32.mxu0 0.0
        %2254 = vmatmul.mubr.f32.gmra.mxu0 %v2107
        %v2255 = vpop.f32.mrf.mxu0
        %v2256 = vadd.f32 0.0, %v2255
        %v2257 = vpop.f32.mrf.mxu0
        %v2258 = vadd.f32 0.0, %v2257
        %2259 = vmatprep.mubr.f32.mxu0 0.0
        %2260 = vmatmul.mubr.f32.gmra.mxu0 %v2110
        %v2261 = vpop.f32.mrf.mxu0
        %v2262 = vadd.f32 0.0, %v2261
        %v2263 = vpop.f32.mrf.mxu0
        %v2264 = vadd.f32 0.0, %v2263
        %2265 = vdwg.mxu0
        %v2266 = vadd.f32 %v1549, %v2179
        %v2267 = vadd.f32 %v1551, %v2181
        %v2268 = vadd.f32 %v1626, %v2256
        %v2269 = vadd.f32 %v1628, %v2258
        %v2270 = vadd.f32 %v1555, %v2185
        %v2271 = vadd.f32 %v1557, %v2187
        %v2272 = vadd.f32 %v1632, %v2262
        %v2273 = vadd.f32 %v1634, %v2264
        %v2274 = vadd.f32 %v2266, %v2270
        %v2275 = vrot.slane %v2274, 4
        %v2276 = vadd.f32 %v2274, %v2275
        %v2277 = vrot.slane %v2276, 2
        %v2278 = vadd.f32 %v2276, %v2277
        %v2279 = vrot.slane %v2278, 1
        %v2280 = vadd.f32 %v2278, %v2279
        %v2281 = vadd.f32 %v2267, %v2271
        %v2282 = vrot.slane %v2281, 4
        %v2283 = vadd.f32 %v2281, %v2282
        %v2284 = vrot.slane %v2283, 2
        %v2285 = vadd.f32 %v2283, %v2284
        %v2286 = vrot.slane %v2285, 1
        %v2287 = vadd.f32 %v2285, %v2286
        %v2288 = vadd.f32 %v2268, %v2272
        %v2289 = vrot.slane %v2288, 4
        %v2290 = vadd.f32 %v2288, %v2289
        %v2291 = vrot.slane %v2290, 2
        %v2292 = vadd.f32 %v2290, %v2291
        %v2293 = vrot.slane %v2292, 1
        %v2294 = vadd.f32 %v2292, %v2293
        %v2295 = vadd.f32 %v2269, %v2273
        %v2296 = vrot.slane %v2295, 4
        %v2297 = vadd.f32 %v2295, %v2296
        %v2298 = vrot.slane %v2297, 2
        %v2299 = vadd.f32 %v2297, %v2298
        %v2300 = vrot.slane %v2299, 1
        %v2301 = vadd.f32 %v2299, %v2300
        %v2302 = vmul.f32 %v2266, %v2266
        %v2303 = vmul.f32 %v2267, %v2267
        %v2304 = vmul.f32 %v2268, %v2268
        %v2305 = vmul.f32 %v2269, %v2269
        %v2306 = vmul.f32 %v2270, %v2270
        %v2307 = vmul.f32 %v2271, %v2271
        %v2308 = vmul.f32 %v2272, %v2272
        %v2309 = vmul.f32 %v2273, %v2273
        %v2310 = vadd.f32 %v2302, %v2306
        %v2311 = vrot.slane %v2310, 4
        %v2312 = vadd.f32 %v2310, %v2311
        %v2313 = vrot.slane %v2312, 2
        %v2314 = vadd.f32 %v2312, %v2313
        %v2315 = vrot.slane %v2314, 1
        %v2316 = vadd.f32 %v2314, %v2315
        %v2317 = vadd.f32 %v2303, %v2307
        %v2318 = vrot.slane %v2317, 4
        %v2319 = vadd.f32 %v2317, %v2318
        %v2320 = vrot.slane %v2319, 2
        %v2321 = vadd.f32 %v2319, %v2320
        %v2322 = vrot.slane %v2321, 1
        %v2323 = vadd.f32 %v2321, %v2322
        %v2324 = vadd.f32 %v2304, %v2308
        %v2325 = vrot.slane %v2324, 4
        %v2326 = vadd.f32 %v2324, %v2325
        %v2327 = vrot.slane %v2326, 2
        %v2328 = vadd.f32 %v2326, %v2327
        %v2329 = vrot.slane %v2328, 1
        %v2330 = vadd.f32 %v2328, %v2329
        %v2331 = vadd.f32 %v2305, %v2309
        %v2332 = vrot.slane %v2331, 4
        %v2333 = vadd.f32 %v2331, %v2332
        %v2334 = vrot.slane %v2333, 2
        %v2335 = vadd.f32 %v2333, %v2334
        %v2336 = vrot.slane %v2335, 1
        %v2337 = vadd.f32 %v2335, %v2336
        %vm2338 = vcmask 1040384
        %v2339 = vsel %vm2338, %v2280, %v2316
        %v2340 = vsel %vm2338, %v2287, %v2323
        %v2341 = vsel %vm2338, %v2294, %v2330
        %v2342 = vsel %vm2338, %v2301, %v2337
        %v2343 = vld [vmem:[#allocation10] sm:$0xff]
        %v2344 = vld [vmem:[#allocation10 + $0x8] sm:$0xff]
        %v2345 = vld [vmem:[#allocation10 + $0x10] sm:$0xff]
        %v2346 = vld [vmem:[#allocation10 + $0x18] sm:$0xff]
        %v2347 = vld [vmem:[#allocation10 + $0x20] sm:$0xff]
        %v2348 = vld [vmem:[#allocation10 + $0x28] sm:$0xff]
        %v2349 = vld [vmem:[#allocation10 + $0x30] sm:$0xff]
        %v2350 = vld [vmem:[#allocation10 + $0x38] sm:$0xff]
        %v2351 = vld [vmem:[#allocation10 + $0x40] sm:$0xff]
        %v2352 = vld [vmem:[#allocation10 + $0x48] sm:$0xff]
        %v2353 = vld [vmem:[#allocation10 + $0x50] sm:$0xff]
        %v2354 = vld [vmem:[#allocation10 + $0x58] sm:$0xff]
        %v2355 = vld [vmem:[#allocation10 + $0x60] sm:$0xff]
        %v2356 = vld [vmem:[#allocation10 + $0x68] sm:$0xff]
        %v2357 = vld [vmem:[#allocation10 + $0x70] sm:$0xff]
        %v2358 = vld [vmem:[#allocation10 + $0x78] sm:$0xff]
        %v2359 = vld [vmem:[#allocation10 + $0x80] sm:$0xff]
        %v2360 = vld [vmem:[#allocation10 + $0x88] sm:$0xff]
        %v2361 = vld [vmem:[#allocation10 + $0x90] sm:$0xff]
        %v2362 = vld [vmem:[#allocation10 + $0x98] sm:$0xff]
        %v2363 = vld [vmem:[#allocation10 + $0xa0] sm:$0xff]
        %v2364 = vld [vmem:[#allocation10 + $0xa8] sm:$0xff]
        %v2365 = vld [vmem:[#allocation10 + $0xb0] sm:$0xff]
        %v2366 = vld [vmem:[#allocation10 + $0xb8] sm:$0xff]
        %v2367 = vld [vmem:[#allocation10 + $0xc0] sm:$0xff]
        %v2368 = vld [vmem:[#allocation10 + $0xc8] sm:$0xff]
        %v2369 = vld [vmem:[#allocation10 + $0xd0] sm:$0xff]
        %v2370 = vld [vmem:[#allocation10 + $0xd8] sm:$0xff]
        %v2371 = vld [vmem:[#allocation10 + $0xe0] sm:$0xff]
        %v2372 = vld [vmem:[#allocation10 + $0xe8] sm:$0xff]
        %v2373 = vld [vmem:[#allocation10 + $0xf0] sm:$0xff]
        %v2374 = vld [vmem:[#allocation10 + $0xf8] sm:$0xff]
        %v2375 = vld [vmem:[#allocation10 + $0x100] sm:$0xff]
        %v2376 = vld [vmem:[#allocation10 + $0x108] sm:$0xff]
        %v2377 = vld [vmem:[#allocation10 + $0x110] sm:$0xff]
        %v2378 = vld [vmem:[#allocation10 + $0x118] sm:$0xff]
        %v2379 = vld [vmem:[#allocation10 + $0x120] sm:$0xff]
        %v2380 = vld [vmem:[#allocation10 + $0x128] sm:$0xff]
        %v2381 = vld [vmem:[#allocation10 + $0x130] sm:$0xff]
        %v2382 = vld [vmem:[#allocation10 + $0x138] sm:$0xff]
        %v2383 = vld [vmem:[#allocation10 + $0x140] sm:$0xff]
        %v2384 = vld [vmem:[#allocation10 + $0x148] sm:$0xff]
        %v2385 = vld [vmem:[#allocation10 + $0x150] sm:$0xff]
        %v2386 = vld [vmem:[#allocation10 + $0x158] sm:$0xff]
        %v2387 = vld [vmem:[#allocation10 + $0x160] sm:$0xff]
        %v2388 = vld [vmem:[#allocation10 + $0x168] sm:$0xff]
        %v2389 = vld [vmem:[#allocation10 + $0x170] sm:$0xff]
        %v2390 = vld [vmem:[#allocation10 + $0x178] sm:$0xff]
        %v2391 = vld [vmem:[#allocation10 + $0x180] sm:$0xff]
        %v2392 = vld [vmem:[#allocation10 + $0x188] sm:$0xff]
        %v2393 = vld [vmem:[#allocation10 + $0x190] sm:$0xff]
        %v2394 = vld [vmem:[#allocation10 + $0x198] sm:$0xff]
        %v2395 = vld [vmem:[#allocation10 + $0x1a0] sm:$0xff]
        %v2396 = vld [vmem:[#allocation10 + $0x1a8] sm:$0xff]
        %v2397 = vld [vmem:[#allocation10 + $0x1b0] sm:$0xff]
        %v2398 = vld [vmem:[#allocation10 + $0x1b8] sm:$0xff]
        %v2399 = vld [vmem:[#allocation10 + $0x1c0] sm:$0xff]
        %v2400 = vld [vmem:[#allocation10 + $0x1c8] sm:$0xff]
        %v2401 = vld [vmem:[#allocation10 + $0x1d0] sm:$0xff]
        %v2402 = vld [vmem:[#allocation10 + $0x1d8] sm:$0xff]
        %v2403 = vld [vmem:[#allocation10 + $0x1e0] sm:$0xff]
        %v2404 = vld [vmem:[#allocation10 + $0x1e8] sm:$0xff]
        %v2405 = vld [vmem:[#allocation10 + $0x1f0] sm:$0xff]
        %v2406 = vld [vmem:[#allocation10 + $0x1f8] sm:$0xff]
        %v2407 = vld [vmem:[#allocation10 + $0x200] sm:$0xff]
        %v2408 = vld [vmem:[#allocation10 + $0x208] sm:$0xff]
        %v2409 = vld [vmem:[#allocation10 + $0x210] sm:$0xff]
        %v2410 = vld [vmem:[#allocation10 + $0x218] sm:$0xff]
        %v2411 = vld [vmem:[#allocation10 + $0x220] sm:$0xff]
        %v2412 = vld [vmem:[#allocation10 + $0x228] sm:$0xff]
        %v2413 = vld [vmem:[#allocation10 + $0x230] sm:$0xff]
        %v2414 = vld [vmem:[#allocation10 + $0x238] sm:$0xff]
        %v2415 = vld [vmem:[#allocation10 + $0x240] sm:$0xff]
        %v2416 = vld [vmem:[#allocation10 + $0x248] sm:$0xff]
        %v2417 = vld [vmem:[#allocation10 + $0x250] sm:$0xff]
        %v2418 = vld [vmem:[#allocation10 + $0x258] sm:$0xff]
        %v2419 = vld [vmem:[#allocation10 + $0x260] sm:$0xff]
        %v2420 = vld [vmem:[#allocation10 + $0x268] sm:$0xff]
        %v2421 = vld [vmem:[#allocation10 + $0x270] sm:$0xff]
        %v2422 = vld [vmem:[#allocation10 + $0x278] sm:$0xff]
        %v2423 = vld [vmem:[#allocation10 + $0x280] sm:$0xff]
        %v2424 = vld [vmem:[#allocation10 + $0x288] sm:$0xff]
        %v2425 = vld [vmem:[#allocation10 + $0x290] sm:$0xff]
        %v2426 = vld [vmem:[#allocation10 + $0x298] sm:$0xff]
        %v2427 = vld [vmem:[#allocation10 + $0x2a0] sm:$0xff]
        %v2428 = vld [vmem:[#allocation10 + $0x2a8] sm:$0xff]
        %v2429 = vld [vmem:[#allocation10 + $0x2b0] sm:$0xff]
        %v2430 = vld [vmem:[#allocation10 + $0x2b8] sm:$0xff]
        %v2431 = vld [vmem:[#allocation10 + $0x2c0] sm:$0xff]
        %v2432 = vld [vmem:[#allocation10 + $0x2c8] sm:$0xff]
        %v2433 = vld [vmem:[#allocation10 + $0x2d0] sm:$0xff]
        %v2434 = vld [vmem:[#allocation10 + $0x2d8] sm:$0xff]
        %v2435 = vld [vmem:[#allocation10 + $0x2e0] sm:$0xff]
        %v2436 = vld [vmem:[#allocation10 + $0x2e8] sm:$0xff]
        %v2437 = vld [vmem:[#allocation10 + $0x2f0] sm:$0xff]
        %v2438 = vld [vmem:[#allocation10 + $0x2f8] sm:$0xff]
        %v2439 = vld [vmem:[#allocation10 + $0x300] sm:$0xff]
        %v2440 = vld [vmem:[#allocation10 + $0x308] sm:$0xff]
        %v2441 = vld [vmem:[#allocation10 + $0x310] sm:$0xff]
        %v2442 = vld [vmem:[#allocation10 + $0x318] sm:$0xff]
        %v2443 = vld [vmem:[#allocation10 + $0x320] sm:$0xff]
        %v2444 = vld [vmem:[#allocation10 + $0x328] sm:$0xff]
        %v2445 = vld [vmem:[#allocation10 + $0x330] sm:$0xff]
        %v2446 = vld [vmem:[#allocation10 + $0x338] sm:$0xff]
        %v2447 = vld [vmem:[#allocation10 + $0x340] sm:$0xff]
        %v2448 = vld [vmem:[#allocation10 + $0x348] sm:$0xff]
        %v2449 = vld [vmem:[#allocation10 + $0x350] sm:$0xff]
        %v2450 = vld [vmem:[#allocation10 + $0x358] sm:$0xff]
        %v2451 = vld [vmem:[#allocation10 + $0x360] sm:$0xff]
        %v2452 = vld [vmem:[#allocation10 + $0x368] sm:$0xff]
        %v2453 = vld [vmem:[#allocation10 + $0x370] sm:$0xff]
        %v2454 = vld [vmem:[#allocation10 + $0x378] sm:$0xff]
        %v2455 = vld [vmem:[#allocation10 + $0x380] sm:$0xff]
        %v2456 = vld [vmem:[#allocation10 + $0x388] sm:$0xff]
        %v2457 = vld [vmem:[#allocation10 + $0x390] sm:$0xff]
        %v2458 = vld [vmem:[#allocation10 + $0x398] sm:$0xff]
        %v2459 = vld [vmem:[#allocation10 + $0x3a0] sm:$0xff]
        %v2460 = vld [vmem:[#allocation10 + $0x3a8] sm:$0xff]
        %v2461 = vld [vmem:[#allocation10 + $0x3b0] sm:$0xff]
        %v2462 = vld [vmem:[#allocation10 + $0x3b8] sm:$0xff]
        %v2463 = vld [vmem:[#allocation10 + $0x3c0] sm:$0xff]
        %v2464 = vld [vmem:[#allocation10 + $0x3c8] sm:$0xff]
        %v2465 = vld [vmem:[#allocation10 + $0x3d0] sm:$0xff]
        %v2466 = vld [vmem:[#allocation10 + $0x3d8] sm:$0xff]
        %v2467 = vld [vmem:[#allocation10 + $0x3e0] sm:$0xff]
        %v2468 = vld [vmem:[#allocation10 + $0x3e8] sm:$0xff]
        %v2469 = vld [vmem:[#allocation10 + $0x3f0] sm:$0xff]
        %v2470 = vld [vmem:[#allocation10 + $0x3f8] sm:$0xff]
        %v2471 = vld [vmem:[#allocation10 + $0x400] sm:$0xff]
        %v2472 = vld [vmem:[#allocation10 + $0x408] sm:$0xff]
        %v2473 = vld [vmem:[#allocation10 + $0x410] sm:$0xff]
        %v2474 = vld [vmem:[#allocation10 + $0x418] sm:$0xff]
        %v2475 = vld [vmem:[#allocation10 + $0x420] sm:$0xff]
        %v2476 = vld [vmem:[#allocation10 + $0x428] sm:$0xff]
        %v2477 = vld [vmem:[#allocation10 + $0x430] sm:$0xff]
        %v2478 = vld [vmem:[#allocation10 + $0x438] sm:$0xff]
        %v2479 = vld [vmem:[#allocation10 + $0x440] sm:$0xff]
        %v2480 = vld [vmem:[#allocation10 + $0x448] sm:$0xff]
        %v2481 = vld [vmem:[#allocation10 + $0x450] sm:$0xff]
        %v2482 = vld [vmem:[#allocation10 + $0x458] sm:$0xff]
        %v2483 = vld [vmem:[#allocation10 + $0x460] sm:$0xff]
        %v2484 = vld [vmem:[#allocation10 + $0x468] sm:$0xff]
        %v2485 = vld [vmem:[#allocation10 + $0x470] sm:$0xff]
        %v2486 = vld [vmem:[#allocation10 + $0x478] sm:$0xff]
        %v2487 = vld [vmem:[#allocation10 + $0x480] sm:$0xff]
        %v2488 = vld [vmem:[#allocation10 + $0x488] sm:$0xff]
        %v2489 = vld [vmem:[#allocation10 + $0x490] sm:$0xff]
        %v2490 = vld [vmem:[#allocation10 + $0x498] sm:$0xff]
        %v2491 = vld [vmem:[#allocation10 + $0x4a0] sm:$0xff]
        %v2492 = vld [vmem:[#allocation10 + $0x4a8] sm:$0xff]
        %v2493 = vld [vmem:[#allocation10 + $0x4b0] sm:$0xff]
        %v2494 = vld [vmem:[#allocation10 + $0x4b8] sm:$0xff]
        %v2495 = vld [vmem:[#allocation10 + $0x4c0] sm:$0xff]
        %v2496 = vld [vmem:[#allocation10 + $0x4c8] sm:$0xff]
        %v2497 = vld [vmem:[#allocation10 + $0x4d0] sm:$0xff]
        %v2498 = vld [vmem:[#allocation10 + $0x4d8] sm:$0xff]
        %v2499 = vld [vmem:[#allocation10 + $0x4e0] sm:$0xff]
        %v2500 = vld [vmem:[#allocation10 + $0x4e8] sm:$0xff]
        %v2501 = vld [vmem:[#allocation10 + $0x4f0] sm:$0xff]
        %v2502 = vld [vmem:[#allocation10 + $0x4f8] sm:$0xff]
        %v2503 = vld [vmem:[#allocation10 + $0x500] sm:$0xff]
        %v2504 = vld [vmem:[#allocation10 + $0x508] sm:$0xff]
        %v2505 = vld [vmem:[#allocation10 + $0x510] sm:$0xff]
        %v2506 = vld [vmem:[#allocation10 + $0x518] sm:$0xff]
        %v2507 = vld [vmem:[#allocation10 + $0x520] sm:$0xff]
        %v2508 = vld [vmem:[#allocation10 + $0x528] sm:$0xff]
        %v2509 = vld [vmem:[#allocation10 + $0x530] sm:$0xff]
        %v2510 = vld [vmem:[#allocation10 + $0x538] sm:$0xff]
        %v2511 = vld [vmem:[#allocation10 + $0x540] sm:$0xff]
        %v2512 = vld [vmem:[#allocation10 + $0x548] sm:$0xff]
        %v2513 = vld [vmem:[#allocation10 + $0x550] sm:$0xff]
        %v2514 = vld [vmem:[#allocation10 + $0x558] sm:$0xff]
        %v2515 = vld [vmem:[#allocation10 + $0x560] sm:$0xff]
        %v2516 = vld [vmem:[#allocation10 + $0x568] sm:$0xff]
        %v2517 = vld [vmem:[#allocation10 + $0x570] sm:$0xff]
        %v2518 = vld [vmem:[#allocation10 + $0x578] sm:$0xff]
        %v2519 = vld [vmem:[#allocation10 + $0x580] sm:$0xff]
        %v2520 = vld [vmem:[#allocation10 + $0x588] sm:$0xff]
        %v2521 = vld [vmem:[#allocation10 + $0x590] sm:$0xff]
        %v2522 = vld [vmem:[#allocation10 + $0x598] sm:$0xff]
        %v2523 = vld [vmem:[#allocation10 + $0x5a0] sm:$0xff]
        %v2524 = vld [vmem:[#allocation10 + $0x5a8] sm:$0xff]
        %v2525 = vld [vmem:[#allocation10 + $0x5b0] sm:$0xff]
        %v2526 = vld [vmem:[#allocation10 + $0x5b8] sm:$0xff]
        %v2527 = vld [vmem:[#allocation10 + $0x5c0] sm:$0xff]
        %v2528 = vld [vmem:[#allocation10 + $0x5c8] sm:$0xff]
        %v2529 = vld [vmem:[#allocation10 + $0x5d0] sm:$0xff]
        %v2530 = vld [vmem:[#allocation10 + $0x5d8] sm:$0xff]
        %v2531 = vld [vmem:[#allocation10 + $0x5e0] sm:$0xff]
        %v2532 = vld [vmem:[#allocation10 + $0x5e8] sm:$0xff]
        %v2533 = vld [vmem:[#allocation10 + $0x5f0] sm:$0xff]
        %v2534 = vld [vmem:[#allocation10 + $0x5f8] sm:$0xff]
        %v2535 = vld [vmem:[#allocation10 + $0x600] sm:$0xff]
        %v2536 = vld [vmem:[#allocation10 + $0x608] sm:$0xff]
        %v2537 = vld [vmem:[#allocation10 + $0x610] sm:$0xff]
        %v2538 = vld [vmem:[#allocation10 + $0x618] sm:$0xff]
        %v2539 = vld [vmem:[#allocation10 + $0x620] sm:$0xff]
        %v2540 = vld [vmem:[#allocation10 + $0x628] sm:$0xff]
        %v2541 = vld [vmem:[#allocation10 + $0x630] sm:$0xff]
        %v2542 = vld [vmem:[#allocation10 + $0x638] sm:$0xff]
        %v2543 = vld [vmem:[#allocation10 + $0x640] sm:$0xff]
        %v2544 = vld [vmem:[#allocation10 + $0x648] sm:$0xff]
        %v2545 = vld [vmem:[#allocation10 + $0x650] sm:$0xff]
        %v2546 = vld [vmem:[#allocation10 + $0x658] sm:$0xff]
        %v2547 = vld [vmem:[#allocation10 + $0x660] sm:$0xff]
        %v2548 = vld [vmem:[#allocation10 + $0x668] sm:$0xff]
        %v2549 = vld [vmem:[#allocation10 + $0x670] sm:$0xff]
        %v2550 = vld [vmem:[#allocation10 + $0x678] sm:$0xff]
        %v2551 = vld [vmem:[#allocation10 + $0x680] sm:$0xff]
        %v2552 = vld [vmem:[#allocation10 + $0x688] sm:$0xff]
        %v2553 = vld [vmem:[#allocation10 + $0x690] sm:$0xff]
        %v2554 = vld [vmem:[#allocation10 + $0x698] sm:$0xff]
        %v2555 = vld [vmem:[#allocation10 + $0x6a0] sm:$0xff]
        %v2556 = vld [vmem:[#allocation10 + $0x6a8] sm:$0xff]
        %v2557 = vld [vmem:[#allocation10 + $0x6b0] sm:$0xff]
        %v2558 = vld [vmem:[#allocation10 + $0x6b8] sm:$0xff]
        %v2559 = vld [vmem:[#allocation10 + $0x6c0] sm:$0xff]
        %v2560 = vld [vmem:[#allocation10 + $0x6c8] sm:$0xff]
        %v2561 = vld [vmem:[#allocation10 + $0x6d0] sm:$0xff]
        %v2562 = vld [vmem:[#allocation10 + $0x6d8] sm:$0xff]
        %v2563 = vld [vmem:[#allocation10 + $0x6e0] sm:$0xff]
        %v2564 = vld [vmem:[#allocation10 + $0x6e8] sm:$0xff]
        %v2565 = vld [vmem:[#allocation10 + $0x6f0] sm:$0xff]
        %v2566 = vld [vmem:[#allocation10 + $0x6f8] sm:$0xff]
        %v2567 = vld [vmem:[#allocation10 + $0x700] sm:$0xff]
        %v2568 = vld [vmem:[#allocation10 + $0x708] sm:$0xff]
        %v2569 = vld [vmem:[#allocation10 + $0x710] sm:$0xff]
        %v2570 = vld [vmem:[#allocation10 + $0x718] sm:$0xff]
        %v2571 = vld [vmem:[#allocation10 + $0x720] sm:$0xff]
        %v2572 = vld [vmem:[#allocation10 + $0x728] sm:$0xff]
        %v2573 = vld [vmem:[#allocation10 + $0x730] sm:$0xff]
        %v2574 = vld [vmem:[#allocation10 + $0x738] sm:$0xff]
        %v2575 = vld [vmem:[#allocation10 + $0x740] sm:$0xff]
        %v2576 = vld [vmem:[#allocation10 + $0x748] sm:$0xff]
        %v2577 = vld [vmem:[#allocation10 + $0x750] sm:$0xff]
        %v2578 = vld [vmem:[#allocation10 + $0x758] sm:$0xff]
        %v2579 = vld [vmem:[#allocation10 + $0x760] sm:$0xff]
        %v2580 = vld [vmem:[#allocation10 + $0x768] sm:$0xff]
        %v2581 = vld [vmem:[#allocation10 + $0x770] sm:$0xff]
        %v2582 = vld [vmem:[#allocation10 + $0x778] sm:$0xff]
        %v2583 = vld [vmem:[#allocation10 + $0x780] sm:$0xff]
        %v2584 = vld [vmem:[#allocation10 + $0x788] sm:$0xff]
        %v2585 = vld [vmem:[#allocation10 + $0x790] sm:$0xff]
        %v2586 = vld [vmem:[#allocation10 + $0x798] sm:$0xff]
        %v2587 = vld [vmem:[#allocation10 + $0x7a0] sm:$0xff]
        %v2588 = vld [vmem:[#allocation10 + $0x7a8] sm:$0xff]
        %v2589 = vld [vmem:[#allocation10 + $0x7b0] sm:$0xff]
        %v2590 = vld [vmem:[#allocation10 + $0x7b8] sm:$0xff]
        %v2591 = vld [vmem:[#allocation10 + $0x7c0] sm:$0xff]
        %v2592 = vld [vmem:[#allocation10 + $0x7c8] sm:$0xff]
        %v2593 = vld [vmem:[#allocation10 + $0x7d0] sm:$0xff]
        %v2594 = vld [vmem:[#allocation10 + $0x7d8] sm:$0xff]
        %v2595 = vld [vmem:[#allocation10 + $0x7e0] sm:$0xff]
        %v2596 = vld [vmem:[#allocation10 + $0x7e8] sm:$0xff]
        %v2597 = vld [vmem:[#allocation10 + $0x7f0] sm:$0xff]
        %v2598 = vld [vmem:[#allocation10 + $0x7f8] sm:$0xff]
        %2599 = vmatprep.subr.mxu0 %v2404
        %2600 = vmatpush1.msra.mxu0 %v2403
        %2601 = vmatprep.subr.mxu0 %v2400
        %2602 = vmatpush1.msra.mxu0 %v2399
        %2603 = vmatprep.subr.mxu0 %v2396
        %2604 = vmatpush1.msra.mxu0 %v2395
        %2605 = vmatprep.subr.mxu0 %v2392
        %2606 = vmatpush1.msra.mxu0 %v2391
        %2607 = vmatprep.subr.mxu0 %v2388
        %2608 = vmatpush1.msra.mxu0 %v2387
        %2609 = vmatprep.subr.mxu0 %v2384
        %2610 = vmatpush1.msra.mxu0 %v2383
        %2611 = vmatprep.subr.mxu0 %v2380
        %2612 = vmatpush1.msra.mxu0 %v2379
        %2613 = vmatprep.subr.mxu0 %v2376
        %2614 = vmatpush1.msra.mxu0 %v2375
        %2615 = vmatprep.subr.mxu0 %v2372
        %2616 = vmatpush1.msra.mxu0 %v2371
        %2617 = vmatprep.subr.mxu0 %v2368
        %2618 = vmatpush1.msra.mxu0 %v2367
        %2619 = vmatprep.subr.mxu0 %v2364
        %2620 = vmatpush1.msra.mxu0 %v2363
        %2621 = vmatprep.subr.mxu0 %v2360
        %2622 = vmatpush1.msra.mxu0 %v2359
        %2623 = vmatprep.subr.mxu0 %v2356
        %2624 = vmatpush1.msra.mxu0 %v2355
        %2625 = vmatprep.subr.mxu0 %v2352
        %2626 = vmatpush1.msra.mxu0 %v2351
        %2627 = vmatprep.subr.mxu0 %v2348
        %2628 = vmatpush1.msra.mxu0 %v2347
        %2629 = vmatprep.subr.mxu0 %v2344
        %2630 = vmatpush1.msra.mxu0 %v2343
        %2631 = vmatprep.subr.mxu0 %v2468
        %2632 = vmatpush2.msra.mxu0 %v2467
        %2633 = vmatprep.subr.mxu0 %v2464
        %2634 = vmatpush2.msra.mxu0 %v2463
        %2635 = vmatprep.subr.mxu0 %v2460
        %2636 = vmatpush2.msra.mxu0 %v2459
        %2637 = vmatprep.subr.mxu0 %v2456
        %2638 = vmatpush2.msra.mxu0 %v2455
        %2639 = vmatprep.subr.mxu0 %v2452
        %2640 = vmatpush2.msra.mxu0 %v2451
        %2641 = vmatprep.subr.mxu0 %v2448
        %2642 = vmatpush2.msra.mxu0 %v2447
        %2643 = vmatprep.subr.mxu0 %v2444
        %2644 = vmatpush2.msra.mxu0 %v2443
        %2645 = vmatprep.subr.mxu0 %v2440
        %2646 = vmatpush2.msra.mxu0 %v2439
        %2647 = vmatprep.subr.mxu0 %v2436
        %2648 = vmatpush2.msra.mxu0 %v2435
        %2649 = vmatprep.subr.mxu0 %v2432
        %2650 = vmatpush2.msra.mxu0 %v2431
        %2651 = vmatprep.subr.mxu0 %v2428
        %2652 = vmatpush2.msra.mxu0 %v2427
        %2653 = vmatprep.subr.mxu0 %v2424
        %2654 = vmatpush2.msra.mxu0 %v2423
        %2655 = vmatprep.subr.mxu0 %v2420
        %2656 = vmatpush2.msra.mxu0 %v2419
        %2657 = vmatprep.subr.mxu0 %v2416
        %2658 = vmatpush2.msra.mxu0 %v2415
        %2659 = vmatprep.subr.mxu0 %v2412
        %2660 = vmatpush2.msra.mxu0 %v2411
        %2661 = vmatprep.subr.mxu0 %v2408
        %2662 = vmatpush2.msra.mxu0 %v2407
        %2663 = vmatprep.mubr.f32.mxu0 %v2340
        %2664 = vmatmul.mubr.f32.gmra.mxu0 %v2339
        %v2665 = vpop.f32.mrf.mxu0
        %v2666 = vadd.f32 0.0, %v2665
        %v2667 = vpop.f32.mrf.mxu0
        %v2668 = vadd.f32 0.0, %v2667
        %2669 = vdwg.mxu0
        %2670 = vmatprep.subr.mxu0 %v2532
        %2671 = vmatpush1.msra.mxu0 %v2531
        %2672 = vmatprep.subr.mxu0 %v2528
        %2673 = vmatpush1.msra.mxu0 %v2527
        %2674 = vmatprep.subr.mxu0 %v2524
        %2675 = vmatpush1.msra.mxu0 %v2523
        %2676 = vmatprep.subr.mxu0 %v2520
        %2677 = vmatpush1.msra.mxu0 %v2519
        %2678 = vmatprep.subr.mxu0 %v2516
        %2679 = vmatpush1.msra.mxu0 %v2515
        %2680 = vmatprep.subr.mxu0 %v2512
        %2681 = vmatpush1.msra.mxu0 %v2511
        %2682 = vmatprep.subr.mxu0 %v2508
        %2683 = vmatpush1.msra.mxu0 %v2507
        %2684 = vmatprep.subr.mxu0 %v2504
        %2685 = vmatpush1.msra.mxu0 %v2503
        %2686 = vmatprep.subr.mxu0 %v2500
        %2687 = vmatpush1.msra.mxu0 %v2499
        %2688 = vmatprep.subr.mxu0 %v2496
        %2689 = vmatpush1.msra.mxu0 %v2495
        %2690 = vmatprep.subr.mxu0 %v2492
        %2691 = vmatpush1.msra.mxu0 %v2491
        %2692 = vmatprep.subr.mxu0 %v2488
        %2693 = vmatpush1.msra.mxu0 %v2487
        %2694 = vmatprep.subr.mxu0 %v2484
        %2695 = vmatpush1.msra.mxu0 %v2483
        %2696 = vmatprep.subr.mxu0 %v2480
        %2697 = vmatpush1.msra.mxu0 %v2479
        %2698 = vmatprep.subr.mxu0 %v2476
        %2699 = vmatpush1.msra.mxu0 %v2475
        %2700 = vmatprep.subr.mxu0 %v2472
        %2701 = vmatpush1.msra.mxu0 %v2471
        %2702 = vmatprep.subr.mxu0 %v2596
        %2703 = vmatpush2.msra.mxu0 %v2595
        %2704 = vmatprep.subr.mxu0 %v2592
        %2705 = vmatpush2.msra.mxu0 %v2591
        %2706 = vmatprep.subr.mxu0 %v2588
        %2707 = vmatpush2.msra.mxu0 %v2587
        %2708 = vmatprep.subr.mxu0 %v2584
        %2709 = vmatpush2.msra.mxu0 %v2583
        %2710 = vmatprep.subr.mxu0 %v2580
        %2711 = vmatpush2.msra.mxu0 %v2579
        %2712 = vmatprep.subr.mxu0 %v2576
        %2713 = vmatpush2.msra.mxu0 %v2575
        %2714 = vmatprep.subr.mxu0 %v2572
        %2715 = vmatpush2.msra.mxu0 %v2571
        %2716 = vmatprep.subr.mxu0 %v2568
        %2717 = vmatpush2.msra.mxu0 %v2567
        %2718 = vmatprep.subr.mxu0 %v2564
        %2719 = vmatpush2.msra.mxu0 %v2563
        %2720 = vmatprep.subr.mxu0 %v2560
        %2721 = vmatpush2.msra.mxu0 %v2559
        %2722 = vmatprep.subr.mxu0 %v2556
        %2723 = vmatpush2.msra.mxu0 %v2555
        %2724 = vmatprep.subr.mxu0 %v2552
        %2725 = vmatpush2.msra.mxu0 %v2551
        %2726 = vmatprep.subr.mxu0 %v2548
        %2727 = vmatpush2.msra.mxu0 %v2547
        %2728 = vmatprep.subr.mxu0 %v2544
        %2729 = vmatpush2.msra.mxu0 %v2543
        %2730 = vmatprep.subr.mxu0 %v2540
        %2731 = vmatpush2.msra.mxu0 %v2539
        %2732 = vmatprep.subr.mxu0 %v2536
        %2733 = vmatpush2.msra.mxu0 %v2535
        %2734 = vmatprep.mubr.f32.mxu0 %v2342
        %2735 = vmatmul.mubr.f32.gmra.mxu0 %v2341
        %v2736 = vpop.f32.mrf.mxu0
        %v2737 = vadd.f32 %v2666, %v2736
        %v2738 = vpop.f32.mrf.mxu0
        %v2739 = vadd.f32 %v2668, %v2738
        %2740 = vdwg.mxu0
        %2741 = vmatprep.subr.mxu0 %v2406
        %2742 = vmatpush1.msra.mxu0 %v2405
        %2743 = vmatprep.subr.mxu0 %v2402
        %2744 = vmatpush1.msra.mxu0 %v2401
        %2745 = vmatprep.subr.mxu0 %v2398
        %2746 = vmatpush1.msra.mxu0 %v2397
        %2747 = vmatprep.subr.mxu0 %v2394
        %2748 = vmatpush1.msra.mxu0 %v2393
        %2749 = vmatprep.subr.mxu0 %v2390
        %2750 = vmatpush1.msra.mxu0 %v2389
        %2751 = vmatprep.subr.mxu0 %v2386
        %2752 = vmatpush1.msra.mxu0 %v2385
        %2753 = vmatprep.subr.mxu0 %v2382
        %2754 = vmatpush1.msra.mxu0 %v2381
        %2755 = vmatprep.subr.mxu0 %v2378
        %2756 = vmatpush1.msra.mxu0 %v2377
        %2757 = vmatprep.subr.mxu0 %v2374
        %2758 = vmatpush1.msra.mxu0 %v2373
        %2759 = vmatprep.subr.mxu0 %v2370
        %2760 = vmatpush1.msra.mxu0 %v2369
        %2761 = vmatprep.subr.mxu0 %v2366
        %2762 = vmatpush1.msra.mxu0 %v2365
        %2763 = vmatprep.subr.mxu0 %v2362
        %2764 = vmatpush1.msra.mxu0 %v2361
        %2765 = vmatprep.subr.mxu0 %v2358
        %2766 = vmatpush1.msra.mxu0 %v2357
        %2767 = vmatprep.subr.mxu0 %v2354
        %2768 = vmatpush1.msra.mxu0 %v2353
        %2769 = vmatprep.subr.mxu0 %v2350
        %2770 = vmatpush1.msra.mxu0 %v2349
        %2771 = vmatprep.subr.mxu0 %v2346
        %2772 = vmatpush1.msra.mxu0 %v2345
        %2773 = vmatprep.subr.mxu0 %v2470
        %2774 = vmatpush2.msra.mxu0 %v2469
        %2775 = vmatprep.subr.mxu0 %v2466
        %2776 = vmatpush2.msra.mxu0 %v2465
        %2777 = vmatprep.subr.mxu0 %v2462
        %2778 = vmatpush2.msra.mxu0 %v2461
        %2779 = vmatprep.subr.mxu0 %v2458
        %2780 = vmatpush2.msra.mxu0 %v2457
        %2781 = vmatprep.subr.mxu0 %v2454
        %2782 = vmatpush2.msra.mxu0 %v2453
        %2783 = vmatprep.subr.mxu0 %v2450
        %2784 = vmatpush2.msra.mxu0 %v2449
        %2785 = vmatprep.subr.mxu0 %v2446
        %2786 = vmatpush2.msra.mxu0 %v2445
        %2787 = vmatprep.subr.mxu0 %v2442
        %2788 = vmatpush2.msra.mxu0 %v2441
        %2789 = vmatprep.subr.mxu0 %v2438
        %2790 = vmatpush2.msra.mxu0 %v2437
        %2791 = vmatprep.subr.mxu0 %v2434
        %2792 = vmatpush2.msra.mxu0 %v2433
        %2793 = vmatprep.subr.mxu0 %v2430
        %2794 = vmatpush2.msra.mxu0 %v2429
        %2795 = vmatprep.subr.mxu0 %v2426
        %2796 = vmatpush2.msra.mxu0 %v2425
        %2797 = vmatprep.subr.mxu0 %v2422
        %2798 = vmatpush2.msra.mxu0 %v2421
        %2799 = vmatprep.subr.mxu0 %v2418
        %2800 = vmatpush2.msra.mxu0 %v2417
        %2801 = vmatprep.subr.mxu0 %v2414
        %2802 = vmatpush2.msra.mxu0 %v2413
        %2803 = vmatprep.subr.mxu0 %v2410
        %2804 = vmatpush2.msra.mxu0 %v2409
        %2805 = vmatprep.mubr.f32.mxu0 %v2340
        %2806 = vmatmul.mubr.f32.gmra.mxu0 %v2339
        %v2807 = vpop.f32.mrf.mxu0
        %v2808 = vadd.f32 0.0, %v2807
        %v2809 = vpop.f32.mrf.mxu0
        %v2810 = vadd.f32 0.0, %v2809
        %2811 = vdwg.mxu0
        %2812 = vmatprep.subr.mxu0 %v2534
        %2813 = vmatpush1.msra.mxu0 %v2533
        %2814 = vmatprep.subr.mxu0 %v2530
        %2815 = vmatpush1.msra.mxu0 %v2529
        %2816 = vmatprep.subr.mxu0 %v2526
        %2817 = vmatpush1.msra.mxu0 %v2525
        %2818 = vmatprep.subr.mxu0 %v2522
        %2819 = vmatpush1.msra.mxu0 %v2521
        %2820 = vmatprep.subr.mxu0 %v2518
        %2821 = vmatpush1.msra.mxu0 %v2517
        %2822 = vmatprep.subr.mxu0 %v2514
        %2823 = vmatpush1.msra.mxu0 %v2513
        %2824 = vmatprep.subr.mxu0 %v2510
        %2825 = vmatpush1.msra.mxu0 %v2509
        %2826 = vmatprep.subr.mxu0 %v2506
        %2827 = vmatpush1.msra.mxu0 %v2505
        %2828 = vmatprep.subr.mxu0 %v2502
        %2829 = vmatpush1.msra.mxu0 %v2501
        %2830 = vmatprep.subr.mxu0 %v2498
        %2831 = vmatpush1.msra.mxu0 %v2497
        %2832 = vmatprep.subr.mxu0 %v2494
        %2833 = vmatpush1.msra.mxu0 %v2493
        %2834 = vmatprep.subr.mxu0 %v2490
        %2835 = vmatpush1.msra.mxu0 %v2489
        %2836 = vmatprep.subr.mxu0 %v2486
        %2837 = vmatpush1.msra.mxu0 %v2485
        %2838 = vmatprep.subr.mxu0 %v2482
        %2839 = vmatpush1.msra.mxu0 %v2481
        %2840 = vmatprep.subr.mxu0 %v2478
        %2841 = vmatpush1.msra.mxu0 %v2477
        %2842 = vmatprep.subr.mxu0 %v2474
        %2843 = vmatpush1.msra.mxu0 %v2473
        %2844 = vmatprep.subr.mxu0 %v2598
        %2845 = vmatpush2.msra.mxu0 %v2597
        %2846 = vmatprep.subr.mxu0 %v2594
        %2847 = vmatpush2.msra.mxu0 %v2593
        %2848 = vmatprep.subr.mxu0 %v2590
        %2849 = vmatpush2.msra.mxu0 %v2589
        %2850 = vmatprep.subr.mxu0 %v2586
        %2851 = vmatpush2.msra.mxu0 %v2585
        %2852 = vmatprep.subr.mxu0 %v2582
        %2853 = vmatpush2.msra.mxu0 %v2581
        %2854 = vmatprep.subr.mxu0 %v2578
        %2855 = vmatpush2.msra.mxu0 %v2577
        %2856 = vmatprep.subr.mxu0 %v2574
        %2857 = vmatpush2.msra.mxu0 %v2573
        %2858 = vmatprep.subr.mxu0 %v2570
        %2859 = vmatpush2.msra.mxu0 %v2569
        %2860 = vmatprep.subr.mxu0 %v2566
        %2861 = vmatpush2.msra.mxu0 %v2565
        %2862 = vmatprep.subr.mxu0 %v2562
        %2863 = vmatpush2.msra.mxu0 %v2561
        %2864 = vmatprep.subr.mxu0 %v2558
        %2865 = vmatpush2.msra.mxu0 %v2557
        %2866 = vmatprep.subr.mxu0 %v2554
        %2867 = vmatpush2.msra.mxu0 %v2553
        %2868 = vmatprep.subr.mxu0 %v2550
        %2869 = vmatpush2.msra.mxu0 %v2549
        %2870 = vmatprep.subr.mxu0 %v2546
        %2871 = vmatpush2.msra.mxu0 %v2545
        %2872 = vmatprep.subr.mxu0 %v2542
        %2873 = vmatpush2.msra.mxu0 %v2541
        %2874 = vmatprep.subr.mxu0 %v2538
        %2875 = vmatpush2.msra.mxu0 %v2537
        %2876 = vmatprep.mubr.f32.mxu0 %v2342
        %2877 = vmatmul.mubr.f32.gmra.mxu0 %v2341
        %v2878 = vpop.f32.mrf.mxu0
        %v2879 = vadd.f32 %v2808, %v2878
        %v2880 = vpop.f32.mrf.mxu0
        %v2881 = vadd.f32 %v2810, %v2880
        %2882 = vdwg.mxu0
        %v2883 = vmul.f32 %v2737, %v2737
        %v2884 = vmul.f32 %v2739, %v2739
        %v2885 = vmul.f32 %v2879, %v2879
        %v2886 = vmul.f32 %v2881, %v2881
        %v2891 = vrot.slane %v2883, 7
        %v2892 = vrot.slane %v2884, 7
        %v2893 = vrot.slane %v2885, 7
        %v2894 = vrot.slane %v2886, 7
        %v2899 = vsub.f32 %v2737, %v2891
        %v2900 = vsub.f32 %v2739, %v2892
        %v2901 = vsub.f32 %v2879, %v2893
        %v2902 = vsub.f32 %v2881, %v2894
        %v2903 = vmax.f32 %v2899, 0.0
        %v2904 = vmax.f32 %v2900, 0.0
        %v2905 = vmax.f32 %v2901, 0.0
        %v2906 = vmax.f32 %v2902, 0.0
        %v2907 = vadd.f32 %v2903, 1e-05
        %v2908 = vadd.f32 %v2904, 1e-05
        %v2909 = vadd.f32 %v2905, 1e-05
        %v2910 = vadd.f32 %v2906, 1e-05
        %v2911 = vrsqrt.pop %v2907
        %v2912 = vrsqrt.pop %v2908
        %v2913 = vrsqrt.pop %v2909
        %v2914 = vrsqrt.pop %v2910
        %v2919 = vcombine.low %v2911, %v2912
        %v2920 = vcombine.low %v2913, %v2914
        %v2922 = vunpack.c.l.s4 1966171168
        %v2923 = vunpack.c.0.s8 %v2922
        %v2924 = vlaneseq
        %v2925 = vshrl.u32 %v2924, 7
        %v2926 = vsub.s32 %v2923, %v2925
        %v2927 = vrot.slane %v2919, %v2926
        %v2929 = vunpack.c.l.s4 1966171168
        %v2930 = vunpack.c.0.s8 %v2929
        %v2931 = vlaneseq
        %v2932 = vshrl.u32 %v2931, 7
        %v2933 = vsub.s32 %v2930, %v2932
        %v2934 = vrot.slane %v2920, %v2933
        %v2935 = vcombine.high %v2927, %v2934
        %v2937 = vunpack.c.l.s4 1966171168
        %v2938 = vunpack.c.0.s8 %v2937
        %v2939 = vlaneseq
        %v2940 = vshrl.u32 %v2939, 7
        %v2941 = vsub.s32 %v2938, %v2940
        %v2942 = vrot.slane %v2935, %v2941
        %v2944 = vmul.f32 %v366, %v2942
        %v2946 = vlaneseq
        %v2947 = vshrl.u32 %v2946, 7
        %v2948 = vsub.s32 0, %v2947
        %v2949 = vrot.slane %v2944, %v2948
        %v2950 = vlaneseq
        %v2951 = vshrl.u32 %v2950, 7
        %v2952 = vsub.s32 1, %v2951
        %v2953 = vrot.slane %v2944, %v2952
        %v2954 = vlaneseq
        %v2955 = vshrl.u32 %v2954, 7
        %v2956 = vsub.s32 2, %v2955
        %v2957 = vrot.slane %v2944, %v2956
        %v2958 = vlaneseq
        %v2959 = vshrl.u32 %v2958, 7
        %v2960 = vsub.s32 3, %v2959
        %v2961 = vrot.slane %v2944, %v2960
        %v2966 = vmul.f32 %v2737, %v2949
        %v2967 = vmul.f32 %v2739, %v2953
        %v2968 = vmul.f32 %v2879, %v2957
        %v2969 = vmul.f32 %v2881, %v2961
        %v2974 = vcombine.low %v2966, %v2967
        %v2975 = vcombine.low %v2968, %v2969
        %v2977 = vunpack.c.l.s4 1966171168
        %v2978 = vunpack.c.0.s8 %v2977
        %v2979 = vlaneseq
        %v2980 = vshrl.u32 %v2979, 7
        %v2981 = vsub.s32 %v2978, %v2980
        %v2982 = vrot.slane %v2974, %v2981
        %v2984 = vunpack.c.l.s4 1966171168
        %v2985 = vunpack.c.0.s8 %v2984
        %v2986 = vlaneseq
        %v2987 = vshrl.u32 %v2986, 7
        %v2988 = vsub.s32 %v2985, %v2987
        %v2989 = vrot.slane %v2975, %v2988
        %v2990 = vcombine.low %v2982, %v2989
        %v2992 = vunpack.c.l.s4 1966171168
        %v2993 = vunpack.c.0.s8 %v2992
        %v2994 = vlaneseq
        %v2995 = vshrl.u32 %v2994, 7
        %v2996 = vsub.s32 %v2993, %v2995
        %v2997 = vrot.slane %v2990, %v2996
        %v2999 = vsub.f32 %v368, %v2997
        %v3000 = vmul.f32 %v2266, %v2949
        %v3001 = vmul.f32 %v2267, %v2953
        %v3002 = vmul.f32 %v2268, %v2957
        %v3003 = vmul.f32 %v2269, %v2961
        %v3004 = vmul.f32 %v2270, %v2949
        %v3005 = vmul.f32 %v2271, %v2953
        %v3006 = vmul.f32 %v2272, %v2957
        %v3007 = vmul.f32 %v2273, %v2961
        %v3009 = vlaneseq
        %v3010 = vshrl.u32 %v3009, 7
        %v3011 = vsub.s32 0, %v3010
        %v3012 = vrot.slane %v2999, %v3011
        %v3013 = vlaneseq
        %v3014 = vshrl.u32 %v3013, 7
        %v3015 = vsub.s32 1, %v3014
        %v3016 = vrot.slane %v2999, %v3015
        %v3017 = vlaneseq
        %v3018 = vshrl.u32 %v3017, 7
        %v3019 = vsub.s32 2, %v3018
        %v3020 = vrot.slane %v2999, %v3019
        %v3021 = vlaneseq
        %v3022 = vshrl.u32 %v3021, 7
        %v3023 = vsub.s32 3, %v3022
        %v3024 = vrot.slane %v2999, %v3023
        %v3029 = vadd.f32 %v3000, %v3012
        %v3030 = vadd.f32 %v3001, %v3016
        %v3031 = vadd.f32 %v3002, %v3020
        %v3032 = vadd.f32 %v3003, %v3024
        %v3033 = vadd.f32 %v3004, %v3012
        %v3034 = vadd.f32 %v3005, %v3016
        %v3035 = vadd.f32 %v3006, %v3020
        %v3036 = vadd.f32 %v3007, %v3024
        %vm3037 = vcmp.ge.f32.partialorder %v3029, 0.0
        %vm3038 = vcmp.ge.f32.partialorder %v3030, 0.0
        %vm3039 = vcmp.ge.f32.partialorder %v3031, 0.0
        %vm3040 = vcmp.ge.f32.partialorder %v3032, 0.0
        %vm3041 = vcmp.ge.f32.partialorder %v3033, 0.0
        %vm3042 = vcmp.ge.f32.partialorder %v3034, 0.0
        %vm3043 = vcmp.ge.f32.partialorder %v3035, 0.0
        %vm3044 = vcmp.ge.f32.partialorder %v3036, 0.0
        %v3045 = vmul.f32 %v3029, 0.01
        %v3046 = vmul.f32 %v3030, 0.01
        %v3047 = vmul.f32 %v3031, 0.01
        %v3048 = vmul.f32 %v3032, 0.01
        %v3049 = vmul.f32 %v3033, 0.01
        %v3050 = vmul.f32 %v3034, 0.01
        %v3051 = vmul.f32 %v3035, 0.01
        %v3052 = vmul.f32 %v3036, 0.01
        %v3053 = vsel %vm3037, %v3029, %v3045
        %v3054 = vsel %vm3038, %v3030, %v3046
        %v3055 = vsel %vm3039, %v3031, %v3047
        %v3056 = vsel %vm3040, %v3032, %v3048
        %v3057 = vsel %vm3041, %v3033, %v3049
        %v3058 = vsel %vm3042, %v3034, %v3050
        %v3059 = vsel %vm3043, %v3035, %v3051
        %v3060 = vsel %vm3044, %v3036, %v3052
        %v3061 = vpack.c.bf16 %v3057, %v3053
        %v3062 = vpack.c.bf16 %v3058, %v3054
        %v3063 = vpack.c.bf16 %v3059, %v3055
        %v3064 = vpack.c.bf16 %v3060, %v3056
        %v3065 = vld [vmem:[#allocation7] sm:$0xff]
        %v3066 = vld [vmem:[#allocation7 + $0x8] sm:$0xff]
        %v3067 = vld [vmem:[#allocation7 + $0x10] sm:$0xff]
        %v3068 = vld [vmem:[#allocation7 + $0x18] sm:$0xff]
        %v3069 = vld [vmem:[#allocation7 + $0x20] sm:$0xff]
        %v3070 = vld [vmem:[#allocation7 + $0x28] sm:$0xff]
        %v3071 = vld [vmem:[#allocation7 + $0x30] sm:$0xff]
        %v3072 = vld [vmem:[#allocation7 + $0x38] sm:$0xff]
        %v3073 = vld [vmem:[#allocation7 + $0x40] sm:$0xff]
        %v3074 = vld [vmem:[#allocation7 + $0x48] sm:$0xff]
        %v3075 = vld [vmem:[#allocation7 + $0x50] sm:$0xff]
        %v3076 = vld [vmem:[#allocation7 + $0x58] sm:$0xff]
        %v3077 = vld [vmem:[#allocation7 + $0x60] sm:$0xff]
        %v3078 = vld [vmem:[#allocation7 + $0x68] sm:$0xff]
        %v3079 = vld [vmem:[#allocation7 + $0x70] sm:$0xff]
        %v3080 = vld [vmem:[#allocation7 + $0x78] sm:$0xff]
        %v3081 = vld [vmem:[#allocation7 + $0x80] sm:$0xff]
        %v3082 = vld [vmem:[#allocation7 + $0x88] sm:$0xff]
        %v3083 = vld [vmem:[#allocation7 + $0x90] sm:$0xff]
        %v3084 = vld [vmem:[#allocation7 + $0x98] sm:$0xff]
        %v3085 = vld [vmem:[#allocation7 + $0xa0] sm:$0xff]
        %v3086 = vld [vmem:[#allocation7 + $0xa8] sm:$0xff]
        %v3087 = vld [vmem:[#allocation7 + $0xb0] sm:$0xff]
        %v3088 = vld [vmem:[#allocation7 + $0xb8] sm:$0xff]
        %v3089 = vld [vmem:[#allocation7 + $0xc0] sm:$0xff]
        %v3090 = vld [vmem:[#allocation7 + $0xc8] sm:$0xff]
        %v3091 = vld [vmem:[#allocation7 + $0xd0] sm:$0xff]
        %v3092 = vld [vmem:[#allocation7 + $0xd8] sm:$0xff]
        %v3093 = vld [vmem:[#allocation7 + $0xe0] sm:$0xff]
        %v3094 = vld [vmem:[#allocation7 + $0xe8] sm:$0xff]
        %v3095 = vld [vmem:[#allocation7 + $0xf0] sm:$0xff]
        %v3096 = vld [vmem:[#allocation7 + $0xf8] sm:$0xff]
        %v3097 = vld [vmem:[#allocation7 + $0x100] sm:$0xff]
        %v3098 = vld [vmem:[#allocation7 + $0x108] sm:$0xff]
        %v3099 = vld [vmem:[#allocation7 + $0x110] sm:$0xff]
        %v3100 = vld [vmem:[#allocation7 + $0x118] sm:$0xff]
        %v3101 = vld [vmem:[#allocation7 + $0x120] sm:$0xff]
        %v3102 = vld [vmem:[#allocation7 + $0x128] sm:$0xff]
        %v3103 = vld [vmem:[#allocation7 + $0x130] sm:$0xff]
        %v3104 = vld [vmem:[#allocation7 + $0x138] sm:$0xff]
        %v3105 = vld [vmem:[#allocation7 + $0x140] sm:$0xff]
        %v3106 = vld [vmem:[#allocation7 + $0x148] sm:$0xff]
        %v3107 = vld [vmem:[#allocation7 + $0x150] sm:$0xff]
        %v3108 = vld [vmem:[#allocation7 + $0x158] sm:$0xff]
        %v3109 = vld [vmem:[#allocation7 + $0x160] sm:$0xff]
        %v3110 = vld [vmem:[#allocation7 + $0x168] sm:$0xff]
        %v3111 = vld [vmem:[#allocation7 + $0x170] sm:$0xff]
        %v3112 = vld [vmem:[#allocation7 + $0x178] sm:$0xff]
        %v3113 = vld [vmem:[#allocation7 + $0x180] sm:$0xff]
        %v3114 = vld [vmem:[#allocation7 + $0x188] sm:$0xff]
        %v3115 = vld [vmem:[#allocation7 + $0x190] sm:$0xff]
        %v3116 = vld [vmem:[#allocation7 + $0x198] sm:$0xff]
        %v3117 = vld [vmem:[#allocation7 + $0x1a0] sm:$0xff]
        %v3118 = vld [vmem:[#allocation7 + $0x1a8] sm:$0xff]
        %v3119 = vld [vmem:[#allocation7 + $0x1b0] sm:$0xff]
        %v3120 = vld [vmem:[#allocation7 + $0x1b8] sm:$0xff]
        %v3121 = vld [vmem:[#allocation7 + $0x1c0] sm:$0xff]
        %v3122 = vld [vmem:[#allocation7 + $0x1c8] sm:$0xff]
        %v3123 = vld [vmem:[#allocation7 + $0x1d0] sm:$0xff]
        %v3124 = vld [vmem:[#allocation7 + $0x1d8] sm:$0xff]
        %v3125 = vld [vmem:[#allocation7 + $0x1e0] sm:$0xff]
        %v3126 = vld [vmem:[#allocation7 + $0x1e8] sm:$0xff]
        %v3127 = vld [vmem:[#allocation7 + $0x1f0] sm:$0xff]
        %v3128 = vld [vmem:[#allocation7 + $0x1f8] sm:$0xff]
        %v3129 = vld [vmem:[#allocation7 + $0x200] sm:$0xff]
        %v3130 = vld [vmem:[#allocation7 + $0x208] sm:$0xff]
        %v3131 = vld [vmem:[#allocation7 + $0x210] sm:$0xff]
        %v3132 = vld [vmem:[#allocation7 + $0x218] sm:$0xff]
        %v3133 = vld [vmem:[#allocation7 + $0x220] sm:$0xff]
        %v3134 = vld [vmem:[#allocation7 + $0x228] sm:$0xff]
        %v3135 = vld [vmem:[#allocation7 + $0x230] sm:$0xff]
        %v3136 = vld [vmem:[#allocation7 + $0x238] sm:$0xff]
        %v3137 = vld [vmem:[#allocation7 + $0x240] sm:$0xff]
        %v3138 = vld [vmem:[#allocation7 + $0x248] sm:$0xff]
        %v3139 = vld [vmem:[#allocation7 + $0x250] sm:$0xff]
        %v3140 = vld [vmem:[#allocation7 + $0x258] sm:$0xff]
        %v3141 = vld [vmem:[#allocation7 + $0x260] sm:$0xff]
        %v3142 = vld [vmem:[#allocation7 + $0x268] sm:$0xff]
        %v3143 = vld [vmem:[#allocation7 + $0x270] sm:$0xff]
        %v3144 = vld [vmem:[#allocation7 + $0x278] sm:$0xff]
        %v3145 = vld [vmem:[#allocation7 + $0x280] sm:$0xff]
        %v3146 = vld [vmem:[#allocation7 + $0x288] sm:$0xff]
        %v3147 = vld [vmem:[#allocation7 + $0x290] sm:$0xff]
        %v3148 = vld [vmem:[#allocation7 + $0x298] sm:$0xff]
        %v3149 = vld [vmem:[#allocation7 + $0x2a0] sm:$0xff]
        %v3150 = vld [vmem:[#allocation7 + $0x2a8] sm:$0xff]
        %v3151 = vld [vmem:[#allocation7 + $0x2b0] sm:$0xff]
        %v3152 = vld [vmem:[#allocation7 + $0x2b8] sm:$0xff]
        %v3153 = vld [vmem:[#allocation7 + $0x2c0] sm:$0xff]
        %v3154 = vld [vmem:[#allocation7 + $0x2c8] sm:$0xff]
        %v3155 = vld [vmem:[#allocation7 + $0x2d0] sm:$0xff]
        %v3156 = vld [vmem:[#allocation7 + $0x2d8] sm:$0xff]
        %v3157 = vld [vmem:[#allocation7 + $0x2e0] sm:$0xff]
        %v3158 = vld [vmem:[#allocation7 + $0x2e8] sm:$0xff]
        %v3159 = vld [vmem:[#allocation7 + $0x2f0] sm:$0xff]
        %v3160 = vld [vmem:[#allocation7 + $0x2f8] sm:$0xff]
        %v3161 = vld [vmem:[#allocation7 + $0x300] sm:$0xff]
        %v3162 = vld [vmem:[#allocation7 + $0x308] sm:$0xff]
        %v3163 = vld [vmem:[#allocation7 + $0x310] sm:$0xff]
        %v3164 = vld [vmem:[#allocation7 + $0x318] sm:$0xff]
        %v3165 = vld [vmem:[#allocation7 + $0x320] sm:$0xff]
        %v3166 = vld [vmem:[#allocation7 + $0x328] sm:$0xff]
        %v3167 = vld [vmem:[#allocation7 + $0x330] sm:$0xff]
        %v3168 = vld [vmem:[#allocation7 + $0x338] sm:$0xff]
        %v3169 = vld [vmem:[#allocation7 + $0x340] sm:$0xff]
        %v3170 = vld [vmem:[#allocation7 + $0x348] sm:$0xff]
        %v3171 = vld [vmem:[#allocation7 + $0x350] sm:$0xff]
        %v3172 = vld [vmem:[#allocation7 + $0x358] sm:$0xff]
        %v3173 = vld [vmem:[#allocation7 + $0x360] sm:$0xff]
        %v3174 = vld [vmem:[#allocation7 + $0x368] sm:$0xff]
        %v3175 = vld [vmem:[#allocation7 + $0x370] sm:$0xff]
        %v3176 = vld [vmem:[#allocation7 + $0x378] sm:$0xff]
        %v3177 = vld [vmem:[#allocation7 + $0x380] sm:$0xff]
        %v3178 = vld [vmem:[#allocation7 + $0x388] sm:$0xff]
        %v3179 = vld [vmem:[#allocation7 + $0x390] sm:$0xff]
        %v3180 = vld [vmem:[#allocation7 + $0x398] sm:$0xff]
        %v3181 = vld [vmem:[#allocation7 + $0x3a0] sm:$0xff]
        %v3182 = vld [vmem:[#allocation7 + $0x3a8] sm:$0xff]
        %v3183 = vld [vmem:[#allocation7 + $0x3b0] sm:$0xff]
        %v3184 = vld [vmem:[#allocation7 + $0x3b8] sm:$0xff]
        %v3185 = vld [vmem:[#allocation7 + $0x3c0] sm:$0xff]
        %v3186 = vld [vmem:[#allocation7 + $0x3c8] sm:$0xff]
        %v3187 = vld [vmem:[#allocation7 + $0x3d0] sm:$0xff]
        %v3188 = vld [vmem:[#allocation7 + $0x3d8] sm:$0xff]
        %v3189 = vld [vmem:[#allocation7 + $0x3e0] sm:$0xff]
        %v3190 = vld [vmem:[#allocation7 + $0x3e8] sm:$0xff]
        %v3191 = vld [vmem:[#allocation7 + $0x3f0] sm:$0xff]
        %v3192 = vld [vmem:[#allocation7 + $0x3f8] sm:$0xff]
        %v3321 = vunpack.c.l.b16 %v3065
        %v3322 = vunpack.c.h.b16 %v3065
        %v3323 = vunpack.c.l.b16 %v3066
        %v3324 = vunpack.c.h.b16 %v3066
        %v3325 = vunpack.c.l.b16 %v3067
        %v3326 = vunpack.c.h.b16 %v3067
        %v3327 = vunpack.c.l.b16 %v3068
        %v3328 = vunpack.c.h.b16 %v3068
        %v3329 = vunpack.c.l.b16 %v3069
        %v3330 = vunpack.c.h.b16 %v3069
        %v3331 = vunpack.c.l.b16 %v3070
        %v3332 = vunpack.c.h.b16 %v3070
        %v3333 = vunpack.c.l.b16 %v3071
        %v3334 = vunpack.c.h.b16 %v3071
        %v3335 = vunpack.c.l.b16 %v3072
        %v3336 = vunpack.c.h.b16 %v3072
        %v3337 = vunpack.c.l.b16 %v3073
        %v3338 = vunpack.c.h.b16 %v3073
        %v3339 = vunpack.c.l.b16 %v3074
        %v3340 = vunpack.c.h.b16 %v3074
        %v3341 = vunpack.c.l.b16 %v3075
        %v3342 = vunpack.c.h.b16 %v3075
        %v3343 = vunpack.c.l.b16 %v3076
        %v3344 = vunpack.c.h.b16 %v3076
        %v3345 = vunpack.c.l.b16 %v3077
        %v3346 = vunpack.c.h.b16 %v3077
        %v3347 = vunpack.c.l.b16 %v3078
        %v3348 = vunpack.c.h.b16 %v3078
        %v3349 = vunpack.c.l.b16 %v3079
        %v3350 = vunpack.c.h.b16 %v3079
        %v3351 = vunpack.c.l.b16 %v3080
        %v3352 = vunpack.c.h.b16 %v3080
        %v3353 = vunpack.c.l.b16 %v3081
        %v3354 = vunpack.c.h.b16 %v3081
        %v3355 = vunpack.c.l.b16 %v3082
        %v3356 = vunpack.c.h.b16 %v3082
        %v3357 = vunpack.c.l.b16 %v3083
        %v3358 = vunpack.c.h.b16 %v3083
        %v3359 = vunpack.c.l.b16 %v3084
        %v3360 = vunpack.c.h.b16 %v3084
        %v3361 = vunpack.c.l.b16 %v3085
        %v3362 = vunpack.c.h.b16 %v3085
        %v3363 = vunpack.c.l.b16 %v3086
        %v3364 = vunpack.c.h.b16 %v3086
        %v3365 = vunpack.c.l.b16 %v3087
        %v3366 = vunpack.c.h.b16 %v3087
        %v3367 = vunpack.c.l.b16 %v3088
        %v3368 = vunpack.c.h.b16 %v3088
        %v3369 = vunpack.c.l.b16 %v3089
        %v3370 = vunpack.c.h.b16 %v3089
        %v3371 = vunpack.c.l.b16 %v3090
        %v3372 = vunpack.c.h.b16 %v3090
        %v3373 = vunpack.c.l.b16 %v3091
        %v3374 = vunpack.c.h.b16 %v3091
        %v3375 = vunpack.c.l.b16 %v3092
        %v3376 = vunpack.c.h.b16 %v3092
        %v3377 = vunpack.c.l.b16 %v3093
        %v3378 = vunpack.c.h.b16 %v3093
        %v3379 = vunpack.c.l.b16 %v3094
        %v3380 = vunpack.c.h.b16 %v3094
        %v3381 = vunpack.c.l.b16 %v3095
        %v3382 = vunpack.c.h.b16 %v3095
        %v3383 = vunpack.c.l.b16 %v3096
        %v3384 = vunpack.c.h.b16 %v3096
        %v3385 = vunpack.c.l.b16 %v3097
        %v3386 = vunpack.c.h.b16 %v3097
        %v3387 = vunpack.c.l.b16 %v3098
        %v3388 = vunpack.c.h.b16 %v3098
        %v3389 = vunpack.c.l.b16 %v3099
        %v3390 = vunpack.c.h.b16 %v3099
        %v3391 = vunpack.c.l.b16 %v3100
        %v3392 = vunpack.c.h.b16 %v3100
        %v3393 = vunpack.c.l.b16 %v3101
        %v3394 = vunpack.c.h.b16 %v3101
        %v3395 = vunpack.c.l.b16 %v3102
        %v3396 = vunpack.c.h.b16 %v3102
        %v3397 = vunpack.c.l.b16 %v3103
        %v3398 = vunpack.c.h.b16 %v3103
        %v3399 = vunpack.c.l.b16 %v3104
        %v3400 = vunpack.c.h.b16 %v3104
        %v3401 = vunpack.c.l.b16 %v3105
        %v3402 = vunpack.c.h.b16 %v3105
        %v3403 = vunpack.c.l.b16 %v3106
        %v3404 = vunpack.c.h.b16 %v3106
        %v3405 = vunpack.c.l.b16 %v3107
        %v3406 = vunpack.c.h.b16 %v3107
        %v3407 = vunpack.c.l.b16 %v3108
        %v3408 = vunpack.c.h.b16 %v3108
        %v3409 = vunpack.c.l.b16 %v3109
        %v3410 = vunpack.c.h.b16 %v3109
        %v3411 = vunpack.c.l.b16 %v3110
        %v3412 = vunpack.c.h.b16 %v3110
        %v3413 = vunpack.c.l.b16 %v3111
        %v3414 = vunpack.c.h.b16 %v3111
        %v3415 = vunpack.c.l.b16 %v3112
        %v3416 = vunpack.c.h.b16 %v3112
        %v3417 = vunpack.c.l.b16 %v3113
        %v3418 = vunpack.c.h.b16 %v3113
        %v3419 = vunpack.c.l.b16 %v3114
        %v3420 = vunpack.c.h.b16 %v3114
        %v3421 = vunpack.c.l.b16 %v3115
        %v3422 = vunpack.c.h.b16 %v3115
        %v3423 = vunpack.c.l.b16 %v3116
        %v3424 = vunpack.c.h.b16 %v3116
        %v3425 = vunpack.c.l.b16 %v3117
        %v3426 = vunpack.c.h.b16 %v3117
        %v3427 = vunpack.c.l.b16 %v3118
        %v3428 = vunpack.c.h.b16 %v3118
        %v3429 = vunpack.c.l.b16 %v3119
        %v3430 = vunpack.c.h.b16 %v3119
        %v3431 = vunpack.c.l.b16 %v3120
        %v3432 = vunpack.c.h.b16 %v3120
        %v3433 = vunpack.c.l.b16 %v3121
        %v3434 = vunpack.c.h.b16 %v3121
        %v3435 = vunpack.c.l.b16 %v3122
        %v3436 = vunpack.c.h.b16 %v3122
        %v3437 = vunpack.c.l.b16 %v3123
        %v3438 = vunpack.c.h.b16 %v3123
        %v3439 = vunpack.c.l.b16 %v3124
        %v3440 = vunpack.c.h.b16 %v3124
        %v3441 = vunpack.c.l.b16 %v3125
        %v3442 = vunpack.c.h.b16 %v3125
        %v3443 = vunpack.c.l.b16 %v3126
        %v3444 = vunpack.c.h.b16 %v3126
        %v3445 = vunpack.c.l.b16 %v3127
        %v3446 = vunpack.c.h.b16 %v3127
        %v3447 = vunpack.c.l.b16 %v3128
        %v3448 = vunpack.c.h.b16 %v3128
        %v3449 = vunpack.c.l.b16 %v3129
        %v3450 = vunpack.c.h.b16 %v3129
        %v3451 = vunpack.c.l.b16 %v3130
        %v3452 = vunpack.c.h.b16 %v3130
        %v3453 = vunpack.c.l.b16 %v3131
        %v3454 = vunpack.c.h.b16 %v3131
        %v3455 = vunpack.c.l.b16 %v3132
        %v3456 = vunpack.c.h.b16 %v3132
        %v3457 = vunpack.c.l.b16 %v3133
        %v3458 = vunpack.c.h.b16 %v3133
        %v3459 = vunpack.c.l.b16 %v3134
        %v3460 = vunpack.c.h.b16 %v3134
        %v3461 = vunpack.c.l.b16 %v3135
        %v3462 = vunpack.c.h.b16 %v3135
        %v3463 = vunpack.c.l.b16 %v3136
        %v3464 = vunpack.c.h.b16 %v3136
        %v3465 = vunpack.c.l.b16 %v3137
        %v3466 = vunpack.c.h.b16 %v3137
        %v3467 = vunpack.c.l.b16 %v3138
        %v3468 = vunpack.c.h.b16 %v3138
        %v3469 = vunpack.c.l.b16 %v3139
        %v3470 = vunpack.c.h.b16 %v3139
        %v3471 = vunpack.c.l.b16 %v3140
        %v3472 = vunpack.c.h.b16 %v3140
        %v3473 = vunpack.c.l.b16 %v3141
        %v3474 = vunpack.c.h.b16 %v3141
        %v3475 = vunpack.c.l.b16 %v3142
        %v3476 = vunpack.c.h.b16 %v3142
        %v3477 = vunpack.c.l.b16 %v3143
        %v3478 = vunpack.c.h.b16 %v3143
        %v3479 = vunpack.c.l.b16 %v3144
        %v3480 = vunpack.c.h.b16 %v3144
        %v3481 = vunpack.c.l.b16 %v3145
        %v3482 = vunpack.c.h.b16 %v3145
        %v3483 = vunpack.c.l.b16 %v3146
        %v3484 = vunpack.c.h.b16 %v3146
        %v3485 = vunpack.c.l.b16 %v3147
        %v3486 = vunpack.c.h.b16 %v3147
        %v3487 = vunpack.c.l.b16 %v3148
        %v3488 = vunpack.c.h.b16 %v3148
        %v3489 = vunpack.c.l.b16 %v3149
        %v3490 = vunpack.c.h.b16 %v3149
        %v3491 = vunpack.c.l.b16 %v3150
        %v3492 = vunpack.c.h.b16 %v3150
        %v3493 = vunpack.c.l.b16 %v3151
        %v3494 = vunpack.c.h.b16 %v3151
        %v3495 = vunpack.c.l.b16 %v3152
        %v3496 = vunpack.c.h.b16 %v3152
        %v3497 = vunpack.c.l.b16 %v3153
        %v3498 = vunpack.c.h.b16 %v3153
        %v3499 = vunpack.c.l.b16 %v3154
        %v3500 = vunpack.c.h.b16 %v3154
        %v3501 = vunpack.c.l.b16 %v3155
        %v3502 = vunpack.c.h.b16 %v3155
        %v3503 = vunpack.c.l.b16 %v3156
        %v3504 = vunpack.c.h.b16 %v3156
        %v3505 = vunpack.c.l.b16 %v3157
        %v3506 = vunpack.c.h.b16 %v3157
        %v3507 = vunpack.c.l.b16 %v3158
        %v3508 = vunpack.c.h.b16 %v3158
        %v3509 = vunpack.c.l.b16 %v3159
        %v3510 = vunpack.c.h.b16 %v3159
        %v3511 = vunpack.c.l.b16 %v3160
        %v3512 = vunpack.c.h.b16 %v3160
        %v3513 = vunpack.c.l.b16 %v3161
        %v3514 = vunpack.c.h.b16 %v3161
        %v3515 = vunpack.c.l.b16 %v3162
        %v3516 = vunpack.c.h.b16 %v3162
        %v3517 = vunpack.c.l.b16 %v3163
        %v3518 = vunpack.c.h.b16 %v3163
        %v3519 = vunpack.c.l.b16 %v3164
        %v3520 = vunpack.c.h.b16 %v3164
        %v3521 = vunpack.c.l.b16 %v3165
        %v3522 = vunpack.c.h.b16 %v3165
        %v3523 = vunpack.c.l.b16 %v3166
        %v3524 = vunpack.c.h.b16 %v3166
        %v3525 = vunpack.c.l.b16 %v3167
        %v3526 = vunpack.c.h.b16 %v3167
        %v3527 = vunpack.c.l.b16 %v3168
        %v3528 = vunpack.c.h.b16 %v3168
        %v3529 = vunpack.c.l.b16 %v3169
        %v3530 = vunpack.c.h.b16 %v3169
        %v3531 = vunpack.c.l.b16 %v3170
        %v3532 = vunpack.c.h.b16 %v3170
        %v3533 = vunpack.c.l.b16 %v3171
        %v3534 = vunpack.c.h.b16 %v3171
        %v3535 = vunpack.c.l.b16 %v3172
        %v3536 = vunpack.c.h.b16 %v3172
        %v3537 = vunpack.c.l.b16 %v3173
        %v3538 = vunpack.c.h.b16 %v3173
        %v3539 = vunpack.c.l.b16 %v3174
        %v3540 = vunpack.c.h.b16 %v3174
        %v3541 = vunpack.c.l.b16 %v3175
        %v3542 = vunpack.c.h.b16 %v3175
        %v3543 = vunpack.c.l.b16 %v3176
        %v3544 = vunpack.c.h.b16 %v3176
        %v3545 = vunpack.c.l.b16 %v3177
        %v3546 = vunpack.c.h.b16 %v3177
        %v3547 = vunpack.c.l.b16 %v3178
        %v3548 = vunpack.c.h.b16 %v3178
        %v3549 = vunpack.c.l.b16 %v3179
        %v3550 = vunpack.c.h.b16 %v3179
        %v3551 = vunpack.c.l.b16 %v3180
        %v3552 = vunpack.c.h.b16 %v3180
        %v3553 = vunpack.c.l.b16 %v3181
        %v3554 = vunpack.c.h.b16 %v3181
        %v3555 = vunpack.c.l.b16 %v3182
        %v3556 = vunpack.c.h.b16 %v3182
        %v3557 = vunpack.c.l.b16 %v3183
        %v3558 = vunpack.c.h.b16 %v3183
        %v3559 = vunpack.c.l.b16 %v3184
        %v3560 = vunpack.c.h.b16 %v3184
        %v3561 = vunpack.c.l.b16 %v3185
        %v3562 = vunpack.c.h.b16 %v3185
        %v3563 = vunpack.c.l.b16 %v3186
        %v3564 = vunpack.c.h.b16 %v3186
        %v3565 = vunpack.c.l.b16 %v3187
        %v3566 = vunpack.c.h.b16 %v3187
        %v3567 = vunpack.c.l.b16 %v3188
        %v3568 = vunpack.c.h.b16 %v3188
        %v3569 = vunpack.c.l.b16 %v3189
        %v3570 = vunpack.c.h.b16 %v3189
        %v3571 = vunpack.c.l.b16 %v3190
        %v3572 = vunpack.c.h.b16 %v3190
        %v3573 = vunpack.c.l.b16 %v3191
        %v3574 = vunpack.c.h.b16 %v3191
        %v3575 = vunpack.c.l.b16 %v3192
        %v3576 = vunpack.c.h.b16 %v3192
        %v3577 = vpack.c.b16 %v3325, %v3321
        %v3578 = vpack.c.b16 %v3326, %v3322
        %v3579 = vpack.c.b16 %v3327, %v3323
        %v3580 = vpack.c.b16 %v3328, %v3324
        %v3581 = vpack.c.b16 %v3333, %v3329
        %v3582 = vpack.c.b16 %v3334, %v3330
        %v3583 = vpack.c.b16 %v3335, %v3331
        %v3584 = vpack.c.b16 %v3336, %v3332
        %v3585 = vpack.c.b16 %v3341, %v3337
        %v3586 = vpack.c.b16 %v3342, %v3338
        %v3587 = vpack.c.b16 %v3343, %v3339
        %v3588 = vpack.c.b16 %v3344, %v3340
        %v3589 = vpack.c.b16 %v3349, %v3345
        %v3590 = vpack.c.b16 %v3350, %v3346
        %v3591 = vpack.c.b16 %v3351, %v3347
        %v3592 = vpack.c.b16 %v3352, %v3348
        %v3593 = vpack.c.b16 %v3357, %v3353
        %v3594 = vpack.c.b16 %v3358, %v3354
        %v3595 = vpack.c.b16 %v3359, %v3355
        %v3596 = vpack.c.b16 %v3360, %v3356
        %v3597 = vpack.c.b16 %v3365, %v3361
        %v3598 = vpack.c.b16 %v3366, %v3362
        %v3599 = vpack.c.b16 %v3367, %v3363
        %v3600 = vpack.c.b16 %v3368, %v3364
        %v3601 = vpack.c.b16 %v3373, %v3369
        %v3602 = vpack.c.b16 %v3374, %v3370
        %v3603 = vpack.c.b16 %v3375, %v3371
        %v3604 = vpack.c.b16 %v3376, %v3372
        %v3605 = vpack.c.b16 %v3381, %v3377
        %v3606 = vpack.c.b16 %v3382, %v3378
        %v3607 = vpack.c.b16 %v3383, %v3379
        %v3608 = vpack.c.b16 %v3384, %v3380
        %v3609 = vpack.c.b16 %v3389, %v3385
        %v3610 = vpack.c.b16 %v3390, %v3386
        %v3611 = vpack.c.b16 %v3391, %v3387
        %v3612 = vpack.c.b16 %v3392, %v3388
        %v3613 = vpack.c.b16 %v3397, %v3393
        %v3614 = vpack.c.b16 %v3398, %v3394
        %v3615 = vpack.c.b16 %v3399, %v3395
        %v3616 = vpack.c.b16 %v3400, %v3396
        %v3617 = vpack.c.b16 %v3405, %v3401
        %v3618 = vpack.c.b16 %v3406, %v3402
        %v3619 = vpack.c.b16 %v3407, %v3403
        %v3620 = vpack.c.b16 %v3408, %v3404
        %v3621 = vpack.c.b16 %v3413, %v3409
        %v3622 = vpack.c.b16 %v3414, %v3410
        %v3623 = vpack.c.b16 %v3415, %v3411
        %v3624 = vpack.c.b16 %v3416, %v3412
        %v3625 = vpack.c.b16 %v3421, %v3417
        %v3626 = vpack.c.b16 %v3422, %v3418
        %v3627 = vpack.c.b16 %v3423, %v3419
        %v3628 = vpack.c.b16 %v3424, %v3420
        %v3629 = vpack.c.b16 %v3429, %v3425
        %v3630 = vpack.c.b16 %v3430, %v3426
        %v3631 = vpack.c.b16 %v3431, %v3427
        %v3632 = vpack.c.b16 %v3432, %v3428
        %v3633 = vpack.c.b16 %v3437, %v3433
        %v3634 = vpack.c.b16 %v3438, %v3434
        %v3635 = vpack.c.b16 %v3439, %v3435
        %v3636 = vpack.c.b16 %v3440, %v3436
        %v3637 = vpack.c.b16 %v3445, %v3441
        %v3638 = vpack.c.b16 %v3446, %v3442
        %v3639 = vpack.c.b16 %v3447, %v3443
        %v3640 = vpack.c.b16 %v3448, %v3444
        %v3641 = vpack.c.b16 %v3453, %v3449
        %v3642 = vpack.c.b16 %v3454, %v3450
        %v3643 = vpack.c.b16 %v3455, %v3451
        %v3644 = vpack.c.b16 %v3456, %v3452
        %v3645 = vpack.c.b16 %v3461, %v3457
        %v3646 = vpack.c.b16 %v3462, %v3458
        %v3647 = vpack.c.b16 %v3463, %v3459
        %v3648 = vpack.c.b16 %v3464, %v3460
        %v3649 = vpack.c.b16 %v3469, %v3465
        %v3650 = vpack.c.b16 %v3470, %v3466
        %v3651 = vpack.c.b16 %v3471, %v3467
        %v3652 = vpack.c.b16 %v3472, %v3468
        %v3653 = vpack.c.b16 %v3477, %v3473
        %v3654 = vpack.c.b16 %v3478, %v3474
        %v3655 = vpack.c.b16 %v3479, %v3475
        %v3656 = vpack.c.b16 %v3480, %v3476
        %v3657 = vpack.c.b16 %v3485, %v3481
        %v3658 = vpack.c.b16 %v3486, %v3482
        %v3659 = vpack.c.b16 %v3487, %v3483
        %v3660 = vpack.c.b16 %v3488, %v3484
        %v3661 = vpack.c.b16 %v3493, %v3489
        %v3662 = vpack.c.b16 %v3494, %v3490
        %v3663 = vpack.c.b16 %v3495, %v3491
        %v3664 = vpack.c.b16 %v3496, %v3492
        %v3665 = vpack.c.b16 %v3501, %v3497
        %v3666 = vpack.c.b16 %v3502, %v3498
        %v3667 = vpack.c.b16 %v3503, %v3499
        %v3668 = vpack.c.b16 %v3504, %v3500
        %v3669 = vpack.c.b16 %v3509, %v3505
        %v3670 = vpack.c.b16 %v3510, %v3506
        %v3671 = vpack.c.b16 %v3511, %v3507
        %v3672 = vpack.c.b16 %v3512, %v3508
        %v3673 = vpack.c.b16 %v3517, %v3513
        %v3674 = vpack.c.b16 %v3518, %v3514
        %v3675 = vpack.c.b16 %v3519, %v3515
        %v3676 = vpack.c.b16 %v3520, %v3516
        %v3677 = vpack.c.b16 %v3525, %v3521
        %v3678 = vpack.c.b16 %v3526, %v3522
        %v3679 = vpack.c.b16 %v3527, %v3523
        %v3680 = vpack.c.b16 %v3528, %v3524
        %v3681 = vpack.c.b16 %v3533, %v3529
        %v3682 = vpack.c.b16 %v3534, %v3530
        %v3683 = vpack.c.b16 %v3535, %v3531
        %v3684 = vpack.c.b16 %v3536, %v3532
        %v3685 = vpack.c.b16 %v3541, %v3537
        %v3686 = vpack.c.b16 %v3542, %v3538
        %v3687 = vpack.c.b16 %v3543, %v3539
        %v3688 = vpack.c.b16 %v3544, %v3540
        %v3689 = vpack.c.b16 %v3549, %v3545
        %v3690 = vpack.c.b16 %v3550, %v3546
        %v3691 = vpack.c.b16 %v3551, %v3547
        %v3692 = vpack.c.b16 %v3552, %v3548
        %v3693 = vpack.c.b16 %v3557, %v3553
        %v3694 = vpack.c.b16 %v3558, %v3554
        %v3695 = vpack.c.b16 %v3559, %v3555
        %v3696 = vpack.c.b16 %v3560, %v3556
        %v3697 = vpack.c.b16 %v3565, %v3561
        %v3698 = vpack.c.b16 %v3566, %v3562
        %v3699 = vpack.c.b16 %v3567, %v3563
        %v3700 = vpack.c.b16 %v3568, %v3564
        %v3701 = vpack.c.b16 %v3573, %v3569
        %v3702 = vpack.c.b16 %v3574, %v3570
        %v3703 = vpack.c.b16 %v3575, %v3571
        %v3704 = vpack.c.b16 %v3576, %v3572
        %3833 = vmatprep.subr.bf16.mxu0 %v3606
        %3834 = vmatpush1.bf16.msra.mxu0 %v3605
        %3835 = vmatprep.subr.bf16.mxu0 %v3602
        %3836 = vmatpush1.bf16.msra.mxu0 %v3601
        %3837 = vmatprep.subr.bf16.mxu0 %v3598
        %3838 = vmatpush1.bf16.msra.mxu0 %v3597
        %3839 = vmatprep.subr.bf16.mxu0 %v3594
        %3840 = vmatpush1.bf16.msra.mxu0 %v3593
        %3841 = vmatprep.subr.bf16.mxu0 %v3590
        %3842 = vmatpush1.bf16.msra.mxu0 %v3589
        %3843 = vmatprep.subr.bf16.mxu0 %v3586
        %3844 = vmatpush1.bf16.msra.mxu0 %v3585
        %3845 = vmatprep.subr.bf16.mxu0 %v3582
        %3846 = vmatpush1.bf16.msra.mxu0 %v3581
        %3847 = vmatprep.subr.bf16.mxu0 %v3578
        %3848 = vmatpush1.bf16.msra.mxu0 %v3577
        %3849 = vmatprep.subr.bf16.mxu0 %v3638
        %3850 = vmatpush2.bf16.msra.mxu0 %v3637
        %3851 = vmatprep.subr.bf16.mxu0 %v3634
        %3852 = vmatpush2.bf16.msra.mxu0 %v3633
        %3853 = vmatprep.subr.bf16.mxu0 %v3630
        %3854 = vmatpush2.bf16.msra.mxu0 %v3629
        %3855 = vmatprep.subr.bf16.mxu0 %v3626
        %3856 = vmatpush2.bf16.msra.mxu0 %v3625
        %3857 = vmatprep.subr.bf16.mxu0 %v3622
        %3858 = vmatpush2.bf16.msra.mxu0 %v3621
        %3859 = vmatprep.subr.bf16.mxu0 %v3618
        %3860 = vmatpush2.bf16.msra.mxu0 %v3617
        %3861 = vmatprep.subr.bf16.mxu0 %v3614
        %3862 = vmatpush2.bf16.msra.mxu0 %v3613
        %3863 = vmatprep.subr.bf16.mxu0 %v3610
        %3864 = vmatpush2.bf16.msra.mxu0 %v3609
        %3865 = vmatprep.mubr.bf16.mxu0 %v3062
        %3866 = vmatmul.mubr.bf16.gmra.mxu0 %v3061
        %v3867 = vpop.f32.mrf.mxu0
        %v3868 = vadd.f32 0.0, %v3867
        %v3869 = vpop.f32.mrf.mxu0
        %v3870 = vadd.f32 0.0, %v3869
        %v3871 = vpop.f32.mrf.mxu0
        %v3872 = vadd.f32 0.0, %v3871
        %v3873 = vpop.f32.mrf.mxu0
        %v3874 = vadd.f32 0.0, %v3873
        %3875 = vdwg.mxu0
        %3876 = vmatprep.subr.bf16.mxu0 %v3670
        %3877 = vmatpush1.bf16.msra.mxu0 %v3669
        %3878 = vmatprep.subr.bf16.mxu0 %v3666
        %3879 = vmatpush1.bf16.msra.mxu0 %v3665
        %3880 = vmatprep.subr.bf16.mxu0 %v3662
        %3881 = vmatpush1.bf16.msra.mxu0 %v3661
        %3882 = vmatprep.subr.bf16.mxu0 %v3658
        %3883 = vmatpush1.bf16.msra.mxu0 %v3657
        %3884 = vmatprep.subr.bf16.mxu0 %v3654
        %3885 = vmatpush1.bf16.msra.mxu0 %v3653
        %3886 = vmatprep.subr.bf16.mxu0 %v3650
        %3887 = vmatpush1.bf16.msra.mxu0 %v3649
        %3888 = vmatprep.subr.bf16.mxu0 %v3646
        %3889 = vmatpush1.bf16.msra.mxu0 %v3645
        %3890 = vmatprep.subr.bf16.mxu0 %v3642
        %3891 = vmatpush1.bf16.msra.mxu0 %v3641
        %3892 = vmatprep.subr.bf16.mxu0 %v3702
        %3893 = vmatpush2.bf16.msra.mxu0 %v3701
        %3894 = vmatprep.subr.bf16.mxu0 %v3698
        %3895 = vmatpush2.bf16.msra.mxu0 %v3697
        %3896 = vmatprep.subr.bf16.mxu0 %v3694
        %3897 = vmatpush2.bf16.msra.mxu0 %v3693
        %3898 = vmatprep.subr.bf16.mxu0 %v3690
        %3899 = vmatpush2.bf16.msra.mxu0 %v3689
        %3900 = vmatprep.subr.bf16.mxu0 %v3686
        %3901 = vmatpush2.bf16.msra.mxu0 %v3685
        %3902 = vmatprep.subr.bf16.mxu0 %v3682
        %3903 = vmatpush2.bf16.msra.mxu0 %v3681
        %3904 = vmatprep.subr.bf16.mxu0 %v3678
        %3905 = vmatpush2.bf16.msra.mxu0 %v3677
        %3906 = vmatprep.subr.bf16.mxu0 %v3674
        %3907 = vmatpush2.bf16.msra.mxu0 %v3673
        %3908 = vmatprep.mubr.bf16.mxu0 %v3064
        %3909 = vmatmul.mubr.bf16.gmra.mxu0 %v3063
        %v3910 = vpop.f32.mrf.mxu0
        %v3911 = vadd.f32 %v3868, %v3910
        %v3912 = vpop.f32.mrf.mxu0
        %v3913 = vadd.f32 %v3870, %v3912
        %v3914 = vpop.f32.mrf.mxu0
        %v3915 = vadd.f32 %v3872, %v3914
        %v3916 = vpop.f32.mrf.mxu0
        %v3917 = vadd.f32 %v3874, %v3916
        %3918 = vdwg.mxu0
        %3919 = vmatprep.subr.bf16.mxu0 %v3608
        %3920 = vmatpush1.bf16.msra.mxu0 %v3607
        %3921 = vmatprep.subr.bf16.mxu0 %v3604
        %3922 = vmatpush1.bf16.msra.mxu0 %v3603
        %3923 = vmatprep.subr.bf16.mxu0 %v3600
        %3924 = vmatpush1.bf16.msra.mxu0 %v3599
        %3925 = vmatprep.subr.bf16.mxu0 %v3596
        %3926 = vmatpush1.bf16.msra.mxu0 %v3595
        %3927 = vmatprep.subr.bf16.mxu0 %v3592
        %3928 = vmatpush1.bf16.msra.mxu0 %v3591
        %3929 = vmatprep.subr.bf16.mxu0 %v3588
        %3930 = vmatpush1.bf16.msra.mxu0 %v3587
        %3931 = vmatprep.subr.bf16.mxu0 %v3584
        %3932 = vmatpush1.bf16.msra.mxu0 %v3583
        %3933 = vmatprep.subr.bf16.mxu0 %v3580
        %3934 = vmatpush1.bf16.msra.mxu0 %v3579
        %3935 = vmatprep.subr.bf16.mxu0 %v3640
        %3936 = vmatpush2.bf16.msra.mxu0 %v3639
        %3937 = vmatprep.subr.bf16.mxu0 %v3636
        %3938 = vmatpush2.bf16.msra.mxu0 %v3635
        %3939 = vmatprep.subr.bf16.mxu0 %v3632
        %3940 = vmatpush2.bf16.msra.mxu0 %v3631
        %3941 = vmatprep.subr.bf16.mxu0 %v3628
        %3942 = vmatpush2.bf16.msra.mxu0 %v3627
        %3943 = vmatprep.subr.bf16.mxu0 %v3624
        %3944 = vmatpush2.bf16.msra.mxu0 %v3623
        %3945 = vmatprep.subr.bf16.mxu0 %v3620
        %3946 = vmatpush2.bf16.msra.mxu0 %v3619
        %3947 = vmatprep.subr.bf16.mxu0 %v3616
        %3948 = vmatpush2.bf16.msra.mxu0 %v3615
        %3949 = vmatprep.subr.bf16.mxu0 %v3612
        %3950 = vmatpush2.bf16.msra.mxu0 %v3611
        %3951 = vmatprep.mubr.bf16.mxu0 %v3062
        %3952 = vmatmul.mubr.bf16.gmra.mxu0 %v3061
        %v3953 = vpop.f32.mrf.mxu0
        %v3954 = vadd.f32 0.0, %v3953
        %v3955 = vpop.f32.mrf.mxu0
        %v3956 = vadd.f32 0.0, %v3955
        %v3957 = vpop.f32.mrf.mxu0
        %v3958 = vadd.f32 0.0, %v3957
        %v3959 = vpop.f32.mrf.mxu0
        %v3960 = vadd.f32 0.0, %v3959
        %3961 = vdwg.mxu0
        %3962 = vmatprep.subr.bf16.mxu0 %v3672
        %3963 = vmatpush1.bf16.msra.mxu0 %v3671
        %3964 = vmatprep.subr.bf16.mxu0 %v3668
        %3965 = vmatpush1.bf16.msra.mxu0 %v3667
        %3966 = vmatprep.subr.bf16.mxu0 %v3664
        %3967 = vmatpush1.bf16.msra.mxu0 %v3663
        %3968 = vmatprep.subr.bf16.mxu0 %v3660
        %3969 = vmatpush1.bf16.msra.mxu0 %v3659
        %3970 = vmatprep.subr.bf16.mxu0 %v3656
        %3971 = vmatpush1.bf16.msra.mxu0 %v3655
        %3972 = vmatprep.subr.bf16.mxu0 %v3652
        %3973 = vmatpush1.bf16.msra.mxu0 %v3651
        %3974 = vmatprep.subr.bf16.mxu0 %v3648
        %3975 = vmatpush1.bf16.msra.mxu0 %v3647
        %3976 = vmatprep.subr.bf16.mxu0 %v3644
        %3977 = vmatpush1.bf16.msra.mxu0 %v3643
        %3978 = vmatprep.subr.bf16.mxu0 %v3704
        %3979 = vmatpush2.bf16.msra.mxu0 %v3703
        %3980 = vmatprep.subr.bf16.mxu0 %v3700
        %3981 = vmatpush2.bf16.msra.mxu0 %v3699
        %3982 = vmatprep.subr.bf16.mxu0 %v3696
        %3983 = vmatpush2.bf16.msra.mxu0 %v3695
        %3984 = vmatprep.subr.bf16.mxu0 %v3692
        %3985 = vmatpush2.bf16.msra.mxu0 %v3691
        %3986 = vmatprep.subr.bf16.mxu0 %v3688
        %3987 = vmatpush2.bf16.msra.mxu0 %v3687
        %3988 = vmatprep.subr.bf16.mxu0 %v3684
        %3989 = vmatpush2.bf16.msra.mxu0 %v3683
        %3990 = vmatprep.subr.bf16.mxu0 %v3680
        %3991 = vmatpush2.bf16.msra.mxu0 %v3679
        %3992 = vmatprep.subr.bf16.mxu0 %v3676
        %3993 = vmatpush2.bf16.msra.mxu0 %v3675
        %3994 = vmatprep.mubr.bf16.mxu0 %v3064
        %3995 = vmatmul.mubr.bf16.gmra.mxu0 %v3063
        %v3996 = vpop.f32.mrf.mxu0
        %v3997 = vadd.f32 %v3954, %v3996
        %v3998 = vpop.f32.mrf.mxu0
        %v3999 = vadd.f32 %v3956, %v3998
        %v4000 = vpop.f32.mrf.mxu0
        %v4001 = vadd.f32 %v3958, %v4000
        %v4002 = vpop.f32.mrf.mxu0
        %v4003 = vadd.f32 %v3960, %v4002
        %4004 = vdwg.mxu0
        %v4005 = vld [vmem:[#allocation8] sm:$0xff]
        %v4006 = vld [vmem:[#allocation8 + $0x8] sm:$0xff]
        %s4007 = scalar_lea.vmem [#allocation7], 1024
        %v4008 = vld [vmem:[%s4007] sm:$0xff]
        %v4009 = vld [vmem:[%s4007 + $0x8] sm:$0xff]
        %v4010 = vld [vmem:[%s4007 + $0x10] sm:$0xff]
        %v4011 = vld [vmem:[%s4007 + $0x18] sm:$0xff]
        %v4012 = vld [vmem:[%s4007 + $0x20] sm:$0xff]
        %v4013 = vld [vmem:[%s4007 + $0x28] sm:$0xff]
        %v4014 = vld [vmem:[%s4007 + $0x30] sm:$0xff]
        %v4015 = vld [vmem:[%s4007 + $0x38] sm:$0xff]
        %v4016 = vld [vmem:[%s4007 + $0x40] sm:$0xff]
        %v4017 = vld [vmem:[%s4007 + $0x48] sm:$0xff]
        %v4018 = vld [vmem:[%s4007 + $0x50] sm:$0xff]
        %v4019 = vld [vmem:[%s4007 + $0x58] sm:$0xff]
        %v4020 = vld [vmem:[%s4007 + $0x60] sm:$0xff]
        %v4021 = vld [vmem:[%s4007 + $0x68] sm:$0xff]
        %v4022 = vld [vmem:[%s4007 + $0x70] sm:$0xff]
        %v4023 = vld [vmem:[%s4007 + $0x78] sm:$0xff]
        %v4024 = vld [vmem:[%s4007 + $0x80] sm:$0xff]
        %v4025 = vld [vmem:[%s4007 + $0x88] sm:$0xff]
        %v4026 = vld [vmem:[%s4007 + $0x90] sm:$0xff]
        %v4027 = vld [vmem:[%s4007 + $0x98] sm:$0xff]
        %v4028 = vld [vmem:[%s4007 + $0xa0] sm:$0xff]
        %v4029 = vld [vmem:[%s4007 + $0xa8] sm:$0xff]
        %v4030 = vld [vmem:[%s4007 + $0xb0] sm:$0xff]
        %v4031 = vld [vmem:[%s4007 + $0xb8] sm:$0xff]
        %v4032 = vld [vmem:[%s4007 + $0xc0] sm:$0xff]
        %v4033 = vld [vmem:[%s4007 + $0xc8] sm:$0xff]
        %v4034 = vld [vmem:[%s4007 + $0xd0] sm:$0xff]
        %v4035 = vld [vmem:[%s4007 + $0xd8] sm:$0xff]
        %v4036 = vld [vmem:[%s4007 + $0xe0] sm:$0xff]
        %v4037 = vld [vmem:[%s4007 + $0xe8] sm:$0xff]
        %v4038 = vld [vmem:[%s4007 + $0xf0] sm:$0xff]
        %v4039 = vld [vmem:[%s4007 + $0xf8] sm:$0xff]
        %v4040 = vld [vmem:[%s4007 + $0x100] sm:$0xff]
        %v4041 = vld [vmem:[%s4007 + $0x108] sm:$0xff]
        %v4042 = vld [vmem:[%s4007 + $0x110] sm:$0xff]
        %v4043 = vld [vmem:[%s4007 + $0x118] sm:$0xff]
        %v4044 = vld [vmem:[%s4007 + $0x120] sm:$0xff]
        %v4045 = vld [vmem:[%s4007 + $0x128] sm:$0xff]
        %v4046 = vld [vmem:[%s4007 + $0x130] sm:$0xff]
        %v4047 = vld [vmem:[%s4007 + $0x138] sm:$0xff]
        %v4048 = vld [vmem:[%s4007 + $0x140] sm:$0xff]
        %v4049 = vld [vmem:[%s4007 + $0x148] sm:$0xff]
        %v4050 = vld [vmem:[%s4007 + $0x150] sm:$0xff]
        %v4051 = vld [vmem:[%s4007 + $0x158] sm:$0xff]
        %v4052 = vld [vmem:[%s4007 + $0x160] sm:$0xff]
        %v4053 = vld [vmem:[%s4007 + $0x168] sm:$0xff]
        %v4054 = vld [vmem:[%s4007 + $0x170] sm:$0xff]
        %v4055 = vld [vmem:[%s4007 + $0x178] sm:$0xff]
        %v4056 = vld [vmem:[%s4007 + $0x180] sm:$0xff]
        %v4057 = vld [vmem:[%s4007 + $0x188] sm:$0xff]
        %v4058 = vld [vmem:[%s4007 + $0x190] sm:$0xff]
        %v4059 = vld [vmem:[%s4007 + $0x198] sm:$0xff]
        %v4060 = vld [vmem:[%s4007 + $0x1a0] sm:$0xff]
        %v4061 = vld [vmem:[%s4007 + $0x1a8] sm:$0xff]
        %v4062 = vld [vmem:[%s4007 + $0x1b0] sm:$0xff]
        %v4063 = vld [vmem:[%s4007 + $0x1b8] sm:$0xff]
        %v4064 = vld [vmem:[%s4007 + $0x1c0] sm:$0xff]
        %v4065 = vld [vmem:[%s4007 + $0x1c8] sm:$0xff]
        %v4066 = vld [vmem:[%s4007 + $0x1d0] sm:$0xff]
        %v4067 = vld [vmem:[%s4007 + $0x1d8] sm:$0xff]
        %v4068 = vld [vmem:[%s4007 + $0x1e0] sm:$0xff]
        %v4069 = vld [vmem:[%s4007 + $0x1e8] sm:$0xff]
        %v4070 = vld [vmem:[%s4007 + $0x1f0] sm:$0xff]
        %v4071 = vld [vmem:[%s4007 + $0x1f8] sm:$0xff]
        %v4072 = vld [vmem:[%s4007 + $0x200] sm:$0xff]
        %v4073 = vld [vmem:[%s4007 + $0x208] sm:$0xff]
        %v4074 = vld [vmem:[%s4007 + $0x210] sm:$0xff]
        %v4075 = vld [vmem:[%s4007 + $0x218] sm:$0xff]
        %v4076 = vld [vmem:[%s4007 + $0x220] sm:$0xff]
        %v4077 = vld [vmem:[%s4007 + $0x228] sm:$0xff]
        %v4078 = vld [vmem:[%s4007 + $0x230] sm:$0xff]
        %v4079 = vld [vmem:[%s4007 + $0x238] sm:$0xff]
        %v4080 = vld [vmem:[%s4007 + $0x240] sm:$0xff]
        %v4081 = vld [vmem:[%s4007 + $0x248] sm:$0xff]
        %v4082 = vld [vmem:[%s4007 + $0x250] sm:$0xff]
        %v4083 = vld [vmem:[%s4007 + $0x258] sm:$0xff]
        %v4084 = vld [vmem:[%s4007 + $0x260] sm:$0xff]
        %v4085 = vld [vmem:[%s4007 + $0x268] sm:$0xff]
        %v4086 = vld [vmem:[%s4007 + $0x270] sm:$0xff]
        %v4087 = vld [vmem:[%s4007 + $0x278] sm:$0xff]
        %v4088 = vld [vmem:[%s4007 + $0x280] sm:$0xff]
        %v4089 = vld [vmem:[%s4007 + $0x288] sm:$0xff]
        %v4090 = vld [vmem:[%s4007 + $0x290] sm:$0xff]
        %v4091 = vld [vmem:[%s4007 + $0x298] sm:$0xff]
        %v4092 = vld [vmem:[%s4007 + $0x2a0] sm:$0xff]
        %v4093 = vld [vmem:[%s4007 + $0x2a8] sm:$0xff]
        %v4094 = vld [vmem:[%s4007 + $0x2b0] sm:$0xff]
        %v4095 = vld [vmem:[%s4007 + $0x2b8] sm:$0xff]
        %v4096 = vld [vmem:[%s4007 + $0x2c0] sm:$0xff]
        %v4097 = vld [vmem:[%s4007 + $0x2c8] sm:$0xff]
        %v4098 = vld [vmem:[%s4007 + $0x2d0] sm:$0xff]
        %v4099 = vld [vmem:[%s4007 + $0x2d8] sm:$0xff]
        %v4100 = vld [vmem:[%s4007 + $0x2e0] sm:$0xff]
        %v4101 = vld [vmem:[%s4007 + $0x2e8] sm:$0xff]
        %v4102 = vld [vmem:[%s4007 + $0x2f0] sm:$0xff]
        %v4103 = vld [vmem:[%s4007 + $0x2f8] sm:$0xff]
        %v4104 = vld [vmem:[%s4007 + $0x300] sm:$0xff]
        %v4105 = vld [vmem:[%s4007 + $0x308] sm:$0xff]
        %v4106 = vld [vmem:[%s4007 + $0x310] sm:$0xff]
        %v4107 = vld [vmem:[%s4007 + $0x318] sm:$0xff]
        %v4108 = vld [vmem:[%s4007 + $0x320] sm:$0xff]
        %v4109 = vld [vmem:[%s4007 + $0x328] sm:$0xff]
        %v4110 = vld [vmem:[%s4007 + $0x330] sm:$0xff]
        %v4111 = vld [vmem:[%s4007 + $0x338] sm:$0xff]
        %v4112 = vld [vmem:[%s4007 + $0x340] sm:$0xff]
        %v4113 = vld [vmem:[%s4007 + $0x348] sm:$0xff]
        %v4114 = vld [vmem:[%s4007 + $0x350] sm:$0xff]
        %v4115 = vld [vmem:[%s4007 + $0x358] sm:$0xff]
        %v4116 = vld [vmem:[%s4007 + $0x360] sm:$0xff]
        %v4117 = vld [vmem:[%s4007 + $0x368] sm:$0xff]
        %v4118 = vld [vmem:[%s4007 + $0x370] sm:$0xff]
        %v4119 = vld [vmem:[%s4007 + $0x378] sm:$0xff]
        %v4120 = vld [vmem:[%s4007 + $0x380] sm:$0xff]
        %v4121 = vld [vmem:[%s4007 + $0x388] sm:$0xff]
        %v4122 = vld [vmem:[%s4007 + $0x390] sm:$0xff]
        %v4123 = vld [vmem:[%s4007 + $0x398] sm:$0xff]
        %v4124 = vld [vmem:[%s4007 + $0x3a0] sm:$0xff]
        %v4125 = vld [vmem:[%s4007 + $0x3a8] sm:$0xff]
        %v4126 = vld [vmem:[%s4007 + $0x3b0] sm:$0xff]
        %v4127 = vld [vmem:[%s4007 + $0x3b8] sm:$0xff]
        %v4128 = vld [vmem:[%s4007 + $0x3c0] sm:$0xff]
        %v4129 = vld [vmem:[%s4007 + $0x3c8] sm:$0xff]
        %v4130 = vld [vmem:[%s4007 + $0x3d0] sm:$0xff]
        %v4131 = vld [vmem:[%s4007 + $0x3d8] sm:$0xff]
        %v4132 = vld [vmem:[%s4007 + $0x3e0] sm:$0xff]
        %v4133 = vld [vmem:[%s4007 + $0x3e8] sm:$0xff]
        %v4134 = vld [vmem:[%s4007 + $0x3f0] sm:$0xff]
        %v4135 = vld [vmem:[%s4007 + $0x3f8] sm:$0xff]
        %v4264 = vunpack.c.l.b16 %v4008
        %v4265 = vunpack.c.h.b16 %v4008
        %v4266 = vunpack.c.l.b16 %v4009
        %v4267 = vunpack.c.h.b16 %v4009
        %v4268 = vunpack.c.l.b16 %v4010
        %v4269 = vunpack.c.h.b16 %v4010
        %v4270 = vunpack.c.l.b16 %v4011
        %v4271 = vunpack.c.h.b16 %v4011
        %v4272 = vunpack.c.l.b16 %v4012
        %v4273 = vunpack.c.h.b16 %v4012
        %v4274 = vunpack.c.l.b16 %v4013
        %v4275 = vunpack.c.h.b16 %v4013
        %v4276 = vunpack.c.l.b16 %v4014
        %v4277 = vunpack.c.h.b16 %v4014
        %v4278 = vunpack.c.l.b16 %v4015
        %v4279 = vunpack.c.h.b16 %v4015
        %v4280 = vunpack.c.l.b16 %v4016
        %v4281 = vunpack.c.h.b16 %v4016
        %v4282 = vunpack.c.l.b16 %v4017
        %v4283 = vunpack.c.h.b16 %v4017
        %v4284 = vunpack.c.l.b16 %v4018
        %v4285 = vunpack.c.h.b16 %v4018
        %v4286 = vunpack.c.l.b16 %v4019
        %v4287 = vunpack.c.h.b16 %v4019
        %v4288 = vunpack.c.l.b16 %v4020
        %v4289 = vunpack.c.h.b16 %v4020
        %v4290 = vunpack.c.l.b16 %v4021
        %v4291 = vunpack.c.h.b16 %v4021
        %v4292 = vunpack.c.l.b16 %v4022
        %v4293 = vunpack.c.h.b16 %v4022
        %v4294 = vunpack.c.l.b16 %v4023
        %v4295 = vunpack.c.h.b16 %v4023
        %v4296 = vunpack.c.l.b16 %v4024
        %v4297 = vunpack.c.h.b16 %v4024
        %v4298 = vunpack.c.l.b16 %v4025
        %v4299 = vunpack.c.h.b16 %v4025
        %v4300 = vunpack.c.l.b16 %v4026
        %v4301 = vunpack.c.h.b16 %v4026
        %v4302 = vunpack.c.l.b16 %v4027
        %v4303 = vunpack.c.h.b16 %v4027
        %v4304 = vunpack.c.l.b16 %v4028
        %v4305 = vunpack.c.h.b16 %v4028
        %v4306 = vunpack.c.l.b16 %v4029
        %v4307 = vunpack.c.h.b16 %v4029
        %v4308 = vunpack.c.l.b16 %v4030
        %v4309 = vunpack.c.h.b16 %v4030
        %v4310 = vunpack.c.l.b16 %v4031
        %v4311 = vunpack.c.h.b16 %v4031
        %v4312 = vunpack.c.l.b16 %v4032
        %v4313 = vunpack.c.h.b16 %v4032
        %v4314 = vunpack.c.l.b16 %v4033
        %v4315 = vunpack.c.h.b16 %v4033
        %v4316 = vunpack.c.l.b16 %v4034
        %v4317 = vunpack.c.h.b16 %v4034
        %v4318 = vunpack.c.l.b16 %v4035
        %v4319 = vunpack.c.h.b16 %v4035
        %v4320 = vunpack.c.l.b16 %v4036
        %v4321 = vunpack.c.h.b16 %v4036
        %v4322 = vunpack.c.l.b16 %v4037
        %v4323 = vunpack.c.h.b16 %v4037
        %v4324 = vunpack.c.l.b16 %v4038
        %v4325 = vunpack.c.h.b16 %v4038
        %v4326 = vunpack.c.l.b16 %v4039
        %v4327 = vunpack.c.h.b16 %v4039
        %v4328 = vunpack.c.l.b16 %v4040
        %v4329 = vunpack.c.h.b16 %v4040
        %v4330 = vunpack.c.l.b16 %v4041
        %v4331 = vunpack.c.h.b16 %v4041
        %v4332 = vunpack.c.l.b16 %v4042
        %v4333 = vunpack.c.h.b16 %v4042
        %v4334 = vunpack.c.l.b16 %v4043
        %v4335 = vunpack.c.h.b16 %v4043
        %v4336 = vunpack.c.l.b16 %v4044
        %v4337 = vunpack.c.h.b16 %v4044
        %v4338 = vunpack.c.l.b16 %v4045
        %v4339 = vunpack.c.h.b16 %v4045
        %v4340 = vunpack.c.l.b16 %v4046
        %v4341 = vunpack.c.h.b16 %v4046
        %v4342 = vunpack.c.l.b16 %v4047
        %v4343 = vunpack.c.h.b16 %v4047
        %v4344 = vunpack.c.l.b16 %v4048
        %v4345 = vunpack.c.h.b16 %v4048
        %v4346 = vunpack.c.l.b16 %v4049
        %v4347 = vunpack.c.h.b16 %v4049
        %v4348 = vunpack.c.l.b16 %v4050
        %v4349 = vunpack.c.h.b16 %v4050
        %v4350 = vunpack.c.l.b16 %v4051
        %v4351 = vunpack.c.h.b16 %v4051
        %v4352 = vunpack.c.l.b16 %v4052
        %v4353 = vunpack.c.h.b16 %v4052
        %v4354 = vunpack.c.l.b16 %v4053
        %v4355 = vunpack.c.h.b16 %v4053
        %v4356 = vunpack.c.l.b16 %v4054
        %v4357 = vunpack.c.h.b16 %v4054
        %v4358 = vunpack.c.l.b16 %v4055
        %v4359 = vunpack.c.h.b16 %v4055
        %v4360 = vunpack.c.l.b16 %v4056
        %v4361 = vunpack.c.h.b16 %v4056
        %v4362 = vunpack.c.l.b16 %v4057
        %v4363 = vunpack.c.h.b16 %v4057
        %v4364 = vunpack.c.l.b16 %v4058
        %v4365 = vunpack.c.h.b16 %v4058
        %v4366 = vunpack.c.l.b16 %v4059
        %v4367 = vunpack.c.h.b16 %v4059
        %v4368 = vunpack.c.l.b16 %v4060
        %v4369 = vunpack.c.h.b16 %v4060
        %v4370 = vunpack.c.l.b16 %v4061
        %v4371 = vunpack.c.h.b16 %v4061
        %v4372 = vunpack.c.l.b16 %v4062
        %v4373 = vunpack.c.h.b16 %v4062
        %v4374 = vunpack.c.l.b16 %v4063
        %v4375 = vunpack.c.h.b16 %v4063
        %v4376 = vunpack.c.l.b16 %v4064
        %v4377 = vunpack.c.h.b16 %v4064
        %v4378 = vunpack.c.l.b16 %v4065
        %v4379 = vunpack.c.h.b16 %v4065
        %v4380 = vunpack.c.l.b16 %v4066
        %v4381 = vunpack.c.h.b16 %v4066
        %v4382 = vunpack.c.l.b16 %v4067
        %v4383 = vunpack.c.h.b16 %v4067
        %v4384 = vunpack.c.l.b16 %v4068
        %v4385 = vunpack.c.h.b16 %v4068
        %v4386 = vunpack.c.l.b16 %v4069
        %v4387 = vunpack.c.h.b16 %v4069
        %v4388 = vunpack.c.l.b16 %v4070
        %v4389 = vunpack.c.h.b16 %v4070
        %v4390 = vunpack.c.l.b16 %v4071
        %v4391 = vunpack.c.h.b16 %v4071
        %v4392 = vunpack.c.l.b16 %v4072
        %v4393 = vunpack.c.h.b16 %v4072
        %v4394 = vunpack.c.l.b16 %v4073
        %v4395 = vunpack.c.h.b16 %v4073
        %v4396 = vunpack.c.l.b16 %v4074
        %v4397 = vunpack.c.h.b16 %v4074
        %v4398 = vunpack.c.l.b16 %v4075
        %v4399 = vunpack.c.h.b16 %v4075
        %v4400 = vunpack.c.l.b16 %v4076
        %v4401 = vunpack.c.h.b16 %v4076
        %v4402 = vunpack.c.l.b16 %v4077
        %v4403 = vunpack.c.h.b16 %v4077
        %v4404 = vunpack.c.l.b16 %v4078
        %v4405 = vunpack.c.h.b16 %v4078
        %v4406 = vunpack.c.l.b16 %v4079
        %v4407 = vunpack.c.h.b16 %v4079
        %v4408 = vunpack.c.l.b16 %v4080
        %v4409 = vunpack.c.h.b16 %v4080
        %v4410 = vunpack.c.l.b16 %v4081
        %v4411 = vunpack.c.h.b16 %v4081
        %v4412 = vunpack.c.l.b16 %v4082
        %v4413 = vunpack.c.h.b16 %v4082
        %v4414 = vunpack.c.l.b16 %v4083
        %v4415 = vunpack.c.h.b16 %v4083
        %v4416 = vunpack.c.l.b16 %v4084
        %v4417 = vunpack.c.h.b16 %v4084
        %v4418 = vunpack.c.l.b16 %v4085
        %v4419 = vunpack.c.h.b16 %v4085
        %v4420 = vunpack.c.l.b16 %v4086
        %v4421 = vunpack.c.h.b16 %v4086
        %v4422 = vunpack.c.l.b16 %v4087
        %v4423 = vunpack.c.h.b16 %v4087
        %v4424 = vunpack.c.l.b16 %v4088
        %v4425 = vunpack.c.h.b16 %v4088
        %v4426 = vunpack.c.l.b16 %v4089
        %v4427 = vunpack.c.h.b16 %v4089
        %v4428 = vunpack.c.l.b16 %v4090
        %v4429 = vunpack.c.h.b16 %v4090
        %v4430 = vunpack.c.l.b16 %v4091
        %v4431 = vunpack.c.h.b16 %v4091
        %v4432 = vunpack.c.l.b16 %v4092
        %v4433 = vunpack.c.h.b16 %v4092
        %v4434 = vunpack.c.l.b16 %v4093
        %v4435 = vunpack.c.h.b16 %v4093
        %v4436 = vunpack.c.l.b16 %v4094
        %v4437 = vunpack.c.h.b16 %v4094
        %v4438 = vunpack.c.l.b16 %v4095
        %v4439 = vunpack.c.h.b16 %v4095
        %v4440 = vunpack.c.l.b16 %v4096
        %v4441 = vunpack.c.h.b16 %v4096
        %v4442 = vunpack.c.l.b16 %v4097
        %v4443 = vunpack.c.h.b16 %v4097
        %v4444 = vunpack.c.l.b16 %v4098
        %v4445 = vunpack.c.h.b16 %v4098
        %v4446 = vunpack.c.l.b16 %v4099
        %v4447 = vunpack.c.h.b16 %v4099
        %v4448 = vunpack.c.l.b16 %v4100
        %v4449 = vunpack.c.h.b16 %v4100
        %v4450 = vunpack.c.l.b16 %v4101
        %v4451 = vunpack.c.h.b16 %v4101
        %v4452 = vunpack.c.l.b16 %v4102
        %v4453 = vunpack.c.h.b16 %v4102
        %v4454 = vunpack.c.l.b16 %v4103
        %v4455 = vunpack.c.h.b16 %v4103
        %v4456 = vunpack.c.l.b16 %v4104
        %v4457 = vunpack.c.h.b16 %v4104
        %v4458 = vunpack.c.l.b16 %v4105
        %v4459 = vunpack.c.h.b16 %v4105
        %v4460 = vunpack.c.l.b16 %v4106
        %v4461 = vunpack.c.h.b16 %v4106
        %v4462 = vunpack.c.l.b16 %v4107
        %v4463 = vunpack.c.h.b16 %v4107
        %v4464 = vunpack.c.l.b16 %v4108
        %v4465 = vunpack.c.h.b16 %v4108
        %v4466 = vunpack.c.l.b16 %v4109
        %v4467 = vunpack.c.h.b16 %v4109
        %v4468 = vunpack.c.l.b16 %v4110
        %v4469 = vunpack.c.h.b16 %v4110
        %v4470 = vunpack.c.l.b16 %v4111
        %v4471 = vunpack.c.h.b16 %v4111
        %v4472 = vunpack.c.l.b16 %v4112
        %v4473 = vunpack.c.h.b16 %v4112
        %v4474 = vunpack.c.l.b16 %v4113
        %v4475 = vunpack.c.h.b16 %v4113
        %v4476 = vunpack.c.l.b16 %v4114
        %v4477 = vunpack.c.h.b16 %v4114
        %v4478 = vunpack.c.l.b16 %v4115
        %v4479 = vunpack.c.h.b16 %v4115
        %v4480 = vunpack.c.l.b16 %v4116
        %v4481 = vunpack.c.h.b16 %v4116
        %v4482 = vunpack.c.l.b16 %v4117
        %v4483 = vunpack.c.h.b16 %v4117
        %v4484 = vunpack.c.l.b16 %v4118
        %v4485 = vunpack.c.h.b16 %v4118
        %v4486 = vunpack.c.l.b16 %v4119
        %v4487 = vunpack.c.h.b16 %v4119
        %v4488 = vunpack.c.l.b16 %v4120
        %v4489 = vunpack.c.h.b16 %v4120
        %v4490 = vunpack.c.l.b16 %v4121
        %v4491 = vunpack.c.h.b16 %v4121
        %v4492 = vunpack.c.l.b16 %v4122
        %v4493 = vunpack.c.h.b16 %v4122
        %v4494 = vunpack.c.l.b16 %v4123
        %v4495 = vunpack.c.h.b16 %v4123
        %v4496 = vunpack.c.l.b16 %v4124
        %v4497 = vunpack.c.h.b16 %v4124
        %v4498 = vunpack.c.l.b16 %v4125
        %v4499 = vunpack.c.h.b16 %v4125
        %v4500 = vunpack.c.l.b16 %v4126
        %v4501 = vunpack.c.h.b16 %v4126
        %v4502 = vunpack.c.l.b16 %v4127
        %v4503 = vunpack.c.h.b16 %v4127
        %v4504 = vunpack.c.l.b16 %v4128
        %v4505 = vunpack.c.h.b16 %v4128
        %v4506 = vunpack.c.l.b16 %v4129
        %v4507 = vunpack.c.h.b16 %v4129
        %v4508 = vunpack.c.l.b16 %v4130
        %v4509 = vunpack.c.h.b16 %v4130
        %v4510 = vunpack.c.l.b16 %v4131
        %v4511 = vunpack.c.h.b16 %v4131
        %v4512 = vunpack.c.l.b16 %v4132
        %v4513 = vunpack.c.h.b16 %v4132
        %v4514 = vunpack.c.l.b16 %v4133
        %v4515 = vunpack.c.h.b16 %v4133
        %v4516 = vunpack.c.l.b16 %v4134
        %v4517 = vunpack.c.h.b16 %v4134
        %v4518 = vunpack.c.l.b16 %v4135
        %v4519 = vunpack.c.h.b16 %v4135
        %v4520 = vpack.c.b16 %v4268, %v4264
        %v4521 = vpack.c.b16 %v4269, %v4265
        %v4522 = vpack.c.b16 %v4270, %v4266
        %v4523 = vpack.c.b16 %v4271, %v4267
        %v4524 = vpack.c.b16 %v4276, %v4272
        %v4525 = vpack.c.b16 %v4277, %v4273
        %v4526 = vpack.c.b16 %v4278, %v4274
        %v4527 = vpack.c.b16 %v4279, %v4275
        %v4528 = vpack.c.b16 %v4284, %v4280
        %v4529 = vpack.c.b16 %v4285, %v4281
        %v4530 = vpack.c.b16 %v4286, %v4282
        %v4531 = vpack.c.b16 %v4287, %v4283
        %v4532 = vpack.c.b16 %v4292, %v4288
        %v4533 = vpack.c.b16 %v4293, %v4289
        %v4534 = vpack.c.b16 %v4294, %v4290
        %v4535 = vpack.c.b16 %v4295, %v4291
        %v4536 = vpack.c.b16 %v4300, %v4296
        %v4537 = vpack.c.b16 %v4301, %v4297
        %v4538 = vpack.c.b16 %v4302, %v4298
        %v4539 = vpack.c.b16 %v4303, %v4299
        %v4540 = vpack.c.b16 %v4308, %v4304
        %v4541 = vpack.c.b16 %v4309, %v4305
        %v4542 = vpack.c.b16 %v4310, %v4306
        %v4543 = vpack.c.b16 %v4311, %v4307
        %v4544 = vpack.c.b16 %v4316, %v4312
        %v4545 = vpack.c.b16 %v4317, %v4313
        %v4546 = vpack.c.b16 %v4318, %v4314
        %v4547 = vpack.c.b16 %v4319, %v4315
        %v4548 = vpack.c.b16 %v4324, %v4320
        %v4549 = vpack.c.b16 %v4325, %v4321
        %v4550 = vpack.c.b16 %v4326, %v4322
        %v4551 = vpack.c.b16 %v4327, %v4323
        %v4552 = vpack.c.b16 %v4332, %v4328
        %v4553 = vpack.c.b16 %v4333, %v4329
        %v4554 = vpack.c.b16 %v4334, %v4330
        %v4555 = vpack.c.b16 %v4335, %v4331
        %v4556 = vpack.c.b16 %v4340, %v4336
        %v4557 = vpack.c.b16 %v4341, %v4337
        %v4558 = vpack.c.b16 %v4342, %v4338
        %v4559 = vpack.c.b16 %v4343, %v4339
        %v4560 = vpack.c.b16 %v4348, %v4344
        %v4561 = vpack.c.b16 %v4349, %v4345
        %v4562 = vpack.c.b16 %v4350, %v4346
        %v4563 = vpack.c.b16 %v4351, %v4347
        %v4564 = vpack.c.b16 %v4356, %v4352
        %v4565 = vpack.c.b16 %v4357, %v4353
        %v4566 = vpack.c.b16 %v4358, %v4354
        %v4567 = vpack.c.b16 %v4359, %v4355
        %v4568 = vpack.c.b16 %v4364, %v4360
        %v4569 = vpack.c.b16 %v4365, %v4361
        %v4570 = vpack.c.b16 %v4366, %v4362
        %v4571 = vpack.c.b16 %v4367, %v4363
        %v4572 = vpack.c.b16 %v4372, %v4368
        %v4573 = vpack.c.b16 %v4373, %v4369
        %v4574 = vpack.c.b16 %v4374, %v4370
        %v4575 = vpack.c.b16 %v4375, %v4371
        %v4576 = vpack.c.b16 %v4380, %v4376
        %v4577 = vpack.c.b16 %v4381, %v4377
        %v4578 = vpack.c.b16 %v4382, %v4378
        %v4579 = vpack.c.b16 %v4383, %v4379
        %v4580 = vpack.c.b16 %v4388, %v4384
        %v4581 = vpack.c.b16 %v4389, %v4385
        %v4582 = vpack.c.b16 %v4390, %v4386
        %v4583 = vpack.c.b16 %v4391, %v4387
        %v4584 = vpack.c.b16 %v4396, %v4392
        %v4585 = vpack.c.b16 %v4397, %v4393
        %v4586 = vpack.c.b16 %v4398, %v4394
        %v4587 = vpack.c.b16 %v4399, %v4395
        %v4588 = vpack.c.b16 %v4404, %v4400
        %v4589 = vpack.c.b16 %v4405, %v4401
        %v4590 = vpack.c.b16 %v4406, %v4402
        %v4591 = vpack.c.b16 %v4407, %v4403
        %v4592 = vpack.c.b16 %v4412, %v4408
        %v4593 = vpack.c.b16 %v4413, %v4409
        %v4594 = vpack.c.b16 %v4414, %v4410
        %v4595 = vpack.c.b16 %v4415, %v4411
        %v4596 = vpack.c.b16 %v4420, %v4416
        %v4597 = vpack.c.b16 %v4421, %v4417
        %v4598 = vpack.c.b16 %v4422, %v4418
        %v4599 = vpack.c.b16 %v4423, %v4419
        %v4600 = vpack.c.b16 %v4428, %v4424
        %v4601 = vpack.c.b16 %v4429, %v4425
        %v4602 = vpack.c.b16 %v4430, %v4426
        %v4603 = vpack.c.b16 %v4431, %v4427
        %v4604 = vpack.c.b16 %v4436, %v4432
        %v4605 = vpack.c.b16 %v4437, %v4433
        %v4606 = vpack.c.b16 %v4438, %v4434
        %v4607 = vpack.c.b16 %v4439, %v4435
        %v4608 = vpack.c.b16 %v4444, %v4440
        %v4609 = vpack.c.b16 %v4445, %v4441
        %v4610 = vpack.c.b16 %v4446, %v4442
        %v4611 = vpack.c.b16 %v4447, %v4443
        %v4612 = vpack.c.b16 %v4452, %v4448
        %v4613 = vpack.c.b16 %v4453, %v4449
        %v4614 = vpack.c.b16 %v4454, %v4450
        %v4615 = vpack.c.b16 %v4455, %v4451
        %v4616 = vpack.c.b16 %v4460, %v4456
        %v4617 = vpack.c.b16 %v4461, %v4457
        %v4618 = vpack.c.b16 %v4462, %v4458
        %v4619 = vpack.c.b16 %v4463, %v4459
        %v4620 = vpack.c.b16 %v4468, %v4464
        %v4621 = vpack.c.b16 %v4469, %v4465
        %v4622 = vpack.c.b16 %v4470, %v4466
        %v4623 = vpack.c.b16 %v4471, %v4467
        %v4624 = vpack.c.b16 %v4476, %v4472
        %v4625 = vpack.c.b16 %v4477, %v4473
        %v4626 = vpack.c.b16 %v4478, %v4474
        %v4627 = vpack.c.b16 %v4479, %v4475
        %v4628 = vpack.c.b16 %v4484, %v4480
        %v4629 = vpack.c.b16 %v4485, %v4481
        %v4630 = vpack.c.b16 %v4486, %v4482
        %v4631 = vpack.c.b16 %v4487, %v4483
        %v4632 = vpack.c.b16 %v4492, %v4488
        %v4633 = vpack.c.b16 %v4493, %v4489
        %v4634 = vpack.c.b16 %v4494, %v4490
        %v4635 = vpack.c.b16 %v4495, %v4491
        %v4636 = vpack.c.b16 %v4500, %v4496
        %v4637 = vpack.c.b16 %v4501, %v4497
        %v4638 = vpack.c.b16 %v4502, %v4498
        %v4639 = vpack.c.b16 %v4503, %v4499
        %v4640 = vpack.c.b16 %v4508, %v4504
        %v4641 = vpack.c.b16 %v4509, %v4505
        %v4642 = vpack.c.b16 %v4510, %v4506
        %v4643 = vpack.c.b16 %v4511, %v4507
        %v4644 = vpack.c.b16 %v4516, %v4512
        %v4645 = vpack.c.b16 %v4517, %v4513
        %v4646 = vpack.c.b16 %v4518, %v4514
        %v4647 = vpack.c.b16 %v4519, %v4515
        %4776 = vmatprep.subr.bf16.mxu0 %v4549
        %4777 = vmatpush1.bf16.msra.mxu0 %v4548
        %4778 = vmatprep.subr.bf16.mxu0 %v4545
        %4779 = vmatpush1.bf16.msra.mxu0 %v4544
        %4780 = vmatprep.subr.bf16.mxu0 %v4541
        %4781 = vmatpush1.bf16.msra.mxu0 %v4540
        %4782 = vmatprep.subr.bf16.mxu0 %v4537
        %4783 = vmatpush1.bf16.msra.mxu0 %v4536
        %4784 = vmatprep.subr.bf16.mxu0 %v4533
        %4785 = vmatpush1.bf16.msra.mxu0 %v4532
        %4786 = vmatprep.subr.bf16.mxu0 %v4529
        %4787 = vmatpush1.bf16.msra.mxu0 %v4528
        %4788 = vmatprep.subr.bf16.mxu0 %v4525
        %4789 = vmatpush1.bf16.msra.mxu0 %v4524
        %4790 = vmatprep.subr.bf16.mxu0 %v4521
        %4791 = vmatpush1.bf16.msra.mxu0 %v4520
        %4792 = vmatprep.subr.bf16.mxu0 %v4581
        %4793 = vmatpush2.bf16.msra.mxu0 %v4580
        %4794 = vmatprep.subr.bf16.mxu0 %v4577
        %4795 = vmatpush2.bf16.msra.mxu0 %v4576
        %4796 = vmatprep.subr.bf16.mxu0 %v4573
        %4797 = vmatpush2.bf16.msra.mxu0 %v4572
        %4798 = vmatprep.subr.bf16.mxu0 %v4569
        %4799 = vmatpush2.bf16.msra.mxu0 %v4568
        %4800 = vmatprep.subr.bf16.mxu0 %v4565
        %4801 = vmatpush2.bf16.msra.mxu0 %v4564
        %4802 = vmatprep.subr.bf16.mxu0 %v4561
        %4803 = vmatpush2.bf16.msra.mxu0 %v4560
        %4804 = vmatprep.subr.bf16.mxu0 %v4557
        %4805 = vmatpush2.bf16.msra.mxu0 %v4556
        %4806 = vmatprep.subr.bf16.mxu0 %v4553
        %4807 = vmatpush2.bf16.msra.mxu0 %v4552
        %4808 = vmatprep.mubr.bf16.mxu0 %v3062
        %4809 = vmatmul.mubr.bf16.gmra.mxu0 %v3061
        %v4810 = vpop.f32.mrf.mxu0
        %v4811 = vadd.f32 0.0, %v4810
        %v4812 = vpop.f32.mrf.mxu0
        %v4813 = vadd.f32 0.0, %v4812
        %v4814 = vpop.f32.mrf.mxu0
        %v4815 = vadd.f32 0.0, %v4814
        %v4816 = vpop.f32.mrf.mxu0
        %v4817 = vadd.f32 0.0, %v4816
        %4818 = vdwg.mxu0
        %4819 = vmatprep.subr.bf16.mxu0 %v4613
        %4820 = vmatpush1.bf16.msra.mxu0 %v4612
        %4821 = vmatprep.subr.bf16.mxu0 %v4609
        %4822 = vmatpush1.bf16.msra.mxu0 %v4608
        %4823 = vmatprep.subr.bf16.mxu0 %v4605
        %4824 = vmatpush1.bf16.msra.mxu0 %v4604
        %4825 = vmatprep.subr.bf16.mxu0 %v4601
        %4826 = vmatpush1.bf16.msra.mxu0 %v4600
        %4827 = vmatprep.subr.bf16.mxu0 %v4597
        %4828 = vmatpush1.bf16.msra.mxu0 %v4596
        %4829 = vmatprep.subr.bf16.mxu0 %v4593
        %4830 = vmatpush1.bf16.msra.mxu0 %v4592
        %4831 = vmatprep.subr.bf16.mxu0 %v4589
        %4832 = vmatpush1.bf16.msra.mxu0 %v4588
        %4833 = vmatprep.subr.bf16.mxu0 %v4585
        %4834 = vmatpush1.bf16.msra.mxu0 %v4584
        %4835 = vmatprep.subr.bf16.mxu0 %v4645
        %4836 = vmatpush2.bf16.msra.mxu0 %v4644
        %4837 = vmatprep.subr.bf16.mxu0 %v4641
        %4838 = vmatpush2.bf16.msra.mxu0 %v4640
        %4839 = vmatprep.subr.bf16.mxu0 %v4637
        %4840 = vmatpush2.bf16.msra.mxu0 %v4636
        %4841 = vmatprep.subr.bf16.mxu0 %v4633
        %4842 = vmatpush2.bf16.msra.mxu0 %v4632
        %4843 = vmatprep.subr.bf16.mxu0 %v4629
        %4844 = vmatpush2.bf16.msra.mxu0 %v4628
        %4845 = vmatprep.subr.bf16.mxu0 %v4625
        %4846 = vmatpush2.bf16.msra.mxu0 %v4624
        %4847 = vmatprep.subr.bf16.mxu0 %v4621
        %4848 = vmatpush2.bf16.msra.mxu0 %v4620
        %4849 = vmatprep.subr.bf16.mxu0 %v4617
        %4850 = vmatpush2.bf16.msra.mxu0 %v4616
        %4851 = vmatprep.mubr.bf16.mxu0 %v3064
        %4852 = vmatmul.mubr.bf16.gmra.mxu0 %v3063
        %v4853 = vpop.f32.mrf.mxu0
        %v4854 = vadd.f32 %v4811, %v4853
        %v4855 = vpop.f32.mrf.mxu0
        %v4856 = vadd.f32 %v4813, %v4855
        %v4857 = vpop.f32.mrf.mxu0
        %v4858 = vadd.f32 %v4815, %v4857
        %v4859 = vpop.f32.mrf.mxu0
        %v4860 = vadd.f32 %v4817, %v4859
        %4861 = vdwg.mxu0
        %4862 = vmatprep.subr.bf16.mxu0 %v4551
        %4863 = vmatpush1.bf16.msra.mxu0 %v4550
        %4864 = vmatprep.subr.bf16.mxu0 %v4547
        %4865 = vmatpush1.bf16.msra.mxu0 %v4546
        %4866 = vmatprep.subr.bf16.mxu0 %v4543
        %4867 = vmatpush1.bf16.msra.mxu0 %v4542
        %4868 = vmatprep.subr.bf16.mxu0 %v4539
        %4869 = vmatpush1.bf16.msra.mxu0 %v4538
        %4870 = vmatprep.subr.bf16.mxu0 %v4535
        %4871 = vmatpush1.bf16.msra.mxu0 %v4534
        %4872 = vmatprep.subr.bf16.mxu0 %v4531
        %4873 = vmatpush1.bf16.msra.mxu0 %v4530
        %4874 = vmatprep.subr.bf16.mxu0 %v4527
        %4875 = vmatpush1.bf16.msra.mxu0 %v4526
        %4876 = vmatprep.subr.bf16.mxu0 %v4523
        %4877 = vmatpush1.bf16.msra.mxu0 %v4522
        %4878 = vmatprep.subr.bf16.mxu0 %v4583
        %4879 = vmatpush2.bf16.msra.mxu0 %v4582
        %4880 = vmatprep.subr.bf16.mxu0 %v4579
        %4881 = vmatpush2.bf16.msra.mxu0 %v4578
        %4882 = vmatprep.subr.bf16.mxu0 %v4575
        %4883 = vmatpush2.bf16.msra.mxu0 %v4574
        %4884 = vmatprep.subr.bf16.mxu0 %v4571
        %4885 = vmatpush2.bf16.msra.mxu0 %v4570
        %4886 = vmatprep.subr.bf16.mxu0 %v4567
        %4887 = vmatpush2.bf16.msra.mxu0 %v4566
        %4888 = vmatprep.subr.bf16.mxu0 %v4563
        %4889 = vmatpush2.bf16.msra.mxu0 %v4562
        %4890 = vmatprep.subr.bf16.mxu0 %v4559
        %4891 = vmatpush2.bf16.msra.mxu0 %v4558
        %4892 = vmatprep.subr.bf16.mxu0 %v4555
        %4893 = vmatpush2.bf16.msra.mxu0 %v4554
        %4894 = vmatprep.mubr.bf16.mxu0 %v3062
        %4895 = vmatmul.mubr.bf16.gmra.mxu0 %v3061
        %v4896 = vpop.f32.mrf.mxu0
        %v4897 = vadd.f32 0.0, %v4896
        %v4898 = vpop.f32.mrf.mxu0
        %v4899 = vadd.f32 0.0, %v4898
        %v4900 = vpop.f32.mrf.mxu0
        %v4901 = vadd.f32 0.0, %v4900
        %v4902 = vpop.f32.mrf.mxu0
        %v4903 = vadd.f32 0.0, %v4902
        %4904 = vdwg.mxu0
        %4905 = vmatprep.subr.bf16.mxu0 %v4615
        %4906 = vmatpush1.bf16.msra.mxu0 %v4614
        %4907 = vmatprep.subr.bf16.mxu0 %v4611
        %4908 = vmatpush1.bf16.msra.mxu0 %v4610
        %4909 = vmatprep.subr.bf16.mxu0 %v4607
        %4910 = vmatpush1.bf16.msra.mxu0 %v4606
        %4911 = vmatprep.subr.bf16.mxu0 %v4603
        %4912 = vmatpush1.bf16.msra.mxu0 %v4602
        %4913 = vmatprep.subr.bf16.mxu0 %v4599
        %4914 = vmatpush1.bf16.msra.mxu0 %v4598
        %4915 = vmatprep.subr.bf16.mxu0 %v4595
        %4916 = vmatpush1.bf16.msra.mxu0 %v4594
        %4917 = vmatprep.subr.bf16.mxu0 %v4591
        %4918 = vmatpush1.bf16.msra.mxu0 %v4590
        %4919 = vmatprep.subr.bf16.mxu0 %v4587
        %4920 = vmatpush1.bf16.msra.mxu0 %v4586
        %4921 = vmatprep.subr.bf16.mxu0 %v4647
        %4922 = vmatpush2.bf16.msra.mxu0 %v4646
        %4923 = vmatprep.subr.bf16.mxu0 %v4643
        %4924 = vmatpush2.bf16.msra.mxu0 %v4642
        %4925 = vmatprep.subr.bf16.mxu0 %v4639
        %4926 = vmatpush2.bf16.msra.mxu0 %v4638
        %4927 = vmatprep.subr.bf16.mxu0 %v4635
        %4928 = vmatpush2.bf16.msra.mxu0 %v4634
        %4929 = vmatprep.subr.bf16.mxu0 %v4631
        %4930 = vmatpush2.bf16.msra.mxu0 %v4630
        %4931 = vmatprep.subr.bf16.mxu0 %v4627
        %4932 = vmatpush2.bf16.msra.mxu0 %v4626
        %4933 = vmatprep.subr.bf16.mxu0 %v4623
        %4934 = vmatpush2.bf16.msra.mxu0 %v4622
        %4935 = vmatprep.subr.bf16.mxu0 %v4619
        %4936 = vmatpush2.bf16.msra.mxu0 %v4618
        %4937 = vmatprep.mubr.bf16.mxu0 %v3064
        %4938 = vmatmul.mubr.bf16.gmra.mxu0 %v3063
        %v4939 = vpop.f32.mrf.mxu0
        %v4940 = vadd.f32 %v4897, %v4939
        %v4941 = vpop.f32.mrf.mxu0
        %v4942 = vadd.f32 %v4899, %v4941
        %v4943 = vpop.f32.mrf.mxu0
        %v4944 = vadd.f32 %v4901, %v4943
        %v4945 = vpop.f32.mrf.mxu0
        %v4946 = vadd.f32 %v4903, %v4945
        %4947 = vdwg.mxu0
        %s4948 = scalar_lea.vmem [#allocation8], 16
        %v4949 = vld [vmem:[%s4948] sm:$0xff]
        %v4950 = vld [vmem:[%s4948 + $0x8] sm:$0xff]
        %vm4951 = vcmask 130048
        %v4953 = vsel %vm4951, %v4949, 0
        %v4956 = vsel %vm4951, %v4950, 0
        %4958 = vmatprep.subr.mxu0 0.0
        %4959 = vmatpush1.msra.mxu0 0.0
        %4960 = vmatprep.subr.mxu0 0.0
        %4961 = vmatpush1.msra.mxu0 0.0
        %4962 = vmatprep.subr.mxu0 0.0
        %4963 = vmatpush1.msra.mxu0 0.0
        %4964 = vmatprep.subr.mxu0 0.0
        %4965 = vmatpush1.msra.mxu0 0.0
        %4966 = vmatprep.subr.mxu0 0.0
        %4967 = vmatpush1.msra.mxu0 0.0
        %4968 = vmatprep.subr.mxu0 0.0
        %4969 = vmatpush1.msra.mxu0 0.0
        %4970 = vmatprep.subr.mxu0 0.0
        %4971 = vmatpush1.msra.mxu0 0.0
        %4972 = vmatprep.subr.mxu0 0.0
        %4973 = vmatpush1.msra.mxu0 0.0
        %4974 = vmatprep.subr.mxu0 0.0
        %4975 = vmatpush1.msra.mxu0 0.0
        %4976 = vmatprep.subr.mxu0 0.0
        %4977 = vmatpush1.msra.mxu0 0.0
        %4978 = vmatprep.subr.mxu0 0.0
        %4979 = vmatpush1.msra.mxu0 0.0
        %4980 = vmatprep.subr.mxu0 0.0
        %4981 = vmatpush1.msra.mxu0 0.0
        %4982 = vmatprep.subr.mxu0 0.0
        %4983 = vmatpush1.msra.mxu0 0.0
        %4984 = vmatprep.subr.mxu0 0.0
        %4985 = vmatpush1.msra.mxu0 0.0
        %4986 = vmatprep.subr.mxu0 %v4860
        %4987 = vmatpush1.msra.mxu0 %v4858
        %4988 = vmatprep.subr.mxu0 %v4856
        %4989 = vmatpush1.msra.mxu0 %v4854
        %4990 = vmatprep.subr.mxu0 0.0
        %4991 = vmatpush2.msra.mxu0 0.0
        %4992 = vmatprep.subr.mxu0 0.0
        %4993 = vmatpush2.msra.mxu0 0.0
        %4994 = vmatprep.subr.mxu0 0.0
        %4995 = vmatpush2.msra.mxu0 0.0
        %4996 = vmatprep.subr.mxu0 0.0
        %4997 = vmatpush2.msra.mxu0 0.0
        %4998 = vmatprep.subr.mxu0 0.0
        %4999 = vmatpush2.msra.mxu0 0.0
        %5000 = vmatprep.subr.mxu0 0.0
        %5001 = vmatpush2.msra.mxu0 0.0
        %5002 = vmatprep.subr.mxu0 0.0
        %5003 = vmatpush2.msra.mxu0 0.0
        %5004 = vmatprep.subr.mxu0 0.0
        %5005 = vmatpush2.msra.mxu0 0.0
        %5006 = vmatprep.subr.mxu0 0.0
        %5007 = vmatpush2.msra.mxu0 0.0
        %5008 = vmatprep.subr.mxu0 0.0
        %5009 = vmatpush2.msra.mxu0 0.0
        %5010 = vmatprep.subr.mxu0 0.0
        %5011 = vmatpush2.msra.mxu0 0.0
        %5012 = vmatprep.subr.mxu0 0.0
        %5013 = vmatpush2.msra.mxu0 0.0
        %5014 = vmatprep.subr.mxu0 0.0
        %5015 = vmatpush2.msra.mxu0 0.0
        %5016 = vmatprep.subr.mxu0 0.0
        %5017 = vmatpush2.msra.mxu0 0.0
        %5018 = vmatprep.subr.mxu0 0.0
        %5019 = vmatpush2.msra.mxu0 0.0
        %5020 = vmatprep.subr.mxu0 0.0
        %5021 = vmatpush2.msra.mxu0 0.0
        %5022 = vmatprep.mubr.f32.mxu0 0.0
        %5023 = vmatmul.mubr.f32.gmra.mxu0 %v4953
        %v5024 = vpop.f32.mrf.mxu0
        %v5025 = vadd.f32 0.0, %v5024
        %v5026 = vpop.f32.mrf.mxu0
        %v5027 = vadd.f32 0.0, %v5026
        %5028 = vmatprep.mubr.f32.mxu0 0.0
        %5029 = vmatmul.mubr.f32.gmra.mxu0 %v4956
        %v5030 = vpop.f32.mrf.mxu0
        %v5031 = vadd.f32 0.0, %v5030
        %v5032 = vpop.f32.mrf.mxu0
        %v5033 = vadd.f32 0.0, %v5032
        %5034 = vdwg.mxu0
        %5035 = vmatprep.subr.mxu0 0.0
        %5036 = vmatpush1.msra.mxu0 0.0
        %5037 = vmatprep.subr.mxu0 0.0
        %5038 = vmatpush1.msra.mxu0 0.0
        %5039 = vmatprep.subr.mxu0 0.0
        %5040 = vmatpush1.msra.mxu0 0.0
        %5041 = vmatprep.subr.mxu0 0.0
        %5042 = vmatpush1.msra.mxu0 0.0
        %5043 = vmatprep.subr.mxu0 0.0
        %5044 = vmatpush1.msra.mxu0 0.0
        %5045 = vmatprep.subr.mxu0 0.0
        %5046 = vmatpush1.msra.mxu0 0.0
        %5047 = vmatprep.subr.mxu0 0.0
        %5048 = vmatpush1.msra.mxu0 0.0
        %5049 = vmatprep.subr.mxu0 0.0
        %5050 = vmatpush1.msra.mxu0 0.0
        %5051 = vmatprep.subr.mxu0 0.0
        %5052 = vmatpush1.msra.mxu0 0.0
        %5053 = vmatprep.subr.mxu0 0.0
        %5054 = vmatpush1.msra.mxu0 0.0
        %5055 = vmatprep.subr.mxu0 0.0
        %5056 = vmatpush1.msra.mxu0 0.0
        %5057 = vmatprep.subr.mxu0 0.0
        %5058 = vmatpush1.msra.mxu0 0.0
        %5059 = vmatprep.subr.mxu0 0.0
        %5060 = vmatpush1.msra.mxu0 0.0
        %5061 = vmatprep.subr.mxu0 0.0
        %5062 = vmatpush1.msra.mxu0 0.0
        %5063 = vmatprep.subr.mxu0 %v4946
        %5064 = vmatpush1.msra.mxu0 %v4944
        %5065 = vmatprep.subr.mxu0 %v4942
        %5066 = vmatpush1.msra.mxu0 %v4940
        %5067 = vmatprep.subr.mxu0 0.0
        %5068 = vmatpush2.msra.mxu0 0.0
        %5069 = vmatprep.subr.mxu0 0.0
        %5070 = vmatpush2.msra.mxu0 0.0
        %5071 = vmatprep.subr.mxu0 0.0
        %5072 = vmatpush2.msra.mxu0 0.0
        %5073 = vmatprep.subr.mxu0 0.0
        %5074 = vmatpush2.msra.mxu0 0.0
        %5075 = vmatprep.subr.mxu0 0.0
        %5076 = vmatpush2.msra.mxu0 0.0
        %5077 = vmatprep.subr.mxu0 0.0
        %5078 = vmatpush2.msra.mxu0 0.0
        %5079 = vmatprep.subr.mxu0 0.0
        %5080 = vmatpush2.msra.mxu0 0.0
        %5081 = vmatprep.subr.mxu0 0.0
        %5082 = vmatpush2.msra.mxu0 0.0
        %5083 = vmatprep.subr.mxu0 0.0
        %5084 = vmatpush2.msra.mxu0 0.0
        %5085 = vmatprep.subr.mxu0 0.0
        %5086 = vmatpush2.msra.mxu0 0.0
        %5087 = vmatprep.subr.mxu0 0.0
        %5088 = vmatpush2.msra.mxu0 0.0
        %5089 = vmatprep.subr.mxu0 0.0
        %5090 = vmatpush2.msra.mxu0 0.0
        %5091 = vmatprep.subr.mxu0 0.0
        %5092 = vmatpush2.msra.mxu0 0.0
        %5093 = vmatprep.subr.mxu0 0.0
        %5094 = vmatpush2.msra.mxu0 0.0
        %5095 = vmatprep.subr.mxu0 0.0
        %5096 = vmatpush2.msra.mxu0 0.0
        %5097 = vmatprep.subr.mxu0 0.0
        %5098 = vmatpush2.msra.mxu0 0.0
        %5099 = vmatprep.mubr.f32.mxu0 0.0
        %5100 = vmatmul.mubr.f32.gmra.mxu0 %v4953
        %v5101 = vpop.f32.mrf.mxu0
        %v5102 = vadd.f32 0.0, %v5101
        %v5103 = vpop.f32.mrf.mxu0
        %v5104 = vadd.f32 0.0, %v5103
        %5105 = vmatprep.mubr.f32.mxu0 0.0
        %5106 = vmatmul.mubr.f32.gmra.mxu0 %v4956
        %v5107 = vpop.f32.mrf.mxu0
        %v5108 = vadd.f32 0.0, %v5107
        %v5109 = vpop.f32.mrf.mxu0
        %v5110 = vadd.f32 0.0, %v5109
        %5111 = vdwg.mxu0
        %v5113 = vsel %vm4951, %v4005, 0
        %v5116 = vsel %vm4951, %v4006, 0
        %5118 = vmatprep.subr.mxu0 0.0
        %5119 = vmatpush1.msra.mxu0 0.0
        %5120 = vmatprep.subr.mxu0 0.0
        %5121 = vmatpush1.msra.mxu0 0.0
        %5122 = vmatprep.subr.mxu0 0.0
        %5123 = vmatpush1.msra.mxu0 0.0
        %5124 = vmatprep.subr.mxu0 0.0
        %5125 = vmatpush1.msra.mxu0 0.0
        %5126 = vmatprep.subr.mxu0 0.0
        %5127 = vmatpush1.msra.mxu0 0.0
        %5128 = vmatprep.subr.mxu0 0.0
        %5129 = vmatpush1.msra.mxu0 0.0
        %5130 = vmatprep.subr.mxu0 0.0
        %5131 = vmatpush1.msra.mxu0 0.0
        %5132 = vmatprep.subr.mxu0 0.0
        %5133 = vmatpush1.msra.mxu0 0.0
        %5134 = vmatprep.subr.mxu0 0.0
        %5135 = vmatpush1.msra.mxu0 0.0
        %5136 = vmatprep.subr.mxu0 0.0
        %5137 = vmatpush1.msra.mxu0 0.0
        %5138 = vmatprep.subr.mxu0 0.0
        %5139 = vmatpush1.msra.mxu0 0.0
        %5140 = vmatprep.subr.mxu0 0.0
        %5141 = vmatpush1.msra.mxu0 0.0
        %5142 = vmatprep.subr.mxu0 0.0
        %5143 = vmatpush1.msra.mxu0 0.0
        %5144 = vmatprep.subr.mxu0 0.0
        %5145 = vmatpush1.msra.mxu0 0.0
        %5146 = vmatprep.subr.mxu0 %v3917
        %5147 = vmatpush1.msra.mxu0 %v3915
        %5148 = vmatprep.subr.mxu0 %v3913
        %5149 = vmatpush1.msra.mxu0 %v3911
        %5150 = vmatprep.subr.mxu0 0.0
        %5151 = vmatpush2.msra.mxu0 0.0
        %5152 = vmatprep.subr.mxu0 0.0
        %5153 = vmatpush2.msra.mxu0 0.0
        %5154 = vmatprep.subr.mxu0 0.0
        %5155 = vmatpush2.msra.mxu0 0.0
        %5156 = vmatprep.subr.mxu0 0.0
        %5157 = vmatpush2.msra.mxu0 0.0
        %5158 = vmatprep.subr.mxu0 0.0
        %5159 = vmatpush2.msra.mxu0 0.0
        %5160 = vmatprep.subr.mxu0 0.0
        %5161 = vmatpush2.msra.mxu0 0.0
        %5162 = vmatprep.subr.mxu0 0.0
        %5163 = vmatpush2.msra.mxu0 0.0
        %5164 = vmatprep.subr.mxu0 0.0
        %5165 = vmatpush2.msra.mxu0 0.0
        %5166 = vmatprep.subr.mxu0 0.0
        %5167 = vmatpush2.msra.mxu0 0.0
        %5168 = vmatprep.subr.mxu0 0.0
        %5169 = vmatpush2.msra.mxu0 0.0
        %5170 = vmatprep.subr.mxu0 0.0
        %5171 = vmatpush2.msra.mxu0 0.0
        %5172 = vmatprep.subr.mxu0 0.0
        %5173 = vmatpush2.msra.mxu0 0.0
        %5174 = vmatprep.subr.mxu0 0.0
        %5175 = vmatpush2.msra.mxu0 0.0
        %5176 = vmatprep.subr.mxu0 0.0
        %5177 = vmatpush2.msra.mxu0 0.0
        %5178 = vmatprep.subr.mxu0 0.0
        %5179 = vmatpush2.msra.mxu0 0.0
        %5180 = vmatprep.subr.mxu0 0.0
        %5181 = vmatpush2.msra.mxu0 0.0
        %5182 = vmatprep.mubr.f32.mxu0 0.0
        %5183 = vmatmul.mubr.f32.gmra.mxu0 %v5113
        %v5184 = vpop.f32.mrf.mxu0
        %v5185 = vadd.f32 %v5025, %v5184
        %v5186 = vpop.f32.mrf.mxu0
        %v5187 = vadd.f32 %v5027, %v5186
        %5188 = vmatprep.mubr.f32.mxu0 0.0
        %5189 = vmatmul.mubr.f32.gmra.mxu0 %v5116
        %v5190 = vpop.f32.mrf.mxu0
        %v5191 = vadd.f32 %v5031, %v5190
        %v5192 = vpop.f32.mrf.mxu0
        %v5193 = vadd.f32 %v5033, %v5192
        %5194 = vdwg.mxu0
        %5195 = vmatprep.subr.mxu0 0.0
        %5196 = vmatpush1.msra.mxu0 0.0
        %5197 = vmatprep.subr.mxu0 0.0
        %5198 = vmatpush1.msra.mxu0 0.0
        %5199 = vmatprep.subr.mxu0 0.0
        %5200 = vmatpush1.msra.mxu0 0.0
        %5201 = vmatprep.subr.mxu0 0.0
        %5202 = vmatpush1.msra.mxu0 0.0
        %5203 = vmatprep.subr.mxu0 0.0
        %5204 = vmatpush1.msra.mxu0 0.0
        %5205 = vmatprep.subr.mxu0 0.0
        %5206 = vmatpush1.msra.mxu0 0.0
        %5207 = vmatprep.subr.mxu0 0.0
        %5208 = vmatpush1.msra.mxu0 0.0
        %5209 = vmatprep.subr.mxu0 0.0
        %5210 = vmatpush1.msra.mxu0 0.0
        %5211 = vmatprep.subr.mxu0 0.0
        %5212 = vmatpush1.msra.mxu0 0.0
        %5213 = vmatprep.subr.mxu0 0.0
        %5214 = vmatpush1.msra.mxu0 0.0
        %5215 = vmatprep.subr.mxu0 0.0
        %5216 = vmatpush1.msra.mxu0 0.0
        %5217 = vmatprep.subr.mxu0 0.0
        %5218 = vmatpush1.msra.mxu0 0.0
        %5219 = vmatprep.subr.mxu0 0.0
        %5220 = vmatpush1.msra.mxu0 0.0
        %5221 = vmatprep.subr.mxu0 0.0
        %5222 = vmatpush1.msra.mxu0 0.0
        %5223 = vmatprep.subr.mxu0 %v4003
        %5224 = vmatpush1.msra.mxu0 %v4001
        %5225 = vmatprep.subr.mxu0 %v3999
        %5226 = vmatpush1.msra.mxu0 %v3997
        %5227 = vmatprep.subr.mxu0 0.0
        %5228 = vmatpush2.msra.mxu0 0.0
        %5229 = vmatprep.subr.mxu0 0.0
        %5230 = vmatpush2.msra.mxu0 0.0
        %5231 = vmatprep.subr.mxu0 0.0
        %5232 = vmatpush2.msra.mxu0 0.0
        %5233 = vmatprep.subr.mxu0 0.0
        %5234 = vmatpush2.msra.mxu0 0.0
        %5235 = vmatprep.subr.mxu0 0.0
        %5236 = vmatpush2.msra.mxu0 0.0
        %5237 = vmatprep.subr.mxu0 0.0
        %5238 = vmatpush2.msra.mxu0 0.0
        %5239 = vmatprep.subr.mxu0 0.0
        %5240 = vmatpush2.msra.mxu0 0.0
        %5241 = vmatprep.subr.mxu0 0.0
        %5242 = vmatpush2.msra.mxu0 0.0
        %5243 = vmatprep.subr.mxu0 0.0
        %5244 = vmatpush2.msra.mxu0 0.0
        %5245 = vmatprep.subr.mxu0 0.0
        %5246 = vmatpush2.msra.mxu0 0.0
        %5247 = vmatprep.subr.mxu0 0.0
        %5248 = vmatpush2.msra.mxu0 0.0
        %5249 = vmatprep.subr.mxu0 0.0
        %5250 = vmatpush2.msra.mxu0 0.0
        %5251 = vmatprep.subr.mxu0 0.0
        %5252 = vmatpush2.msra.mxu0 0.0
        %5253 = vmatprep.subr.mxu0 0.0
        %5254 = vmatpush2.msra.mxu0 0.0
        %5255 = vmatprep.subr.mxu0 0.0
        %5256 = vmatpush2.msra.mxu0 0.0
        %5257 = vmatprep.subr.mxu0 0.0
        %5258 = vmatpush2.msra.mxu0 0.0
        %5259 = vmatprep.mubr.f32.mxu0 0.0
        %5260 = vmatmul.mubr.f32.gmra.mxu0 %v5113
        %v5261 = vpop.f32.mrf.mxu0
        %v5262 = vadd.f32 %v5102, %v5261
        %v5263 = vpop.f32.mrf.mxu0
        %v5264 = vadd.f32 %v5104, %v5263
        %5265 = vmatprep.mubr.f32.mxu0 0.0
        %5266 = vmatmul.mubr.f32.gmra.mxu0 %v5116
        %v5267 = vpop.f32.mrf.mxu0
        %v5268 = vadd.f32 %v5108, %v5267
        %v5269 = vpop.f32.mrf.mxu0
        %v5270 = vadd.f32 %v5110, %v5269
        %5271 = vdwg.mxu0
        %s5272 = scalar_lea.vmem [#allocation7], 2048
        %v5273 = vld [vmem:[%s5272] sm:$0xff]
        %v5274 = vld [vmem:[%s5272 + $0x8] sm:$0xff]
        %v5275 = vld [vmem:[%s5272 + $0x10] sm:$0xff]
        %v5276 = vld [vmem:[%s5272 + $0x18] sm:$0xff]
        %v5277 = vld [vmem:[%s5272 + $0x20] sm:$0xff]
        %v5278 = vld [vmem:[%s5272 + $0x28] sm:$0xff]
        %v5279 = vld [vmem:[%s5272 + $0x30] sm:$0xff]
        %v5280 = vld [vmem:[%s5272 + $0x38] sm:$0xff]
        %v5281 = vld [vmem:[%s5272 + $0x40] sm:$0xff]
        %v5282 = vld [vmem:[%s5272 + $0x48] sm:$0xff]
        %v5283 = vld [vmem:[%s5272 + $0x50] sm:$0xff]
        %v5284 = vld [vmem:[%s5272 + $0x58] sm:$0xff]
        %v5285 = vld [vmem:[%s5272 + $0x60] sm:$0xff]
        %v5286 = vld [vmem:[%s5272 + $0x68] sm:$0xff]
        %v5287 = vld [vmem:[%s5272 + $0x70] sm:$0xff]
        %v5288 = vld [vmem:[%s5272 + $0x78] sm:$0xff]
        %v5289 = vld [vmem:[%s5272 + $0x80] sm:$0xff]
        %v5290 = vld [vmem:[%s5272 + $0x88] sm:$0xff]
        %v5291 = vld [vmem:[%s5272 + $0x90] sm:$0xff]
        %v5292 = vld [vmem:[%s5272 + $0x98] sm:$0xff]
        %v5293 = vld [vmem:[%s5272 + $0xa0] sm:$0xff]
        %v5294 = vld [vmem:[%s5272 + $0xa8] sm:$0xff]
        %v5295 = vld [vmem:[%s5272 + $0xb0] sm:$0xff]
        %v5296 = vld [vmem:[%s5272 + $0xb8] sm:$0xff]
        %v5297 = vld [vmem:[%s5272 + $0xc0] sm:$0xff]
        %v5298 = vld [vmem:[%s5272 + $0xc8] sm:$0xff]
        %v5299 = vld [vmem:[%s5272 + $0xd0] sm:$0xff]
        %v5300 = vld [vmem:[%s5272 + $0xd8] sm:$0xff]
        %v5301 = vld [vmem:[%s5272 + $0xe0] sm:$0xff]
        %v5302 = vld [vmem:[%s5272 + $0xe8] sm:$0xff]
        %v5303 = vld [vmem:[%s5272 + $0xf0] sm:$0xff]
        %v5304 = vld [vmem:[%s5272 + $0xf8] sm:$0xff]
        %v5305 = vld [vmem:[%s5272 + $0x100] sm:$0xff]
        %v5306 = vld [vmem:[%s5272 + $0x108] sm:$0xff]
        %v5307 = vld [vmem:[%s5272 + $0x110] sm:$0xff]
        %v5308 = vld [vmem:[%s5272 + $0x118] sm:$0xff]
        %v5309 = vld [vmem:[%s5272 + $0x120] sm:$0xff]
        %v5310 = vld [vmem:[%s5272 + $0x128] sm:$0xff]
        %v5311 = vld [vmem:[%s5272 + $0x130] sm:$0xff]
        %v5312 = vld [vmem:[%s5272 + $0x138] sm:$0xff]
        %v5313 = vld [vmem:[%s5272 + $0x140] sm:$0xff]
        %v5314 = vld [vmem:[%s5272 + $0x148] sm:$0xff]
        %v5315 = vld [vmem:[%s5272 + $0x150] sm:$0xff]
        %v5316 = vld [vmem:[%s5272 + $0x158] sm:$0xff]
        %v5317 = vld [vmem:[%s5272 + $0x160] sm:$0xff]
        %v5318 = vld [vmem:[%s5272 + $0x168] sm:$0xff]
        %v5319 = vld [vmem:[%s5272 + $0x170] sm:$0xff]
        %v5320 = vld [vmem:[%s5272 + $0x178] sm:$0xff]
        %v5321 = vld [vmem:[%s5272 + $0x180] sm:$0xff]
        %v5322 = vld [vmem:[%s5272 + $0x188] sm:$0xff]
        %v5323 = vld [vmem:[%s5272 + $0x190] sm:$0xff]
        %v5324 = vld [vmem:[%s5272 + $0x198] sm:$0xff]
        %v5325 = vld [vmem:[%s5272 + $0x1a0] sm:$0xff]
        %v5326 = vld [vmem:[%s5272 + $0x1a8] sm:$0xff]
        %v5327 = vld [vmem:[%s5272 + $0x1b0] sm:$0xff]
        %v5328 = vld [vmem:[%s5272 + $0x1b8] sm:$0xff]
        %v5329 = vld [vmem:[%s5272 + $0x1c0] sm:$0xff]
        %v5330 = vld [vmem:[%s5272 + $0x1c8] sm:$0xff]
        %v5331 = vld [vmem:[%s5272 + $0x1d0] sm:$0xff]
        %v5332 = vld [vmem:[%s5272 + $0x1d8] sm:$0xff]
        %v5333 = vld [vmem:[%s5272 + $0x1e0] sm:$0xff]
        %v5334 = vld [vmem:[%s5272 + $0x1e8] sm:$0xff]
        %v5335 = vld [vmem:[%s5272 + $0x1f0] sm:$0xff]
        %v5336 = vld [vmem:[%s5272 + $0x1f8] sm:$0xff]
        %v5337 = vld [vmem:[%s5272 + $0x200] sm:$0xff]
        %v5338 = vld [vmem:[%s5272 + $0x208] sm:$0xff]
        %v5339 = vld [vmem:[%s5272 + $0x210] sm:$0xff]
        %v5340 = vld [vmem:[%s5272 + $0x218] sm:$0xff]
        %v5341 = vld [vmem:[%s5272 + $0x220] sm:$0xff]
        %v5342 = vld [vmem:[%s5272 + $0x228] sm:$0xff]
        %v5343 = vld [vmem:[%s5272 + $0x230] sm:$0xff]
        %v5344 = vld [vmem:[%s5272 + $0x238] sm:$0xff]
        %v5345 = vld [vmem:[%s5272 + $0x240] sm:$0xff]
        %v5346 = vld [vmem:[%s5272 + $0x248] sm:$0xff]
        %v5347 = vld [vmem:[%s5272 + $0x250] sm:$0xff]
        %v5348 = vld [vmem:[%s5272 + $0x258] sm:$0xff]
        %v5349 = vld [vmem:[%s5272 + $0x260] sm:$0xff]
        %v5350 = vld [vmem:[%s5272 + $0x268] sm:$0xff]
        %v5351 = vld [vmem:[%s5272 + $0x270] sm:$0xff]
        %v5352 = vld [vmem:[%s5272 + $0x278] sm:$0xff]
        %v5353 = vld [vmem:[%s5272 + $0x280] sm:$0xff]
        %v5354 = vld [vmem:[%s5272 + $0x288] sm:$0xff]
        %v5355 = vld [vmem:[%s5272 + $0x290] sm:$0xff]
        %v5356 = vld [vmem:[%s5272 + $0x298] sm:$0xff]
        %v5357 = vld [vmem:[%s5272 + $0x2a0] sm:$0xff]
        %v5358 = vld [vmem:[%s5272 + $0x2a8] sm:$0xff]
        %v5359 = vld [vmem:[%s5272 + $0x2b0] sm:$0xff]
        %v5360 = vld [vmem:[%s5272 + $0x2b8] sm:$0xff]
        %v5361 = vld [vmem:[%s5272 + $0x2c0] sm:$0xff]
        %v5362 = vld [vmem:[%s5272 + $0x2c8] sm:$0xff]
        %v5363 = vld [vmem:[%s5272 + $0x2d0] sm:$0xff]
        %v5364 = vld [vmem:[%s5272 + $0x2d8] sm:$0xff]
        %v5365 = vld [vmem:[%s5272 + $0x2e0] sm:$0xff]
        %v5366 = vld [vmem:[%s5272 + $0x2e8] sm:$0xff]
        %v5367 = vld [vmem:[%s5272 + $0x2f0] sm:$0xff]
        %v5368 = vld [vmem:[%s5272 + $0x2f8] sm:$0xff]
        %v5369 = vld [vmem:[%s5272 + $0x300] sm:$0xff]
        %v5370 = vld [vmem:[%s5272 + $0x308] sm:$0xff]
        %v5371 = vld [vmem:[%s5272 + $0x310] sm:$0xff]
        %v5372 = vld [vmem:[%s5272 + $0x318] sm:$0xff]
        %v5373 = vld [vmem:[%s5272 + $0x320] sm:$0xff]
        %v5374 = vld [vmem:[%s5272 + $0x328] sm:$0xff]
        %v5375 = vld [vmem:[%s5272 + $0x330] sm:$0xff]
        %v5376 = vld [vmem:[%s5272 + $0x338] sm:$0xff]
        %v5377 = vld [vmem:[%s5272 + $0x340] sm:$0xff]
        %v5378 = vld [vmem:[%s5272 + $0x348] sm:$0xff]
        %v5379 = vld [vmem:[%s5272 + $0x350] sm:$0xff]
        %v5380 = vld [vmem:[%s5272 + $0x358] sm:$0xff]
        %v5381 = vld [vmem:[%s5272 + $0x360] sm:$0xff]
        %v5382 = vld [vmem:[%s5272 + $0x368] sm:$0xff]
        %v5383 = vld [vmem:[%s5272 + $0x370] sm:$0xff]
        %v5384 = vld [vmem:[%s5272 + $0x378] sm:$0xff]
        %v5385 = vld [vmem:[%s5272 + $0x380] sm:$0xff]
        %v5386 = vld [vmem:[%s5272 + $0x388] sm:$0xff]
        %v5387 = vld [vmem:[%s5272 + $0x390] sm:$0xff]
        %v5388 = vld [vmem:[%s5272 + $0x398] sm:$0xff]
        %v5389 = vld [vmem:[%s5272 + $0x3a0] sm:$0xff]
        %v5390 = vld [vmem:[%s5272 + $0x3a8] sm:$0xff]
        %v5391 = vld [vmem:[%s5272 + $0x3b0] sm:$0xff]
        %v5392 = vld [vmem:[%s5272 + $0x3b8] sm:$0xff]
        %v5393 = vld [vmem:[%s5272 + $0x3c0] sm:$0xff]
        %v5394 = vld [vmem:[%s5272 + $0x3c8] sm:$0xff]
        %v5395 = vld [vmem:[%s5272 + $0x3d0] sm:$0xff]
        %v5396 = vld [vmem:[%s5272 + $0x3d8] sm:$0xff]
        %v5397 = vld [vmem:[%s5272 + $0x3e0] sm:$0xff]
        %v5398 = vld [vmem:[%s5272 + $0x3e8] sm:$0xff]
        %v5399 = vld [vmem:[%s5272 + $0x3f0] sm:$0xff]
        %v5400 = vld [vmem:[%s5272 + $0x3f8] sm:$0xff]
        %v5529 = vunpack.c.l.b16 %v5273
        %v5530 = vunpack.c.h.b16 %v5273
        %v5531 = vunpack.c.l.b16 %v5274
        %v5532 = vunpack.c.h.b16 %v5274
        %v5533 = vunpack.c.l.b16 %v5275
        %v5534 = vunpack.c.h.b16 %v5275
        %v5535 = vunpack.c.l.b16 %v5276
        %v5536 = vunpack.c.h.b16 %v5276
        %v5537 = vunpack.c.l.b16 %v5277
        %v5538 = vunpack.c.h.b16 %v5277
        %v5539 = vunpack.c.l.b16 %v5278
        %v5540 = vunpack.c.h.b16 %v5278
        %v5541 = vunpack.c.l.b16 %v5279
        %v5542 = vunpack.c.h.b16 %v5279
        %v5543 = vunpack.c.l.b16 %v5280
        %v5544 = vunpack.c.h.b16 %v5280
        %v5545 = vunpack.c.l.b16 %v5281
        %v5546 = vunpack.c.h.b16 %v5281
        %v5547 = vunpack.c.l.b16 %v5282
        %v5548 = vunpack.c.h.b16 %v5282
        %v5549 = vunpack.c.l.b16 %v5283
        %v5550 = vunpack.c.h.b16 %v5283
        %v5551 = vunpack.c.l.b16 %v5284
        %v5552 = vunpack.c.h.b16 %v5284
        %v5553 = vunpack.c.l.b16 %v5285
        %v5554 = vunpack.c.h.b16 %v5285
        %v5555 = vunpack.c.l.b16 %v5286
        %v5556 = vunpack.c.h.b16 %v5286
        %v5557 = vunpack.c.l.b16 %v5287
        %v5558 = vunpack.c.h.b16 %v5287
        %v5559 = vunpack.c.l.b16 %v5288
        %v5560 = vunpack.c.h.b16 %v5288
        %v5561 = vunpack.c.l.b16 %v5289
        %v5562 = vunpack.c.h.b16 %v5289
        %v5563 = vunpack.c.l.b16 %v5290
        %v5564 = vunpack.c.h.b16 %v5290
        %v5565 = vunpack.c.l.b16 %v5291
        %v5566 = vunpack.c.h.b16 %v5291
        %v5567 = vunpack.c.l.b16 %v5292
        %v5568 = vunpack.c.h.b16 %v5292
        %v5569 = vunpack.c.l.b16 %v5293
        %v5570 = vunpack.c.h.b16 %v5293
        %v5571 = vunpack.c.l.b16 %v5294
        %v5572 = vunpack.c.h.b16 %v5294
        %v5573 = vunpack.c.l.b16 %v5295
        %v5574 = vunpack.c.h.b16 %v5295
        %v5575 = vunpack.c.l.b16 %v5296
        %v5576 = vunpack.c.h.b16 %v5296
        %v5577 = vunpack.c.l.b16 %v5297
        %v5578 = vunpack.c.h.b16 %v5297
        %v5579 = vunpack.c.l.b16 %v5298
        %v5580 = vunpack.c.h.b16 %v5298
        %v5581 = vunpack.c.l.b16 %v5299
        %v5582 = vunpack.c.h.b16 %v5299
        %v5583 = vunpack.c.l.b16 %v5300
        %v5584 = vunpack.c.h.b16 %v5300
        %v5585 = vunpack.c.l.b16 %v5301
        %v5586 = vunpack.c.h.b16 %v5301
        %v5587 = vunpack.c.l.b16 %v5302
        %v5588 = vunpack.c.h.b16 %v5302
        %v5589 = vunpack.c.l.b16 %v5303
        %v5590 = vunpack.c.h.b16 %v5303
        %v5591 = vunpack.c.l.b16 %v5304
        %v5592 = vunpack.c.h.b16 %v5304
        %v5593 = vunpack.c.l.b16 %v5305
        %v5594 = vunpack.c.h.b16 %v5305
        %v5595 = vunpack.c.l.b16 %v5306
        %v5596 = vunpack.c.h.b16 %v5306
        %v5597 = vunpack.c.l.b16 %v5307
        %v5598 = vunpack.c.h.b16 %v5307
        %v5599 = vunpack.c.l.b16 %v5308
        %v5600 = vunpack.c.h.b16 %v5308
        %v5601 = vunpack.c.l.b16 %v5309
        %v5602 = vunpack.c.h.b16 %v5309
        %v5603 = vunpack.c.l.b16 %v5310
        %v5604 = vunpack.c.h.b16 %v5310
        %v5605 = vunpack.c.l.b16 %v5311
        %v5606 = vunpack.c.h.b16 %v5311
        %v5607 = vunpack.c.l.b16 %v5312
        %v5608 = vunpack.c.h.b16 %v5312
        %v5609 = vunpack.c.l.b16 %v5313
        %v5610 = vunpack.c.h.b16 %v5313
        %v5611 = vunpack.c.l.b16 %v5314
        %v5612 = vunpack.c.h.b16 %v5314
        %v5613 = vunpack.c.l.b16 %v5315
        %v5614 = vunpack.c.h.b16 %v5315
        %v5615 = vunpack.c.l.b16 %v5316
        %v5616 = vunpack.c.h.b16 %v5316
        %v5617 = vunpack.c.l.b16 %v5317
        %v5618 = vunpack.c.h.b16 %v5317
        %v5619 = vunpack.c.l.b16 %v5318
        %v5620 = vunpack.c.h.b16 %v5318
        %v5621 = vunpack.c.l.b16 %v5319
        %v5622 = vunpack.c.h.b16 %v5319
        %v5623 = vunpack.c.l.b16 %v5320
        %v5624 = vunpack.c.h.b16 %v5320
        %v5625 = vunpack.c.l.b16 %v5321
        %v5626 = vunpack.c.h.b16 %v5321
        %v5627 = vunpack.c.l.b16 %v5322
        %v5628 = vunpack.c.h.b16 %v5322
        %v5629 = vunpack.c.l.b16 %v5323
        %v5630 = vunpack.c.h.b16 %v5323
        %v5631 = vunpack.c.l.b16 %v5324
        %v5632 = vunpack.c.h.b16 %v5324
        %v5633 = vunpack.c.l.b16 %v5325
        %v5634 = vunpack.c.h.b16 %v5325
        %v5635 = vunpack.c.l.b16 %v5326
        %v5636 = vunpack.c.h.b16 %v5326
        %v5637 = vunpack.c.l.b16 %v5327
        %v5638 = vunpack.c.h.b16 %v5327
        %v5639 = vunpack.c.l.b16 %v5328
        %v5640 = vunpack.c.h.b16 %v5328
        %v5641 = vunpack.c.l.b16 %v5329
        %v5642 = vunpack.c.h.b16 %v5329
        %v5643 = vunpack.c.l.b16 %v5330
        %v5644 = vunpack.c.h.b16 %v5330
        %v5645 = vunpack.c.l.b16 %v5331
        %v5646 = vunpack.c.h.b16 %v5331
        %v5647 = vunpack.c.l.b16 %v5332
        %v5648 = vunpack.c.h.b16 %v5332
        %v5649 = vunpack.c.l.b16 %v5333
        %v5650 = vunpack.c.h.b16 %v5333
        %v5651 = vunpack.c.l.b16 %v5334
        %v5652 = vunpack.c.h.b16 %v5334
        %v5653 = vunpack.c.l.b16 %v5335
        %v5654 = vunpack.c.h.b16 %v5335
        %v5655 = vunpack.c.l.b16 %v5336
        %v5656 = vunpack.c.h.b16 %v5336
        %v5657 = vunpack.c.l.b16 %v5337
        %v5658 = vunpack.c.h.b16 %v5337
        %v5659 = vunpack.c.l.b16 %v5338
        %v5660 = vunpack.c.h.b16 %v5338
        %v5661 = vunpack.c.l.b16 %v5339
        %v5662 = vunpack.c.h.b16 %v5339
        %v5663 = vunpack.c.l.b16 %v5340
        %v5664 = vunpack.c.h.b16 %v5340
        %v5665 = vunpack.c.l.b16 %v5341
        %v5666 = vunpack.c.h.b16 %v5341
        %v5667 = vunpack.c.l.b16 %v5342
        %v5668 = vunpack.c.h.b16 %v5342
        %v5669 = vunpack.c.l.b16 %v5343
        %v5670 = vunpack.c.h.b16 %v5343
        %v5671 = vunpack.c.l.b16 %v5344
        %v5672 = vunpack.c.h.b16 %v5344
        %v5673 = vunpack.c.l.b16 %v5345
        %v5674 = vunpack.c.h.b16 %v5345
        %v5675 = vunpack.c.l.b16 %v5346
        %v5676 = vunpack.c.h.b16 %v5346
        %v5677 = vunpack.c.l.b16 %v5347
        %v5678 = vunpack.c.h.b16 %v5347
        %v5679 = vunpack.c.l.b16 %v5348
        %v5680 = vunpack.c.h.b16 %v5348
        %v5681 = vunpack.c.l.b16 %v5349
        %v5682 = vunpack.c.h.b16 %v5349
        %v5683 = vunpack.c.l.b16 %v5350
        %v5684 = vunpack.c.h.b16 %v5350
        %v5685 = vunpack.c.l.b16 %v5351
        %v5686 = vunpack.c.h.b16 %v5351
        %v5687 = vunpack.c.l.b16 %v5352
        %v5688 = vunpack.c.h.b16 %v5352
        %v5689 = vunpack.c.l.b16 %v5353
        %v5690 = vunpack.c.h.b16 %v5353
        %v5691 = vunpack.c.l.b16 %v5354
        %v5692 = vunpack.c.h.b16 %v5354
        %v5693 = vunpack.c.l.b16 %v5355
        %v5694 = vunpack.c.h.b16 %v5355
        %v5695 = vunpack.c.l.b16 %v5356
        %v5696 = vunpack.c.h.b16 %v5356
        %v5697 = vunpack.c.l.b16 %v5357
        %v5698 = vunpack.c.h.b16 %v5357
        %v5699 = vunpack.c.l.b16 %v5358
        %v5700 = vunpack.c.h.b16 %v5358
        %v5701 = vunpack.c.l.b16 %v5359
        %v5702 = vunpack.c.h.b16 %v5359
        %v5703 = vunpack.c.l.b16 %v5360
        %v5704 = vunpack.c.h.b16 %v5360
        %v5705 = vunpack.c.l.b16 %v5361
        %v5706 = vunpack.c.h.b16 %v5361
        %v5707 = vunpack.c.l.b16 %v5362
        %v5708 = vunpack.c.h.b16 %v5362
        %v5709 = vunpack.c.l.b16 %v5363
        %v5710 = vunpack.c.h.b16 %v5363
        %v5711 = vunpack.c.l.b16 %v5364
        %v5712 = vunpack.c.h.b16 %v5364
        %v5713 = vunpack.c.l.b16 %v5365
        %v5714 = vunpack.c.h.b16 %v5365
        %v5715 = vunpack.c.l.b16 %v5366
        %v5716 = vunpack.c.h.b16 %v5366
        %v5717 = vunpack.c.l.b16 %v5367
        %v5718 = vunpack.c.h.b16 %v5367
        %v5719 = vunpack.c.l.b16 %v5368
        %v5720 = vunpack.c.h.b16 %v5368
        %v5721 = vunpack.c.l.b16 %v5369
        %v5722 = vunpack.c.h.b16 %v5369
        %v5723 = vunpack.c.l.b16 %v5370
        %v5724 = vunpack.c.h.b16 %v5370
        %v5725 = vunpack.c.l.b16 %v5371
        %v5726 = vunpack.c.h.b16 %v5371
        %v5727 = vunpack.c.l.b16 %v5372
        %v5728 = vunpack.c.h.b16 %v5372
        %v5729 = vunpack.c.l.b16 %v5373
        %v5730 = vunpack.c.h.b16 %v5373
        %v5731 = vunpack.c.l.b16 %v5374
        %v5732 = vunpack.c.h.b16 %v5374
        %v5733 = vunpack.c.l.b16 %v5375
        %v5734 = vunpack.c.h.b16 %v5375
        %v5735 = vunpack.c.l.b16 %v5376
        %v5736 = vunpack.c.h.b16 %v5376
        %v5737 = vunpack.c.l.b16 %v5377
        %v5738 = vunpack.c.h.b16 %v5377
        %v5739 = vunpack.c.l.b16 %v5378
        %v5740 = vunpack.c.h.b16 %v5378
        %v5741 = vunpack.c.l.b16 %v5379
        %v5742 = vunpack.c.h.b16 %v5379
        %v5743 = vunpack.c.l.b16 %v5380
        %v5744 = vunpack.c.h.b16 %v5380
        %v5745 = vunpack.c.l.b16 %v5381
        %v5746 = vunpack.c.h.b16 %v5381
        %v5747 = vunpack.c.l.b16 %v5382
        %v5748 = vunpack.c.h.b16 %v5382
        %v5749 = vunpack.c.l.b16 %v5383
        %v5750 = vunpack.c.h.b16 %v5383
        %v5751 = vunpack.c.l.b16 %v5384
        %v5752 = vunpack.c.h.b16 %v5384
        %v5753 = vunpack.c.l.b16 %v5385
        %v5754 = vunpack.c.h.b16 %v5385
        %v5755 = vunpack.c.l.b16 %v5386
        %v5756 = vunpack.c.h.b16 %v5386
        %v5757 = vunpack.c.l.b16 %v5387
        %v5758 = vunpack.c.h.b16 %v5387
        %v5759 = vunpack.c.l.b16 %v5388
        %v5760 = vunpack.c.h.b16 %v5388
        %v5761 = vunpack.c.l.b16 %v5389
        %v5762 = vunpack.c.h.b16 %v5389
        %v5763 = vunpack.c.l.b16 %v5390
        %v5764 = vunpack.c.h.b16 %v5390
        %v5765 = vunpack.c.l.b16 %v5391
        %v5766 = vunpack.c.h.b16 %v5391
        %v5767 = vunpack.c.l.b16 %v5392
        %v5768 = vunpack.c.h.b16 %v5392
        %v5769 = vunpack.c.l.b16 %v5393
        %v5770 = vunpack.c.h.b16 %v5393
        %v5771 = vunpack.c.l.b16 %v5394
        %v5772 = vunpack.c.h.b16 %v5394
        %v5773 = vunpack.c.l.b16 %v5395
        %v5774 = vunpack.c.h.b16 %v5395
        %v5775 = vunpack.c.l.b16 %v5396
        %v5776 = vunpack.c.h.b16 %v5396
        %v5777 = vunpack.c.l.b16 %v5397
        %v5778 = vunpack.c.h.b16 %v5397
        %v5779 = vunpack.c.l.b16 %v5398
        %v5780 = vunpack.c.h.b16 %v5398
        %v5781 = vunpack.c.l.b16 %v5399
        %v5782 = vunpack.c.h.b16 %v5399
        %v5783 = vunpack.c.l.b16 %v5400
        %v5784 = vunpack.c.h.b16 %v5400
        %v5785 = vpack.c.b16 %v5533, %v5529
        %v5786 = vpack.c.b16 %v5534, %v5530
        %v5787 = vpack.c.b16 %v5535, %v5531
        %v5788 = vpack.c.b16 %v5536, %v5532
        %v5789 = vpack.c.b16 %v5541, %v5537
        %v5790 = vpack.c.b16 %v5542, %v5538
        %v5791 = vpack.c.b16 %v5543, %v5539
        %v5792 = vpack.c.b16 %v5544, %v5540
        %v5793 = vpack.c.b16 %v5549, %v5545
        %v5794 = vpack.c.b16 %v5550, %v5546
        %v5795 = vpack.c.b16 %v5551, %v5547
        %v5796 = vpack.c.b16 %v5552, %v5548
        %v5797 = vpack.c.b16 %v5557, %v5553
        %v5798 = vpack.c.b16 %v5558, %v5554
        %v5799 = vpack.c.b16 %v5559, %v5555
        %v5800 = vpack.c.b16 %v5560, %v5556
        %v5801 = vpack.c.b16 %v5565, %v5561
        %v5802 = vpack.c.b16 %v5566, %v5562
        %v5803 = vpack.c.b16 %v5567, %v5563
        %v5804 = vpack.c.b16 %v5568, %v5564
        %v5805 = vpack.c.b16 %v5573, %v5569
        %v5806 = vpack.c.b16 %v5574, %v5570
        %v5807 = vpack.c.b16 %v5575, %v5571
        %v5808 = vpack.c.b16 %v5576, %v5572
        %v5809 = vpack.c.b16 %v5581, %v5577
        %v5810 = vpack.c.b16 %v5582, %v5578
        %v5811 = vpack.c.b16 %v5583, %v5579
        %v5812 = vpack.c.b16 %v5584, %v5580
        %v5813 = vpack.c.b16 %v5589, %v5585
        %v5814 = vpack.c.b16 %v5590, %v5586
        %v5815 = vpack.c.b16 %v5591, %v5587
        %v5816 = vpack.c.b16 %v5592, %v5588
        %v5817 = vpack.c.b16 %v5597, %v5593
        %v5818 = vpack.c.b16 %v5598, %v5594
        %v5819 = vpack.c.b16 %v5599, %v5595
        %v5820 = vpack.c.b16 %v5600, %v5596
        %v5821 = vpack.c.b16 %v5605, %v5601
        %v5822 = vpack.c.b16 %v5606, %v5602
        %v5823 = vpack.c.b16 %v5607, %v5603
        %v5824 = vpack.c.b16 %v5608, %v5604
        %v5825 = vpack.c.b16 %v5613, %v5609
        %v5826 = vpack.c.b16 %v5614, %v5610
        %v5827 = vpack.c.b16 %v5615, %v5611
        %v5828 = vpack.c.b16 %v5616, %v5612
        %v5829 = vpack.c.b16 %v5621, %v5617
        %v5830 = vpack.c.b16 %v5622, %v5618
        %v5831 = vpack.c.b16 %v5623, %v5619
        %v5832 = vpack.c.b16 %v5624, %v5620
        %v5833 = vpack.c.b16 %v5629, %v5625
        %v5834 = vpack.c.b16 %v5630, %v5626
        %v5835 = vpack.c.b16 %v5631, %v5627
        %v5836 = vpack.c.b16 %v5632, %v5628
        %v5837 = vpack.c.b16 %v5637, %v5633
        %v5838 = vpack.c.b16 %v5638, %v5634
        %v5839 = vpack.c.b16 %v5639, %v5635
        %v5840 = vpack.c.b16 %v5640, %v5636
        %v5841 = vpack.c.b16 %v5645, %v5641
        %v5842 = vpack.c.b16 %v5646, %v5642
        %v5843 = vpack.c.b16 %v5647, %v5643
        %v5844 = vpack.c.b16 %v5648, %v5644
        %v5845 = vpack.c.b16 %v5653, %v5649
        %v5846 = vpack.c.b16 %v5654, %v5650
        %v5847 = vpack.c.b16 %v5655, %v5651
        %v5848 = vpack.c.b16 %v5656, %v5652
        %v5849 = vpack.c.b16 %v5661, %v5657
        %v5850 = vpack.c.b16 %v5662, %v5658
        %v5851 = vpack.c.b16 %v5663, %v5659
        %v5852 = vpack.c.b16 %v5664, %v5660
        %v5853 = vpack.c.b16 %v5669, %v5665
        %v5854 = vpack.c.b16 %v5670, %v5666
        %v5855 = vpack.c.b16 %v5671, %v5667
        %v5856 = vpack.c.b16 %v5672, %v5668
        %v5857 = vpack.c.b16 %v5677, %v5673
        %v5858 = vpack.c.b16 %v5678, %v5674
        %v5859 = vpack.c.b16 %v5679, %v5675
        %v5860 = vpack.c.b16 %v5680, %v5676
        %v5861 = vpack.c.b16 %v5685, %v5681
        %v5862 = vpack.c.b16 %v5686, %v5682
        %v5863 = vpack.c.b16 %v5687, %v5683
        %v5864 = vpack.c.b16 %v5688, %v5684
        %v5865 = vpack.c.b16 %v5693, %v5689
        %v5866 = vpack.c.b16 %v5694, %v5690
        %v5867 = vpack.c.b16 %v5695, %v5691
        %v5868 = vpack.c.b16 %v5696, %v5692
        %v5869 = vpack.c.b16 %v5701, %v5697
        %v5870 = vpack.c.b16 %v5702, %v5698
        %v5871 = vpack.c.b16 %v5703, %v5699
        %v5872 = vpack.c.b16 %v5704, %v5700
        %v5873 = vpack.c.b16 %v5709, %v5705
        %v5874 = vpack.c.b16 %v5710, %v5706
        %v5875 = vpack.c.b16 %v5711, %v5707
        %v5876 = vpack.c.b16 %v5712, %v5708
        %v5877 = vpack.c.b16 %v5717, %v5713
        %v5878 = vpack.c.b16 %v5718, %v5714
        %v5879 = vpack.c.b16 %v5719, %v5715
        %v5880 = vpack.c.b16 %v5720, %v5716
        %v5881 = vpack.c.b16 %v5725, %v5721
        %v5882 = vpack.c.b16 %v5726, %v5722
        %v5883 = vpack.c.b16 %v5727, %v5723
        %v5884 = vpack.c.b16 %v5728, %v5724
        %v5885 = vpack.c.b16 %v5733, %v5729
        %v5886 = vpack.c.b16 %v5734, %v5730
        %v5887 = vpack.c.b16 %v5735, %v5731
        %v5888 = vpack.c.b16 %v5736, %v5732
        %v5889 = vpack.c.b16 %v5741, %v5737
        %v5890 = vpack.c.b16 %v5742, %v5738
        %v5891 = vpack.c.b16 %v5743, %v5739
        %v5892 = vpack.c.b16 %v5744, %v5740
        %v5893 = vpack.c.b16 %v5749, %v5745
        %v5894 = vpack.c.b16 %v5750, %v5746
        %v5895 = vpack.c.b16 %v5751, %v5747
        %v5896 = vpack.c.b16 %v5752, %v5748
        %v5897 = vpack.c.b16 %v5757, %v5753
        %v5898 = vpack.c.b16 %v5758, %v5754
        %v5899 = vpack.c.b16 %v5759, %v5755
        %v5900 = vpack.c.b16 %v5760, %v5756
        %v5901 = vpack.c.b16 %v5765, %v5761
        %v5902 = vpack.c.b16 %v5766, %v5762
        %v5903 = vpack.c.b16 %v5767, %v5763
        %v5904 = vpack.c.b16 %v5768, %v5764
        %v5905 = vpack.c.b16 %v5773, %v5769
        %v5906 = vpack.c.b16 %v5774, %v5770
        %v5907 = vpack.c.b16 %v5775, %v5771
        %v5908 = vpack.c.b16 %v5776, %v5772
        %v5909 = vpack.c.b16 %v5781, %v5777
        %v5910 = vpack.c.b16 %v5782, %v5778
        %v5911 = vpack.c.b16 %v5783, %v5779
        %v5912 = vpack.c.b16 %v5784, %v5780
        %6041 = vmatprep.subr.bf16.mxu0 %v5814
        %6042 = vmatpush1.bf16.msra.mxu0 %v5813
        %6043 = vmatprep.subr.bf16.mxu0 %v5810
        %6044 = vmatpush1.bf16.msra.mxu0 %v5809
        %6045 = vmatprep.subr.bf16.mxu0 %v5806
        %6046 = vmatpush1.bf16.msra.mxu0 %v5805
        %6047 = vmatprep.subr.bf16.mxu0 %v5802
        %6048 = vmatpush1.bf16.msra.mxu0 %v5801
        %6049 = vmatprep.subr.bf16.mxu0 %v5798
        %6050 = vmatpush1.bf16.msra.mxu0 %v5797
        %6051 = vmatprep.subr.bf16.mxu0 %v5794
        %6052 = vmatpush1.bf16.msra.mxu0 %v5793
        %6053 = vmatprep.subr.bf16.mxu0 %v5790
        %6054 = vmatpush1.bf16.msra.mxu0 %v5789
        %6055 = vmatprep.subr.bf16.mxu0 %v5786
        %6056 = vmatpush1.bf16.msra.mxu0 %v5785
        %6057 = vmatprep.subr.bf16.mxu0 %v5846
        %6058 = vmatpush2.bf16.msra.mxu0 %v5845
        %6059 = vmatprep.subr.bf16.mxu0 %v5842
        %6060 = vmatpush2.bf16.msra.mxu0 %v5841
        %6061 = vmatprep.subr.bf16.mxu0 %v5838
        %6062 = vmatpush2.bf16.msra.mxu0 %v5837
        %6063 = vmatprep.subr.bf16.mxu0 %v5834
        %6064 = vmatpush2.bf16.msra.mxu0 %v5833
        %6065 = vmatprep.subr.bf16.mxu0 %v5830
        %6066 = vmatpush2.bf16.msra.mxu0 %v5829
        %6067 = vmatprep.subr.bf16.mxu0 %v5826
        %6068 = vmatpush2.bf16.msra.mxu0 %v5825
        %6069 = vmatprep.subr.bf16.mxu0 %v5822
        %6070 = vmatpush2.bf16.msra.mxu0 %v5821
        %6071 = vmatprep.subr.bf16.mxu0 %v5818
        %6072 = vmatpush2.bf16.msra.mxu0 %v5817
        %6073 = vmatprep.mubr.bf16.mxu0 %v3062
        %6074 = vmatmul.mubr.bf16.gmra.mxu0 %v3061
        %v6075 = vpop.f32.mrf.mxu0
        %v6076 = vadd.f32 0.0, %v6075
        %v6077 = vpop.f32.mrf.mxu0
        %v6078 = vadd.f32 0.0, %v6077
        %v6079 = vpop.f32.mrf.mxu0
        %v6080 = vadd.f32 0.0, %v6079
        %v6081 = vpop.f32.mrf.mxu0
        %v6082 = vadd.f32 0.0, %v6081
        %6083 = vdwg.mxu0
        %6084 = vmatprep.subr.bf16.mxu0 %v5878
        %6085 = vmatpush1.bf16.msra.mxu0 %v5877
        %6086 = vmatprep.subr.bf16.mxu0 %v5874
        %6087 = vmatpush1.bf16.msra.mxu0 %v5873
        %6088 = vmatprep.subr.bf16.mxu0 %v5870
        %6089 = vmatpush1.bf16.msra.mxu0 %v5869
        %6090 = vmatprep.subr.bf16.mxu0 %v5866
        %6091 = vmatpush1.bf16.msra.mxu0 %v5865
        %6092 = vmatprep.subr.bf16.mxu0 %v5862
        %6093 = vmatpush1.bf16.msra.mxu0 %v5861
        %6094 = vmatprep.subr.bf16.mxu0 %v5858
        %6095 = vmatpush1.bf16.msra.mxu0 %v5857
        %6096 = vmatprep.subr.bf16.mxu0 %v5854
        %6097 = vmatpush1.bf16.msra.mxu0 %v5853
        %6098 = vmatprep.subr.bf16.mxu0 %v5850
        %6099 = vmatpush1.bf16.msra.mxu0 %v5849
        %6100 = vmatprep.subr.bf16.mxu0 %v5910
        %6101 = vmatpush2.bf16.msra.mxu0 %v5909
        %6102 = vmatprep.subr.bf16.mxu0 %v5906
        %6103 = vmatpush2.bf16.msra.mxu0 %v5905
        %6104 = vmatprep.subr.bf16.mxu0 %v5902
        %6105 = vmatpush2.bf16.msra.mxu0 %v5901
        %6106 = vmatprep.subr.bf16.mxu0 %v5898
        %6107 = vmatpush2.bf16.msra.mxu0 %v5897
        %6108 = vmatprep.subr.bf16.mxu0 %v5894
        %6109 = vmatpush2.bf16.msra.mxu0 %v5893
        %6110 = vmatprep.subr.bf16.mxu0 %v5890
        %6111 = vmatpush2.bf16.msra.mxu0 %v5889
        %6112 = vmatprep.subr.bf16.mxu0 %v5886
        %6113 = vmatpush2.bf16.msra.mxu0 %v5885
        %6114 = vmatprep.subr.bf16.mxu0 %v5882
        %6115 = vmatpush2.bf16.msra.mxu0 %v5881
        %6116 = vmatprep.mubr.bf16.mxu0 %v3064
        %6117 = vmatmul.mubr.bf16.gmra.mxu0 %v3063
        %v6118 = vpop.f32.mrf.mxu0
        %v6119 = vadd.f32 %v6076, %v6118
        %v6120 = vpop.f32.mrf.mxu0
        %v6121 = vadd.f32 %v6078, %v6120
        %v6122 = vpop.f32.mrf.mxu0
        %v6123 = vadd.f32 %v6080, %v6122
        %v6124 = vpop.f32.mrf.mxu0
        %v6125 = vadd.f32 %v6082, %v6124
        %6126 = vdwg.mxu0
        %6127 = vmatprep.subr.bf16.mxu0 %v5816
        %6128 = vmatpush1.bf16.msra.mxu0 %v5815
        %6129 = vmatprep.subr.bf16.mxu0 %v5812
        %6130 = vmatpush1.bf16.msra.mxu0 %v5811
        %6131 = vmatprep.subr.bf16.mxu0 %v5808
        %6132 = vmatpush1.bf16.msra.mxu0 %v5807
        %6133 = vmatprep.subr.bf16.mxu0 %v5804
        %6134 = vmatpush1.bf16.msra.mxu0 %v5803
        %6135 = vmatprep.subr.bf16.mxu0 %v5800
        %6136 = vmatpush1.bf16.msra.mxu0 %v5799
        %6137 = vmatprep.subr.bf16.mxu0 %v5796
        %6138 = vmatpush1.bf16.msra.mxu0 %v5795
        %6139 = vmatprep.subr.bf16.mxu0 %v5792
        %6140 = vmatpush1.bf16.msra.mxu0 %v5791
        %6141 = vmatprep.subr.bf16.mxu0 %v5788
        %6142 = vmatpush1.bf16.msra.mxu0 %v5787
        %6143 = vmatprep.subr.bf16.mxu0 %v5848
        %6144 = vmatpush2.bf16.msra.mxu0 %v5847
        %6145 = vmatprep.subr.bf16.mxu0 %v5844
        %6146 = vmatpush2.bf16.msra.mxu0 %v5843
        %6147 = vmatprep.subr.bf16.mxu0 %v5840
        %6148 = vmatpush2.bf16.msra.mxu0 %v5839
        %6149 = vmatprep.subr.bf16.mxu0 %v5836
        %6150 = vmatpush2.bf16.msra.mxu0 %v5835
        %6151 = vmatprep.subr.bf16.mxu0 %v5832
        %6152 = vmatpush2.bf16.msra.mxu0 %v5831
        %6153 = vmatprep.subr.bf16.mxu0 %v5828
        %6154 = vmatpush2.bf16.msra.mxu0 %v5827
        %6155 = vmatprep.subr.bf16.mxu0 %v5824
        %6156 = vmatpush2.bf16.msra.mxu0 %v5823
        %6157 = vmatprep.subr.bf16.mxu0 %v5820
        %6158 = vmatpush2.bf16.msra.mxu0 %v5819
        %6159 = vmatprep.mubr.bf16.mxu0 %v3062
        %6160 = vmatmul.mubr.bf16.gmra.mxu0 %v3061
        %v6161 = vpop.f32.mrf.mxu0
        %v6162 = vadd.f32 0.0, %v6161
        %v6163 = vpop.f32.mrf.mxu0
        %v6164 = vadd.f32 0.0, %v6163
        %v6165 = vpop.f32.mrf.mxu0
        %v6166 = vadd.f32 0.0, %v6165
        %v6167 = vpop.f32.mrf.mxu0
        %v6168 = vadd.f32 0.0, %v6167
        %6169 = vdwg.mxu0
        %6170 = vmatprep.subr.bf16.mxu0 %v5880
        %6171 = vmatpush1.bf16.msra.mxu0 %v5879
        %6172 = vmatprep.subr.bf16.mxu0 %v5876
        %6173 = vmatpush1.bf16.msra.mxu0 %v5875
        %6174 = vmatprep.subr.bf16.mxu0 %v5872
        %6175 = vmatpush1.bf16.msra.mxu0 %v5871
        %6176 = vmatprep.subr.bf16.mxu0 %v5868
        %6177 = vmatpush1.bf16.msra.mxu0 %v5867
        %6178 = vmatprep.subr.bf16.mxu0 %v5864
        %6179 = vmatpush1.bf16.msra.mxu0 %v5863
        %6180 = vmatprep.subr.bf16.mxu0 %v5860
        %6181 = vmatpush1.bf16.msra.mxu0 %v5859
        %6182 = vmatprep.subr.bf16.mxu0 %v5856
        %6183 = vmatpush1.bf16.msra.mxu0 %v5855
        %6184 = vmatprep.subr.bf16.mxu0 %v5852
        %6185 = vmatpush1.bf16.msra.mxu0 %v5851
        %6186 = vmatprep.subr.bf16.mxu0 %v5912
        %6187 = vmatpush2.bf16.msra.mxu0 %v5911
        %6188 = vmatprep.subr.bf16.mxu0 %v5908
        %6189 = vmatpush2.bf16.msra.mxu0 %v5907
        %6190 = vmatprep.subr.bf16.mxu0 %v5904
        %6191 = vmatpush2.bf16.msra.mxu0 %v5903
        %6192 = vmatprep.subr.bf16.mxu0 %v5900
        %6193 = vmatpush2.bf16.msra.mxu0 %v5899
        %6194 = vmatprep.subr.bf16.mxu0 %v5896
        %6195 = vmatpush2.bf16.msra.mxu0 %v5895
        %6196 = vmatprep.subr.bf16.mxu0 %v5892
        %6197 = vmatpush2.bf16.msra.mxu0 %v5891
        %6198 = vmatprep.subr.bf16.mxu0 %v5888
        %6199 = vmatpush2.bf16.msra.mxu0 %v5887
        %6200 = vmatprep.subr.bf16.mxu0 %v5884
        %6201 = vmatpush2.bf16.msra.mxu0 %v5883
        %6202 = vmatprep.mubr.bf16.mxu0 %v3064
        %6203 = vmatmul.mubr.bf16.gmra.mxu0 %v3063
        %v6204 = vpop.f32.mrf.mxu0
        %v6205 = vadd.f32 %v6162, %v6204
        %v6206 = vpop.f32.mrf.mxu0
        %v6207 = vadd.f32 %v6164, %v6206
        %v6208 = vpop.f32.mrf.mxu0
        %v6209 = vadd.f32 %v6166, %v6208
        %v6210 = vpop.f32.mrf.mxu0
        %v6211 = vadd.f32 %v6168, %v6210
        %6212 = vdwg.mxu0
        %s6213 = scalar_lea.vmem [#allocation8], 32
        %v6214 = vld [vmem:[%s6213] sm:$0xff]
        %v6215 = vld [vmem:[%s6213 + $0x8] sm:$0xff]
        %v6217 = vsel %vm4951, %v6214, 0
        %v6220 = vsel %vm4951, %v6215, 0
        %6222 = vmatprep.subr.mxu0 0.0
        %6223 = vmatpush1.msra.mxu0 0.0
        %6224 = vmatprep.subr.mxu0 0.0
        %6225 = vmatpush1.msra.mxu0 0.0
        %6226 = vmatprep.subr.mxu0 0.0
        %6227 = vmatpush1.msra.mxu0 0.0
        %6228 = vmatprep.subr.mxu0 0.0
        %6229 = vmatpush1.msra.mxu0 0.0
        %6230 = vmatprep.subr.mxu0 0.0
        %6231 = vmatpush1.msra.mxu0 0.0
        %6232 = vmatprep.subr.mxu0 0.0
        %6233 = vmatpush1.msra.mxu0 0.0
        %6234 = vmatprep.subr.mxu0 0.0
        %6235 = vmatpush1.msra.mxu0 0.0
        %6236 = vmatprep.subr.mxu0 0.0
        %6237 = vmatpush1.msra.mxu0 0.0
        %6238 = vmatprep.subr.mxu0 0.0
        %6239 = vmatpush1.msra.mxu0 0.0
        %6240 = vmatprep.subr.mxu0 0.0
        %6241 = vmatpush1.msra.mxu0 0.0
        %6242 = vmatprep.subr.mxu0 0.0
        %6243 = vmatpush1.msra.mxu0 0.0
        %6244 = vmatprep.subr.mxu0 0.0
        %6245 = vmatpush1.msra.mxu0 0.0
        %6246 = vmatprep.subr.mxu0 0.0
        %6247 = vmatpush1.msra.mxu0 0.0
        %6248 = vmatprep.subr.mxu0 0.0
        %6249 = vmatpush1.msra.mxu0 0.0
        %6250 = vmatprep.subr.mxu0 %v6125
        %6251 = vmatpush1.msra.mxu0 %v6123
        %6252 = vmatprep.subr.mxu0 %v6121
        %6253 = vmatpush1.msra.mxu0 %v6119
        %6254 = vmatprep.subr.mxu0 0.0
        %6255 = vmatpush2.msra.mxu0 0.0
        %6256 = vmatprep.subr.mxu0 0.0
        %6257 = vmatpush2.msra.mxu0 0.0
        %6258 = vmatprep.subr.mxu0 0.0
        %6259 = vmatpush2.msra.mxu0 0.0
        %6260 = vmatprep.subr.mxu0 0.0
        %6261 = vmatpush2.msra.mxu0 0.0
        %6262 = vmatprep.subr.mxu0 0.0
        %6263 = vmatpush2.msra.mxu0 0.0
        %6264 = vmatprep.subr.mxu0 0.0
        %6265 = vmatpush2.msra.mxu0 0.0
        %6266 = vmatprep.subr.mxu0 0.0
        %6267 = vmatpush2.msra.mxu0 0.0
        %6268 = vmatprep.subr.mxu0 0.0
        %6269 = vmatpush2.msra.mxu0 0.0
        %6270 = vmatprep.subr.mxu0 0.0
        %6271 = vmatpush2.msra.mxu0 0.0
        %6272 = vmatprep.subr.mxu0 0.0
        %6273 = vmatpush2.msra.mxu0 0.0
        %6274 = vmatprep.subr.mxu0 0.0
        %6275 = vmatpush2.msra.mxu0 0.0
        %6276 = vmatprep.subr.mxu0 0.0
        %6277 = vmatpush2.msra.mxu0 0.0
        %6278 = vmatprep.subr.mxu0 0.0
        %6279 = vmatpush2.msra.mxu0 0.0
        %6280 = vmatprep.subr.mxu0 0.0
        %6281 = vmatpush2.msra.mxu0 0.0
        %6282 = vmatprep.subr.mxu0 0.0
        %6283 = vmatpush2.msra.mxu0 0.0
        %6284 = vmatprep.subr.mxu0 0.0
        %6285 = vmatpush2.msra.mxu0 0.0
        %6286 = vmatprep.mubr.f32.mxu0 0.0
        %6287 = vmatmul.mubr.f32.gmra.mxu0 %v6217
        %v6288 = vpop.f32.mrf.mxu0
        %v6289 = vadd.f32 0.0, %v6288
        %v6290 = vpop.f32.mrf.mxu0
        %v6291 = vadd.f32 0.0, %v6290
        %6292 = vmatprep.mubr.f32.mxu0 0.0
        %6293 = vmatmul.mubr.f32.gmra.mxu0 %v6220
        %v6294 = vpop.f32.mrf.mxu0
        %v6295 = vadd.f32 0.0, %v6294
        %v6296 = vpop.f32.mrf.mxu0
        %v6297 = vadd.f32 0.0, %v6296
        %6298 = vdwg.mxu0
        %6299 = vmatprep.subr.mxu0 0.0
        %6300 = vmatpush1.msra.mxu0 0.0
        %6301 = vmatprep.subr.mxu0 0.0
        %6302 = vmatpush1.msra.mxu0 0.0
        %6303 = vmatprep.subr.mxu0 0.0
        %6304 = vmatpush1.msra.mxu0 0.0
        %6305 = vmatprep.subr.mxu0 0.0
        %6306 = vmatpush1.msra.mxu0 0.0
        %6307 = vmatprep.subr.mxu0 0.0
        %6308 = vmatpush1.msra.mxu0 0.0
        %6309 = vmatprep.subr.mxu0 0.0
        %6310 = vmatpush1.msra.mxu0 0.0
        %6311 = vmatprep.subr.mxu0 0.0
        %6312 = vmatpush1.msra.mxu0 0.0
        %6313 = vmatprep.subr.mxu0 0.0
        %6314 = vmatpush1.msra.mxu0 0.0
        %6315 = vmatprep.subr.mxu0 0.0
        %6316 = vmatpush1.msra.mxu0 0.0
        %6317 = vmatprep.subr.mxu0 0.0
        %6318 = vmatpush1.msra.mxu0 0.0
        %6319 = vmatprep.subr.mxu0 0.0
        %6320 = vmatpush1.msra.mxu0 0.0
        %6321 = vmatprep.subr.mxu0 0.0
        %6322 = vmatpush1.msra.mxu0 0.0
        %6323 = vmatprep.subr.mxu0 0.0
        %6324 = vmatpush1.msra.mxu0 0.0
        %6325 = vmatprep.subr.mxu0 0.0
        %6326 = vmatpush1.msra.mxu0 0.0
        %6327 = vmatprep.subr.mxu0 %v6211
        %6328 = vmatpush1.msra.mxu0 %v6209
        %6329 = vmatprep.subr.mxu0 %v6207
        %6330 = vmatpush1.msra.mxu0 %v6205
        %6331 = vmatprep.subr.mxu0 0.0
        %6332 = vmatpush2.msra.mxu0 0.0
        %6333 = vmatprep.subr.mxu0 0.0
        %6334 = vmatpush2.msra.mxu0 0.0
        %6335 = vmatprep.subr.mxu0 0.0
        %6336 = vmatpush2.msra.mxu0 0.0
        %6337 = vmatprep.subr.mxu0 0.0
        %6338 = vmatpush2.msra.mxu0 0.0
        %6339 = vmatprep.subr.mxu0 0.0
        %6340 = vmatpush2.msra.mxu0 0.0
        %6341 = vmatprep.subr.mxu0 0.0
        %6342 = vmatpush2.msra.mxu0 0.0
        %6343 = vmatprep.subr.mxu0 0.0
        %6344 = vmatpush2.msra.mxu0 0.0
        %6345 = vmatprep.subr.mxu0 0.0
        %6346 = vmatpush2.msra.mxu0 0.0
        %6347 = vmatprep.subr.mxu0 0.0
        %6348 = vmatpush2.msra.mxu0 0.0
        %6349 = vmatprep.subr.mxu0 0.0
        %6350 = vmatpush2.msra.mxu0 0.0
        %6351 = vmatprep.subr.mxu0 0.0
        %6352 = vmatpush2.msra.mxu0 0.0
        %6353 = vmatprep.subr.mxu0 0.0
        %6354 = vmatpush2.msra.mxu0 0.0
        %6355 = vmatprep.subr.mxu0 0.0
        %6356 = vmatpush2.msra.mxu0 0.0
        %6357 = vmatprep.subr.mxu0 0.0
        %6358 = vmatpush2.msra.mxu0 0.0
        %6359 = vmatprep.subr.mxu0 0.0
        %6360 = vmatpush2.msra.mxu0 0.0
        %6361 = vmatprep.subr.mxu0 0.0
        %6362 = vmatpush2.msra.mxu0 0.0
        %6363 = vmatprep.mubr.f32.mxu0 0.0
        %6364 = vmatmul.mubr.f32.gmra.mxu0 %v6217
        %v6365 = vpop.f32.mrf.mxu0
        %v6366 = vadd.f32 0.0, %v6365
        %v6367 = vpop.f32.mrf.mxu0
        %v6368 = vadd.f32 0.0, %v6367
        %6369 = vmatprep.mubr.f32.mxu0 0.0
        %6370 = vmatmul.mubr.f32.gmra.mxu0 %v6220
        %v6371 = vpop.f32.mrf.mxu0
        %v6372 = vadd.f32 0.0, %v6371
        %v6373 = vpop.f32.mrf.mxu0
        %v6374 = vadd.f32 0.0, %v6373
        %6375 = vdwg.mxu0
        %v6376 = vadd.f32 %v5185, %v6289
        %v6377 = vadd.f32 %v5187, %v6291
        %v6378 = vadd.f32 %v5262, %v6366
        %v6379 = vadd.f32 %v5264, %v6368
        %v6380 = vadd.f32 %v5191, %v6295
        %v6381 = vadd.f32 %v5193, %v6297
        %v6382 = vadd.f32 %v5268, %v6372
        %v6383 = vadd.f32 %v5270, %v6374
        %v6384 = vadd.f32 %v6376, %v6380
        %v6385 = vrot.slane %v6384, 4
        %v6386 = vadd.f32 %v6384, %v6385
        %v6387 = vrot.slane %v6386, 2
        %v6388 = vadd.f32 %v6386, %v6387
        %v6389 = vrot.slane %v6388, 1
        %v6390 = vadd.f32 %v6388, %v6389
        %v6391 = vadd.f32 %v6377, %v6381
        %v6392 = vrot.slane %v6391, 4
        %v6393 = vadd.f32 %v6391, %v6392
        %v6394 = vrot.slane %v6393, 2
        %v6395 = vadd.f32 %v6393, %v6394
        %v6396 = vrot.slane %v6395, 1
        %v6397 = vadd.f32 %v6395, %v6396
        %v6398 = vadd.f32 %v6378, %v6382
        %v6399 = vrot.slane %v6398, 4
        %v6400 = vadd.f32 %v6398, %v6399
        %v6401 = vrot.slane %v6400, 2
        %v6402 = vadd.f32 %v6400, %v6401
        %v6403 = vrot.slane %v6402, 1
        %v6404 = vadd.f32 %v6402, %v6403
        %v6405 = vadd.f32 %v6379, %v6383
        %v6406 = vrot.slane %v6405, 4
        %v6407 = vadd.f32 %v6405, %v6406
        %v6408 = vrot.slane %v6407, 2
        %v6409 = vadd.f32 %v6407, %v6408
        %v6410 = vrot.slane %v6409, 1
        %v6411 = vadd.f32 %v6409, %v6410
        %v6412 = vmul.f32 %v6376, %v6376
        %v6413 = vmul.f32 %v6377, %v6377
        %v6414 = vmul.f32 %v6378, %v6378
        %v6415 = vmul.f32 %v6379, %v6379
        %v6416 = vmul.f32 %v6380, %v6380
        %v6417 = vmul.f32 %v6381, %v6381
        %v6418 = vmul.f32 %v6382, %v6382
        %v6419 = vmul.f32 %v6383, %v6383
        %v6420 = vadd.f32 %v6412, %v6416
        %v6421 = vrot.slane %v6420, 4
        %v6422 = vadd.f32 %v6420, %v6421
        %v6423 = vrot.slane %v6422, 2
        %v6424 = vadd.f32 %v6422, %v6423
        %v6425 = vrot.slane %v6424, 1
        %v6426 = vadd.f32 %v6424, %v6425
        %v6427 = vadd.f32 %v6413, %v6417
        %v6428 = vrot.slane %v6427, 4
        %v6429 = vadd.f32 %v6427, %v6428
        %v6430 = vrot.slane %v6429, 2
        %v6431 = vadd.f32 %v6429, %v6430
        %v6432 = vrot.slane %v6431, 1
        %v6433 = vadd.f32 %v6431, %v6432
        %v6434 = vadd.f32 %v6414, %v6418
        %v6435 = vrot.slane %v6434, 4
        %v6436 = vadd.f32 %v6434, %v6435
        %v6437 = vrot.slane %v6436, 2
        %v6438 = vadd.f32 %v6436, %v6437
        %v6439 = vrot.slane %v6438, 1
        %v6440 = vadd.f32 %v6438, %v6439
        %v6441 = vadd.f32 %v6415, %v6419
        %v6442 = vrot.slane %v6441, 4
        %v6443 = vadd.f32 %v6441, %v6442
        %v6444 = vrot.slane %v6443, 2
        %v6445 = vadd.f32 %v6443, %v6444
        %v6446 = vrot.slane %v6445, 1
        %v6447 = vadd.f32 %v6445, %v6446
        %v6448 = vsel %vm2338, %v6390, %v6426
        %v6449 = vsel %vm2338, %v6397, %v6433
        %v6450 = vsel %vm2338, %v6404, %v6440
        %v6451 = vsel %vm2338, %v6411, %v6447
        %6452 = vmatprep.subr.mxu0 %v2404
        %6453 = vmatpush1.msra.mxu0 %v2403
        %6454 = vmatprep.subr.mxu0 %v2400
        %6455 = vmatpush1.msra.mxu0 %v2399
        %6456 = vmatprep.subr.mxu0 %v2396
        %6457 = vmatpush1.msra.mxu0 %v2395
        %6458 = vmatprep.subr.mxu0 %v2392
        %6459 = vmatpush1.msra.mxu0 %v2391
        %6460 = vmatprep.subr.mxu0 %v2388
        %6461 = vmatpush1.msra.mxu0 %v2387
        %6462 = vmatprep.subr.mxu0 %v2384
        %6463 = vmatpush1.msra.mxu0 %v2383
        %6464 = vmatprep.subr.mxu0 %v2380
        %6465 = vmatpush1.msra.mxu0 %v2379
        %6466 = vmatprep.subr.mxu0 %v2376
        %6467 = vmatpush1.msra.mxu0 %v2375
        %6468 = vmatprep.subr.mxu0 %v2372
        %6469 = vmatpush1.msra.mxu0 %v2371
        %6470 = vmatprep.subr.mxu0 %v2368
        %6471 = vmatpush1.msra.mxu0 %v2367
        %6472 = vmatprep.subr.mxu0 %v2364
        %6473 = vmatpush1.msra.mxu0 %v2363
        %6474 = vmatprep.subr.mxu0 %v2360
        %6475 = vmatpush1.msra.mxu0 %v2359
        %6476 = vmatprep.subr.mxu0 %v2356
        %6477 = vmatpush1.msra.mxu0 %v2355
        %6478 = vmatprep.subr.mxu0 %v2352
        %6479 = vmatpush1.msra.mxu0 %v2351
        %6480 = vmatprep.subr.mxu0 %v2348
        %6481 = vmatpush1.msra.mxu0 %v2347
        %6482 = vmatprep.subr.mxu0 %v2344
        %6483 = vmatpush1.msra.mxu0 %v2343
        %6484 = vmatprep.subr.mxu0 %v2468
        %6485 = vmatpush2.msra.mxu0 %v2467
        %6486 = vmatprep.subr.mxu0 %v2464
        %6487 = vmatpush2.msra.mxu0 %v2463
        %6488 = vmatprep.subr.mxu0 %v2460
        %6489 = vmatpush2.msra.mxu0 %v2459
        %6490 = vmatprep.subr.mxu0 %v2456
        %6491 = vmatpush2.msra.mxu0 %v2455
        %6492 = vmatprep.subr.mxu0 %v2452
        %6493 = vmatpush2.msra.mxu0 %v2451
        %6494 = vmatprep.subr.mxu0 %v2448
        %6495 = vmatpush2.msra.mxu0 %v2447
        %6496 = vmatprep.subr.mxu0 %v2444
        %6497 = vmatpush2.msra.mxu0 %v2443
        %6498 = vmatprep.subr.mxu0 %v2440
        %6499 = vmatpush2.msra.mxu0 %v2439
        %6500 = vmatprep.subr.mxu0 %v2436
        %6501 = vmatpush2.msra.mxu0 %v2435
        %6502 = vmatprep.subr.mxu0 %v2432
        %6503 = vmatpush2.msra.mxu0 %v2431
        %6504 = vmatprep.subr.mxu0 %v2428
        %6505 = vmatpush2.msra.mxu0 %v2427
        %6506 = vmatprep.subr.mxu0 %v2424
        %6507 = vmatpush2.msra.mxu0 %v2423
        %6508 = vmatprep.subr.mxu0 %v2420
        %6509 = vmatpush2.msra.mxu0 %v2419
        %6510 = vmatprep.subr.mxu0 %v2416
        %6511 = vmatpush2.msra.mxu0 %v2415
        %6512 = vmatprep.subr.mxu0 %v2412
        %6513 = vmatpush2.msra.mxu0 %v2411
        %6514 = vmatprep.subr.mxu0 %v2408
        %6515 = vmatpush2.msra.mxu0 %v2407
        %6516 = vmatprep.mubr.f32.mxu0 %v6449
        %6517 = vmatmul.mubr.f32.gmra.mxu0 %v6448
        %v6518 = vpop.f32.mrf.mxu0
        %v6519 = vadd.f32 0.0, %v6518
        %v6520 = vpop.f32.mrf.mxu0
        %v6521 = vadd.f32 0.0, %v6520
        %6522 = vdwg.mxu0
        %6523 = vmatprep.subr.mxu0 %v2532
        %6524 = vmatpush1.msra.mxu0 %v2531
        %6525 = vmatprep.subr.mxu0 %v2528
        %6526 = vmatpush1.msra.mxu0 %v2527
        %6527 = vmatprep.subr.mxu0 %v2524
        %6528 = vmatpush1.msra.mxu0 %v2523
        %6529 = vmatprep.subr.mxu0 %v2520
        %6530 = vmatpush1.msra.mxu0 %v2519
        %6531 = vmatprep.subr.mxu0 %v2516
        %6532 = vmatpush1.msra.mxu0 %v2515
        %6533 = vmatprep.subr.mxu0 %v2512
        %6534 = vmatpush1.msra.mxu0 %v2511
        %6535 = vmatprep.subr.mxu0 %v2508
        %6536 = vmatpush1.msra.mxu0 %v2507
        %6537 = vmatprep.subr.mxu0 %v2504
        %6538 = vmatpush1.msra.mxu0 %v2503
        %6539 = vmatprep.subr.mxu0 %v2500
        %6540 = vmatpush1.msra.mxu0 %v2499
        %6541 = vmatprep.subr.mxu0 %v2496
        %6542 = vmatpush1.msra.mxu0 %v2495
        %6543 = vmatprep.subr.mxu0 %v2492
        %6544 = vmatpush1.msra.mxu0 %v2491
        %6545 = vmatprep.subr.mxu0 %v2488
        %6546 = vmatpush1.msra.mxu0 %v2487
        %6547 = vmatprep.subr.mxu0 %v2484
        %6548 = vmatpush1.msra.mxu0 %v2483
        %6549 = vmatprep.subr.mxu0 %v2480
        %6550 = vmatpush1.msra.mxu0 %v2479
        %6551 = vmatprep.subr.mxu0 %v2476
        %6552 = vmatpush1.msra.mxu0 %v2475
        %6553 = vmatprep.subr.mxu0 %v2472
        %6554 = vmatpush1.msra.mxu0 %v2471
        %6555 = vmatprep.subr.mxu0 %v2596
        %6556 = vmatpush2.msra.mxu0 %v2595
        %6557 = vmatprep.subr.mxu0 %v2592
        %6558 = vmatpush2.msra.mxu0 %v2591
        %6559 = vmatprep.subr.mxu0 %v2588
        %6560 = vmatpush2.msra.mxu0 %v2587
        %6561 = vmatprep.subr.mxu0 %v2584
        %6562 = vmatpush2.msra.mxu0 %v2583
        %6563 = vmatprep.subr.mxu0 %v2580
        %6564 = vmatpush2.msra.mxu0 %v2579
        %6565 = vmatprep.subr.mxu0 %v2576
        %6566 = vmatpush2.msra.mxu0 %v2575
        %6567 = vmatprep.subr.mxu0 %v2572
        %6568 = vmatpush2.msra.mxu0 %v2571
        %6569 = vmatprep.subr.mxu0 %v2568
        %6570 = vmatpush2.msra.mxu0 %v2567
        %6571 = vmatprep.subr.mxu0 %v2564
        %6572 = vmatpush2.msra.mxu0 %v2563
        %6573 = vmatprep.subr.mxu0 %v2560
        %6574 = vmatpush2.msra.mxu0 %v2559
        %6575 = vmatprep.subr.mxu0 %v2556
        %6576 = vmatpush2.msra.mxu0 %v2555
        %6577 = vmatprep.subr.mxu0 %v2552
        %6578 = vmatpush2.msra.mxu0 %v2551
        %6579 = vmatprep.subr.mxu0 %v2548
        %6580 = vmatpush2.msra.mxu0 %v2547
        %6581 = vmatprep.subr.mxu0 %v2544
        %6582 = vmatpush2.msra.mxu0 %v2543
        %6583 = vmatprep.subr.mxu0 %v2540
        %6584 = vmatpush2.msra.mxu0 %v2539
        %6585 = vmatprep.subr.mxu0 %v2536
        %6586 = vmatpush2.msra.mxu0 %v2535
        %6587 = vmatprep.mubr.f32.mxu0 %v6451
        %6588 = vmatmul.mubr.f32.gmra.mxu0 %v6450
        %v6589 = vpop.f32.mrf.mxu0
        %v6590 = vadd.f32 %v6519, %v6589
        %v6591 = vpop.f32.mrf.mxu0
        %v6592 = vadd.f32 %v6521, %v6591
        %6593 = vdwg.mxu0
        %6594 = vmatprep.subr.mxu0 %v2406
        %6595 = vmatpush1.msra.mxu0 %v2405
        %6596 = vmatprep.subr.mxu0 %v2402
        %6597 = vmatpush1.msra.mxu0 %v2401
        %6598 = vmatprep.subr.mxu0 %v2398
        %6599 = vmatpush1.msra.mxu0 %v2397
        %6600 = vmatprep.subr.mxu0 %v2394
        %6601 = vmatpush1.msra.mxu0 %v2393
        %6602 = vmatprep.subr.mxu0 %v2390
        %6603 = vmatpush1.msra.mxu0 %v2389
        %6604 = vmatprep.subr.mxu0 %v2386
        %6605 = vmatpush1.msra.mxu0 %v2385
        %6606 = vmatprep.subr.mxu0 %v2382
        %6607 = vmatpush1.msra.mxu0 %v2381
        %6608 = vmatprep.subr.mxu0 %v2378
        %6609 = vmatpush1.msra.mxu0 %v2377
        %6610 = vmatprep.subr.mxu0 %v2374
        %6611 = vmatpush1.msra.mxu0 %v2373
        %6612 = vmatprep.subr.mxu0 %v2370
        %6613 = vmatpush1.msra.mxu0 %v2369
        %6614 = vmatprep.subr.mxu0 %v2366
        %6615 = vmatpush1.msra.mxu0 %v2365
        %6616 = vmatprep.subr.mxu0 %v2362
        %6617 = vmatpush1.msra.mxu0 %v2361
        %6618 = vmatprep.subr.mxu0 %v2358
        %6619 = vmatpush1.msra.mxu0 %v2357
        %6620 = vmatprep.subr.mxu0 %v2354
        %6621 = vmatpush1.msra.mxu0 %v2353
        %6622 = vmatprep.subr.mxu0 %v2350
        %6623 = vmatpush1.msra.mxu0 %v2349
        %6624 = vmatprep.subr.mxu0 %v2346
        %6625 = vmatpush1.msra.mxu0 %v2345
        %6626 = vmatprep.subr.mxu0 %v2470
        %6627 = vmatpush2.msra.mxu0 %v2469
        %6628 = vmatprep.subr.mxu0 %v2466
        %6629 = vmatpush2.msra.mxu0 %v2465
        %6630 = vmatprep.subr.mxu0 %v2462
        %6631 = vmatpush2.msra.mxu0 %v2461
        %6632 = vmatprep.subr.mxu0 %v2458
        %6633 = vmatpush2.msra.mxu0 %v2457
        %6634 = vmatprep.subr.mxu0 %v2454
        %6635 = vmatpush2.msra.mxu0 %v2453
        %6636 = vmatprep.subr.mxu0 %v2450
        %6637 = vmatpush2.msra.mxu0 %v2449
        %6638 = vmatprep.subr.mxu0 %v2446
        %6639 = vmatpush2.msra.mxu0 %v2445
        %6640 = vmatprep.subr.mxu0 %v2442
        %6641 = vmatpush2.msra.mxu0 %v2441
        %6642 = vmatprep.subr.mxu0 %v2438
        %6643 = vmatpush2.msra.mxu0 %v2437
        %6644 = vmatprep.subr.mxu0 %v2434
        %6645 = vmatpush2.msra.mxu0 %v2433
        %6646 = vmatprep.subr.mxu0 %v2430
        %6647 = vmatpush2.msra.mxu0 %v2429
        %6648 = vmatprep.subr.mxu0 %v2426
        %6649 = vmatpush2.msra.mxu0 %v2425
        %6650 = vmatprep.subr.mxu0 %v2422
        %6651 = vmatpush2.msra.mxu0 %v2421
        %6652 = vmatprep.subr.mxu0 %v2418
        %6653 = vmatpush2.msra.mxu0 %v2417
        %6654 = vmatprep.subr.mxu0 %v2414
        %6655 = vmatpush2.msra.mxu0 %v2413
        %6656 = vmatprep.subr.mxu0 %v2410
        %6657 = vmatpush2.msra.mxu0 %v2409
        %6658 = vmatprep.mubr.f32.mxu0 %v6449
        %6659 = vmatmul.mubr.f32.gmra.mxu0 %v6448
        %v6660 = vpop.f32.mrf.mxu0
        %v6661 = vadd.f32 0.0, %v6660
        %v6662 = vpop.f32.mrf.mxu0
        %v6663 = vadd.f32 0.0, %v6662
        %6664 = vdwg.mxu0
        %6665 = vmatprep.subr.mxu0 %v2534
        %6666 = vmatpush1.msra.mxu0 %v2533
        %6667 = vmatprep.subr.mxu0 %v2530
        %6668 = vmatpush1.msra.mxu0 %v2529
        %6669 = vmatprep.subr.mxu0 %v2526
        %6670 = vmatpush1.msra.mxu0 %v2525
        %6671 = vmatprep.subr.mxu0 %v2522
        %6672 = vmatpush1.msra.mxu0 %v2521
        %6673 = vmatprep.subr.mxu0 %v2518
        %6674 = vmatpush1.msra.mxu0 %v2517
        %6675 = vmatprep.subr.mxu0 %v2514
        %6676 = vmatpush1.msra.mxu0 %v2513
        %6677 = vmatprep.subr.mxu0 %v2510
        %6678 = vmatpush1.msra.mxu0 %v2509
        %6679 = vmatprep.subr.mxu0 %v2506
        %6680 = vmatpush1.msra.mxu0 %v2505
        %6681 = vmatprep.subr.mxu0 %v2502
        %6682 = vmatpush1.msra.mxu0 %v2501
        %6683 = vmatprep.subr.mxu0 %v2498
        %6684 = vmatpush1.msra.mxu0 %v2497
        %6685 = vmatprep.subr.mxu0 %v2494
        %6686 = vmatpush1.msra.mxu0 %v2493
        %6687 = vmatprep.subr.mxu0 %v2490
        %6688 = vmatpush1.msra.mxu0 %v2489
        %6689 = vmatprep.subr.mxu0 %v2486
        %6690 = vmatpush1.msra.mxu0 %v2485
        %6691 = vmatprep.subr.mxu0 %v2482
        %6692 = vmatpush1.msra.mxu0 %v2481
        %6693 = vmatprep.subr.mxu0 %v2478
        %6694 = vmatpush1.msra.mxu0 %v2477
        %6695 = vmatprep.subr.mxu0 %v2474
        %6696 = vmatpush1.msra.mxu0 %v2473
        %6697 = vmatprep.subr.mxu0 %v2598
        %6698 = vmatpush2.msra.mxu0 %v2597
        %6699 = vmatprep.subr.mxu0 %v2594
        %6700 = vmatpush2.msra.mxu0 %v2593
        %6701 = vmatprep.subr.mxu0 %v2590
        %6702 = vmatpush2.msra.mxu0 %v2589
        %6703 = vmatprep.subr.mxu0 %v2586
        %6704 = vmatpush2.msra.mxu0 %v2585
        %6705 = vmatprep.subr.mxu0 %v2582
        %6706 = vmatpush2.msra.mxu0 %v2581
        %6707 = vmatprep.subr.mxu0 %v2578
        %6708 = vmatpush2.msra.mxu0 %v2577
        %6709 = vmatprep.subr.mxu0 %v2574
        %6710 = vmatpush2.msra.mxu0 %v2573
        %6711 = vmatprep.subr.mxu0 %v2570
        %6712 = vmatpush2.msra.mxu0 %v2569
        %6713 = vmatprep.subr.mxu0 %v2566
        %6714 = vmatpush2.msra.mxu0 %v2565
        %6715 = vmatprep.subr.mxu0 %v2562
        %6716 = vmatpush2.msra.mxu0 %v2561
        %6717 = vmatprep.subr.mxu0 %v2558
        %6718 = vmatpush2.msra.mxu0 %v2557
        %6719 = vmatprep.subr.mxu0 %v2554
        %6720 = vmatpush2.msra.mxu0 %v2553
        %6721 = vmatprep.subr.mxu0 %v2550
        %6722 = vmatpush2.msra.mxu0 %v2549
        %6723 = vmatprep.subr.mxu0 %v2546
        %6724 = vmatpush2.msra.mxu0 %v2545
        %6725 = vmatprep.subr.mxu0 %v2542
        %6726 = vmatpush2.msra.mxu0 %v2541
        %6727 = vmatprep.subr.mxu0 %v2538
        %6728 = vmatpush2.msra.mxu0 %v2537
        %6729 = vmatprep.mubr.f32.mxu0 %v6451
        %6730 = vmatmul.mubr.f32.gmra.mxu0 %v6450
        %v6731 = vpop.f32.mrf.mxu0
        %v6732 = vadd.f32 %v6661, %v6731
        %v6733 = vpop.f32.mrf.mxu0
        %v6734 = vadd.f32 %v6663, %v6733
        %6735 = vdwg.mxu0
        %v6736 = vmul.f32 %v6590, %v6590
        %v6737 = vmul.f32 %v6592, %v6592
        %v6738 = vmul.f32 %v6732, %v6732
        %v6739 = vmul.f32 %v6734, %v6734
        %v6744 = vrot.slane %v6736, 7
        %v6745 = vrot.slane %v6737, 7
        %v6746 = vrot.slane %v6738, 7
        %v6747 = vrot.slane %v6739, 7
        %v6752 = vsub.f32 %v6590, %v6744
        %v6753 = vsub.f32 %v6592, %v6745
        %v6754 = vsub.f32 %v6732, %v6746
        %v6755 = vsub.f32 %v6734, %v6747
        %v6756 = vmax.f32 %v6752, 0.0
        %v6757 = vmax.f32 %v6753, 0.0
        %v6758 = vmax.f32 %v6754, 0.0
        %v6759 = vmax.f32 %v6755, 0.0
        %v6760 = vadd.f32 %v6756, 1e-05
        %v6761 = vadd.f32 %v6757, 1e-05
        %v6762 = vadd.f32 %v6758, 1e-05
        %v6763 = vadd.f32 %v6759, 1e-05
        %v6764 = vrsqrt.pop %v6760
        %v6765 = vrsqrt.pop %v6761
        %v6766 = vrsqrt.pop %v6762
        %v6767 = vrsqrt.pop %v6763
        %v6772 = vcombine.low %v6764, %v6765
        %v6773 = vcombine.low %v6766, %v6767
        %v6775 = vunpack.c.l.s4 1966171168
        %v6776 = vunpack.c.0.s8 %v6775
        %v6777 = vlaneseq
        %v6778 = vshrl.u32 %v6777, 7
        %v6779 = vsub.s32 %v6776, %v6778
        %v6780 = vrot.slane %v6772, %v6779
        %v6782 = vunpack.c.l.s4 1966171168
        %v6783 = vunpack.c.0.s8 %v6782
        %v6784 = vlaneseq
        %v6785 = vshrl.u32 %v6784, 7
        %v6786 = vsub.s32 %v6783, %v6785
        %v6787 = vrot.slane %v6773, %v6786
        %v6788 = vcombine.high %v6780, %v6787
        %v6790 = vunpack.c.l.s4 1966171168
        %v6791 = vunpack.c.0.s8 %v6790
        %v6792 = vlaneseq
        %v6793 = vshrl.u32 %v6792, 7
        %v6794 = vsub.s32 %v6791, %v6793
        %v6795 = vrot.slane %v6788, %v6794
        %v6797 = vmul.f32 %v370, %v6795
        %v6799 = vlaneseq
        %v6800 = vshrl.u32 %v6799, 7
        %v6801 = vsub.s32 0, %v6800
        %v6802 = vrot.slane %v6797, %v6801
        %v6803 = vlaneseq
        %v6804 = vshrl.u32 %v6803, 7
        %v6805 = vsub.s32 1, %v6804
        %v6806 = vrot.slane %v6797, %v6805
        %v6807 = vlaneseq
        %v6808 = vshrl.u32 %v6807, 7
        %v6809 = vsub.s32 2, %v6808
        %v6810 = vrot.slane %v6797, %v6809
        %v6811 = vlaneseq
        %v6812 = vshrl.u32 %v6811, 7
        %v6813 = vsub.s32 3, %v6812
        %v6814 = vrot.slane %v6797, %v6813
        %v6819 = vmul.f32 %v6590, %v6802
        %v6820 = vmul.f32 %v6592, %v6806
        %v6821 = vmul.f32 %v6732, %v6810
        %v6822 = vmul.f32 %v6734, %v6814
        %v6827 = vcombine.low %v6819, %v6820
        %v6828 = vcombine.low %v6821, %v6822
        %v6830 = vunpack.c.l.s4 1966171168
        %v6831 = vunpack.c.0.s8 %v6830
        %v6832 = vlaneseq
        %v6833 = vshrl.u32 %v6832, 7
        %v6834 = vsub.s32 %v6831, %v6833
        %v6835 = vrot.slane %v6827, %v6834
        %v6837 = vunpack.c.l.s4 1966171168
        %v6838 = vunpack.c.0.s8 %v6837
        %v6839 = vlaneseq
        %v6840 = vshrl.u32 %v6839, 7
        %v6841 = vsub.s32 %v6838, %v6840
        %v6842 = vrot.slane %v6828, %v6841
        %v6843 = vcombine.low %v6835, %v6842
        %v6845 = vunpack.c.l.s4 1966171168
        %v6846 = vunpack.c.0.s8 %v6845
        %v6847 = vlaneseq
        %v6848 = vshrl.u32 %v6847, 7
        %v6849 = vsub.s32 %v6846, %v6848
        %v6850 = vrot.slane %v6843, %v6849
        %v6852 = vsub.f32 %v372, %v6850
        %v6853 = vmul.f32 %v6376, %v6802
        %v6854 = vmul.f32 %v6377, %v6806
        %v6855 = vmul.f32 %v6378, %v6810
        %v6856 = vmul.f32 %v6379, %v6814
        %v6857 = vmul.f32 %v6380, %v6802
        %v6858 = vmul.f32 %v6381, %v6806
        %v6859 = vmul.f32 %v6382, %v6810
        %v6860 = vmul.f32 %v6383, %v6814
        %v6862 = vlaneseq
        %v6863 = vshrl.u32 %v6862, 7
        %v6864 = vsub.s32 0, %v6863
        %v6865 = vrot.slane %v6852, %v6864
        %v6866 = vlaneseq
        %v6867 = vshrl.u32 %v6866, 7
        %v6868 = vsub.s32 1, %v6867
        %v6869 = vrot.slane %v6852, %v6868
        %v6870 = vlaneseq
        %v6871 = vshrl.u32 %v6870, 7
        %v6872 = vsub.s32 2, %v6871
        %v6873 = vrot.slane %v6852, %v6872
        %v6874 = vlaneseq
        %v6875 = vshrl.u32 %v6874, 7
        %v6876 = vsub.s32 3, %v6875
        %v6877 = vrot.slane %v6852, %v6876
        %v6882 = vadd.f32 %v6853, %v6865
        %v6883 = vadd.f32 %v6854, %v6869
        %v6884 = vadd.f32 %v6855, %v6873
        %v6885 = vadd.f32 %v6856, %v6877
        %v6886 = vadd.f32 %v6857, %v6865
        %v6887 = vadd.f32 %v6858, %v6869
        %v6888 = vadd.f32 %v6859, %v6873
        %v6889 = vadd.f32 %v6860, %v6877
        %vm6890 = vcmp.ge.f32.partialorder %v6882, 0.0
        %vm6891 = vcmp.ge.f32.partialorder %v6883, 0.0
        %vm6892 = vcmp.ge.f32.partialorder %v6884, 0.0
        %vm6893 = vcmp.ge.f32.partialorder %v6885, 0.0
        %vm6894 = vcmp.ge.f32.partialorder %v6886, 0.0
        %vm6895 = vcmp.ge.f32.partialorder %v6887, 0.0
        %vm6896 = vcmp.ge.f32.partialorder %v6888, 0.0
        %vm6897 = vcmp.ge.f32.partialorder %v6889, 0.0
        %v6898 = vmul.f32 %v6882, 0.01
        %v6899 = vmul.f32 %v6883, 0.01
        %v6900 = vmul.f32 %v6884, 0.01
        %v6901 = vmul.f32 %v6885, 0.01
        %v6902 = vmul.f32 %v6886, 0.01
        %v6903 = vmul.f32 %v6887, 0.01
        %v6904 = vmul.f32 %v6888, 0.01
        %v6905 = vmul.f32 %v6889, 0.01
        %v6906 = vsel %vm6890, %v6882, %v6898
        %v6907 = vsel %vm6891, %v6883, %v6899
        %v6908 = vsel %vm6892, %v6884, %v6900
        %v6909 = vsel %vm6893, %v6885, %v6901
        %v6910 = vsel %vm6894, %v6886, %v6902
        %v6911 = vsel %vm6895, %v6887, %v6903
        %v6912 = vsel %vm6896, %v6888, %v6904
        %v6913 = vsel %vm6897, %v6889, %v6905
        %v6914 = vadd.f32 %v6906, %v3053
        %v6915 = vadd.f32 %v6907, %v3054
        %v6916 = vadd.f32 %v6908, %v3055
        %v6917 = vadd.f32 %v6909, %v3056
        %v6918 = vadd.f32 %v6910, %v3057
        %v6919 = vadd.f32 %v6911, %v3058
        %v6920 = vadd.f32 %v6912, %v3059
        %v6921 = vadd.f32 %v6913, %v3060
        %6922 = vst [vmem:[%s365] sm:$0xff] %v6914
        %6923 = vst [vmem:[%s365 + $0x8] sm:$0xff] %v6915
        %6924 = vst [vmem:[%s365 + $0x10] sm:$0xff] %v6916
        %6925 = vst [vmem:[%s365 + $0x18] sm:$0xff] %v6917
        %6926 = vst [vmem:[%s365 + $0x20] sm:$0xff] %v6918
        %6927 = vst [vmem:[%s365 + $0x28] sm:$0xff] %v6919
        %6928 = vst [vmem:[%s365 + $0x30] sm:$0xff] %v6920
        %6929 = vst [vmem:[%s365 + $0x38] sm:$0xff] %v6921
        %s6930 = sand.u32 %s187, 1
        %s6931 = scalar_lea.sflag [#allocation4], %s6930
        %s6932 = sand.u32 %s187, 1
        %s6933 = smul.addr %s6932, 64
        %s6934 = scalar_lea.vmem [#allocation13], %s6933
        // Predicated region
        $region73: #{tpu_custom_call.1} parent=47 // pred_check
          %p6935 = pneg %p197
        $region74: #{tpu_custom_call.1} parent=47 // pred_check_branch
          %6937 = sbr.rel (%p6935) target = $region76
        $region75: #{tpu_custom_call.1} parent=47 // pred_region
          %s6939 = ssub.s32 1024, 1024
          %6940 = vsyncadd %s6931, %s6939
          %s6941 = smul.addr %s27, 8
          %s6942 = smul.addr %s6941, 128
          %s6943 = scalar_lea.hbm %s7, %s6942
          %s6944 = sshll.u32 %s6934, 4
          %s6945 = int_to_ptr.vmem [resolvable:$true] %s6944
          %6950 = dma.vmem_to_hbm [thread:$0]  %s6945, 1024, %s6943, %s6931, 512, 512, 32
        $region76: #{tpu_custom_call.1} parent=47 // pred_fallthru
          _
      $region48: #{tpu_custom_call.1} parent=5 // pred_fallthru
        _
      %p6951 = scmp.le.s32.totalorder 2, %s22
      // Predicated region
      $region77: #{tpu_custom_call.1} parent=5 // pred_check
        %p6952 = pneg %p6951
      $region78: #{tpu_custom_call.1} parent=5 // pred_check_branch
        %6954 = sbr.rel (%p6952) target = $region80
      $region79: #{tpu_custom_call.1} parent=5 // pred_region
        %s6955 = ssub.s32 %s22, 2
        // Predicated region
        $region81: #{tpu_custom_call.1} parent=79 // pred_check
          %p6956 = pneg %p203
        $region82: #{tpu_custom_call.1} parent=79 // pred_check_branch
          %6958 = sbr.rel (%p6956) target = $region84
        $region83: #{tpu_custom_call.1} parent=79 // pred_region
          %s6959 = sand.u32 %s188, 1
          %s6960 = scalar_lea.sflag [#allocation4], %s6959
          %s6961 = sand.u32 %s188, 1
          %s6962 = smul.addr %s6961, 64
          %s6963 = scalar_lea.vmem [#allocation13], %s6962
          %6964 = dma.done %s6960, 1024
        $region84: #{tpu_custom_call.1} parent=79 // pred_fallthru
          _
      $region80: #{tpu_custom_call.1} parent=5 // pred_fallthru
        _
    $region6: #{tpu_custom_call.1} parent=1 // loop_footer
      %s26 = sadd.s32 1, %s22
    $region7: #{tpu_custom_call.1} parent=1 // loop_footer_branch
      %21 = sbr.rel target = $region3
    $region8: #{tpu_custom_call.1} parent=1 // loop_exit
      _
    %6965 = vsyncpa [#allocation3], 1
    %s6966 = scalar_lea.sflag [#allocation3], 1
    %6967 = vsyncpa %s6966, 1
    %6968 = vsyncpa [#allocation6], 1
    %6969 = vsyncpa [#allocation9], 1
    %6970 = vsyncpa [#allocation12], 1
    %6971 = vsyncpa [#allocation4], 1
    %s6972 = scalar_lea.sflag [#allocation4], 1
    %6973 = vsyncpa %s6972, 1

</llo_original>
